<compile_context>
chip_gen: v5e
topology: v5e:2x2
jax: 0.10.0
libtpu: 0.0.40
codegen_flags: <defaults>
</compile_context>

<pallas_src>
import numpy as np

import jax
import jax.numpy as jnp
from jax.experimental import pallas as pl
from jax.experimental.pallas import tpu as pltpu

EPS = 1e-5  # nn.BatchNorm2d default


def _round_up(x, m):
    return -(-x // m) * m


# --------------------------------------------------------------------------- #
# static plan: levels, block meta, row offsets inside the packed slabs
# --------------------------------------------------------------------------- #

def _make_plan(n, in_ch, h, w, nf, num_blocks, num_classes):
    cin0 = _round_up(max(in_ch, nf), 8)
    # The pre-broadcast mask slab assumes every conv that builds patches at a given
    # level has the same Cin; for level 0 that requires padded stem Cin == nf.
    assert cin0 == nf, "use nf >= round_up(in_ch, 8) and nf % 8 == 0"

    levels = [(h, w)]
    level_cin = [cin0]
    blocks = []
    w_row = nf            # rows [0, nf) of the weight slab hold the stem conv
    bn_row = nf           # rows [0, nf) of the BN slab hold the stem BN
    in_planes = nf
    cur = 0
    for li, nb in enumerate(num_blocks):
        planes = nf * (2 ** li)
        strides = [1 if li == 0 else 2] + [1] * (nb - 1)
        for s in strides:
            in_lvl = cur
            if s == 2:
                hh, ww = levels[cur]
                levels.append(((hh + 1) // 2, (ww + 1) // 2))
                level_cin.append(planes)
                cur += 1
            has_sc = (s != 1) or (in_planes != planes)
            b = dict(in_planes=in_planes, planes=planes, stride=s,
                     in_lvl=in_lvl, out_lvl=cur, has_sc=has_sc,
                     w1_row=w_row, bn1_row=bn_row,
                     w2_row=w_row + planes, bn2_row=bn_row + planes)
            w_row += 2 * planes
            bn_row += 2 * planes
            if has_sc:
                b["ws_row"] = w_row
                b["bns_row"] = bn_row
                w_row += planes
                bn_row += planes
            blocks.append(b)
            in_planes = planes
    c_final = in_planes

    # mask-slab consistency: one pre-broadcast mask per level
    for b in blocks:
        assert b["in_planes"] == level_cin[b["in_lvl"]]
        assert b["planes"] == level_cin[b["out_lvl"]]

    m_sp = [n * hh * ww for hh, ww in levels]

    mask_off, r = [], 0
    for cl in level_cin:
        mask_off.append(r)
        r += 9 * cl
    mask_rows = r

    sub_off, r = [], 0
    for l in range(len(levels) - 1):
        sub_off.append(r)
        r += m_sp[l]
    pool_off = r
    sub_rows = r + m_sp[-1]
    sub_cols = max([n] + [m_sp[l + 1] for l in range(len(levels) - 1)])

    cls_rows = _round_up(num_classes, 8)
    w_cols = max([c_final] + [9 * cl for cl in level_cin])

    return dict(
        n=n, in_ch=in_ch, cin0=cin0, nf=nf, num_classes=num_classes,
        levels=levels, level_cin=level_cin, m_sp=m_sp, blocks=blocks,
        stem_w_row=0, stem_bn_row=0,
        cls_w_row=w_row, cls_b_row=bn_row, cls_rows=cls_rows,
        w_rows=w_row + cls_rows, w_cols=w_cols,
        bn_rows=bn_row + cls_rows,
        mask_off=mask_off, mask_rows=mask_rows, mask_cols=m_sp[0],
        sub_off=sub_off, pool_off=pool_off, sub_rows=sub_rows, sub_cols=sub_cols,
        c_final=c_final,
        scr_rows=max(9 * cl for cl in level_cin), scr_cols=max(m_sp),
    )


# --------------------------------------------------------------------------- #
# host-side constant / parameter slab builders
# --------------------------------------------------------------------------- #

def _tap_masks(n, h, w):
    """(9, n*h*w) 0/1 validity mask per 3x3 tap (dy,dx) for padding=1 convs."""
    m = n * h * w
    yy = (np.arange(m) // w) % h
    xx = np.arange(m) % w
    out = np.zeros((9, m), np.float32)
    t = 0
    for dy in (-1, 0, 1):
        for dx in (-1, 0, 1):
            out[t] = ((yy + dy >= 0) & (yy + dy < h) &
                      (xx + dx >= 0) & (xx + dx < w)).astype(np.float32)
            t += 1
    return out


def _subsample_mat(n, h, w):
    """(n*h*w, n*ho*wo) 0/1 matrix selecting the stride-2 output columns."""
    ho, wo = (h + 1) // 2, (w + 1) // 2
    r = np.zeros((n * h * w, n * ho * wo), np.float32)
    for ni in range(n):
        for yo in range(ho):
            for xo in range(wo):
                r[ni * h * w + (2 * yo) * w + (2 * xo),
                  ni * ho * wo + yo * wo + xo] = 1.0
    return r


def build_constants(plan):
    """Data-independent slabs: pre-broadcast tap masks (f32), subsample+pool (bf16)."""
    n = plan["n"]
    mask = np.zeros((plan["mask_rows"], plan["mask_cols"]), np.float32)
    for l, (hh, ww) in enumerate(plan["levels"]):
        cin = plan["level_cin"][l]
        tm = _tap_masks(n, hh, ww)                        # (9, m_l)
        # row order t*cin + c  == the patch-scratch row order
        mask[plan["mask_off"][l]:plan["mask_off"][l] + 9 * cin, :plan["m_sp"][l]] = \
            np.repeat(tm, cin, axis=0)

    sub = np.zeros((plan["sub_rows"], plan["sub_cols"]), np.float32)
    for l in range(len(plan["levels"]) - 1):
        s = _subsample_mat(n, *plan["levels"][l])
        sub[plan["sub_off"][l]:plan["sub_off"][l] + s.shape[0], :s.shape[1]] = s
    hl, wl = plan["levels"][-1]
    for ni in range(n):                                   # exact global average pool
        sub[plan["pool_off"] + ni * hl * wl:
            plan["pool_off"] + (ni + 1) * hl * wl, ni] = 1.0 / (hl * wl)
    # 0/1 selections are exact in bf16; 1/(hl*wl) is exact when hl*wl is a power of 2.
    return jnp.asarray(mask, jnp.float32), jnp.asarray(sub, jnp.bfloat16)


def init_params(key, plan):
    """Packed parameter slabs: bf16 weights (w_slab), f32 BN gamma/beta (bn_slab)."""
    w = np.zeros((plan["w_rows"], plan["w_cols"]), np.float32)
    bn = np.zeros((plan["bn_rows"], 2), np.float32)       # col 0 = gamma, col 1 = beta
    keys = iter(jax.random.split(key, 64))

    def conv3x3_w(k, cin, cout, cin_pad=None):
        cin_pad = cin if cin_pad is None else cin_pad
        sc = 1.0 / np.sqrt(9.0 * cin)
        wt = np.zeros((cout, 3, 3, cin_pad), np.float32)
        wt[..., :cin] = np.asarray(
            jax.random.normal(k, (cout, 3, 3, cin), jnp.float32)) * sc
        return wt.reshape(cout, 9 * cin_pad)    # (ky,kx)-major, channel-minor columns

    nf, cin0 = plan["nf"], plan["cin0"]
    w[0:nf, :9 * cin0] = conv3x3_w(next(keys), plan["in_ch"], nf, cin0)
    bn[0:nf, 0] = 1.0
    for b in plan["blocks"]:
        cin, cout = b["in_planes"], b["planes"]
        w[b["w1_row"]:b["w1_row"] + cout, :9 * cin] = conv3x3_w(next(keys), cin, cout)
        bn[b["bn1_row"]:b["bn1_row"] + cout, 0] = 1.0
        w[b["w2_row"]:b["w2_row"] + cout, :9 * cout] = conv3x3_w(next(keys), cout, cout)
        bn[b["bn2_row"]:b["bn2_row"] + cout, 0] = 1.0
        if b["has_sc"]:
            sc = 1.0 / np.sqrt(float(cin))
            w[b["ws_row"]:b["ws_row"] + cout, :cin] = \
                np.asarray(jax.random.normal(next(keys), (cout, cin), jnp.float32)) * sc
            bn[b["bns_row"]:b["bns_row"] + cout, 0] = 1.0
    nc, cf = plan["num_classes"], plan["c_final"]
    w[plan["cls_w_row"]:plan["cls_w_row"] + nc, :cf] = \
        np.asarray(jax.random.normal(next(keys), (nc, cf), jnp.float32)) / np.sqrt(float(cf))
    # classifier bias lives at bn rows [cls_b_row, cls_b_row+nc), col 0 (init 0)
    return jnp.asarray(w, jnp.bfloat16), jnp.asarray(bn, jnp.float32)


# --------------------------------------------------------------------------- #
# fused forward pass (one gridless pallas_call)
# --------------------------------------------------------------------------- #

def resnet_forward(x, w_slab, bn_slab, mask_slab, sub_slab,
                   nf=8, num_blocks=(1, 1, 1, 1), num_classes=10):
    """Returns (fea, logits) exactly like ResNet.forward (train-mode BN)."""
    x = jnp.asarray(x, jnp.float32)
    n, in_ch, h, w = x.shape
    plan = _make_plan(n, in_ch, h, w, nf, tuple(num_blocks), num_classes)

    cin0 = plan["cin0"]
    m_sp = plan["m_sp"]
    w_sp = [ww for (_, ww) in plan["levels"]]
    mask_off, sub_off, pool_off = plan["mask_off"], plan["sub_off"], plan["pool_off"]
    c_final = plan["c_final"]

    # channels-first lane-dense layout: (C, N*H*W); pad input channels up to cin0
    x_cm = jnp.transpose(x, (1, 0, 2, 3)).reshape(in_ch, m_sp[0])
    if cin0 != in_ch:
        x_cm = jnp.pad(x_cm, ((0, cin0 - in_ch), (0, 0)))

    def kernel(x_ref, mask_ref, sub_ref, w_ref, bn_ref, fea_ref, out_ref, patch_scr):

        def shifted(v, off):
            """s[:, c] = v[:, c + off], zero fill (fallback when M % 128 != 0)."""
            m = v.shape[1]
            z = jnp.zeros((v.shape[0], abs(off)), v.dtype)
            if off > 0:
                return jnp.concatenate([v[:, off:], z], axis=1)
            return jnp.concatenate([z, v[:, :m + off]], axis=1)

        def patches_bf16(act, level):
            """Masked bf16 im2col patches (9*Cin, M) for a 3x3 / pad=1 / stride=1 conv.

            Taps are lane-rotations of `act` written into the shared VMEM scratch at
            static sublane offsets; the level's pre-broadcast (9*Cin, M) 0/1 mask is
            applied in ONE dense multiply.  The mask is 0 at every wrapped and
            out-of-image position, which makes roll (wrap) == shift (zero fill).
            """
            cin = act.shape[0]
            m, ww = m_sp[level], w_sp[level]
            t = 0
            for dy in (-1, 0, 1):
                for dx in (-1, 0, 1):
                    off = dy * ww + dx
                    if off == 0:
                        tap = act
                    elif m % 128 == 0:
                        tap = pltpu.roll(act, shift=(-off) % m, axis=1)   # XLU rotate
                    else:
                        tap = shifted(act, off)       # tiny deep levels (M < 128)
                    patch_scr[pl.ds(t * cin, cin), pl.ds(0, m)] = tap
                    t += 1
            pat = patch_scr[pl.ds(0, 9 * cin), pl.ds(0, m)]
            msk = mask_ref[pl.ds(mask_off[level], 9 * cin), pl.ds(0, m)]
            return (pat * msk).astype(jnp.bfloat16)

        def conv3x3(act, w_row, cout, level, sub_lvl=None):
            """3x3 conv as one bf16 MXU matmul; stride-2 subsamples the bf16 patches
            BEFORE the conv matmul (0/1 selection matmul, exact in bf16)."""
            cin = act.shape[0]
            pat = patches_bf16(act, level)
            if sub_lvl is not None:
                m_in, m_out = m_sp[sub_lvl], m_sp[sub_lvl + 1]
                sub = sub_ref[pl.ds(sub_off[sub_lvl], m_in), pl.ds(0, m_out)]
                pat = jnp.dot(pat, sub,
                              preferred_element_type=jnp.float32).astype(jnp.bfloat16)
            wmat = w_ref[pl.ds(w_row, cout), pl.ds(0, 9 * cin)]
            return jnp.dot(wmat, pat, preferred_element_type=jnp.float32), pat

        def bn(y, row):
            """Train-mode BatchNorm over N*H*W, centered two-pass variance (f32)."""
            c, m = y.shape
            g = bn_ref[pl.ds(row, c), pl.ds(0, 1)]
            b = bn_ref[pl.ds(row, c), pl.ds(1, 1)]
            mean = jnp.sum(y, axis=1, keepdims=True) * (1.0 / m)
            d = y - mean
            var = jnp.sum(d * d, axis=1, keepdims=True) * (1.0 / m)
            return d * (jax.lax.rsqrt(var + EPS) * g) + b

        # ---- stem: conv3x3 + BN + ReLU ---------------------------------------
        y, _ = conv3x3(x_ref[...], plan["stem_w_row"], plan["nf"], 0)
        act = jnp.maximum(bn(y, plan["stem_bn_row"]), 0.0)

        # ---- BasicBlocks -------------------------------------------------------
        for b in plan["blocks"]:
            in_lvl, out_lvl = b["in_lvl"], b["out_lvl"]
            cin, planes = b["in_planes"], b["planes"]
            sub_lvl = in_lvl if b["stride"] == 2 else None

            y1, pat1 = conv3x3(act, b["w1_row"], planes, in_lvl, sub_lvl=sub_lvl)
            a1 = jnp.maximum(bn(y1, b["bn1_row"]), 0.0)
            y2, _ = conv3x3(a1, b["w2_row"], planes, out_lvl)
            y2 = bn(y2, b["bn2_row"])

            if b["has_sc"]:
                # 1x1 (strided) conv + BN shortcut.  The strided input is exactly
                # the centre tap (dy=dx=0) of the already-subsampled bf16 patches.
                if b["stride"] == 2:
                    xs = pat1[4 * cin:5 * cin, :]
                else:
                    xs = act.astype(jnp.bfloat16)
                ws = w_ref[pl.ds(b["ws_row"], planes), pl.ds(0, cin)]
                sc = bn(jnp.dot(ws, xs, preferred_element_type=jnp.float32),
                        b["bns_row"])
            else:
                sc = act
            act = jnp.maximum(y2 + sc, 0.0)

        # ---- head: global average pool + classifier (bf16-in, f32-acc) --------
        m_last = m_sp[-1]
        pool = sub_ref[pl.ds(pool_off, m_last), pl.ds(0, n)]
        fea = jnp.dot(act.astype(jnp.bfloat16), pool,
                      preferred_element_type=jnp.float32)             # (c_final, N)
        fea_ref[...] = fea
        cw = w_ref[pl.ds(plan["cls_w_row"], plan["cls_rows"]), pl.ds(0, c_final)]
        cb = bn_ref[pl.ds(plan["cls_b_row"], plan["cls_rows"]), pl.ds(0, 1)]
        logits = jnp.dot(cw, fea.astype(jnp.bfloat16),
                         preferred_element_type=jnp.float32) + cb
        out_ref[...] = logits[:num_classes, :]

    vmem_spec = pl.BlockSpec(memory_space=pltpu.MemorySpace.VMEM)
    fea_cm, logits_cm = pl.pallas_call(
        kernel,
        out_shape=(jax.ShapeDtypeStruct((c_final, n), jnp.float32),
                   jax.ShapeDtypeStruct((num_classes, n), jnp.float32)),
        in_specs=[vmem_spec] * 5,
        out_specs=(vmem_spec, vmem_spec),
        scratch_shapes=[pltpu.VMEM((plan["scr_rows"], plan["scr_cols"]), jnp.float32)],
    )(x_cm, mask_slab, sub_slab, w_slab, bn_slab)

    return fea_cm.T, logits_cm.T


# ----------------------------------- main ----------------------------------- #

if __name__ == "__main__":
    key = jax.random.PRNGKey(0)
    k_x, k_p = jax.random.split(key)

    batch, in_ch, spatial = 2, 3, 16
    nf, num_classes = 8, 10
    num_blocks = (1, 1, 1, 1)

    x = jax.random.normal(k_x, (batch, in_ch, spatial, spatial), jnp.float32)

    plan = _make_plan(batch, in_ch, spatial, spatial, nf, num_blocks, num_classes)
    mask_slab, sub_slab = build_constants(plan)
    w_slab, bn_slab = init_params(k_p, plan)

    fwd = jax.jit(resnet_forward)
    fea, logits = jax.block_until_ready(
        fwd(x, w_slab, bn_slab, mask_slab, sub_slab))

    assert fea.shape == (batch, plan["c_final"]), fea.shape
    assert logits.shape == (batch, num_classes), logits.shape
    assert bool(jnp.all(jnp.isfinite(fea))) and bool(jnp.all(jnp.isfinite(logits)))
    print("KERNEL_OK")
</pallas_src>

<mosaic_0001>
module attributes {stable_mosaic.version = 11 : i64} {
  func.func @kernel(%arg0: memref<8x512xf32, #tpu.memory_space<vmem>>, %arg1: memref<1080x512xf32, #tpu.memory_space<vmem>>, %arg2: memref<680x128xbf16, #tpu.memory_space<vmem>>, %arg3: memref<376x576xbf16, #tpu.memory_space<vmem>>, %arg4: memref<376x2xf32, #tpu.memory_space<vmem>>, %arg5: memref<64x2xf32, #tpu.memory_space<vmem>>, %arg6: memref<10x2xf32, #tpu.memory_space<vmem>>, %arg7: memref<576x512xf32, #tpu.memory_space<vmem>>) attributes {dimension_semantics = [], scalar_prefetch = 0 : i64, scratch_operands = 1 : i64, tpu.core_type = #tpu.core_type<tc>} {
    %c0 = arith.constant 0 : index
    %c0_0 = arith.constant 0 : index
    %0 = vector.load %arg0[%c0, %c0_0] : memref<8x512xf32, #tpu.memory_space<vmem>>, vector<8x512xf32>
    %c17_i32 = arith.constant 17 : i32
    %1 = tpu.dynamic_rotate %0 by %c17_i32 dim 1 : vector<8x512xf32>, i32 -> vector<8x512xf32>
    %c0_1 = arith.constant 0 : index
    %c0_2 = arith.constant 0 : index
    %2 = vector.load %arg7[%c0_1, %c0_2] : memref<576x512xf32, #tpu.memory_space<vmem>>, vector<8x512xf32>
    tpu.vector_store %arg7[%c0_1, %c0_2], %1 {strides = array<i32>} : memref<576x512xf32, #tpu.memory_space<vmem>>, vector<8x512xf32>,
    %c16_i32 = arith.constant 16 : i32
    %3 = tpu.dynamic_rotate %0 by %c16_i32 dim 1 : vector<8x512xf32>, i32 -> vector<8x512xf32>
    %c8 = arith.constant 8 : index
    %c0_3 = arith.constant 0 : index
    %4 = vector.load %arg7[%c8, %c0_3] : memref<576x512xf32, #tpu.memory_space<vmem>>, vector<8x512xf32>
    tpu.vector_store %arg7[%c8, %c0_3], %3 {strides = array<i32>} : memref<576x512xf32, #tpu.memory_space<vmem>>, vector<8x512xf32>,
    %c15_i32 = arith.constant 15 : i32
    %5 = tpu.dynamic_rotate %0 by %c15_i32 dim 1 : vector<8x512xf32>, i32 -> vector<8x512xf32>
    %c16 = arith.constant 16 : index
    %c0_4 = arith.constant 0 : index
    %6 = vector.load %arg7[%c16, %c0_4] : memref<576x512xf32, #tpu.memory_space<vmem>>, vector<8x512xf32>
    tpu.vector_store %arg7[%c16, %c0_4], %5 {strides = array<i32>} : memref<576x512xf32, #tpu.memory_space<vmem>>, vector<8x512xf32>,
    %c1_i32 = arith.constant 1 : i32
    %7 = tpu.dynamic_rotate %0 by %c1_i32 dim 1 : vector<8x512xf32>, i32 -> vector<8x512xf32>
    %c24 = arith.constant 24 : index
    %c0_5 = arith.constant 0 : index
    %8 = vector.load %arg7[%c24, %c0_5] : memref<576x512xf32, #tpu.memory_space<vmem>>, vector<8x512xf32>
    tpu.vector_store %arg7[%c24, %c0_5], %7 {strides = array<i32>} : memref<576x512xf32, #tpu.memory_space<vmem>>, vector<8x512xf32>,
    %c32 = arith.constant 32 : index
    %c0_6 = arith.constant 0 : index
    %9 = vector.load %arg7[%c32, %c0_6] : memref<576x512xf32, #tpu.memory_space<vmem>>, vector<8x512xf32>
    tpu.vector_store %arg7[%c32, %c0_6], %0 {strides = array<i32>} : memref<576x512xf32, #tpu.memory_space<vmem>>, vector<8x512xf32>,
    %c511_i32 = arith.constant 511 : i32
    %10 = tpu.dynamic_rotate %0 by %c511_i32 dim 1 : vector<8x512xf32>, i32 -> vector<8x512xf32>
    %c40 = arith.constant 40 : index
    %c0_7 = arith.constant 0 : index
    %11 = vector.load %arg7[%c40, %c0_7] : memref<576x512xf32, #tpu.memory_space<vmem>>, vector<8x512xf32>
    tpu.vector_store %arg7[%c40, %c0_7], %10 {strides = array<i32>} : memref<576x512xf32, #tpu.memory_space<vmem>>, vector<8x512xf32>,
    %c497_i32 = arith.constant 497 : i32
    %12 = tpu.dynamic_rotate %0 by %c497_i32 dim 1 : vector<8x512xf32>, i32 -> vector<8x512xf32>
    %c48 = arith.constant 48 : index
    %c0_8 = arith.constant 0 : index
    %13 = vector.load %arg7[%c48, %c0_8] : memref<576x512xf32, #tpu.memory_space<vmem>>, vector<8x512xf32>
    tpu.vector_store %arg7[%c48, %c0_8], %12 {strides = array<i32>} : memref<576x512xf32, #tpu.memory_space<vmem>>, vector<8x512xf32>,
    %c496_i32 = arith.constant 496 : i32
    %14 = tpu.dynamic_rotate %0 by %c496_i32 dim 1 : vector<8x512xf32>, i32 -> vector<8x512xf32>
    %c56 = arith.constant 56 : index
    %c0_9 = arith.constant 0 : index
    %15 = vector.load %arg7[%c56, %c0_9] : memref<576x512xf32, #tpu.memory_space<vmem>>, vector<8x512xf32>
    tpu.vector_store %arg7[%c56, %c0_9], %14 {strides = array<i32>} : memref<576x512xf32, #tpu.memory_space<vmem>>, vector<8x512xf32>,
    %c495_i32 = arith.constant 495 : i32
    %16 = tpu.dynamic_rotate %0 by %c495_i32 dim 1 : vector<8x512xf32>, i32 -> vector<8x512xf32>
    %c64 = arith.constant 64 : index
    %c0_10 = arith.constant 0 : index
    %17 = vector.load %arg7[%c64, %c0_10] : memref<576x512xf32, #tpu.memory_space<vmem>>, vector<8x512xf32>
    tpu.vector_store %arg7[%c64, %c0_10], %16 {strides = array<i32>} : memref<576x512xf32, #tpu.memory_space<vmem>>, vector<8x512xf32>,
    %c0_11 = arith.constant 0 : index
    %c0_12 = arith.constant 0 : index
    %18 = vector.load %arg7[%c0_11, %c0_12] : memref<576x512xf32, #tpu.memory_space<vmem>>, vector<72x512xf32>
    %c0_13 = arith.constant 0 : index
    %c0_14 = arith.constant 0 : index
    %19 = vector.load %arg1[%c0_13, %c0_14] : memref<1080x512xf32, #tpu.memory_space<vmem>>, vector<72x512xf32>
    %20 = arith.mulf %18, %19 : vector<72x512xf32>
    %21 = arith.truncf %20 : vector<72x512xf32> to vector<72x512xbf16>
    %c0_15 = arith.constant 0 : index
    %c0_16 = arith.constant 0 : index
    %22 = vector.load %arg3[%c0_15, %c0_16] : memref<376x576xbf16, #tpu.memory_space<vmem>>, vector<8x72xbf16>
    %cst = arith.constant dense<0.000000e+00> : vector<8x512xf32>
    %23 = tpu.matmul %22, %21, %cst {dimension_numbers = #tpu.dot_dimension_numbers<[1], [0], [0], [1], [0, 0, 1, 1], [], []>} : vector<8x72xbf16>, vector<72x512xbf16>, vector<8x512xf32> -> vector<8x512xf32>
    %c0_17 = arith.constant 0 : index
    %c0_18 = arith.constant 0 : index
    %24 = vector.load %arg4[%c0_17, %c0_18] : memref<376x2xf32, #tpu.memory_space<vmem>>, vector<8x1xf32>
    %c0_19 = arith.constant 0 : index
    %c1 = arith.constant 1 : index
    %25 = vector.load %arg4[%c0_19, %c1] : memref<376x2xf32, #tpu.memory_space<vmem>>, vector<8x1xf32>
    %cst_20 = arith.constant dense<0.000000e+00> : vector<8xf32>
    %26 = vector.multi_reduction <add>, %23, %cst_20 [1] : vector<8x512xf32> to vector<8xf32>
    %27 = vector.shape_cast %26 : vector<8xf32> to vector<8x1xf32>
    %cst_21 = arith.constant 0.001953125 : f32
    %28 = vector.broadcast %cst_21 : f32 to vector<8x1xf32>
    %29 = arith.mulf %27, %28 : vector<8x1xf32>
    %30 = vector.broadcast %29 : vector<8x1xf32> to vector<8x512xf32>
    %31 = arith.subf %23, %30 : vector<8x512xf32>
    %32 = arith.mulf %31, %31 : vector<8x512xf32>
    %cst_22 = arith.constant dense<0.000000e+00> : vector<8xf32>
    %33 = vector.multi_reduction <add>, %32, %cst_22 [1] : vector<8x512xf32> to vector<8xf32>
    %34 = vector.shape_cast %33 : vector<8xf32> to vector<8x1xf32>
    %cst_23 = arith.constant 0.001953125 : f32
    %35 = vector.broadcast %cst_23 : f32 to vector<8x1xf32>
    %36 = arith.mulf %34, %35 : vector<8x1xf32>
    %cst_24 = arith.constant 9.99999974E-6 : f32
    %37 = vector.broadcast %cst_24 : f32 to vector<8x1xf32>
    %38 = arith.addf %36, %37 : vector<8x1xf32>
    %39 = math.rsqrt %38 : vector<8x1xf32>
    %40 = arith.mulf %39, %24 : vector<8x1xf32>
    %41 = vector.broadcast %40 : vector<8x1xf32> to vector<8x512xf32>
    %42 = arith.mulf %31, %41 : vector<8x512xf32>
    %43 = vector.broadcast %25 : vector<8x1xf32> to vector<8x512xf32>
    %44 = arith.addf %42, %43 : vector<8x512xf32>
    %cst_25 = arith.constant 0.000000e+00 : f32
    %45 = vector.broadcast %cst_25 : f32 to vector<8x512xf32>
    %46 = arith.maximumf %44, %45 : vector<8x512xf32>
    %c17_i32_26 = arith.constant 17 : i32
    %47 = tpu.dynamic_rotate %46 by %c17_i32_26 dim 1 : vector<8x512xf32>, i32 -> vector<8x512xf32>
    %c0_27 = arith.constant 0 : index
    %c0_28 = arith.constant 0 : index
    %48 = vector.load %arg7[%c0_27, %c0_28] : memref<576x512xf32, #tpu.memory_space<vmem>>, vector<8x512xf32>
    tpu.vector_store %arg7[%c0_27, %c0_28], %47 {strides = array<i32>} : memref<576x512xf32, #tpu.memory_space<vmem>>, vector<8x512xf32>,
    %c16_i32_29 = arith.constant 16 : i32
    %49 = tpu.dynamic_rotate %46 by %c16_i32_29 dim 1 : vector<8x512xf32>, i32 -> vector<8x512xf32>
    %c8_30 = arith.constant 8 : index
    %c0_31 = arith.constant 0 : index
    %50 = vector.load %arg7[%c8_30, %c0_31] : memref<576x512xf32, #tpu.memory_space<vmem>>, vector<8x512xf32>
    tpu.vector_store %arg7[%c8_30, %c0_31], %49 {strides = array<i32>} : memref<576x512xf32, #tpu.memory_space<vmem>>, vector<8x512xf32>,
    %c15_i32_32 = arith.constant 15 : i32
    %51 = tpu.dynamic_rotate %46 by %c15_i32_32 dim 1 : vector<8x512xf32>, i32 -> vector<8x512xf32>
    %c16_33 = arith.constant 16 : index
    %c0_34 = arith.constant 0 : index
    %52 = vector.load %arg7[%c16_33, %c0_34] : memref<576x512xf32, #tpu.memory_space<vmem>>, vector<8x512xf32>
    tpu.vector_store %arg7[%c16_33, %c0_34], %51 {strides = array<i32>} : memref<576x512xf32, #tpu.memory_space<vmem>>, vector<8x512xf32>,
    %c1_i32_35 = arith.constant 1 : i32
    %53 = tpu.dynamic_rotate %46 by %c1_i32_35 dim 1 : vector<8x512xf32>, i32 -> vector<8x512xf32>
    %c24_36 = arith.constant 24 : index
    %c0_37 = arith.constant 0 : index
    %54 = vector.load %arg7[%c24_36, %c0_37] : memref<576x512xf32, #tpu.memory_space<vmem>>, vector<8x512xf32>
    tpu.vector_store %arg7[%c24_36, %c0_37], %53 {strides = array<i32>} : memref<576x512xf32, #tpu.memory_space<vmem>>, vector<8x512xf32>,
    %c32_38 = arith.constant 32 : index
    %c0_39 = arith.constant 0 : index
    %55 = vector.load %arg7[%c32_38, %c0_39] : memref<576x512xf32, #tpu.memory_space<vmem>>, vector<8x512xf32>
    tpu.vector_store %arg7[%c32_38, %c0_39], %46 {strides = array<i32>} : memref<576x512xf32, #tpu.memory_space<vmem>>, vector<8x512xf32>,
    %c511_i32_40 = arith.constant 511 : i32
    %56 = tpu.dynamic_rotate %46 by %c511_i32_40 dim 1 : vector<8x512xf32>, i32 -> vector<8x512xf32>
    %c40_41 = arith.constant 40 : index
    %c0_42 = arith.constant 0 : index
    %57 = vector.load %arg7[%c40_41, %c0_42] : memref<576x512xf32, #tpu.memory_space<vmem>>, vector<8x512xf32>
    tpu.vector_store %arg7[%c40_41, %c0_42], %56 {strides = array<i32>} : memref<576x512xf32, #tpu.memory_space<vmem>>, vector<8x512xf32>,
    %c497_i32_43 = arith.constant 497 : i32
    %58 = tpu.dynamic_rotate %46 by %c497_i32_43 dim 1 : vector<8x512xf32>, i32 -> vector<8x512xf32>
    %c48_44 = arith.constant 48 : index
    %c0_45 = arith.constant 0 : index
    %59 = vector.load %arg7[%c48_44, %c0_45] : memref<576x512xf32, #tpu.memory_space<vmem>>, vector<8x512xf32>
    tpu.vector_store %arg7[%c48_44, %c0_45], %58 {strides = array<i32>} : memref<576x512xf32, #tpu.memory_space<vmem>>, vector<8x512xf32>,
    %c496_i32_46 = arith.constant 496 : i32
    %60 = tpu.dynamic_rotate %46 by %c496_i32_46 dim 1 : vector<8x512xf32>, i32 -> vector<8x512xf32>
    %c56_47 = arith.constant 56 : index
    %c0_48 = arith.constant 0 : index
    %61 = vector.load %arg7[%c56_47, %c0_48] : memref<576x512xf32, #tpu.memory_space<vmem>>, vector<8x512xf32>
    tpu.vector_store %arg7[%c56_47, %c0_48], %60 {strides = array<i32>} : memref<576x512xf32, #tpu.memory_space<vmem>>, vector<8x512xf32>,
    %c495_i32_49 = arith.constant 495 : i32
    %62 = tpu.dynamic_rotate %46 by %c495_i32_49 dim 1 : vector<8x512xf32>, i32 -> vector<8x512xf32>
    %c64_50 = arith.constant 64 : index
    %c0_51 = arith.constant 0 : index
    %63 = vector.load %arg7[%c64_50, %c0_51] : memref<576x512xf32, #tpu.memory_space<vmem>>, vector<8x512xf32>
    tpu.vector_store %arg7[%c64_50, %c0_51], %62 {strides = array<i32>} : memref<576x512xf32, #tpu.memory_space<vmem>>, vector<8x512xf32>,
    %c0_52 = arith.constant 0 : index
    %c0_53 = arith.constant 0 : index
    %64 = vector.load %arg7[%c0_52, %c0_53] : memref<576x512xf32, #tpu.memory_space<vmem>>, vector<72x512xf32>
    %c0_54 = arith.constant 0 : index
    %c0_55 = arith.constant 0 : index
    %65 = vector.load %arg1[%c0_54, %c0_55] : memref<1080x512xf32, #tpu.memory_space<vmem>>, vector<72x512xf32>
    %66 = arith.mulf %64, %65 : vector<72x512xf32>
    %67 = arith.truncf %66 : vector<72x512xf32> to vector<72x512xbf16>
    %c8_56 = arith.constant 8 : index
    %c0_57 = arith.constant 0 : index
    %68 = vector.load %arg3[%c8_56, %c0_57] : memref<376x576xbf16, #tpu.memory_space<vmem>>, vector<8x72xbf16>
    %cst_58 = arith.constant dense<0.000000e+00> : vector<8x512xf32>
    %69 = tpu.matmul %68, %67, %cst_58 {dimension_numbers = #tpu.dot_dimension_numbers<[1], [0], [0], [1], [0, 0, 1, 1], [], []>} : vector<8x72xbf16>, vector<72x512xbf16>, vector<8x512xf32> -> vector<8x512xf32>
    %c8_59 = arith.constant 8 : index
    %c0_60 = arith.constant 0 : index
    %70 = vector.load %arg4[%c8_59, %c0_60] : memref<376x2xf32, #tpu.memory_space<vmem>>, vector<8x1xf32>
    %c8_61 = arith.constant 8 : index
    %c1_62 = arith.constant 1 : index
    %71 = vector.load %arg4[%c8_61, %c1_62] : memref<376x2xf32, #tpu.memory_space<vmem>>, vector<8x1xf32>
    %cst_63 = arith.constant dense<0.000000e+00> : vector<8xf32>
    %72 = vector.multi_reduction <add>, %69, %cst_63 [1] : vector<8x512xf32> to vector<8xf32>
    %73 = vector.shape_cast %72 : vector<8xf32> to vector<8x1xf32>
    %cst_64 = arith.constant 0.001953125 : f32
    %74 = vector.broadcast %cst_64 : f32 to vector<8x1xf32>
    %75 = arith.mulf %73, %74 : vector<8x1xf32>
    %76 = vector.broadcast %75 : vector<8x1xf32> to vector<8x512xf32>
    %77 = arith.subf %69, %76 : vector<8x512xf32>
    %78 = arith.mulf %77, %77 : vector<8x512xf32>
    %cst_65 = arith.constant dense<0.000000e+00> : vector<8xf32>
    %79 = vector.multi_reduction <add>, %78, %cst_65 [1] : vector<8x512xf32> to vector<8xf32>
    %80 = vector.shape_cast %79 : vector<8xf32> to vector<8x1xf32>
    %cst_66 = arith.constant 0.001953125 : f32
    %81 = vector.broadcast %cst_66 : f32 to vector<8x1xf32>
    %82 = arith.mulf %80, %81 : vector<8x1xf32>
    %cst_67 = arith.constant 9.99999974E-6 : f32
    %83 = vector.broadcast %cst_67 : f32 to vector<8x1xf32>
    %84 = arith.addf %82, %83 : vector<8x1xf32>
    %85 = math.rsqrt %84 : vector<8x1xf32>
    %86 = arith.mulf %85, %70 : vector<8x1xf32>
    %87 = vector.broadcast %86 : vector<8x1xf32> to vector<8x512xf32>
    %88 = arith.mulf %77, %87 : vector<8x512xf32>
    %89 = vector.broadcast %71 : vector<8x1xf32> to vector<8x512xf32>
    %90 = arith.addf %88, %89 : vector<8x512xf32>
    %cst_68 = arith.constant 0.000000e+00 : f32
    %91 = vector.broadcast %cst_68 : f32 to vector<8x512xf32>
    %92 = arith.maximumf %90, %91 : vector<8x512xf32>
    %c17_i32_69 = arith.constant 17 : i32
    %93 = tpu.dynamic_rotate %92 by %c17_i32_69 dim 1 : vector<8x512xf32>, i32 -> vector<8x512xf32>
    %c0_70 = arith.constant 0 : index
    %c0_71 = arith.constant 0 : index
    %94 = vector.load %arg7[%c0_70, %c0_71] : memref<576x512xf32, #tpu.memory_space<vmem>>, vector<8x512xf32>
    tpu.vector_store %arg7[%c0_70, %c0_71], %93 {strides = array<i32>} : memref<576x512xf32, #tpu.memory_space<vmem>>, vector<8x512xf32>,
    %c16_i32_72 = arith.constant 16 : i32
    %95 = tpu.dynamic_rotate %92 by %c16_i32_72 dim 1 : vector<8x512xf32>, i32 -> vector<8x512xf32>
    %c8_73 = arith.constant 8 : index
    %c0_74 = arith.constant 0 : index
    %96 = vector.load %arg7[%c8_73, %c0_74] : memref<576x512xf32, #tpu.memory_space<vmem>>, vector<8x512xf32>
    tpu.vector_store %arg7[%c8_73, %c0_74], %95 {strides = array<i32>} : memref<576x512xf32, #tpu.memory_space<vmem>>, vector<8x512xf32>,
    %c15_i32_75 = arith.constant 15 : i32
    %97 = tpu.dynamic_rotate %92 by %c15_i32_75 dim 1 : vector<8x512xf32>, i32 -> vector<8x512xf32>
    %c16_76 = arith.constant 16 : index
    %c0_77 = arith.constant 0 : index
    %98 = vector.load %arg7[%c16_76, %c0_77] : memref<576x512xf32, #tpu.memory_space<vmem>>, vector<8x512xf32>
    tpu.vector_store %arg7[%c16_76, %c0_77], %97 {strides = array<i32>} : memref<576x512xf32, #tpu.memory_space<vmem>>, vector<8x512xf32>,
    %c1_i32_78 = arith.constant 1 : i32
    %99 = tpu.dynamic_rotate %92 by %c1_i32_78 dim 1 : vector<8x512xf32>, i32 -> vector<8x512xf32>
    %c24_79 = arith.constant 24 : index
    %c0_80 = arith.constant 0 : index
    %100 = vector.load %arg7[%c24_79, %c0_80] : memref<576x512xf32, #tpu.memory_space<vmem>>, vector<8x512xf32>
    tpu.vector_store %arg7[%c24_79, %c0_80], %99 {strides = array<i32>} : memref<576x512xf32, #tpu.memory_space<vmem>>, vector<8x512xf32>,
    %c32_81 = arith.constant 32 : index
    %c0_82 = arith.constant 0 : index
    %101 = vector.load %arg7[%c32_81, %c0_82] : memref<576x512xf32, #tpu.memory_space<vmem>>, vector<8x512xf32>
    tpu.vector_store %arg7[%c32_81, %c0_82], %92 {strides = array<i32>} : memref<576x512xf32, #tpu.memory_space<vmem>>, vector<8x512xf32>,
    %c511_i32_83 = arith.constant 511 : i32
    %102 = tpu.dynamic_rotate %92 by %c511_i32_83 dim 1 : vector<8x512xf32>, i32 -> vector<8x512xf32>
    %c40_84 = arith.constant 40 : index
    %c0_85 = arith.constant 0 : index
    %103 = vector.load %arg7[%c40_84, %c0_85] : memref<576x512xf32, #tpu.memory_space<vmem>>, vector<8x512xf32>
    tpu.vector_store %arg7[%c40_84, %c0_85], %102 {strides = array<i32>} : memref<576x512xf32, #tpu.memory_space<vmem>>, vector<8x512xf32>,
    %c497_i32_86 = arith.constant 497 : i32
    %104 = tpu.dynamic_rotate %92 by %c497_i32_86 dim 1 : vector<8x512xf32>, i32 -> vector<8x512xf32>
    %c48_87 = arith.constant 48 : index
    %c0_88 = arith.constant 0 : index
    %105 = vector.load %arg7[%c48_87, %c0_88] : memref<576x512xf32, #tpu.memory_space<vmem>>, vector<8x512xf32>
    tpu.vector_store %arg7[%c48_87, %c0_88], %104 {strides = array<i32>} : memref<576x512xf32, #tpu.memory_space<vmem>>, vector<8x512xf32>,
    %c496_i32_89 = arith.constant 496 : i32
    %106 = tpu.dynamic_rotate %92 by %c496_i32_89 dim 1 : vector<8x512xf32>, i32 -> vector<8x512xf32>
    %c56_90 = arith.constant 56 : index
    %c0_91 = arith.constant 0 : index
    %107 = vector.load %arg7[%c56_90, %c0_91] : memref<576x512xf32, #tpu.memory_space<vmem>>, vector<8x512xf32>
    tpu.vector_store %arg7[%c56_90, %c0_91], %106 {strides = array<i32>} : memref<576x512xf32, #tpu.memory_space<vmem>>, vector<8x512xf32>,
    %c495_i32_92 = arith.constant 495 : i32
    %108 = tpu.dynamic_rotate %92 by %c495_i32_92 dim 1 : vector<8x512xf32>, i32 -> vector<8x512xf32>
    %c64_93 = arith.constant 64 : index
    %c0_94 = arith.constant 0 : index
    %109 = vector.load %arg7[%c64_93, %c0_94] : memref<576x512xf32, #tpu.memory_space<vmem>>, vector<8x512xf32>
    tpu.vector_store %arg7[%c64_93, %c0_94], %108 {strides = array<i32>} : memref<576x512xf32, #tpu.memory_space<vmem>>, vector<8x512xf32>,
    %c0_95 = arith.constant 0 : index
    %c0_96 = arith.constant 0 : index
    %110 = vector.load %arg7[%c0_95, %c0_96] : memref<576x512xf32, #tpu.memory_space<vmem>>, vector<72x512xf32>
    %c0_97 = arith.constant 0 : index
    %c0_98 = arith.constant 0 : index
    %111 = vector.load %arg1[%c0_97, %c0_98] : memref<1080x512xf32, #tpu.memory_space<vmem>>, vector<72x512xf32>
    %112 = arith.mulf %110, %111 : vector<72x512xf32>
    %113 = arith.truncf %112 : vector<72x512xf32> to vector<72x512xbf16>
    %c16_99 = arith.constant 16 : index
    %c0_100 = arith.constant 0 : index
    %114 = vector.load %arg3[%c16_99, %c0_100] : memref<376x576xbf16, #tpu.memory_space<vmem>>, vector<8x72xbf16>
    %cst_101 = arith.constant dense<0.000000e+00> : vector<8x512xf32>
    %115 = tpu.matmul %114, %113, %cst_101 {dimension_numbers = #tpu.dot_dimension_numbers<[1], [0], [0], [1], [0, 0, 1, 1], [], []>} : vector<8x72xbf16>, vector<72x512xbf16>, vector<8x512xf32> -> vector<8x512xf32>
    %c16_102 = arith.constant 16 : index
    %c0_103 = arith.constant 0 : index
    %116 = vector.load %arg4[%c16_102, %c0_103] : memref<376x2xf32, #tpu.memory_space<vmem>>, vector<8x1xf32>
    %c16_104 = arith.constant 16 : index
    %c1_105 = arith.constant 1 : index
    %117 = vector.load %arg4[%c16_104, %c1_105] : memref<376x2xf32, #tpu.memory_space<vmem>>, vector<8x1xf32>
    %cst_106 = arith.constant dense<0.000000e+00> : vector<8xf32>
    %118 = vector.multi_reduction <add>, %115, %cst_106 [1] : vector<8x512xf32> to vector<8xf32>
    %119 = vector.shape_cast %118 : vector<8xf32> to vector<8x1xf32>
    %cst_107 = arith.constant 0.001953125 : f32
    %120 = vector.broadcast %cst_107 : f32 to vector<8x1xf32>
    %121 = arith.mulf %119, %120 : vector<8x1xf32>
    %122 = vector.broadcast %121 : vector<8x1xf32> to vector<8x512xf32>
    %123 = arith.subf %115, %122 : vector<8x512xf32>
    %124 = arith.mulf %123, %123 : vector<8x512xf32>
    %cst_108 = arith.constant dense<0.000000e+00> : vector<8xf32>
    %125 = vector.multi_reduction <add>, %124, %cst_108 [1] : vector<8x512xf32> to vector<8xf32>
    %126 = vector.shape_cast %125 : vector<8xf32> to vector<8x1xf32>
    %cst_109 = arith.constant 0.001953125 : f32
    %127 = vector.broadcast %cst_109 : f32 to vector<8x1xf32>
    %128 = arith.mulf %126, %127 : vector<8x1xf32>
    %cst_110 = arith.constant 9.99999974E-6 : f32
    %129 = vector.broadcast %cst_110 : f32 to vector<8x1xf32>
    %130 = arith.addf %128, %129 : vector<8x1xf32>
    %131 = math.rsqrt %130 : vector<8x1xf32>
    %132 = arith.mulf %131, %116 : vector<8x1xf32>
    %133 = vector.broadcast %132 : vector<8x1xf32> to vector<8x512xf32>
    %134 = arith.mulf %123, %133 : vector<8x512xf32>
    %135 = vector.broadcast %117 : vector<8x1xf32> to vector<8x512xf32>
    %136 = arith.addf %134, %135 : vector<8x512xf32>
    %137 = arith.addf %136, %46 : vector<8x512xf32>
    %cst_111 = arith.constant 0.000000e+00 : f32
    %138 = vector.broadcast %cst_111 : f32 to vector<8x512xf32>
    %139 = arith.maximumf %137, %138 : vector<8x512xf32>
    %c17_i32_112 = arith.constant 17 : i32
    %140 = tpu.dynamic_rotate %139 by %c17_i32_112 dim 1 : vector<8x512xf32>, i32 -> vector<8x512xf32>
    %c0_113 = arith.constant 0 : index
    %c0_114 = arith.constant 0 : index
    %141 = vector.load %arg7[%c0_113, %c0_114] : memref<576x512xf32, #tpu.memory_space<vmem>>, vector<8x512xf32>
    tpu.vector_store %arg7[%c0_113, %c0_114], %140 {strides = array<i32>} : memref<576x512xf32, #tpu.memory_space<vmem>>, vector<8x512xf32>,
    %c16_i32_115 = arith.constant 16 : i32
    %142 = tpu.dynamic_rotate %139 by %c16_i32_115 dim 1 : vector<8x512xf32>, i32 -> vector<8x512xf32>
    %c8_116 = arith.constant 8 : index
    %c0_117 = arith.constant 0 : index
    %143 = vector.load %arg7[%c8_116, %c0_117] : memref<576x512xf32, #tpu.memory_space<vmem>>, vector<8x512xf32>
    tpu.vector_store %arg7[%c8_116, %c0_117], %142 {strides = array<i32>} : memref<576x512xf32, #tpu.memory_space<vmem>>, vector<8x512xf32>,
    %c15_i32_118 = arith.constant 15 : i32
    %144 = tpu.dynamic_rotate %139 by %c15_i32_118 dim 1 : vector<8x512xf32>, i32 -> vector<8x512xf32>
    %c16_119 = arith.constant 16 : index
    %c0_120 = arith.constant 0 : index
    %145 = vector.load %arg7[%c16_119, %c0_120] : memref<576x512xf32, #tpu.memory_space<vmem>>, vector<8x512xf32>
    tpu.vector_store %arg7[%c16_119, %c0_120], %144 {strides = array<i32>} : memref<576x512xf32, #tpu.memory_space<vmem>>, vector<8x512xf32>,
    %c1_i32_121 = arith.constant 1 : i32
    %146 = tpu.dynamic_rotate %139 by %c1_i32_121 dim 1 : vector<8x512xf32>, i32 -> vector<8x512xf32>
    %c24_122 = arith.constant 24 : index
    %c0_123 = arith.constant 0 : index
    %147 = vector.load %arg7[%c24_122, %c0_123] : memref<576x512xf32, #tpu.memory_space<vmem>>, vector<8x512xf32>
    tpu.vector_store %arg7[%c24_122, %c0_123], %146 {strides = array<i32>} : memref<576x512xf32, #tpu.memory_space<vmem>>, vector<8x512xf32>,
    %c32_124 = arith.constant 32 : index
    %c0_125 = arith.constant 0 : index
    %148 = vector.load %arg7[%c32_124, %c0_125] : memref<576x512xf32, #tpu.memory_space<vmem>>, vector<8x512xf32>
    tpu.vector_store %arg7[%c32_124, %c0_125], %139 {strides = array<i32>} : memref<576x512xf32, #tpu.memory_space<vmem>>, vector<8x512xf32>,
    %c511_i32_126 = arith.constant 511 : i32
    %149 = tpu.dynamic_rotate %139 by %c511_i32_126 dim 1 : vector<8x512xf32>, i32 -> vector<8x512xf32>
    %c40_127 = arith.constant 40 : index
    %c0_128 = arith.constant 0 : index
    %150 = vector.load %arg7[%c40_127, %c0_128] : memref<576x512xf32, #tpu.memory_space<vmem>>, vector<8x512xf32>
    tpu.vector_store %arg7[%c40_127, %c0_128], %149 {strides = array<i32>} : memref<576x512xf32, #tpu.memory_space<vmem>>, vector<8x512xf32>,
    %c497_i32_129 = arith.constant 497 : i32
    %151 = tpu.dynamic_rotate %139 by %c497_i32_129 dim 1 : vector<8x512xf32>, i32 -> vector<8x512xf32>
    %c48_130 = arith.constant 48 : index
    %c0_131 = arith.constant 0 : index
    %152 = vector.load %arg7[%c48_130, %c0_131] : memref<576x512xf32, #tpu.memory_space<vmem>>, vector<8x512xf32>
    tpu.vector_store %arg7[%c48_130, %c0_131], %151 {strides = array<i32>} : memref<576x512xf32, #tpu.memory_space<vmem>>, vector<8x512xf32>,
    %c496_i32_132 = arith.constant 496 : i32
    %153 = tpu.dynamic_rotate %139 by %c496_i32_132 dim 1 : vector<8x512xf32>, i32 -> vector<8x512xf32>
    %c56_133 = arith.constant 56 : index
    %c0_134 = arith.constant 0 : index
    %154 = vector.load %arg7[%c56_133, %c0_134] : memref<576x512xf32, #tpu.memory_space<vmem>>, vector<8x512xf32>
    tpu.vector_store %arg7[%c56_133, %c0_134], %153 {strides = array<i32>} : memref<576x512xf32, #tpu.memory_space<vmem>>, vector<8x512xf32>,
    %c495_i32_135 = arith.constant 495 : i32
    %155 = tpu.dynamic_rotate %139 by %c495_i32_135 dim 1 : vector<8x512xf32>, i32 -> vector<8x512xf32>
    %c64_136 = arith.constant 64 : index
    %c0_137 = arith.constant 0 : index
    %156 = vector.load %arg7[%c64_136, %c0_137] : memref<576x512xf32, #tpu.memory_space<vmem>>, vector<8x512xf32>
    tpu.vector_store %arg7[%c64_136, %c0_137], %155 {strides = array<i32>} : memref<576x512xf32, #tpu.memory_space<vmem>>, vector<8x512xf32>,
    %c0_138 = arith.constant 0 : index
    %c0_139 = arith.constant 0 : index
    %157 = vector.load %arg7[%c0_138, %c0_139] : memref<576x512xf32, #tpu.memory_space<vmem>>, vector<72x512xf32>
    %c0_140 = arith.constant 0 : index
    %c0_141 = arith.constant 0 : index
    %158 = vector.load %arg1[%c0_140, %c0_141] : memref<1080x512xf32, #tpu.memory_space<vmem>>, vector<72x512xf32>
    %159 = arith.mulf %157, %158 : vector<72x512xf32>
    %160 = arith.truncf %159 : vector<72x512xf32> to vector<72x512xbf16>
    %c0_142 = arith.constant 0 : index
    %c0_143 = arith.constant 0 : index
    %161 = vector.load %arg2[%c0_142, %c0_143] : memref<680x128xbf16, #tpu.memory_space<vmem>>, vector<512x128xbf16>
    %cst_144 = arith.constant dense<0.000000e+00> : vector<72x128xf32>
    %162 = tpu.matmul %160, %161, %cst_144 {dimension_numbers = #tpu.dot_dimension_numbers<[1], [0], [0], [1], [0, 0, 1, 1], [], []>} : vector<72x512xbf16>, vector<512x128xbf16>, vector<72x128xf32> -> vector<72x128xf32>
    %163 = arith.truncf %162 : vector<72x128xf32> to vector<72x128xbf16>
    %c24_145 = arith.constant 24 : index
    %c0_146 = arith.constant 0 : index
    %164 = vector.load %arg3[%c24_145, %c0_146] : memref<376x576xbf16, #tpu.memory_space<vmem>>, vector<16x72xbf16>
    %cst_147 = arith.constant dense<0.000000e+00> : vector<16x128xf32>
    %165 = tpu.matmul %164, %163, %cst_147 {dimension_numbers = #tpu.dot_dimension_numbers<[1], [0], [0], [1], [0, 0, 1, 1], [], []>} : vector<16x72xbf16>, vector<72x128xbf16>, vector<16x128xf32> -> vector<16x128xf32>
    %c24_148 = arith.constant 24 : index
    %c0_149 = arith.constant 0 : index
    %166 = vector.load %arg4[%c24_148, %c0_149] : memref<376x2xf32, #tpu.memory_space<vmem>>, vector<16x1xf32>
    %c24_150 = arith.constant 24 : index
    %c1_151 = arith.constant 1 : index
    %167 = vector.load %arg4[%c24_150, %c1_151] : memref<376x2xf32, #tpu.memory_space<vmem>>, vector<16x1xf32>
    %cst_152 = arith.constant dense<0.000000e+00> : vector<16xf32>
    %168 = vector.multi_reduction <add>, %165, %cst_152 [1] : vector<16x128xf32> to vector<16xf32>
    %169 = vector.shape_cast %168 : vector<16xf32> to vector<16x1xf32>
    %cst_153 = arith.constant 7.812500e-03 : f32
    %170 = vector.broadcast %cst_153 : f32 to vector<16x1xf32>
    %171 = arith.mulf %169, %170 : vector<16x1xf32>
    %172 = vector.broadcast %171 : vector<16x1xf32> to vector<16x128xf32>
    %173 = arith.subf %165, %172 : vector<16x128xf32>
    %174 = arith.mulf %173, %173 : vector<16x128xf32>
    %cst_154 = arith.constant dense<0.000000e+00> : vector<16xf32>
    %175 = vector.multi_reduction <add>, %174, %cst_154 [1] : vector<16x128xf32> to vector<16xf32>
    %176 = vector.shape_cast %175 : vector<16xf32> to vector<16x1xf32>
    %cst_155 = arith.constant 7.812500e-03 : f32
    %177 = vector.broadcast %cst_155 : f32 to vector<16x1xf32>
    %178 = arith.mulf %176, %177 : vector<16x1xf32>
    %cst_156 = arith.constant 9.99999974E-6 : f32
    %179 = vector.broadcast %cst_156 : f32 to vector<16x1xf32>
    %180 = arith.addf %178, %179 : vector<16x1xf32>
    %181 = math.rsqrt %180 : vector<16x1xf32>
    %182 = arith.mulf %181, %166 : vector<16x1xf32>
    %183 = vector.broadcast %182 : vector<16x1xf32> to vector<16x128xf32>
    %184 = arith.mulf %173, %183 : vector<16x128xf32>
    %185 = vector.broadcast %167 : vector<16x1xf32> to vector<16x128xf32>
    %186 = arith.addf %184, %185 : vector<16x128xf32>
    %cst_157 = arith.constant 0.000000e+00 : f32
    %187 = vector.broadcast %cst_157 : f32 to vector<16x128xf32>
    %188 = arith.maximumf %186, %187 : vector<16x128xf32>
    %c9_i32 = arith.constant 9 : i32
    %189 = tpu.dynamic_rotate %188 by %c9_i32 dim 1 : vector<16x128xf32>, i32 -> vector<16x128xf32>
    %c0_158 = arith.constant 0 : index
    %c0_159 = arith.constant 0 : index
    %190 = vector.load %arg7[%c0_158, %c0_159] : memref<576x512xf32, #tpu.memory_space<vmem>>, vector<16x128xf32>
    tpu.vector_store %arg7[%c0_158, %c0_159], %189 {strides = array<i32>} : memref<576x512xf32, #tpu.memory_space<vmem>>, vector<16x128xf32>,
    %c8_i32 = arith.constant 8 : i32
    %191 = tpu.dynamic_rotate %188 by %c8_i32 dim 1 : vector<16x128xf32>, i32 -> vector<16x128xf32>
    %c16_160 = arith.constant 16 : index
    %c0_161 = arith.constant 0 : index
    %192 = vector.load %arg7[%c16_160, %c0_161] : memref<576x512xf32, #tpu.memory_space<vmem>>, vector<16x128xf32>
    tpu.vector_store %arg7[%c16_160, %c0_161], %191 {strides = array<i32>} : memref<576x512xf32, #tpu.memory_space<vmem>>, vector<16x128xf32>,
    %c7_i32 = arith.constant 7 : i32
    %193 = tpu.dynamic_rotate %188 by %c7_i32 dim 1 : vector<16x128xf32>, i32 -> vector<16x128xf32>
    %c32_162 = arith.constant 32 : index
    %c0_163 = arith.constant 0 : index
    %194 = vector.load %arg7[%c32_162, %c0_163] : memref<576x512xf32, #tpu.memory_space<vmem>>, vector<16x128xf32>
    tpu.vector_store %arg7[%c32_162, %c0_163], %193 {strides = array<i32>} : memref<576x512xf32, #tpu.memory_space<vmem>>, vector<16x128xf32>,
    %c1_i32_164 = arith.constant 1 : i32
    %195 = tpu.dynamic_rotate %188 by %c1_i32_164 dim 1 : vector<16x128xf32>, i32 -> vector<16x128xf32>
    %c48_165 = arith.constant 48 : index
    %c0_166 = arith.constant 0 : index
    %196 = vector.load %arg7[%c48_165, %c0_166] : memref<576x512xf32, #tpu.memory_space<vmem>>, vector<16x128xf32>
    tpu.vector_store %arg7[%c48_165, %c0_166], %195 {strides = array<i32>} : memref<576x512xf32, #tpu.memory_space<vmem>>, vector<16x128xf32>,
    %c64_167 = arith.constant 64 : index
    %c0_168 = arith.constant 0 : index
    %197 = vector.load %arg7[%c64_167, %c0_168] : memref<576x512xf32, #tpu.memory_space<vmem>>, vector<16x128xf32>
    tpu.vector_store %arg7[%c64_167, %c0_168], %188 {strides = array<i32>} : memref<576x512xf32, #tpu.memory_space<vmem>>, vector<16x128xf32>,
    %c127_i32 = arith.constant 127 : i32
    %198 = tpu.dynamic_rotate %188 by %c127_i32 dim 1 : vector<16x128xf32>, i32 -> vector<16x128xf32>
    %c80 = arith.constant 80 : index
    %c0_169 = arith.constant 0 : index
    %199 = vector.load %arg7[%c80, %c0_169] : memref<576x512xf32, #tpu.memory_space<vmem>>, vector<16x128xf32>
    tpu.vector_store %arg7[%c80, %c0_169], %198 {strides = array<i32>} : memref<576x512xf32, #tpu.memory_space<vmem>>, vector<16x128xf32>,
    %c121_i32 = arith.constant 121 : i32
    %200 = tpu.dynamic_rotate %188 by %c121_i32 dim 1 : vector<16x128xf32>, i32 -> vector<16x128xf32>
    %c96 = arith.constant 96 : index
    %c0_170 = arith.constant 0 : index
    %201 = vector.load %arg7[%c96, %c0_170] : memref<576x512xf32, #tpu.memory_space<vmem>>, vector<16x128xf32>
    tpu.vector_store %arg7[%c96, %c0_170], %200 {strides = array<i32>} : memref<576x512xf32, #tpu.memory_space<vmem>>, vector<16x128xf32>,
    %c120_i32 = arith.constant 120 : i32
    %202 = tpu.dynamic_rotate %188 by %c120_i32 dim 1 : vector<16x128xf32>, i32 -> vector<16x128xf32>
    %c112 = arith.constant 112 : index
    %c0_171 = arith.constant 0 : index
    %203 = vector.load %arg7[%c112, %c0_171] : memref<576x512xf32, #tpu.memory_space<vmem>>, vector<16x128xf32>
    tpu.vector_store %arg7[%c112, %c0_171], %202 {strides = array<i32>} : memref<576x512xf32, #tpu.memory_space<vmem>>, vector<16x128xf32>,
    %c119_i32 = arith.constant 119 : i32
    %204 = tpu.dynamic_rotate %188 by %c119_i32 dim 1 : vector<16x128xf32>, i32 -> vector<16x128xf32>
    %c128 = arith.constant 128 : index
    %c0_172 = arith.constant 0 : index
    %205 = vector.load %arg7[%c128, %c0_172] : memref<576x512xf32, #tpu.memory_space<vmem>>, vector<16x128xf32>
    tpu.vector_store %arg7[%c128, %c0_172], %204 {strides = array<i32>} : memref<576x512xf32, #tpu.memory_space<vmem>>, vector<16x128xf32>,
    %c0_173 = arith.constant 0 : index
    %c0_174 = arith.constant 0 : index
    %206 = vector.load %arg7[%c0_173, %c0_174] : memref<576x512xf32, #tpu.memory_space<vmem>>, vector<144x128xf32>
    %c72 = arith.constant 72 : index
    %c0_175 = arith.constant 0 : index
    %207 = vector.load %arg1[%c72, %c0_175] : memref<1080x512xf32, #tpu.memory_space<vmem>>, vector<144x128xf32>
    %208 = arith.mulf %206, %207 : vector<144x128xf32>
    %209 = arith.truncf %208 : vector<144x128xf32> to vector<144x128xbf16>
    %c40_176 = arith.constant 40 : index
    %c0_177 = arith.constant 0 : index
    %210 = vector.load %arg3[%c40_176, %c0_177] : memref<376x576xbf16, #tpu.memory_space<vmem>>, vector<16x144xbf16>
    %cst_178 = arith.constant dense<0.000000e+00> : vector<16x128xf32>
    %211 = tpu.matmul %210, %209, %cst_178 {dimension_numbers = #tpu.dot_dimension_numbers<[1], [0], [0], [1], [0, 0, 1, 1], [], []>} : vector<16x144xbf16>, vector<144x128xbf16>, vector<16x128xf32> -> vector<16x128xf32>
    %c40_179 = arith.constant 40 : index
    %c0_180 = arith.constant 0 : index
    %212 = vector.load %arg4[%c40_179, %c0_180] : memref<376x2xf32, #tpu.memory_space<vmem>>, vector<16x1xf32>
    %c40_181 = arith.constant 40 : index
    %c1_182 = arith.constant 1 : index
    %213 = vector.load %arg4[%c40_181, %c1_182] : memref<376x2xf32, #tpu.memory_space<vmem>>, vector<16x1xf32>
    %cst_183 = arith.constant dense<0.000000e+00> : vector<16xf32>
    %214 = vector.multi_reduction <add>, %211, %cst_183 [1] : vector<16x128xf32> to vector<16xf32>
    %215 = vector.shape_cast %214 : vector<16xf32> to vector<16x1xf32>
    %cst_184 = arith.constant 7.812500e-03 : f32
    %216 = vector.broadcast %cst_184 : f32 to vector<16x1xf32>
    %217 = arith.mulf %215, %216 : vector<16x1xf32>
    %218 = vector.broadcast %217 : vector<16x1xf32> to vector<16x128xf32>
    %219 = arith.subf %211, %218 : vector<16x128xf32>
    %220 = arith.mulf %219, %219 : vector<16x128xf32>
    %cst_185 = arith.constant dense<0.000000e+00> : vector<16xf32>
    %221 = vector.multi_reduction <add>, %220, %cst_185 [1] : vector<16x128xf32> to vector<16xf32>
    %222 = vector.shape_cast %221 : vector<16xf32> to vector<16x1xf32>
    %cst_186 = arith.constant 7.812500e-03 : f32
    %223 = vector.broadcast %cst_186 : f32 to vector<16x1xf32>
    %224 = arith.mulf %222, %223 : vector<16x1xf32>
    %cst_187 = arith.constant 9.99999974E-6 : f32
    %225 = vector.broadcast %cst_187 : f32 to vector<16x1xf32>
    %226 = arith.addf %224, %225 : vector<16x1xf32>
    %227 = math.rsqrt %226 : vector<16x1xf32>
    %228 = arith.mulf %227, %212 : vector<16x1xf32>
    %229 = vector.broadcast %228 : vector<16x1xf32> to vector<16x128xf32>
    %230 = arith.mulf %219, %229 : vector<16x128xf32>
    %231 = vector.broadcast %213 : vector<16x1xf32> to vector<16x128xf32>
    %232 = arith.addf %230, %231 : vector<16x128xf32>
    %233 = vector.extract_strided_slice %163 {offsets = [32, 0], sizes = [8, 128], strides = [1, 1]} : vector<72x128xbf16> to vector<8x128xbf16>
    %c56_188 = arith.constant 56 : index
    %c0_189 = arith.constant 0 : index
    %234 = vector.load %arg3[%c56_188, %c0_189] : memref<376x576xbf16, #tpu.memory_space<vmem>>, vector<16x8xbf16>
    %cst_190 = arith.constant dense<0.000000e+00> : vector<16x128xf32>
    %235 = tpu.matmul %234, %233, %cst_190 {dimension_numbers = #tpu.dot_dimension_numbers<[1], [0], [0], [1], [0, 0, 1, 1], [], []>} : vector<16x8xbf16>, vector<8x128xbf16>, vector<16x128xf32> -> vector<16x128xf32>
    %c56_191 = arith.constant 56 : index
    %c0_192 = arith.constant 0 : index
    %236 = vector.load %arg4[%c56_191, %c0_192] : memref<376x2xf32, #tpu.memory_space<vmem>>, vector<16x1xf32>
    %c56_193 = arith.constant 56 : index
    %c1_194 = arith.constant 1 : index
    %237 = vector.load %arg4[%c56_193, %c1_194] : memref<376x2xf32, #tpu.memory_space<vmem>>, vector<16x1xf32>
    %cst_195 = arith.constant dense<0.000000e+00> : vector<16xf32>
    %238 = vector.multi_reduction <add>, %235, %cst_195 [1] : vector<16x128xf32> to vector<16xf32>
    %239 = vector.shape_cast %238 : vector<16xf32> to vector<16x1xf32>
    %cst_196 = arith.constant 7.812500e-03 : f32
    %240 = vector.broadcast %cst_196 : f32 to vector<16x1xf32>
    %241 = arith.mulf %239, %240 : vector<16x1xf32>
    %242 = vector.broadcast %241 : vector<16x1xf32> to vector<16x128xf32>
    %243 = arith.subf %235, %242 : vector<16x128xf32>
    %244 = arith.mulf %243, %243 : vector<16x128xf32>
    %cst_197 = arith.constant dense<0.000000e+00> : vector<16xf32>
    %245 = vector.multi_reduction <add>, %244, %cst_197 [1] : vector<16x128xf32> to vector<16xf32>
    %246 = vector.shape_cast %245 : vector<16xf32> to vector<16x1xf32>
    %cst_198 = arith.constant 7.812500e-03 : f32
    %247 = vector.broadcast %cst_198 : f32 to vector<16x1xf32>
    %248 = arith.mulf %246, %247 : vector<16x1xf32>
    %cst_199 = arith.constant 9.99999974E-6 : f32
    %249 = vector.broadcast %cst_199 : f32 to vector<16x1xf32>
    %250 = arith.addf %248, %249 : vector<16x1xf32>
    %251 = math.rsqrt %250 : vector<16x1xf32>
    %252 = arith.mulf %251, %236 : vector<16x1xf32>
    %253 = vector.broadcast %252 : vector<16x1xf32> to vector<16x128xf32>
    %254 = arith.mulf %243, %253 : vector<16x128xf32>
    %255 = vector.broadcast %237 : vector<16x1xf32> to vector<16x128xf32>
    %256 = arith.addf %254, %255 : vector<16x128xf32>
    %257 = arith.addf %232, %256 : vector<16x128xf32>
    %cst_200 = arith.constant 0.000000e+00 : f32
    %258 = vector.broadcast %cst_200 : f32 to vector<16x128xf32>
    %259 = arith.maximumf %257, %258 : vector<16x128xf32>
    %c9_i32_201 = arith.constant 9 : i32
    %260 = tpu.dynamic_rotate %259 by %c9_i32_201 dim 1 : vector<16x128xf32>, i32 -> vector<16x128xf32>
    %c0_202 = arith.constant 0 : index
    %c0_203 = arith.constant 0 : index
    %261 = vector.load %arg7[%c0_202, %c0_203] : memref<576x512xf32, #tpu.memory_space<vmem>>, vector<16x128xf32>
    tpu.vector_store %arg7[%c0_202, %c0_203], %260 {strides = array<i32>} : memref<576x512xf32, #tpu.memory_space<vmem>>, vector<16x128xf32>,
    %c8_i32_204 = arith.constant 8 : i32
    %262 = tpu.dynamic_rotate %259 by %c8_i32_204 dim 1 : vector<16x128xf32>, i32 -> vector<16x128xf32>
    %c16_205 = arith.constant 16 : index
    %c0_206 = arith.constant 0 : index
    %263 = vector.load %arg7[%c16_205, %c0_206] : memref<576x512xf32, #tpu.memory_space<vmem>>, vector<16x128xf32>
    tpu.vector_store %arg7[%c16_205, %c0_206], %262 {strides = array<i32>} : memref<576x512xf32, #tpu.memory_space<vmem>>, vector<16x128xf32>,
    %c7_i32_207 = arith.constant 7 : i32
    %264 = tpu.dynamic_rotate %259 by %c7_i32_207 dim 1 : vector<16x128xf32>, i32 -> vector<16x128xf32>
    %c32_208 = arith.constant 32 : index
    %c0_209 = arith.constant 0 : index
    %265 = vector.load %arg7[%c32_208, %c0_209] : memref<576x512xf32, #tpu.memory_space<vmem>>, vector<16x128xf32>
    tpu.vector_store %arg7[%c32_208, %c0_209], %264 {strides = array<i32>} : memref<576x512xf32, #tpu.memory_space<vmem>>, vector<16x128xf32>,
    %c1_i32_210 = arith.constant 1 : i32
    %266 = tpu.dynamic_rotate %259 by %c1_i32_210 dim 1 : vector<16x128xf32>, i32 -> vector<16x128xf32>
    %c48_211 = arith.constant 48 : index
    %c0_212 = arith.constant 0 : index
    %267 = vector.load %arg7[%c48_211, %c0_212] : memref<576x512xf32, #tpu.memory_space<vmem>>, vector<16x128xf32>
    tpu.vector_store %arg7[%c48_211, %c0_212], %266 {strides = array<i32>} : memref<576x512xf32, #tpu.memory_space<vmem>>, vector<16x128xf32>,
    %c64_213 = arith.constant 64 : index
    %c0_214 = arith.constant 0 : index
    %268 = vector.load %arg7[%c64_213, %c0_214] : memref<576x512xf32, #tpu.memory_space<vmem>>, vector<16x128xf32>
    tpu.vector_store %arg7[%c64_213, %c0_214], %259 {strides = array<i32>} : memref<576x512xf32, #tpu.memory_space<vmem>>, vector<16x128xf32>,
    %c127_i32_215 = arith.constant 127 : i32
    %269 = tpu.dynamic_rotate %259 by %c127_i32_215 dim 1 : vector<16x128xf32>, i32 -> vector<16x128xf32>
    %c80_216 = arith.constant 80 : index
    %c0_217 = arith.constant 0 : index
    %270 = vector.load %arg7[%c80_216, %c0_217] : memref<576x512xf32, #tpu.memory_space<vmem>>, vector<16x128xf32>
    tpu.vector_store %arg7[%c80_216, %c0_217], %269 {strides = array<i32>} : memref<576x512xf32, #tpu.memory_space<vmem>>, vector<16x128xf32>,
    %c121_i32_218 = arith.constant 121 : i32
    %271 = tpu.dynamic_rotate %259 by %c121_i32_218 dim 1 : vector<16x128xf32>, i32 -> vector<16x128xf32>
    %c96_219 = arith.constant 96 : index
    %c0_220 = arith.constant 0 : index
    %272 = vector.load %arg7[%c96_219, %c0_220] : memref<576x512xf32, #tpu.memory_space<vmem>>, vector<16x128xf32>
    tpu.vector_store %arg7[%c96_219, %c0_220], %271 {strides = array<i32>} : memref<576x512xf32, #tpu.memory_space<vmem>>, vector<16x128xf32>,
    %c120_i32_221 = arith.constant 120 : i32
    %273 = tpu.dynamic_rotate %259 by %c120_i32_221 dim 1 : vector<16x128xf32>, i32 -> vector<16x128xf32>
    %c112_222 = arith.constant 112 : index
    %c0_223 = arith.constant 0 : index
    %274 = vector.load %arg7[%c112_222, %c0_223] : memref<576x512xf32, #tpu.memory_space<vmem>>, vector<16x128xf32>
    tpu.vector_store %arg7[%c112_222, %c0_223], %273 {strides = array<i32>} : memref<576x512xf32, #tpu.memory_space<vmem>>, vector<16x128xf32>,
    %c119_i32_224 = arith.constant 119 : i32
    %275 = tpu.dynamic_rotate %259 by %c119_i32_224 dim 1 : vector<16x128xf32>, i32 -> vector<16x128xf32>
    %c128_225 = arith.constant 128 : index
    %c0_226 = arith.constant 0 : index
    %276 = vector.load %arg7[%c128_225, %c0_226] : memref<576x512xf32, #tpu.memory_space<vmem>>, vector<16x128xf32>
    tpu.vector_store %arg7[%c128_225, %c0_226], %275 {strides = array<i32>} : memref<576x512xf32, #tpu.memory_space<vmem>>, vector<16x128xf32>,
    %c0_227 = arith.constant 0 : index
    %c0_228 = arith.constant 0 : index
    %277 = vector.load %arg7[%c0_227, %c0_228] : memref<576x512xf32, #tpu.memory_space<vmem>>, vector<144x128xf32>
    %c72_229 = arith.constant 72 : index
    %c0_230 = arith.constant 0 : index
    %278 = vector.load %arg1[%c72_229, %c0_230] : memref<1080x512xf32, #tpu.memory_space<vmem>>, vector<144x128xf32>
    %279 = arith.mulf %277, %278 : vector<144x128xf32>
    %280 = arith.truncf %279 : vector<144x128xf32> to vector<144x128xbf16>
    %c512 = arith.constant 512 : index
    %c0_231 = arith.constant 0 : index
    %281 = vector.load %arg2[%c512, %c0_231] : memref<680x128xbf16, #tpu.memory_space<vmem>>, vector<128x32xbf16>
    %cst_232 = arith.constant dense<0.000000e+00> : vector<144x32xf32>
    %282 = tpu.matmul %280, %281, %cst_232 {dimension_numbers = #tpu.dot_dimension_numbers<[1], [0], [0], [1], [0, 0, 1, 1], [], []>} : vector<144x128xbf16>, vector<128x32xbf16>, vector<144x32xf32> -> vector<144x32xf32>
    %283 = arith.truncf %282 : vector<144x32xf32> to vector<144x32xbf16>
    %c72_233 = arith.constant 72 : index
    %c0_234 = arith.constant 0 : index
    %284 = vector.load %arg3[%c72_233, %c0_234] : memref<376x576xbf16, #tpu.memory_space<vmem>>, vector<32x144xbf16>
    %cst_235 = arith.constant dense<0.000000e+00> : vector<32x32xf32>
    %285 = tpu.matmul %284, %283, %cst_235 {dimension_numbers = #tpu.dot_dimension_numbers<[1], [0], [0], [1], [0, 0, 1, 1], [], []>} : vector<32x144xbf16>, vector<144x32xbf16>, vector<32x32xf32> -> vector<32x32xf32>
    %c72_236 = arith.constant 72 : index
    %c0_237 = arith.constant 0 : index
    %286 = vector.load %arg4[%c72_236, %c0_237] : memref<376x2xf32, #tpu.memory_space<vmem>>, vector<32x1xf32>
    %c72_238 = arith.constant 72 : index
    %c1_239 = arith.constant 1 : index
    %287 = vector.load %arg4[%c72_238, %c1_239] : memref<376x2xf32, #tpu.memory_space<vmem>>, vector<32x1xf32>
    %cst_240 = arith.constant dense<0.000000e+00> : vector<32xf32>
    %288 = vector.multi_reduction <add>, %285, %cst_240 [1] : vector<32x32xf32> to vector<32xf32>
    %289 = vector.shape_cast %288 : vector<32xf32> to vector<32x1xf32>
    %cst_241 = arith.constant 3.125000e-02 : f32
    %290 = vector.broadcast %cst_241 : f32 to vector<32x1xf32>
    %291 = arith.mulf %289, %290 : vector<32x1xf32>
    %292 = vector.broadcast %291 : vector<32x1xf32> to vector<32x32xf32>
    %293 = arith.subf %285, %292 : vector<32x32xf32>
    %294 = arith.mulf %293, %293 : vector<32x32xf32>
    %cst_242 = arith.constant dense<0.000000e+00> : vector<32xf32>
    %295 = vector.multi_reduction <add>, %294, %cst_242 [1] : vector<32x32xf32> to vector<32xf32>
    %296 = vector.shape_cast %295 : vector<32xf32> to vector<32x1xf32>
    %cst_243 = arith.constant 3.125000e-02 : f32
    %297 = vector.broadcast %cst_243 : f32 to vector<32x1xf32>
    %298 = arith.mulf %296, %297 : vector<32x1xf32>
    %cst_244 = arith.constant 9.99999974E-6 : f32
    %299 = vector.broadcast %cst_244 : f32 to vector<32x1xf32>
    %300 = arith.addf %298, %299 : vector<32x1xf32>
    %301 = math.rsqrt %300 : vector<32x1xf32>
    %302 = arith.mulf %301, %286 : vector<32x1xf32>
    %303 = vector.broadcast %302 : vector<32x1xf32> to vector<32x32xf32>
    %304 = arith.mulf %293, %303 : vector<32x32xf32>
    %305 = vector.broadcast %287 : vector<32x1xf32> to vector<32x32xf32>
    %306 = arith.addf %304, %305 : vector<32x32xf32>
    %cst_245 = arith.constant 0.000000e+00 : f32
    %307 = vector.broadcast %cst_245 : f32 to vector<32x32xf32>
    %308 = arith.maximumf %306, %307 : vector<32x32xf32>
    %cst_246 = arith.constant 0.000000e+00 : f32
    %309 = vector.broadcast %cst_246 : f32 to vector<32x5xf32>
    %310 = vector.extract_strided_slice %308 {offsets = [0, 0], sizes = [32, 27], strides = [1, 1]} : vector<32x32xf32> to vector<32x27xf32>
    %311 = tpu.concatenate %309, %310 in 1 : vector<32x5xf32>, vector<32x27xf32> -> vector<32x32xf32>
    %c0_247 = arith.constant 0 : index
    %c0_248 = arith.constant 0 : index
    %312 = vector.load %arg7[%c0_247, %c0_248] : memref<576x512xf32, #tpu.memory_space<vmem>>, vector<32x32xf32>
    tpu.vector_store %arg7[%c0_247, %c0_248], %311 {strides = array<i32>} : memref<576x512xf32, #tpu.memory_space<vmem>>, vector<32x32xf32>,
    %cst_249 = arith.constant 0.000000e+00 : f32
    %313 = vector.broadcast %cst_249 : f32 to vector<32x4xf32>
    %314 = vector.extract_strided_slice %308 {offsets = [0, 0], sizes = [32, 28], strides = [1, 1]} : vector<32x32xf32> to vector<32x28xf32>
    %315 = tpu.concatenate %313, %314 in 1 : vector<32x4xf32>, vector<32x28xf32> -> vector<32x32xf32>
    %c32_250 = arith.constant 32 : index
    %c0_251 = arith.constant 0 : index
    %316 = vector.load %arg7[%c32_250, %c0_251] : memref<576x512xf32, #tpu.memory_space<vmem>>, vector<32x32xf32>
    tpu.vector_store %arg7[%c32_250, %c0_251], %315 {strides = array<i32>} : memref<576x512xf32, #tpu.memory_space<vmem>>, vector<32x32xf32>,
    %cst_252 = arith.constant 0.000000e+00 : f32
    %317 = vector.broadcast %cst_252 : f32 to vector<32x3xf32>
    %318 = vector.extract_strided_slice %308 {offsets = [0, 0], sizes = [32, 29], strides = [1, 1]} : vector<32x32xf32> to vector<32x29xf32>
    %319 = tpu.concatenate %317, %318 in 1 : vector<32x3xf32>, vector<32x29xf32> -> vector<32x32xf32>
    %c64_253 = arith.constant 64 : index
    %c0_254 = arith.constant 0 : index
    %320 = vector.load %arg7[%c64_253, %c0_254] : memref<576x512xf32, #tpu.memory_space<vmem>>, vector<32x32xf32>
    tpu.vector_store %arg7[%c64_253, %c0_254], %319 {strides = array<i32>} : memref<576x512xf32, #tpu.memory_space<vmem>>, vector<32x32xf32>,
    %cst_255 = arith.constant 0.000000e+00 : f32
    %321 = vector.broadcast %cst_255 : f32 to vector<32x1xf32>
    %322 = vector.extract_strided_slice %308 {offsets = [0, 0], sizes = [32, 31], strides = [1, 1]} : vector<32x32xf32> to vector<32x31xf32>
    %323 = tpu.concatenate %321, %322 in 1 : vector<32x1xf32>, vector<32x31xf32> -> vector<32x32xf32>
    %c96_256 = arith.constant 96 : index
    %c0_257 = arith.constant 0 : index
    %324 = vector.load %arg7[%c96_256, %c0_257] : memref<576x512xf32, #tpu.memory_space<vmem>>, vector<32x32xf32>
    tpu.vector_store %arg7[%c96_256, %c0_257], %323 {strides = array<i32>} : memref<576x512xf32, #tpu.memory_space<vmem>>, vector<32x32xf32>,
    %c128_258 = arith.constant 128 : index
    %c0_259 = arith.constant 0 : index
    %325 = vector.load %arg7[%c128_258, %c0_259] : memref<576x512xf32, #tpu.memory_space<vmem>>, vector<32x32xf32>
    tpu.vector_store %arg7[%c128_258, %c0_259], %308 {strides = array<i32>} : memref<576x512xf32, #tpu.memory_space<vmem>>, vector<32x32xf32>,
    %cst_260 = arith.constant 0.000000e+00 : f32
    %326 = vector.broadcast %cst_260 : f32 to vector<32x1xf32>
    %327 = vector.extract_strided_slice %308 {offsets = [0, 1], sizes = [32, 31], strides = [1, 1]} : vector<32x32xf32> to vector<32x31xf32>
    %328 = tpu.concatenate %327, %326 in 1 : vector<32x31xf32>, vector<32x1xf32> -> vector<32x32xf32>
    %c160 = arith.constant 160 : index
    %c0_261 = arith.constant 0 : index
    %329 = vector.load %arg7[%c160, %c0_261] : memref<576x512xf32, #tpu.memory_space<vmem>>, vector<32x32xf32>
    tpu.vector_store %arg7[%c160, %c0_261], %328 {strides = array<i32>} : memref<576x512xf32, #tpu.memory_space<vmem>>, vector<32x32xf32>,
    %cst_262 = arith.constant 0.000000e+00 : f32
    %330 = vector.broadcast %cst_262 : f32 to vector<32x3xf32>
    %331 = vector.extract_strided_slice %308 {offsets = [0, 3], sizes = [32, 29], strides = [1, 1]} : vector<32x32xf32> to vector<32x29xf32>
    %332 = tpu.concatenate %331, %330 in 1 : vector<32x29xf32>, vector<32x3xf32> -> vector<32x32xf32>
    %c192 = arith.constant 192 : index
    %c0_263 = arith.constant 0 : index
    %333 = vector.load %arg7[%c192, %c0_263] : memref<576x512xf32, #tpu.memory_space<vmem>>, vector<32x32xf32>
    tpu.vector_store %arg7[%c192, %c0_263], %332 {strides = array<i32>} : memref<576x512xf32, #tpu.memory_space<vmem>>, vector<32x32xf32>,
    %cst_264 = arith.constant 0.000000e+00 : f32
    %334 = vector.broadcast %cst_264 : f32 to vector<32x4xf32>
    %335 = vector.extract_strided_slice %308 {offsets = [0, 4], sizes = [32, 28], strides = [1, 1]} : vector<32x32xf32> to vector<32x28xf32>
    %336 = tpu.concatenate %335, %334 in 1 : vector<32x28xf32>, vector<32x4xf32> -> vector<32x32xf32>
    %c224 = arith.constant 224 : index
    %c0_265 = arith.constant 0 : index
    %337 = vector.load %arg7[%c224, %c0_265] : memref<576x512xf32, #tpu.memory_space<vmem>>, vector<32x32xf32>
    tpu.vector_store %arg7[%c224, %c0_265], %336 {strides = array<i32>} : memref<576x512xf32, #tpu.memory_space<vmem>>, vector<32x32xf32>,
    %cst_266 = arith.constant 0.000000e+00 : f32
    %338 = vector.broadcast %cst_266 : f32 to vector<32x5xf32>
    %339 = vector.extract_strided_slice %308 {offsets = [0, 5], sizes = [32, 27], strides = [1, 1]} : vector<32x32xf32> to vector<32x27xf32>
    %340 = tpu.concatenate %339, %338 in 1 : vector<32x27xf32>, vector<32x5xf32> -> vector<32x32xf32>
    %c256 = arith.constant 256 : index
    %c0_267 = arith.constant 0 : index
    %341 = vector.load %arg7[%c256, %c0_267] : memref<576x512xf32, #tpu.memory_space<vmem>>, vector<32x32xf32>
    tpu.vector_store %arg7[%c256, %c0_267], %340 {strides = array<i32>} : memref<576x512xf32, #tpu.memory_space<vmem>>, vector<32x32xf32>,
    %c0_268 = arith.constant 0 : index
    %c0_269 = arith.constant 0 : index
    %342 = vector.load %arg7[%c0_268, %c0_269] : memref<576x512xf32, #tpu.memory_space<vmem>>, vector<288x32xf32>
    %c216 = arith.constant 216 : index
    %c0_270 = arith.constant 0 : index
    %343 = vector.load %arg1[%c216, %c0_270] : memref<1080x512xf32, #tpu.memory_space<vmem>>, vector<288x32xf32>
    %344 = arith.mulf %342, %343 : vector<288x32xf32>
    %345 = arith.truncf %344 : vector<288x32xf32> to vector<288x32xbf16>
    %c104 = arith.constant 104 : index
    %c0_271 = arith.constant 0 : index
    %346 = vector.load %arg3[%c104, %c0_271] : memref<376x576xbf16, #tpu.memory_space<vmem>>, vector<32x288xbf16>
    %cst_272 = arith.constant dense<0.000000e+00> : vector<32x32xf32>
    %347 = tpu.matmul %346, %345, %cst_272 {dimension_numbers = #tpu.dot_dimension_numbers<[1], [0], [0], [1], [0, 0, 1, 1], [], []>} : vector<32x288xbf16>, vector<288x32xbf16>, vector<32x32xf32> -> vector<32x32xf32>
    %c104_273 = arith.constant 104 : index
    %c0_274 = arith.constant 0 : index
    %348 = vector.load %arg4[%c104_273, %c0_274] : memref<376x2xf32, #tpu.memory_space<vmem>>, vector<32x1xf32>
    %c104_275 = arith.constant 104 : index
    %c1_276 = arith.constant 1 : index
    %349 = vector.load %arg4[%c104_275, %c1_276] : memref<376x2xf32, #tpu.memory_space<vmem>>, vector<32x1xf32>
    %cst_277 = arith.constant dense<0.000000e+00> : vector<32xf32>
    %350 = vector.multi_reduction <add>, %347, %cst_277 [1] : vector<32x32xf32> to vector<32xf32>
    %351 = vector.shape_cast %350 : vector<32xf32> to vector<32x1xf32>
    %cst_278 = arith.constant 3.125000e-02 : f32
    %352 = vector.broadcast %cst_278 : f32 to vector<32x1xf32>
    %353 = arith.mulf %351, %352 : vector<32x1xf32>
    %354 = vector.broadcast %353 : vector<32x1xf32> to vector<32x32xf32>
    %355 = arith.subf %347, %354 : vector<32x32xf32>
    %356 = arith.mulf %355, %355 : vector<32x32xf32>
    %cst_279 = arith.constant dense<0.000000e+00> : vector<32xf32>
    %357 = vector.multi_reduction <add>, %356, %cst_279 [1] : vector<32x32xf32> to vector<32xf32>
    %358 = vector.shape_cast %357 : vector<32xf32> to vector<32x1xf32>
    %cst_280 = arith.constant 3.125000e-02 : f32
    %359 = vector.broadcast %cst_280 : f32 to vector<32x1xf32>
    %360 = arith.mulf %358, %359 : vector<32x1xf32>
    %cst_281 = arith.constant 9.99999974E-6 : f32
    %361 = vector.broadcast %cst_281 : f32 to vector<32x1xf32>
    %362 = arith.addf %360, %361 : vector<32x1xf32>
    %363 = math.rsqrt %362 : vector<32x1xf32>
    %364 = arith.mulf %363, %348 : vector<32x1xf32>
    %365 = vector.broadcast %364 : vector<32x1xf32> to vector<32x32xf32>
    %366 = arith.mulf %355, %365 : vector<32x32xf32>
    %367 = vector.broadcast %349 : vector<32x1xf32> to vector<32x32xf32>
    %368 = arith.addf %366, %367 : vector<32x32xf32>
    %369 = vector.extract_strided_slice %283 {offsets = [64, 0], sizes = [16, 32], strides = [1, 1]} : vector<144x32xbf16> to vector<16x32xbf16>
    %c136 = arith.constant 136 : index
    %c0_282 = arith.constant 0 : index
    %370 = vector.load %arg3[%c136, %c0_282] : memref<376x576xbf16, #tpu.memory_space<vmem>>, vector<32x16xbf16>
    %cst_283 = arith.constant dense<0.000000e+00> : vector<32x32xf32>
    %371 = tpu.matmul %370, %369, %cst_283 {dimension_numbers = #tpu.dot_dimension_numbers<[1], [0], [0], [1], [0, 0, 1, 1], [], []>} : vector<32x16xbf16>, vector<16x32xbf16>, vector<32x32xf32> -> vector<32x32xf32>
    %c136_284 = arith.constant 136 : index
    %c0_285 = arith.constant 0 : index
    %372 = vector.load %arg4[%c136_284, %c0_285] : memref<376x2xf32, #tpu.memory_space<vmem>>, vector<32x1xf32>
    %c136_286 = arith.constant 136 : index
    %c1_287 = arith.constant 1 : index
    %373 = vector.load %arg4[%c136_286, %c1_287] : memref<376x2xf32, #tpu.memory_space<vmem>>, vector<32x1xf32>
    %cst_288 = arith.constant dense<0.000000e+00> : vector<32xf32>
    %374 = vector.multi_reduction <add>, %371, %cst_288 [1] : vector<32x32xf32> to vector<32xf32>
    %375 = vector.shape_cast %374 : vector<32xf32> to vector<32x1xf32>
    %cst_289 = arith.constant 3.125000e-02 : f32
    %376 = vector.broadcast %cst_289 : f32 to vector<32x1xf32>
    %377 = arith.mulf %375, %376 : vector<32x1xf32>
    %378 = vector.broadcast %377 : vector<32x1xf32> to vector<32x32xf32>
    %379 = arith.subf %371, %378 : vector<32x32xf32>
    %380 = arith.mulf %379, %379 : vector<32x32xf32>
    %cst_290 = arith.constant dense<0.000000e+00> : vector<32xf32>
    %381 = vector.multi_reduction <add>, %380, %cst_290 [1] : vector<32x32xf32> to vector<32xf32>
    %382 = vector.shape_cast %381 : vector<32xf32> to vector<32x1xf32>
    %cst_291 = arith.constant 3.125000e-02 : f32
    %383 = vector.broadcast %cst_291 : f32 to vector<32x1xf32>
    %384 = arith.mulf %382, %383 : vector<32x1xf32>
    %cst_292 = arith.constant 9.99999974E-6 : f32
    %385 = vector.broadcast %cst_292 : f32 to vector<32x1xf32>
    %386 = arith.addf %384, %385 : vector<32x1xf32>
    %387 = math.rsqrt %386 : vector<32x1xf32>
    %388 = arith.mulf %387, %372 : vector<32x1xf32>
    %389 = vector.broadcast %388 : vector<32x1xf32> to vector<32x32xf32>
    %390 = arith.mulf %379, %389 : vector<32x32xf32>
    %391 = vector.broadcast %373 : vector<32x1xf32> to vector<32x32xf32>
    %392 = arith.addf %390, %391 : vector<32x32xf32>
    %393 = arith.addf %368, %392 : vector<32x32xf32>
    %cst_293 = arith.constant 0.000000e+00 : f32
    %394 = vector.broadcast %cst_293 : f32 to vector<32x32xf32>
    %395 = arith.maximumf %393, %394 : vector<32x32xf32>
    %cst_294 = arith.constant 0.000000e+00 : f32
    %396 = vector.broadcast %cst_294 : f32 to vector<32x5xf32>
    %397 = vector.extract_strided_slice %395 {offsets = [0, 0], sizes = [32, 27], strides = [1, 1]} : vector<32x32xf32> to vector<32x27xf32>
    %398 = tpu.concatenate %396, %397 in 1 : vector<32x5xf32>, vector<32x27xf32> -> vector<32x32xf32>
    %c0_295 = arith.constant 0 : index
    %c0_296 = arith.constant 0 : index
    %399 = vector.load %arg7[%c0_295, %c0_296] : memref<576x512xf32, #tpu.memory_space<vmem>>, vector<32x32xf32>
    tpu.vector_store %arg7[%c0_295, %c0_296], %398 {strides = array<i32>} : memref<576x512xf32, #tpu.memory_space<vmem>>, vector<32x32xf32>,
    %cst_297 = arith.constant 0.000000e+00 : f32
    %400 = vector.broadcast %cst_297 : f32 to vector<32x4xf32>
    %401 = vector.extract_strided_slice %395 {offsets = [0, 0], sizes = [32, 28], strides = [1, 1]} : vector<32x32xf32> to vector<32x28xf32>
    %402 = tpu.concatenate %400, %401 in 1 : vector<32x4xf32>, vector<32x28xf32> -> vector<32x32xf32>
    %c32_298 = arith.constant 32 : index
    %c0_299 = arith.constant 0 : index
    %403 = vector.load %arg7[%c32_298, %c0_299] : memref<576x512xf32, #tpu.memory_space<vmem>>, vector<32x32xf32>
    tpu.vector_store %arg7[%c32_298, %c0_299], %402 {strides = array<i32>} : memref<576x512xf32, #tpu.memory_space<vmem>>, vector<32x32xf32>,
    %cst_300 = arith.constant 0.000000e+00 : f32
    %404 = vector.broadcast %cst_300 : f32 to vector<32x3xf32>
    %405 = vector.extract_strided_slice %395 {offsets = [0, 0], sizes = [32, 29], strides = [1, 1]} : vector<32x32xf32> to vector<32x29xf32>
    %406 = tpu.concatenate %404, %405 in 1 : vector<32x3xf32>, vector<32x29xf32> -> vector<32x32xf32>
    %c64_301 = arith.constant 64 : index
    %c0_302 = arith.constant 0 : index
    %407 = vector.load %arg7[%c64_301, %c0_302] : memref<576x512xf32, #tpu.memory_space<vmem>>, vector<32x32xf32>
    tpu.vector_store %arg7[%c64_301, %c0_302], %406 {strides = array<i32>} : memref<576x512xf32, #tpu.memory_space<vmem>>, vector<32x32xf32>,
    %cst_303 = arith.constant 0.000000e+00 : f32
    %408 = vector.broadcast %cst_303 : f32 to vector<32x1xf32>
    %409 = vector.extract_strided_slice %395 {offsets = [0, 0], sizes = [32, 31], strides = [1, 1]} : vector<32x32xf32> to vector<32x31xf32>
    %410 = tpu.concatenate %408, %409 in 1 : vector<32x1xf32>, vector<32x31xf32> -> vector<32x32xf32>
    %c96_304 = arith.constant 96 : index
    %c0_305 = arith.constant 0 : index
    %411 = vector.load %arg7[%c96_304, %c0_305] : memref<576x512xf32, #tpu.memory_space<vmem>>, vector<32x32xf32>
    tpu.vector_store %arg7[%c96_304, %c0_305], %410 {strides = array<i32>} : memref<576x512xf32, #tpu.memory_space<vmem>>, vector<32x32xf32>,
    %c128_306 = arith.constant 128 : index
    %c0_307 = arith.constant 0 : index
    %412 = vector.load %arg7[%c128_306, %c0_307] : memref<576x512xf32, #tpu.memory_space<vmem>>, vector<32x32xf32>
    tpu.vector_store %arg7[%c128_306, %c0_307], %395 {strides = array<i32>} : memref<576x512xf32, #tpu.memory_space<vmem>>, vector<32x32xf32>,
    %cst_308 = arith.constant 0.000000e+00 : f32
    %413 = vector.broadcast %cst_308 : f32 to vector<32x1xf32>
    %414 = vector.extract_strided_slice %395 {offsets = [0, 1], sizes = [32, 31], strides = [1, 1]} : vector<32x32xf32> to vector<32x31xf32>
    %415 = tpu.concatenate %414, %413 in 1 : vector<32x31xf32>, vector<32x1xf32> -> vector<32x32xf32>
    %c160_309 = arith.constant 160 : index
    %c0_310 = arith.constant 0 : index
    %416 = vector.load %arg7[%c160_309, %c0_310] : memref<576x512xf32, #tpu.memory_space<vmem>>, vector<32x32xf32>
    tpu.vector_store %arg7[%c160_309, %c0_310], %415 {strides = array<i32>} : memref<576x512xf32, #tpu.memory_space<vmem>>, vector<32x32xf32>,
    %cst_311 = arith.constant 0.000000e+00 : f32
    %417 = vector.broadcast %cst_311 : f32 to vector<32x3xf32>
    %418 = vector.extract_strided_slice %395 {offsets = [0, 3], sizes = [32, 29], strides = [1, 1]} : vector<32x32xf32> to vector<32x29xf32>
    %419 = tpu.concatenate %418, %417 in 1 : vector<32x29xf32>, vector<32x3xf32> -> vector<32x32xf32>
    %c192_312 = arith.constant 192 : index
    %c0_313 = arith.constant 0 : index
    %420 = vector.load %arg7[%c192_312, %c0_313] : memref<576x512xf32, #tpu.memory_space<vmem>>, vector<32x32xf32>
    tpu.vector_store %arg7[%c192_312, %c0_313], %419 {strides = array<i32>} : memref<576x512xf32, #tpu.memory_space<vmem>>, vector<32x32xf32>,
    %cst_314 = arith.constant 0.000000e+00 : f32
    %421 = vector.broadcast %cst_314 : f32 to vector<32x4xf32>
    %422 = vector.extract_strided_slice %395 {offsets = [0, 4], sizes = [32, 28], strides = [1, 1]} : vector<32x32xf32> to vector<32x28xf32>
    %423 = tpu.concatenate %422, %421 in 1 : vector<32x28xf32>, vector<32x4xf32> -> vector<32x32xf32>
    %c224_315 = arith.constant 224 : index
    %c0_316 = arith.constant 0 : index
    %424 = vector.load %arg7[%c224_315, %c0_316] : memref<576x512xf32, #tpu.memory_space<vmem>>, vector<32x32xf32>
    tpu.vector_store %arg7[%c224_315, %c0_316], %423 {strides = array<i32>} : memref<576x512xf32, #tpu.memory_space<vmem>>, vector<32x32xf32>,
    %cst_317 = arith.constant 0.000000e+00 : f32
    %425 = vector.broadcast %cst_317 : f32 to vector<32x5xf32>
    %426 = vector.extract_strided_slice %395 {offsets = [0, 5], sizes = [32, 27], strides = [1, 1]} : vector<32x32xf32> to vector<32x27xf32>
    %427 = tpu.concatenate %426, %425 in 1 : vector<32x27xf32>, vector<32x5xf32> -> vector<32x32xf32>
    %c256_318 = arith.constant 256 : index
    %c0_319 = arith.constant 0 : index
    %428 = vector.load %arg7[%c256_318, %c0_319] : memref<576x512xf32, #tpu.memory_space<vmem>>, vector<32x32xf32>
    tpu.vector_store %arg7[%c256_318, %c0_319], %427 {strides = array<i32>} : memref<576x512xf32, #tpu.memory_space<vmem>>, vector<32x32xf32>,
    %c0_320 = arith.constant 0 : index
    %c0_321 = arith.constant 0 : index
    %429 = vector.load %arg7[%c0_320, %c0_321] : memref<576x512xf32, #tpu.memory_space<vmem>>, vector<288x32xf32>
    %c216_322 = arith.constant 216 : index
    %c0_323 = arith.constant 0 : index
    %430 = vector.load %arg1[%c216_322, %c0_323] : memref<1080x512xf32, #tpu.memory_space<vmem>>, vector<288x32xf32>
    %431 = arith.mulf %429, %430 : vector<288x32xf32>
    %432 = arith.truncf %431 : vector<288x32xf32> to vector<288x32xbf16>
    %c640 = arith.constant 640 : index
    %c0_324 = arith.constant 0 : index
    %433 = vector.load %arg2[%c640, %c0_324] : memref<680x128xbf16, #tpu.memory_space<vmem>>, vector<32x8xbf16>
    %cst_325 = arith.constant dense<0.000000e+00> : vector<288x8xf32>
    %434 = tpu.matmul %432, %433, %cst_325 {dimension_numbers = #tpu.dot_dimension_numbers<[1], [0], [0], [1], [0, 0, 1, 1], [], []>} : vector<288x32xbf16>, vector<32x8xbf16>, vector<288x8xf32> -> vector<288x8xf32>
    %435 = arith.truncf %434 : vector<288x8xf32> to vector<288x8xbf16>
    %c168 = arith.constant 168 : index
    %c0_326 = arith.constant 0 : index
    %436 = vector.load %arg3[%c168, %c0_326] : memref<376x576xbf16, #tpu.memory_space<vmem>>, vector<64x288xbf16>
    %cst_327 = arith.constant dense<0.000000e+00> : vector<64x8xf32>
    %437 = tpu.matmul %436, %435, %cst_327 {dimension_numbers = #tpu.dot_dimension_numbers<[1], [0], [0], [1], [0, 0, 1, 1], [], []>} : vector<64x288xbf16>, vector<288x8xbf16>, vector<64x8xf32> -> vector<64x8xf32>
    %c168_328 = arith.constant 168 : index
    %c0_329 = arith.constant 0 : index
    %438 = vector.load %arg4[%c168_328, %c0_329] : memref<376x2xf32, #tpu.memory_space<vmem>>, vector<64x1xf32>
    %c168_330 = arith.constant 168 : index
    %c1_331 = arith.constant 1 : index
    %439 = vector.load %arg4[%c168_330, %c1_331] : memref<376x2xf32, #tpu.memory_space<vmem>>, vector<64x1xf32>
    %cst_332 = arith.constant dense<0.000000e+00> : vector<64xf32>
    %440 = vector.multi_reduction <add>, %437, %cst_332 [1] : vector<64x8xf32> to vector<64xf32>
    %441 = vector.shape_cast %440 : vector<64xf32> to vector<64x1xf32>
    %cst_333 = arith.constant 1.250000e-01 : f32
    %442 = vector.broadcast %cst_333 : f32 to vector<64x1xf32>
    %443 = arith.mulf %441, %442 : vector<64x1xf32>
    %444 = vector.broadcast %443 : vector<64x1xf32> to vector<64x8xf32>
    %445 = arith.subf %437, %444 : vector<64x8xf32>
    %446 = arith.mulf %445, %445 : vector<64x8xf32>
    %cst_334 = arith.constant dense<0.000000e+00> : vector<64xf32>
    %447 = vector.multi_reduction <add>, %446, %cst_334 [1] : vector<64x8xf32> to vector<64xf32>
    %448 = vector.shape_cast %447 : vector<64xf32> to vector<64x1xf32>
    %cst_335 = arith.constant 1.250000e-01 : f32
    %449 = vector.broadcast %cst_335 : f32 to vector<64x1xf32>
    %450 = arith.mulf %448, %449 : vector<64x1xf32>
    %cst_336 = arith.constant 9.99999974E-6 : f32
    %451 = vector.broadcast %cst_336 : f32 to vector<64x1xf32>
    %452 = arith.addf %450, %451 : vector<64x1xf32>
    %453 = math.rsqrt %452 : vector<64x1xf32>
    %454 = arith.mulf %453, %438 : vector<64x1xf32>
    %455 = vector.broadcast %454 : vector<64x1xf32> to vector<64x8xf32>
    %456 = arith.mulf %445, %455 : vector<64x8xf32>
    %457 = vector.broadcast %439 : vector<64x1xf32> to vector<64x8xf32>
    %458 = arith.addf %456, %457 : vector<64x8xf32>
    %cst_337 = arith.constant 0.000000e+00 : f32
    %459 = vector.broadcast %cst_337 : f32 to vector<64x8xf32>
    %460 = arith.maximumf %458, %459 : vector<64x8xf32>
    %cst_338 = arith.constant 0.000000e+00 : f32
    %461 = vector.broadcast %cst_338 : f32 to vector<64x3xf32>
    %462 = vector.extract_strided_slice %460 {offsets = [0, 0], sizes = [64, 5], strides = [1, 1]} : vector<64x8xf32> to vector<64x5xf32>
    %463 = tpu.concatenate %461, %462 in 1 : vector<64x3xf32>, vector<64x5xf32> -> vector<64x8xf32>
    %c0_339 = arith.constant 0 : index
    %c0_340 = arith.constant 0 : index
    %464 = vector.load %arg7[%c0_339, %c0_340] : memref<576x512xf32, #tpu.memory_space<vmem>>, vector<64x8xf32>
    tpu.vector_store %arg7[%c0_339, %c0_340], %463 {strides = array<i32>} : memref<576x512xf32, #tpu.memory_space<vmem>>, vector<64x8xf32>,
    %cst_341 = arith.constant 0.000000e+00 : f32
    %465 = vector.broadcast %cst_341 : f32 to vector<64x2xf32>
    %466 = vector.extract_strided_slice %460 {offsets = [0, 0], sizes = [64, 6], strides = [1, 1]} : vector<64x8xf32> to vector<64x6xf32>
    %467 = tpu.concatenate %465, %466 in 1 : vector<64x2xf32>, vector<64x6xf32> -> vector<64x8xf32>
    %c64_342 = arith.constant 64 : index
    %c0_343 = arith.constant 0 : index
    %468 = vector.load %arg7[%c64_342, %c0_343] : memref<576x512xf32, #tpu.memory_space<vmem>>, vector<64x8xf32>
    tpu.vector_store %arg7[%c64_342, %c0_343], %467 {strides = array<i32>} : memref<576x512xf32, #tpu.memory_space<vmem>>, vector<64x8xf32>,
    %cst_344 = arith.constant 0.000000e+00 : f32
    %469 = vector.broadcast %cst_344 : f32 to vector<64x1xf32>
    %470 = vector.extract_strided_slice %460 {offsets = [0, 0], sizes = [64, 7], strides = [1, 1]} : vector<64x8xf32> to vector<64x7xf32>
    %471 = tpu.concatenate %469, %470 in 1 : vector<64x1xf32>, vector<64x7xf32> -> vector<64x8xf32>
    %c128_345 = arith.constant 128 : index
    %c0_346 = arith.constant 0 : index
    %472 = vector.load %arg7[%c128_345, %c0_346] : memref<576x512xf32, #tpu.memory_space<vmem>>, vector<64x8xf32>
    tpu.vector_store %arg7[%c128_345, %c0_346], %471 {strides = array<i32>} : memref<576x512xf32, #tpu.memory_space<vmem>>, vector<64x8xf32>,
    %cst_347 = arith.constant 0.000000e+00 : f32
    %473 = vector.broadcast %cst_347 : f32 to vector<64x1xf32>
    %474 = vector.extract_strided_slice %460 {offsets = [0, 0], sizes = [64, 7], strides = [1, 1]} : vector<64x8xf32> to vector<64x7xf32>
    %475 = tpu.concatenate %473, %474 in 1 : vector<64x1xf32>, vector<64x7xf32> -> vector<64x8xf32>
    %c192_348 = arith.constant 192 : index
    %c0_349 = arith.constant 0 : index
    %476 = vector.load %arg7[%c192_348, %c0_349] : memref<576x512xf32, #tpu.memory_space<vmem>>, vector<64x8xf32>
    tpu.vector_store %arg7[%c192_348, %c0_349], %475 {strides = array<i32>} : memref<576x512xf32, #tpu.memory_space<vmem>>, vector<64x8xf32>,
    %c256_350 = arith.constant 256 : index
    %c0_351 = arith.constant 0 : index
    %477 = vector.load %arg7[%c256_350, %c0_351] : memref<576x512xf32, #tpu.memory_space<vmem>>, vector<64x8xf32>
    tpu.vector_store %arg7[%c256_350, %c0_351], %460 {strides = array<i32>} : memref<576x512xf32, #tpu.memory_space<vmem>>, vector<64x8xf32>,
    %cst_352 = arith.constant 0.000000e+00 : f32
    %478 = vector.broadcast %cst_352 : f32 to vector<64x1xf32>
    %479 = vector.extract_strided_slice %460 {offsets = [0, 1], sizes = [64, 7], strides = [1, 1]} : vector<64x8xf32> to vector<64x7xf32>
    %480 = tpu.concatenate %479, %478 in 1 : vector<64x7xf32>, vector<64x1xf32> -> vector<64x8xf32>
    %c320 = arith.constant 320 : index
    %c0_353 = arith.constant 0 : index
    %481 = vector.load %arg7[%c320, %c0_353] : memref<576x512xf32, #tpu.memory_space<vmem>>, vector<64x8xf32>
    tpu.vector_store %arg7[%c320, %c0_353], %480 {strides = array<i32>} : memref<576x512xf32, #tpu.memory_space<vmem>>, vector<64x8xf32>,
    %cst_354 = arith.constant 0.000000e+00 : f32
    %482 = vector.broadcast %cst_354 : f32 to vector<64x1xf32>
    %483 = vector.extract_strided_slice %460 {offsets = [0, 1], sizes = [64, 7], strides = [1, 1]} : vector<64x8xf32> to vector<64x7xf32>
    %484 = tpu.concatenate %483, %482 in 1 : vector<64x7xf32>, vector<64x1xf32> -> vector<64x8xf32>
    %c384 = arith.constant 384 : index
    %c0_355 = arith.constant 0 : index
    %485 = vector.load %arg7[%c384, %c0_355] : memref<576x512xf32, #tpu.memory_space<vmem>>, vector<64x8xf32>
    tpu.vector_store %arg7[%c384, %c0_355], %484 {strides = array<i32>} : memref<576x512xf32, #tpu.memory_space<vmem>>, vector<64x8xf32>,
    %cst_356 = arith.constant 0.000000e+00 : f32
    %486 = vector.broadcast %cst_356 : f32 to vector<64x2xf32>
    %487 = vector.extract_strided_slice %460 {offsets = [0, 2], sizes = [64, 6], strides = [1, 1]} : vector<64x8xf32> to vector<64x6xf32>
    %488 = tpu.concatenate %487, %486 in 1 : vector<64x6xf32>, vector<64x2xf32> -> vector<64x8xf32>
    %c448 = arith.constant 448 : index
    %c0_357 = arith.constant 0 : index
    %489 = vector.load %arg7[%c448, %c0_357] : memref<576x512xf32, #tpu.memory_space<vmem>>, vector<64x8xf32>
    tpu.vector_store %arg7[%c448, %c0_357], %488 {strides = array<i32>} : memref<576x512xf32, #tpu.memory_space<vmem>>, vector<64x8xf32>,
    %cst_358 = arith.constant 0.000000e+00 : f32
    %490 = vector.broadcast %cst_358 : f32 to vector<64x3xf32>
    %491 = vector.extract_strided_slice %460 {offsets = [0, 3], sizes = [64, 5], strides = [1, 1]} : vector<64x8xf32> to vector<64x5xf32>
    %492 = tpu.concatenate %491, %490 in 1 : vector<64x5xf32>, vector<64x3xf32> -> vector<64x8xf32>
    %c512_359 = arith.constant 512 : index
    %c0_360 = arith.constant 0 : index
    %493 = vector.load %arg7[%c512_359, %c0_360] : memref<576x512xf32, #tpu.memory_space<vmem>>, vector<64x8xf32>
    tpu.vector_store %arg7[%c512_359, %c0_360], %492 {strides = array<i32>} : memref<576x512xf32, #tpu.memory_space<vmem>>, vector<64x8xf32>,
    %c0_361 = arith.constant 0 : index
    %c0_362 = arith.constant 0 : index
    %494 = vector.load %arg7[%c0_361, %c0_362] : memref<576x512xf32, #tpu.memory_space<vmem>>, vector<576x8xf32>
    %c504 = arith.constant 504 : index
    %c0_363 = arith.constant 0 : index
    %495 = vector.load %arg1[%c504, %c0_363] : memref<1080x512xf32, #tpu.memory_space<vmem>>, vector<576x8xf32>
    %496 = arith.mulf %494, %495 : vector<576x8xf32>
    %497 = arith.truncf %496 : vector<576x8xf32> to vector<576x8xbf16>
    %c232 = arith.constant 232 : index
    %c0_364 = arith.constant 0 : index
    %498 = vector.load %arg3[%c232, %c0_364] : memref<376x576xbf16, #tpu.memory_space<vmem>>, vector<64x576xbf16>
    %cst_365 = arith.constant dense<0.000000e+00> : vector<64x8xf32>
    %499 = tpu.matmul %498, %497, %cst_365 {dimension_numbers = #tpu.dot_dimension_numbers<[1], [0], [0], [1], [0, 0, 1, 1], [], []>} : vector<64x576xbf16>, vector<576x8xbf16>, vector<64x8xf32> -> vector<64x8xf32>
    %c232_366 = arith.constant 232 : index
    %c0_367 = arith.constant 0 : index
    %500 = vector.load %arg4[%c232_366, %c0_367] : memref<376x2xf32, #tpu.memory_space<vmem>>, vector<64x1xf32>
    %c232_368 = arith.constant 232 : index
    %c1_369 = arith.constant 1 : index
    %501 = vector.load %arg4[%c232_368, %c1_369] : memref<376x2xf32, #tpu.memory_space<vmem>>, vector<64x1xf32>
    %cst_370 = arith.constant dense<0.000000e+00> : vector<64xf32>
    %502 = vector.multi_reduction <add>, %499, %cst_370 [1] : vector<64x8xf32> to vector<64xf32>
    %503 = vector.shape_cast %502 : vector<64xf32> to vector<64x1xf32>
    %cst_371 = arith.constant 1.250000e-01 : f32
    %504 = vector.broadcast %cst_371 : f32 to vector<64x1xf32>
    %505 = arith.mulf %503, %504 : vector<64x1xf32>
    %506 = vector.broadcast %505 : vector<64x1xf32> to vector<64x8xf32>
    %507 = arith.subf %499, %506 : vector<64x8xf32>
    %508 = arith.mulf %507, %507 : vector<64x8xf32>
    %cst_372 = arith.constant dense<0.000000e+00> : vector<64xf32>
    %509 = vector.multi_reduction <add>, %508, %cst_372 [1] : vector<64x8xf32> to vector<64xf32>
    %510 = vector.shape_cast %509 : vector<64xf32> to vector<64x1xf32>
    %cst_373 = arith.constant 1.250000e-01 : f32
    %511 = vector.broadcast %cst_373 : f32 to vector<64x1xf32>
    %512 = arith.mulf %510, %511 : vector<64x1xf32>
    %cst_374 = arith.constant 9.99999974E-6 : f32
    %513 = vector.broadcast %cst_374 : f32 to vector<64x1xf32>
    %514 = arith.addf %512, %513 : vector<64x1xf32>
    %515 = math.rsqrt %514 : vector<64x1xf32>
    %516 = arith.mulf %515, %500 : vector<64x1xf32>
    %517 = vector.broadcast %516 : vector<64x1xf32> to vector<64x8xf32>
    %518 = arith.mulf %507, %517 : vector<64x8xf32>
    %519 = vector.broadcast %501 : vector<64x1xf32> to vector<64x8xf32>
    %520 = arith.addf %518, %519 : vector<64x8xf32>
    %521 = vector.extract_strided_slice %435 {offsets = [128, 0], sizes = [32, 8], strides = [1, 1]} : vector<288x8xbf16> to vector<32x8xbf16>
    %c296 = arith.constant 296 : index
    %c0_375 = arith.constant 0 : index
    %522 = vector.load %arg3[%c296, %c0_375] : memref<376x576xbf16, #tpu.memory_space<vmem>>, vector<64x32xbf16>
    %cst_376 = arith.constant dense<0.000000e+00> : vector<64x8xf32>
    %523 = tpu.matmul %522, %521, %cst_376 {dimension_numbers = #tpu.dot_dimension_numbers<[1], [0], [0], [1], [0, 0, 1, 1], [], []>} : vector<64x32xbf16>, vector<32x8xbf16>, vector<64x8xf32> -> vector<64x8xf32>
    %c296_377 = arith.constant 296 : index
    %c0_378 = arith.constant 0 : index
    %524 = vector.load %arg4[%c296_377, %c0_378] : memref<376x2xf32, #tpu.memory_space<vmem>>, vector<64x1xf32>
    %c296_379 = arith.constant 296 : index
    %c1_380 = arith.constant 1 : index
    %525 = vector.load %arg4[%c296_379, %c1_380] : memref<376x2xf32, #tpu.memory_space<vmem>>, vector<64x1xf32>
    %cst_381 = arith.constant dense<0.000000e+00> : vector<64xf32>
    %526 = vector.multi_reduction <add>, %523, %cst_381 [1] : vector<64x8xf32> to vector<64xf32>
    %527 = vector.shape_cast %526 : vector<64xf32> to vector<64x1xf32>
    %cst_382 = arith.constant 1.250000e-01 : f32
    %528 = vector.broadcast %cst_382 : f32 to vector<64x1xf32>
    %529 = arith.mulf %527, %528 : vector<64x1xf32>
    %530 = vector.broadcast %529 : vector<64x1xf32> to vector<64x8xf32>
    %531 = arith.subf %523, %530 : vector<64x8xf32>
    %532 = arith.mulf %531, %531 : vector<64x8xf32>
    %cst_383 = arith.constant dense<0.000000e+00> : vector<64xf32>
    %533 = vector.multi_reduction <add>, %532, %cst_383 [1] : vector<64x8xf32> to vector<64xf32>
    %534 = vector.shape_cast %533 : vector<64xf32> to vector<64x1xf32>
    %cst_384 = arith.constant 1.250000e-01 : f32
    %535 = vector.broadcast %cst_384 : f32 to vector<64x1xf32>
    %536 = arith.mulf %534, %535 : vector<64x1xf32>
    %cst_385 = arith.constant 9.99999974E-6 : f32
    %537 = vector.broadcast %cst_385 : f32 to vector<64x1xf32>
    %538 = arith.addf %536, %537 : vector<64x1xf32>
    %539 = math.rsqrt %538 : vector<64x1xf32>
    %540 = arith.mulf %539, %524 : vector<64x1xf32>
    %541 = vector.broadcast %540 : vector<64x1xf32> to vector<64x8xf32>
    %542 = arith.mulf %531, %541 : vector<64x8xf32>
    %543 = vector.broadcast %525 : vector<64x1xf32> to vector<64x8xf32>
    %544 = arith.addf %542, %543 : vector<64x8xf32>
    %545 = arith.addf %520, %544 : vector<64x8xf32>
    %cst_386 = arith.constant 0.000000e+00 : f32
    %546 = vector.broadcast %cst_386 : f32 to vector<64x8xf32>
    %547 = arith.maximumf %545, %546 : vector<64x8xf32>
    %c672 = arith.constant 672 : index
    %c0_387 = arith.constant 0 : index
    %548 = vector.load %arg2[%c672, %c0_387] : memref<680x128xbf16, #tpu.memory_space<vmem>>, vector<8x2xbf16>
    %549 = arith.truncf %547 : vector<64x8xf32> to vector<64x8xbf16>
    %cst_388 = arith.constant dense<0.000000e+00> : vector<64x2xf32>
    %550 = tpu.matmul %549, %548, %cst_388 {dimension_numbers = #tpu.dot_dimension_numbers<[1], [0], [0], [1], [0, 0, 1, 1], [], []>} : vector<64x8xbf16>, vector<8x2xbf16>, vector<64x2xf32> -> vector<64x2xf32>
    %c0_389 = arith.constant 0 : index
    %c0_390 = arith.constant 0 : index
    %551 = vector.load %arg5[%c0_389, %c0_390] : memref<64x2xf32, #tpu.memory_space<vmem>>, vector<64x2xf32>
    tpu.vector_store %arg5[%c0_389, %c0_390], %550 {strides = array<i32>} : memref<64x2xf32, #tpu.memory_space<vmem>>, vector<64x2xf32>,
    %c360 = arith.constant 360 : index
    %c0_391 = arith.constant 0 : index
    %552 = vector.load %arg3[%c360, %c0_391] : memref<376x576xbf16, #tpu.memory_space<vmem>>, vector<16x64xbf16>
    %c360_392 = arith.constant 360 : index
    %c0_393 = arith.constant 0 : index
    %553 = vector.load %arg4[%c360_392, %c0_393] : memref<376x2xf32, #tpu.memory_space<vmem>>, vector<16x1xf32>
    %554 = arith.truncf %550 : vector<64x2xf32> to vector<64x2xbf16>
    %cst_394 = arith.constant dense<0.000000e+00> : vector<16x2xf32>
    %555 = tpu.matmul %552, %554, %cst_394 {dimension_numbers = #tpu.dot_dimension_numbers<[1], [0], [0], [1], [0, 0, 1, 1], [], []>} : vector<16x64xbf16>, vector<64x2xbf16>, vector<16x2xf32> -> vector<16x2xf32>
    %556 = vector.broadcast %553 : vector<16x1xf32> to vector<16x2xf32>
    %557 = arith.addf %555, %556 : vector<16x2xf32>
    %558 = vector.extract_strided_slice %557 {offsets = [0, 0], sizes = [10, 2], strides = [1, 1]} : vector<16x2xf32> to vector<10x2xf32>
    %c0_395 = arith.constant 0 : index
    %c0_396 = arith.constant 0 : index
    %559 = vector.load %arg6[%c0_395, %c0_396] : memref<10x2xf32, #tpu.memory_space<vmem>>, vector<10x2xf32>
    tpu.vector_store %arg6[%c0_395, %c0_396], %558 {strides = array<i32>} : memref<10x2xf32, #tpu.memory_space<vmem>>, vector<10x2xf32>,
    return
  }
}

</mosaic_0001>

<llo_original>
// kernel: resnet_forward.1
$region0: #{resnet_forward.1}
  #allocation0 [shape = 'u32[]', space=smem, size = 0x4, offset = 0x4, fixed_abs, tag = 'smem constant byte address 0x4 - core index']
  #allocation1 [shape = 'u32[72,128]{1,0:T(1,128)}', space=vmem, size = 0x9000, scoped, tag = 'internal scratch']
  #allocation2 [shape = 'f32[576,512]{1,0:T(8,128)}', space=vmem, size = 0x120000, scoped, tag = 'scratch operand']
  %s0 = inlined_call_operand.vmem [shape: f32[8,512], index: 0, kind: input, shape index: {}]
  %s1 = inlined_call_operand.hbm [shape: f32[1080,512], index: 1, kind: input, shape index: {}]
  %s2 = inlined_call_operand.hbm [shape: bf16[680,128], index: 2, kind: input, shape index: {}]
  %s3 = inlined_call_operand.vmem [shape: bf16[376,576], index: 3, kind: input, shape index: {}]
  %s4 = inlined_call_operand.vmem [shape: f32[376,2], index: 4, kind: input, shape index: {}]
  %s5 = inlined_call_operand.vmem [shape: f32[64,2], index: 5, kind: output, shape index: {0}]
  %s6 = inlined_call_operand.vmem [shape: f32[10,2], index: 6, kind: output, shape index: {1}]
  %7 = xla_tuple %s5, %s6
  %s8 = sld [smem:[#allocation0]]
  $region46: #{resnet_forward.1} parent=0
    _
  %s10 = ssub.s32 1, %s8
  %s11 = scalar_select 0, %s10, %s8
  $region1: #{resnet_forward.1} parent=0
    #allocation3 [shape = 'u8[2211840]{0}', space=vmem, size = 0x21c000, scoped, tag = 'input window, operand 1, single buffered']
    #allocation4 [shape = 's32[1]{0}', space=sflag, size = 0x4, scoped, tag = 'scoped memory for resnet_forward.1']
    #allocation5 [shape = 'u8[174080]{0}', space=vmem, size = 0x2a800, scoped, tag = 'input window, operand 2, single buffered']
    #allocation6 [shape = 's32[1]{0}', space=sflag, size = 0x4, scoped, tag = 'scoped memory for resnet_forward.1']
    %12 = vsyncpa [#allocation4], 0
    %13 = vsyncpa [#allocation6], 0
    // Predicated region
    $region2: #{resnet_forward.1} parent=1 // pred_check
      _
    $region3: #{resnet_forward.1} parent=1 // pred_check_branch
      %15 = sbr.rel (0) target = $region5
    $region4: #{resnet_forward.1} parent=1 // pred_region
      _
    $region5: #{resnet_forward.1} parent=1 // pred_fallthru
      _
    // Predicated region
    $region6: #{resnet_forward.1} parent=1 // pred_check
      _
    $region7: #{resnet_forward.1} parent=1 // pred_check_branch
      %17 = sbr.rel (0) target = $region9
    $region8: #{resnet_forward.1} parent=1 // pred_region
      %19 = vsyncadd [#allocation4], 0
      %s20 = sshll.u32 %s1, 4
      %s21 = int_to_ptr.hbm [resolvable:$true] %s20
      %s22 = sshll.u32 [#allocation3], 4
      %s23 = int_to_ptr.vmem [resolvable:$true] %s22
      %28 = dma.hbm_to_vmem [thread:$0]  %s21, 69120, %s23, [#allocation4], 512, 512, 32
    $region9: #{resnet_forward.1} parent=1 // pred_fallthru
      _
    // Predicated region
    $region10: #{resnet_forward.1} parent=1 // pred_check
      _
    $region11: #{resnet_forward.1} parent=1 // pred_check_branch
      %30 = sbr.rel (0) target = $region13
    $region12: #{resnet_forward.1} parent=1 // pred_region
      %32 = vsyncadd [#allocation6], 0
      %s33 = sshll.u32 %s2, 4
      %s34 = int_to_ptr.hbm [resolvable:$true] %s33
      %s35 = sshll.u32 [#allocation5], 4
      %s36 = int_to_ptr.vmem [resolvable:$true] %s35
      %41 = dma.hbm_to_vmem [thread:$0]  %s34, 5440, %s36, [#allocation6], 64, 64, 4
    $region13: #{resnet_forward.1} parent=1 // pred_fallthru
      _
    // Predicated region
    $region14: #{resnet_forward.1} parent=1 // pred_check
      _
    $region15: #{resnet_forward.1} parent=1 // pred_check_branch
      %43 = sbr.rel (0) target = $region17
    $region16: #{resnet_forward.1} parent=1 // pred_region
      _
    $region17: #{resnet_forward.1} parent=1 // pred_fallthru
      _
    // Predicated region
    $region18: #{resnet_forward.1} parent=1 // pred_check
      _
    $region19: #{resnet_forward.1} parent=1 // pred_check_branch
      %45 = sbr.rel (0) target = $region21
    $region20: #{resnet_forward.1} parent=1 // pred_region
      _
    $region21: #{resnet_forward.1} parent=1 // pred_fallthru
      _
    // Predicated region
    $region22: #{resnet_forward.1} parent=1 // pred_check
      _
    $region23: #{resnet_forward.1} parent=1 // pred_check_branch
      %47 = sbr.rel (0) target = $region25
    $region24: #{resnet_forward.1} parent=1 // pred_region
      %49 = dma.done [#allocation4], 69120
    $region25: #{resnet_forward.1} parent=1 // pred_fallthru
      _
    // Predicated region
    $region26: #{resnet_forward.1} parent=1 // pred_check
      _
    $region27: #{resnet_forward.1} parent=1 // pred_check_branch
      %51 = sbr.rel (0) target = $region29
    $region28: #{resnet_forward.1} parent=1 // pred_region
      %53 = dma.done [#allocation6], 5440
    $region29: #{resnet_forward.1} parent=1 // pred_fallthru
      _
    %v55 = vld [vmem:[%s0] sm:$0xff]
    %v56 = vld [vmem:[%s0 + $0x8] sm:$0xff]
    %v57 = vld [vmem:[%s0 + $0x10] sm:$0xff]
    %v58 = vld [vmem:[%s0 + $0x18] sm:$0xff]
    %59 = vrot.lane.b32.xlu0 %v55, 17
    %v60 = vpop.permute.xlu0 %59
    %61 = vrot.lane.b32.xlu0 %v56, 17
    %v62 = vpop.permute.xlu0 %61
    %63 = vrot.lane.b32.xlu0 %v57, 17
    %v64 = vpop.permute.xlu0 %63
    %65 = vrot.lane.b32.xlu0 %v58, 17
    %v66 = vpop.permute.xlu0 %65
    %v67 = vlaneseq
    %v68 = vand.u32 %v67, 127
    %vm69 = vcmp.lt.s32.totalorder %v68, 17
    %v70 = vsel %vm69, %v64, %v66
    %v71 = vsel %vm69, %v62, %v64
    %v72 = vsel %vm69, %v60, %v62
    %v73 = vsel %vm69, %v66, %v60
    %74 = vst [vmem:[#allocation2] sm:$0xff] %v73
    %75 = vst [vmem:[#allocation2 + $0x8] sm:$0xff] %v72
    %76 = vst [vmem:[#allocation2 + $0x10] sm:$0xff] %v71
    %77 = vst [vmem:[#allocation2 + $0x18] sm:$0xff] %v70
    %78 = vrot.lane.b32.xlu0 %v55, 16
    %v79 = vpop.permute.xlu0 %78
    %80 = vrot.lane.b32.xlu0 %v56, 16
    %v81 = vpop.permute.xlu0 %80
    %82 = vrot.lane.b32.xlu0 %v57, 16
    %v83 = vpop.permute.xlu0 %82
    %84 = vrot.lane.b32.xlu0 %v58, 16
    %v85 = vpop.permute.xlu0 %84
    %vm86 = vcmp.lt.s32.totalorder %v68, 16
    %v87 = vsel %vm86, %v83, %v85
    %v88 = vsel %vm86, %v81, %v83
    %v89 = vsel %vm86, %v79, %v81
    %v90 = vsel %vm86, %v85, %v79
    %91 = vst [vmem:[#allocation2 + $0x20] sm:$0xff] %v90
    %92 = vst [vmem:[#allocation2 + $0x28] sm:$0xff] %v89
    %93 = vst [vmem:[#allocation2 + $0x30] sm:$0xff] %v88
    %94 = vst [vmem:[#allocation2 + $0x38] sm:$0xff] %v87
    %95 = vrot.lane.b32.xlu0 %v55, 15
    %v96 = vpop.permute.xlu0 %95
    %97 = vrot.lane.b32.xlu0 %v56, 15
    %v98 = vpop.permute.xlu0 %97
    %99 = vrot.lane.b32.xlu0 %v57, 15
    %v100 = vpop.permute.xlu0 %99
    %101 = vrot.lane.b32.xlu0 %v58, 15
    %v102 = vpop.permute.xlu0 %101
    %vm103 = vcmp.lt.s32.totalorder %v68, 15
    %v104 = vsel %vm103, %v100, %v102
    %v105 = vsel %vm103, %v98, %v100
    %v106 = vsel %vm103, %v96, %v98
    %v107 = vsel %vm103, %v102, %v96
    %108 = vst [vmem:[#allocation2 + $0x40] sm:$0xff] %v107
    %109 = vst [vmem:[#allocation2 + $0x48] sm:$0xff] %v106
    %110 = vst [vmem:[#allocation2 + $0x50] sm:$0xff] %v105
    %111 = vst [vmem:[#allocation2 + $0x58] sm:$0xff] %v104
    %112 = vrot.lane.b32.xlu0 %v55, 1
    %v113 = vpop.permute.xlu0 %112
    %114 = vrot.lane.b32.xlu0 %v56, 1
    %v115 = vpop.permute.xlu0 %114
    %116 = vrot.lane.b32.xlu0 %v57, 1
    %v117 = vpop.permute.xlu0 %116
    %118 = vrot.lane.b32.xlu0 %v58, 1
    %v119 = vpop.permute.xlu0 %118
    %vm120 = vcmp.lt.s32.totalorder %v68, 1
    %v121 = vsel %vm120, %v117, %v119
    %v122 = vsel %vm120, %v115, %v117
    %v123 = vsel %vm120, %v113, %v115
    %v124 = vsel %vm120, %v119, %v113
    %125 = vst [vmem:[#allocation2 + $0x60] sm:$0xff] %v124
    %126 = vst [vmem:[#allocation2 + $0x68] sm:$0xff] %v123
    %127 = vst [vmem:[#allocation2 + $0x70] sm:$0xff] %v122
    %128 = vst [vmem:[#allocation2 + $0x78] sm:$0xff] %v121
    %129 = vst [vmem:[#allocation2 + $0x80] sm:$0xff] %v55
    %130 = vst [vmem:[#allocation2 + $0x88] sm:$0xff] %v56
    %131 = vst [vmem:[#allocation2 + $0x90] sm:$0xff] %v57
    %132 = vst [vmem:[#allocation2 + $0x98] sm:$0xff] %v58
    %133 = vrot.lane.b32.xlu0 %v55, 127
    %v134 = vpop.permute.xlu0 %133
    %135 = vrot.lane.b32.xlu0 %v56, 127
    %v136 = vpop.permute.xlu0 %135
    %137 = vrot.lane.b32.xlu0 %v57, 127
    %v138 = vpop.permute.xlu0 %137
    %139 = vrot.lane.b32.xlu0 %v58, 127
    %v140 = vpop.permute.xlu0 %139
    %vm141 = vcmp.lt.s32.totalorder %v68, 127
    %v142 = vsel %vm141, %v138, %v140
    %v143 = vsel %vm141, %v136, %v138
    %v144 = vsel %vm141, %v134, %v136
    %v145 = vsel %vm141, %v140, %v134
    %146 = vst [vmem:[#allocation2 + $0xa0] sm:$0xff] %v144
    %147 = vst [vmem:[#allocation2 + $0xa8] sm:$0xff] %v143
    %148 = vst [vmem:[#allocation2 + $0xb0] sm:$0xff] %v142
    %149 = vst [vmem:[#allocation2 + $0xb8] sm:$0xff] %v145
    %150 = vrot.lane.b32.xlu0 %v55, 113
    %v151 = vpop.permute.xlu0 %150
    %152 = vrot.lane.b32.xlu0 %v56, 113
    %v153 = vpop.permute.xlu0 %152
    %154 = vrot.lane.b32.xlu0 %v57, 113
    %v155 = vpop.permute.xlu0 %154
    %156 = vrot.lane.b32.xlu0 %v58, 113
    %v157 = vpop.permute.xlu0 %156
    %vm158 = vcmp.lt.s32.totalorder %v68, 113
    %v159 = vsel %vm158, %v155, %v157
    %v160 = vsel %vm158, %v153, %v155
    %v161 = vsel %vm158, %v151, %v153
    %v162 = vsel %vm158, %v157, %v151
    %163 = vst [vmem:[#allocation2 + $0xc0] sm:$0xff] %v161
    %164 = vst [vmem:[#allocation2 + $0xc8] sm:$0xff] %v160
    %165 = vst [vmem:[#allocation2 + $0xd0] sm:$0xff] %v159
    %166 = vst [vmem:[#allocation2 + $0xd8] sm:$0xff] %v162
    %167 = vrot.lane.b32.xlu0 %v55, 112
    %v168 = vpop.permute.xlu0 %167
    %169 = vrot.lane.b32.xlu0 %v56, 112
    %v170 = vpop.permute.xlu0 %169
    %171 = vrot.lane.b32.xlu0 %v57, 112
    %v172 = vpop.permute.xlu0 %171
    %173 = vrot.lane.b32.xlu0 %v58, 112
    %v174 = vpop.permute.xlu0 %173
    %vm175 = vcmp.lt.s32.totalorder %v68, 112
    %v176 = vsel %vm175, %v172, %v174
    %v177 = vsel %vm175, %v170, %v172
    %v178 = vsel %vm175, %v168, %v170
    %v179 = vsel %vm175, %v174, %v168
    %180 = vst [vmem:[#allocation2 + $0xe0] sm:$0xff] %v178
    %181 = vst [vmem:[#allocation2 + $0xe8] sm:$0xff] %v177
    %182 = vst [vmem:[#allocation2 + $0xf0] sm:$0xff] %v176
    %183 = vst [vmem:[#allocation2 + $0xf8] sm:$0xff] %v179
    %184 = vrot.lane.b32.xlu0 %v55, 111
    %v185 = vpop.permute.xlu0 %184
    %186 = vrot.lane.b32.xlu0 %v56, 111
    %v187 = vpop.permute.xlu0 %186
    %188 = vrot.lane.b32.xlu0 %v57, 111
    %v189 = vpop.permute.xlu0 %188
    %190 = vrot.lane.b32.xlu0 %v58, 111
    %v191 = vpop.permute.xlu0 %190
    %vm192 = vcmp.lt.s32.totalorder %v68, 111
    %v193 = vsel %vm192, %v189, %v191
    %v194 = vsel %vm192, %v187, %v189
    %v195 = vsel %vm192, %v185, %v187
    %v196 = vsel %vm192, %v191, %v185
    %197 = vst [vmem:[#allocation2 + $0x100] sm:$0xff] %v195
    %198 = vst [vmem:[#allocation2 + $0x108] sm:$0xff] %v194
    %199 = vst [vmem:[#allocation2 + $0x110] sm:$0xff] %v193
    %200 = vst [vmem:[#allocation2 + $0x118] sm:$0xff] %v196
    %v201 = vld [vmem:[#allocation2] sm:$0xff]
    %v202 = vld [vmem:[#allocation2 + $0x8] sm:$0xff]
    %v203 = vld [vmem:[#allocation2 + $0x10] sm:$0xff]
    %v204 = vld [vmem:[#allocation2 + $0x18] sm:$0xff]
    %v205 = vld [vmem:[#allocation2 + $0x20] sm:$0xff]
    %v206 = vld [vmem:[#allocation2 + $0x28] sm:$0xff]
    %v207 = vld [vmem:[#allocation2 + $0x30] sm:$0xff]
    %v208 = vld [vmem:[#allocation2 + $0x38] sm:$0xff]
    %v209 = vld [vmem:[#allocation2 + $0x40] sm:$0xff]
    %v210 = vld [vmem:[#allocation2 + $0x48] sm:$0xff]
    %v211 = vld [vmem:[#allocation2 + $0x50] sm:$0xff]
    %v212 = vld [vmem:[#allocation2 + $0x58] sm:$0xff]
    %v213 = vld [vmem:[#allocation2 + $0x60] sm:$0xff]
    %v214 = vld [vmem:[#allocation2 + $0x68] sm:$0xff]
    %v215 = vld [vmem:[#allocation2 + $0x70] sm:$0xff]
    %v216 = vld [vmem:[#allocation2 + $0x78] sm:$0xff]
    %v217 = vld [vmem:[#allocation2 + $0x80] sm:$0xff]
    %v218 = vld [vmem:[#allocation2 + $0x88] sm:$0xff]
    %v219 = vld [vmem:[#allocation2 + $0x90] sm:$0xff]
    %v220 = vld [vmem:[#allocation2 + $0x98] sm:$0xff]
    %v221 = vld [vmem:[#allocation2 + $0xa0] sm:$0xff]
    %v222 = vld [vmem:[#allocation2 + $0xa8] sm:$0xff]
    %v223 = vld [vmem:[#allocation2 + $0xb0] sm:$0xff]
    %v224 = vld [vmem:[#allocation2 + $0xb8] sm:$0xff]
    %v225 = vld [vmem:[#allocation2 + $0xc0] sm:$0xff]
    %v226 = vld [vmem:[#allocation2 + $0xc8] sm:$0xff]
    %v227 = vld [vmem:[#allocation2 + $0xd0] sm:$0xff]
    %v228 = vld [vmem:[#allocation2 + $0xd8] sm:$0xff]
    %v229 = vld [vmem:[#allocation2 + $0xe0] sm:$0xff]
    %v230 = vld [vmem:[#allocation2 + $0xe8] sm:$0xff]
    %v231 = vld [vmem:[#allocation2 + $0xf0] sm:$0xff]
    %v232 = vld [vmem:[#allocation2 + $0xf8] sm:$0xff]
    %v233 = vld [vmem:[#allocation2 + $0x100] sm:$0xff]
    %v234 = vld [vmem:[#allocation2 + $0x108] sm:$0xff]
    %v235 = vld [vmem:[#allocation2 + $0x110] sm:$0xff]
    %v236 = vld [vmem:[#allocation2 + $0x118] sm:$0xff]
    %v237 = vld [vmem:[#allocation3] sm:$0xff]
    %v238 = vld [vmem:[#allocation3 + $0x8] sm:$0xff]
    %v239 = vld [vmem:[#allocation3 + $0x10] sm:$0xff]
    %v240 = vld [vmem:[#allocation3 + $0x18] sm:$0xff]
    %v241 = vld [vmem:[#allocation3 + $0x20] sm:$0xff]
    %v242 = vld [vmem:[#allocation3 + $0x28] sm:$0xff]
    %v243 = vld [vmem:[#allocation3 + $0x30] sm:$0xff]
    %v244 = vld [vmem:[#allocation3 + $0x38] sm:$0xff]
    %v245 = vld [vmem:[#allocation3 + $0x40] sm:$0xff]
    %v246 = vld [vmem:[#allocation3 + $0x48] sm:$0xff]
    %v247 = vld [vmem:[#allocation3 + $0x50] sm:$0xff]
    %v248 = vld [vmem:[#allocation3 + $0x58] sm:$0xff]
    %v249 = vld [vmem:[#allocation3 + $0x60] sm:$0xff]
    %v250 = vld [vmem:[#allocation3 + $0x68] sm:$0xff]
    %v251 = vld [vmem:[#allocation3 + $0x70] sm:$0xff]
    %v252 = vld [vmem:[#allocation3 + $0x78] sm:$0xff]
    %v253 = vld [vmem:[#allocation3 + $0x80] sm:$0xff]
    %v254 = vld [vmem:[#allocation3 + $0x88] sm:$0xff]
    %v255 = vld [vmem:[#allocation3 + $0x90] sm:$0xff]
    %v256 = vld [vmem:[#allocation3 + $0x98] sm:$0xff]
    %v257 = vld [vmem:[#allocation3 + $0xa0] sm:$0xff]
    %v258 = vld [vmem:[#allocation3 + $0xa8] sm:$0xff]
    %v259 = vld [vmem:[#allocation3 + $0xb0] sm:$0xff]
    %v260 = vld [vmem:[#allocation3 + $0xb8] sm:$0xff]
    %v261 = vld [vmem:[#allocation3 + $0xc0] sm:$0xff]
    %v262 = vld [vmem:[#allocation3 + $0xc8] sm:$0xff]
    %v263 = vld [vmem:[#allocation3 + $0xd0] sm:$0xff]
    %v264 = vld [vmem:[#allocation3 + $0xd8] sm:$0xff]
    %v265 = vld [vmem:[#allocation3 + $0xe0] sm:$0xff]
    %v266 = vld [vmem:[#allocation3 + $0xe8] sm:$0xff]
    %v267 = vld [vmem:[#allocation3 + $0xf0] sm:$0xff]
    %v268 = vld [vmem:[#allocation3 + $0xf8] sm:$0xff]
    %v269 = vld [vmem:[#allocation3 + $0x100] sm:$0xff]
    %v270 = vld [vmem:[#allocation3 + $0x108] sm:$0xff]
    %v271 = vld [vmem:[#allocation3 + $0x110] sm:$0xff]
    %v272 = vld [vmem:[#allocation3 + $0x118] sm:$0xff]
    %v273 = vmul.f32 %v201, %v237
    %v274 = vmul.f32 %v202, %v238
    %v275 = vmul.f32 %v203, %v239
    %v276 = vmul.f32 %v204, %v240
    %v277 = vmul.f32 %v205, %v241
    %v278 = vmul.f32 %v206, %v242
    %v279 = vmul.f32 %v207, %v243
    %v280 = vmul.f32 %v208, %v244
    %v281 = vmul.f32 %v209, %v245
    %v282 = vmul.f32 %v210, %v246
    %v283 = vmul.f32 %v211, %v247
    %v284 = vmul.f32 %v212, %v248
    %v285 = vmul.f32 %v213, %v249
    %v286 = vmul.f32 %v214, %v250
    %v287 = vmul.f32 %v215, %v251
    %v288 = vmul.f32 %v216, %v252
    %v289 = vmul.f32 %v217, %v253
    %v290 = vmul.f32 %v218, %v254
    %v291 = vmul.f32 %v219, %v255
    %v292 = vmul.f32 %v220, %v256
    %v293 = vmul.f32 %v221, %v257
    %v294 = vmul.f32 %v222, %v258
    %v295 = vmul.f32 %v223, %v259
    %v296 = vmul.f32 %v224, %v260
    %v297 = vmul.f32 %v225, %v261
    %v298 = vmul.f32 %v226, %v262
    %v299 = vmul.f32 %v227, %v263
    %v300 = vmul.f32 %v228, %v264
    %v301 = vmul.f32 %v229, %v265
    %v302 = vmul.f32 %v230, %v266
    %v303 = vmul.f32 %v231, %v267
    %v304 = vmul.f32 %v232, %v268
    %v305 = vmul.f32 %v233, %v269
    %v306 = vmul.f32 %v234, %v270
    %v307 = vmul.f32 %v235, %v271
    %v308 = vmul.f32 %v236, %v272
    %v309 = vpack.c.bf16 %v277, %v273
    %v310 = vpack.c.bf16 %v278, %v274
    %v311 = vpack.c.bf16 %v279, %v275
    %v312 = vpack.c.bf16 %v280, %v276
    %v313 = vpack.c.bf16 %v285, %v281
    %v314 = vpack.c.bf16 %v286, %v282
    %v315 = vpack.c.bf16 %v287, %v283
    %v316 = vpack.c.bf16 %v288, %v284
    %v317 = vpack.c.bf16 %v293, %v289
    %v318 = vpack.c.bf16 %v294, %v290
    %v319 = vpack.c.bf16 %v295, %v291
    %v320 = vpack.c.bf16 %v296, %v292
    %v321 = vpack.c.bf16 %v301, %v297
    %v322 = vpack.c.bf16 %v302, %v298
    %v323 = vpack.c.bf16 %v303, %v299
    %v324 = vpack.c.bf16 %v304, %v300
    %v325 = vpack.c.bf16 %v305, %v305
    %v326 = vpack.c.bf16 %v306, %v306
    %v327 = vpack.c.bf16 %v307, %v307
    %v328 = vpack.c.bf16 %v308, %v308
    %v329 = vld [vmem:[%s3] sm:$0xf]
    %vm330 = vcmask 588800
    %v332 = vsel %vm330, %v329, 0
    %vm334 = vcmask 1043456
    %v336 = vsel %vm334, %v325, 0
    %v339 = vsel %vm334, %v326, 0
    %v342 = vsel %vm334, %v327, 0
    %v345 = vsel %vm334, %v328, 0
    %347 = vmatpush.bf16.msra.mxu0 0
    %348 = vmatpush.bf16.msra.mxu0 0
    %349 = vmatpush.bf16.msra.mxu0 0
    %350 = vmatpush.bf16.msra.mxu0 %v336
    %351 = vmatpush.bf16.msra.mxu0 %v321
    %352 = vmatpush.bf16.msra.mxu0 %v317
    %353 = vmatpush.bf16.msra.mxu0 %v313
    %354 = vmatpush.bf16.msra.mxu0 %v309
    %355 = vmatmul.bf16.gmra.mxu0 %v332
    %v356 = vpop.f32.mrf.mxu0
    %v357 = vadd.f32 0.0, %v356
    %v358 = vpop.f32.mrf.mxu0
    %359 = vdwg.mxu0
    %360 = vmatpush.bf16.msra.mxu0 0
    %361 = vmatpush.bf16.msra.mxu0 0
    %362 = vmatpush.bf16.msra.mxu0 0
    %363 = vmatpush.bf16.msra.mxu0 %v339
    %364 = vmatpush.bf16.msra.mxu0 %v322
    %365 = vmatpush.bf16.msra.mxu0 %v318
    %366 = vmatpush.bf16.msra.mxu0 %v314
    %367 = vmatpush.bf16.msra.mxu0 %v310
    %368 = vmatmul.bf16.gmra.mxu0 %v332
    %v369 = vpop.f32.mrf.mxu0
    %v370 = vadd.f32 0.0, %v369
    %v371 = vpop.f32.mrf.mxu0
    %372 = vdwg.mxu0
    %373 = vmatpush.bf16.msra.mxu0 0
    %374 = vmatpush.bf16.msra.mxu0 0
    %375 = vmatpush.bf16.msra.mxu0 0
    %376 = vmatpush.bf16.msra.mxu0 %v342
    %377 = vmatpush.bf16.msra.mxu0 %v323
    %378 = vmatpush.bf16.msra.mxu0 %v319
    %379 = vmatpush.bf16.msra.mxu0 %v315
    %380 = vmatpush.bf16.msra.mxu0 %v311
    %381 = vmatmul.bf16.gmra.mxu0 %v332
    %v382 = vpop.f32.mrf.mxu0
    %v383 = vadd.f32 0.0, %v382
    %v384 = vpop.f32.mrf.mxu0
    %385 = vdwg.mxu0
    %386 = vmatpush.bf16.msra.mxu0 0
    %387 = vmatpush.bf16.msra.mxu0 0
    %388 = vmatpush.bf16.msra.mxu0 0
    %389 = vmatpush.bf16.msra.mxu0 %v345
    %390 = vmatpush.bf16.msra.mxu0 %v324
    %391 = vmatpush.bf16.msra.mxu0 %v320
    %392 = vmatpush.bf16.msra.mxu0 %v316
    %393 = vmatpush.bf16.msra.mxu0 %v312
    %394 = vmatmul.bf16.gmra.mxu0 %v332
    %v395 = vpop.f32.mrf.mxu0
    %v396 = vadd.f32 0.0, %v395
    %v397 = vpop.f32.mrf.mxu0
    %398 = vdwg.mxu0
    %v399 = vld [vmem:[%s4] sm:$0xff]
    %v400 = vadd.f32 %v357, %v370
    %v401 = vadd.f32 %v400, %v383
    %v402 = vadd.f32 %v401, %v396
    %403 = vadd.xlane.f32.xlu0 %v402
    %v404 = vpop.xlane.xlu0 %403
    %v405 = vmul.f32 %v404, 0.001953125
    %v406 = vsub.f32 %v357, %v405
    %v407 = vsub.f32 %v370, %v405
    %v408 = vsub.f32 %v383, %v405
    %v409 = vsub.f32 %v396, %v405
    %v410 = vmul.f32 %v406, %v406
    %v411 = vmul.f32 %v407, %v407
    %v412 = vmul.f32 %v408, %v408
    %v413 = vmul.f32 %v409, %v409
    %v414 = vadd.f32 %v410, %v411
    %v415 = vadd.f32 %v414, %v412
    %v416 = vadd.f32 %v415, %v413
    %417 = vadd.xlane.f32.xlu0 %v416
    %v418 = vpop.xlane.xlu0 %417
    %v419 = vmul.f32 %v418, 0.001953125
    %v420 = vadd.f32 %v419, 1e-05
    %v421 = vrsqrt.pop %v420
    %v422 = vmul.f32 %v421, %v420
    %v423 = vmul.f32 %v422, %v421
    %v424 = vmul.f32 0.5, %v423
    %v425 = vsub.f32 1.5, %v424
    %v426 = vmul.f32 %v421, %v425
    %vm427 = vweird.f32 %v420
    %vm428 = vweird.f32 %v421
    %vm429 = vmor %vm427, %vm428
    %v430 = vsel %vm429, %v421, %v426
    %v431 = vmul.f32 %v430, %v399
    %433 = vset.pattern.permute.xlu0 0
    %434 = vperm.xlu0 %433, %v431
    %v435 = vpop.permute.xlu0 %434
    %v437 = vmul.f32 %v406, %v435
    %v438 = vmul.f32 %v407, %v435
    %v439 = vmul.f32 %v408, %v435
    %v440 = vmul.f32 %v409, %v435
    %442 = vset.pattern.permute.xlu0 1
    %443 = vperm.xlu0 %442, %v399
    %v444 = vpop.permute.xlu0 %443
    %v446 = vadd.f32 %v437, %v444
    %v447 = vadd.f32 %v438, %v444
    %v448 = vadd.f32 %v439, %v444
    %v449 = vadd.f32 %v440, %v444
    %v450 = vmax.f32 %v446, 0.0
    %v451 = vmax.f32 %v447, 0.0
    %v452 = vmax.f32 %v448, 0.0
    %v453 = vmax.f32 %v449, 0.0
    %454 = vrot.lane.b32.xlu0 %v450, 17
    %v455 = vpop.permute.xlu0 %454
    %456 = vrot.lane.b32.xlu0 %v451, 17
    %v457 = vpop.permute.xlu0 %456
    %458 = vrot.lane.b32.xlu0 %v452, 17
    %v459 = vpop.permute.xlu0 %458
    %460 = vrot.lane.b32.xlu0 %v453, 17
    %v461 = vpop.permute.xlu0 %460
    %v462 = vsel %vm69, %v459, %v461
    %v463 = vsel %vm69, %v457, %v459
    %v464 = vsel %vm69, %v455, %v457
    %v465 = vsel %vm69, %v461, %v455
    %466 = vst [vmem:[#allocation2] sm:$0xff] %v465
    %467 = vst [vmem:[#allocation2 + $0x8] sm:$0xff] %v464
    %468 = vst [vmem:[#allocation2 + $0x10] sm:$0xff] %v463
    %469 = vst [vmem:[#allocation2 + $0x18] sm:$0xff] %v462
    %470 = vrot.lane.b32.xlu0 %v450, 16
    %v471 = vpop.permute.xlu0 %470
    %472 = vrot.lane.b32.xlu0 %v451, 16
    %v473 = vpop.permute.xlu0 %472
    %474 = vrot.lane.b32.xlu0 %v452, 16
    %v475 = vpop.permute.xlu0 %474
    %476 = vrot.lane.b32.xlu0 %v453, 16
    %v477 = vpop.permute.xlu0 %476
    %v478 = vsel %vm86, %v475, %v477
    %v479 = vsel %vm86, %v473, %v475
    %v480 = vsel %vm86, %v471, %v473
    %v481 = vsel %vm86, %v477, %v471
    %482 = vst [vmem:[#allocation2 + $0x20] sm:$0xff] %v481
    %483 = vst [vmem:[#allocation2 + $0x28] sm:$0xff] %v480
    %484 = vst [vmem:[#allocation2 + $0x30] sm:$0xff] %v479
    %485 = vst [vmem:[#allocation2 + $0x38] sm:$0xff] %v478
    %486 = vrot.lane.b32.xlu0 %v450, 15
    %v487 = vpop.permute.xlu0 %486
    %488 = vrot.lane.b32.xlu0 %v451, 15
    %v489 = vpop.permute.xlu0 %488
    %490 = vrot.lane.b32.xlu0 %v452, 15
    %v491 = vpop.permute.xlu0 %490
    %492 = vrot.lane.b32.xlu0 %v453, 15
    %v493 = vpop.permute.xlu0 %492
    %v494 = vsel %vm103, %v491, %v493
    %v495 = vsel %vm103, %v489, %v491
    %v496 = vsel %vm103, %v487, %v489
    %v497 = vsel %vm103, %v493, %v487
    %498 = vst [vmem:[#allocation2 + $0x40] sm:$0xff] %v497
    %499 = vst [vmem:[#allocation2 + $0x48] sm:$0xff] %v496
    %500 = vst [vmem:[#allocation2 + $0x50] sm:$0xff] %v495
    %501 = vst [vmem:[#allocation2 + $0x58] sm:$0xff] %v494
    %502 = vrot.lane.b32.xlu0 %v450, 1
    %v503 = vpop.permute.xlu0 %502
    %504 = vrot.lane.b32.xlu0 %v451, 1
    %v505 = vpop.permute.xlu0 %504
    %506 = vrot.lane.b32.xlu0 %v452, 1
    %v507 = vpop.permute.xlu0 %506
    %508 = vrot.lane.b32.xlu0 %v453, 1
    %v509 = vpop.permute.xlu0 %508
    %v510 = vsel %vm120, %v507, %v509
    %v511 = vsel %vm120, %v505, %v507
    %v512 = vsel %vm120, %v503, %v505
    %v513 = vsel %vm120, %v509, %v503
    %514 = vst [vmem:[#allocation2 + $0x60] sm:$0xff] %v513
    %515 = vst [vmem:[#allocation2 + $0x68] sm:$0xff] %v512
    %516 = vst [vmem:[#allocation2 + $0x70] sm:$0xff] %v511
    %517 = vst [vmem:[#allocation2 + $0x78] sm:$0xff] %v510
    %518 = vst [vmem:[#allocation2 + $0x80] sm:$0xff] %v450
    %519 = vst [vmem:[#allocation2 + $0x88] sm:$0xff] %v451
    %520 = vst [vmem:[#allocation2 + $0x90] sm:$0xff] %v452
    %521 = vst [vmem:[#allocation2 + $0x98] sm:$0xff] %v453
    %522 = vrot.lane.b32.xlu0 %v450, 127
    %v523 = vpop.permute.xlu0 %522
    %524 = vrot.lane.b32.xlu0 %v451, 127
    %v525 = vpop.permute.xlu0 %524
    %526 = vrot.lane.b32.xlu0 %v452, 127
    %v527 = vpop.permute.xlu0 %526
    %528 = vrot.lane.b32.xlu0 %v453, 127
    %v529 = vpop.permute.xlu0 %528
    %v530 = vsel %vm141, %v527, %v529
    %v531 = vsel %vm141, %v525, %v527
    %v532 = vsel %vm141, %v523, %v525
    %v533 = vsel %vm141, %v529, %v523
    %534 = vst [vmem:[#allocation2 + $0xa0] sm:$0xff] %v532
    %535 = vst [vmem:[#allocation2 + $0xa8] sm:$0xff] %v531
    %536 = vst [vmem:[#allocation2 + $0xb0] sm:$0xff] %v530
    %537 = vst [vmem:[#allocation2 + $0xb8] sm:$0xff] %v533
    %538 = vrot.lane.b32.xlu0 %v450, 113
    %v539 = vpop.permute.xlu0 %538
    %540 = vrot.lane.b32.xlu0 %v451, 113
    %v541 = vpop.permute.xlu0 %540
    %542 = vrot.lane.b32.xlu0 %v452, 113
    %v543 = vpop.permute.xlu0 %542
    %544 = vrot.lane.b32.xlu0 %v453, 113
    %v545 = vpop.permute.xlu0 %544
    %v546 = vsel %vm158, %v543, %v545
    %v547 = vsel %vm158, %v541, %v543
    %v548 = vsel %vm158, %v539, %v541
    %v549 = vsel %vm158, %v545, %v539
    %550 = vst [vmem:[#allocation2 + $0xc0] sm:$0xff] %v548
    %551 = vst [vmem:[#allocation2 + $0xc8] sm:$0xff] %v547
    %552 = vst [vmem:[#allocation2 + $0xd0] sm:$0xff] %v546
    %553 = vst [vmem:[#allocation2 + $0xd8] sm:$0xff] %v549
    %554 = vrot.lane.b32.xlu0 %v450, 112
    %v555 = vpop.permute.xlu0 %554
    %556 = vrot.lane.b32.xlu0 %v451, 112
    %v557 = vpop.permute.xlu0 %556
    %558 = vrot.lane.b32.xlu0 %v452, 112
    %v559 = vpop.permute.xlu0 %558
    %560 = vrot.lane.b32.xlu0 %v453, 112
    %v561 = vpop.permute.xlu0 %560
    %v562 = vsel %vm175, %v559, %v561
    %v563 = vsel %vm175, %v557, %v559
    %v564 = vsel %vm175, %v555, %v557
    %v565 = vsel %vm175, %v561, %v555
    %566 = vst [vmem:[#allocation2 + $0xe0] sm:$0xff] %v564
    %567 = vst [vmem:[#allocation2 + $0xe8] sm:$0xff] %v563
    %568 = vst [vmem:[#allocation2 + $0xf0] sm:$0xff] %v562
    %569 = vst [vmem:[#allocation2 + $0xf8] sm:$0xff] %v565
    %570 = vrot.lane.b32.xlu0 %v450, 111
    %v571 = vpop.permute.xlu0 %570
    %572 = vrot.lane.b32.xlu0 %v451, 111
    %v573 = vpop.permute.xlu0 %572
    %574 = vrot.lane.b32.xlu0 %v452, 111
    %v575 = vpop.permute.xlu0 %574
    %576 = vrot.lane.b32.xlu0 %v453, 111
    %v577 = vpop.permute.xlu0 %576
    %v578 = vsel %vm192, %v575, %v577
    %v579 = vsel %vm192, %v573, %v575
    %v580 = vsel %vm192, %v571, %v573
    %v581 = vsel %vm192, %v577, %v571
    %582 = vst [vmem:[#allocation2 + $0x100] sm:$0xff] %v580
    %583 = vst [vmem:[#allocation2 + $0x108] sm:$0xff] %v579
    %584 = vst [vmem:[#allocation2 + $0x110] sm:$0xff] %v578
    %585 = vst [vmem:[#allocation2 + $0x118] sm:$0xff] %v581
    %v586 = vld [vmem:[#allocation2] sm:$0xff]
    %v587 = vld [vmem:[#allocation2 + $0x8] sm:$0xff]
    %v588 = vld [vmem:[#allocation2 + $0x10] sm:$0xff]
    %v589 = vld [vmem:[#allocation2 + $0x18] sm:$0xff]
    %v590 = vld [vmem:[#allocation2 + $0x20] sm:$0xff]
    %v591 = vld [vmem:[#allocation2 + $0x28] sm:$0xff]
    %v592 = vld [vmem:[#allocation2 + $0x30] sm:$0xff]
    %v593 = vld [vmem:[#allocation2 + $0x38] sm:$0xff]
    %v594 = vld [vmem:[#allocation2 + $0x40] sm:$0xff]
    %v595 = vld [vmem:[#allocation2 + $0x48] sm:$0xff]
    %v596 = vld [vmem:[#allocation2 + $0x50] sm:$0xff]
    %v597 = vld [vmem:[#allocation2 + $0x58] sm:$0xff]
    %v598 = vld [vmem:[#allocation2 + $0x60] sm:$0xff]
    %v599 = vld [vmem:[#allocation2 + $0x68] sm:$0xff]
    %v600 = vld [vmem:[#allocation2 + $0x70] sm:$0xff]
    %v601 = vld [vmem:[#allocation2 + $0x78] sm:$0xff]
    %v602 = vld [vmem:[#allocation2 + $0x80] sm:$0xff]
    %v603 = vld [vmem:[#allocation2 + $0x88] sm:$0xff]
    %v604 = vld [vmem:[#allocation2 + $0x90] sm:$0xff]
    %v605 = vld [vmem:[#allocation2 + $0x98] sm:$0xff]
    %v606 = vld [vmem:[#allocation2 + $0xa0] sm:$0xff]
    %v607 = vld [vmem:[#allocation2 + $0xa8] sm:$0xff]
    %v608 = vld [vmem:[#allocation2 + $0xb0] sm:$0xff]
    %v609 = vld [vmem:[#allocation2 + $0xb8] sm:$0xff]
    %v610 = vld [vmem:[#allocation2 + $0xc0] sm:$0xff]
    %v611 = vld [vmem:[#allocation2 + $0xc8] sm:$0xff]
    %v612 = vld [vmem:[#allocation2 + $0xd0] sm:$0xff]
    %v613 = vld [vmem:[#allocation2 + $0xd8] sm:$0xff]
    %v614 = vld [vmem:[#allocation2 + $0xe0] sm:$0xff]
    %v615 = vld [vmem:[#allocation2 + $0xe8] sm:$0xff]
    %v616 = vld [vmem:[#allocation2 + $0xf0] sm:$0xff]
    %v617 = vld [vmem:[#allocation2 + $0xf8] sm:$0xff]
    %v618 = vld [vmem:[#allocation2 + $0x100] sm:$0xff]
    %v619 = vld [vmem:[#allocation2 + $0x108] sm:$0xff]
    %v620 = vld [vmem:[#allocation2 + $0x110] sm:$0xff]
    %v621 = vld [vmem:[#allocation2 + $0x118] sm:$0xff]
    %v622 = vld [vmem:[#allocation3] sm:$0xff]
    %v623 = vld [vmem:[#allocation3 + $0x8] sm:$0xff]
    %v624 = vld [vmem:[#allocation3 + $0x10] sm:$0xff]
    %v625 = vld [vmem:[#allocation3 + $0x18] sm:$0xff]
    %v626 = vld [vmem:[#allocation3 + $0x20] sm:$0xff]
    %v627 = vld [vmem:[#allocation3 + $0x28] sm:$0xff]
    %v628 = vld [vmem:[#allocation3 + $0x30] sm:$0xff]
    %v629 = vld [vmem:[#allocation3 + $0x38] sm:$0xff]
    %v630 = vld [vmem:[#allocation3 + $0x40] sm:$0xff]
    %v631 = vld [vmem:[#allocation3 + $0x48] sm:$0xff]
    %v632 = vld [vmem:[#allocation3 + $0x50] sm:$0xff]
    %v633 = vld [vmem:[#allocation3 + $0x58] sm:$0xff]
    %v634 = vld [vmem:[#allocation3 + $0x60] sm:$0xff]
    %v635 = vld [vmem:[#allocation3 + $0x68] sm:$0xff]
    %v636 = vld [vmem:[#allocation3 + $0x70] sm:$0xff]
    %v637 = vld [vmem:[#allocation3 + $0x78] sm:$0xff]
    %v638 = vld [vmem:[#allocation3 + $0x80] sm:$0xff]
    %v639 = vld [vmem:[#allocation3 + $0x88] sm:$0xff]
    %v640 = vld [vmem:[#allocation3 + $0x90] sm:$0xff]
    %v641 = vld [vmem:[#allocation3 + $0x98] sm:$0xff]
    %v642 = vld [vmem:[#allocation3 + $0xa0] sm:$0xff]
    %v643 = vld [vmem:[#allocation3 + $0xa8] sm:$0xff]
    %v644 = vld [vmem:[#allocation3 + $0xb0] sm:$0xff]
    %v645 = vld [vmem:[#allocation3 + $0xb8] sm:$0xff]
    %v646 = vld [vmem:[#allocation3 + $0xc0] sm:$0xff]
    %v647 = vld [vmem:[#allocation3 + $0xc8] sm:$0xff]
    %v648 = vld [vmem:[#allocation3 + $0xd0] sm:$0xff]
    %v649 = vld [vmem:[#allocation3 + $0xd8] sm:$0xff]
    %v650 = vld [vmem:[#allocation3 + $0xe0] sm:$0xff]
    %v651 = vld [vmem:[#allocation3 + $0xe8] sm:$0xff]
    %v652 = vld [vmem:[#allocation3 + $0xf0] sm:$0xff]
    %v653 = vld [vmem:[#allocation3 + $0xf8] sm:$0xff]
    %v654 = vld [vmem:[#allocation3 + $0x100] sm:$0xff]
    %v655 = vld [vmem:[#allocation3 + $0x108] sm:$0xff]
    %v656 = vld [vmem:[#allocation3 + $0x110] sm:$0xff]
    %v657 = vld [vmem:[#allocation3 + $0x118] sm:$0xff]
    %v658 = vmul.f32 %v586, %v622
    %v659 = vmul.f32 %v587, %v623
    %v660 = vmul.f32 %v588, %v624
    %v661 = vmul.f32 %v589, %v625
    %v662 = vmul.f32 %v590, %v626
    %v663 = vmul.f32 %v591, %v627
    %v664 = vmul.f32 %v592, %v628
    %v665 = vmul.f32 %v593, %v629
    %v666 = vmul.f32 %v594, %v630
    %v667 = vmul.f32 %v595, %v631
    %v668 = vmul.f32 %v596, %v632
    %v669 = vmul.f32 %v597, %v633
    %v670 = vmul.f32 %v598, %v634
    %v671 = vmul.f32 %v599, %v635
    %v672 = vmul.f32 %v600, %v636
    %v673 = vmul.f32 %v601, %v637
    %v674 = vmul.f32 %v602, %v638
    %v675 = vmul.f32 %v603, %v639
    %v676 = vmul.f32 %v604, %v640
    %v677 = vmul.f32 %v605, %v641
    %v678 = vmul.f32 %v606, %v642
    %v679 = vmul.f32 %v607, %v643
    %v680 = vmul.f32 %v608, %v644
    %v681 = vmul.f32 %v609, %v645
    %v682 = vmul.f32 %v610, %v646
    %v683 = vmul.f32 %v611, %v647
    %v684 = vmul.f32 %v612, %v648
    %v685 = vmul.f32 %v613, %v649
    %v686 = vmul.f32 %v614, %v650
    %v687 = vmul.f32 %v615, %v651
    %v688 = vmul.f32 %v616, %v652
    %v689 = vmul.f32 %v617, %v653
    %v690 = vmul.f32 %v618, %v654
    %v691 = vmul.f32 %v619, %v655
    %v692 = vmul.f32 %v620, %v656
    %v693 = vmul.f32 %v621, %v657
    %v694 = vpack.c.bf16 %v662, %v658
    %v695 = vpack.c.bf16 %v663, %v659
    %v696 = vpack.c.bf16 %v664, %v660
    %v697 = vpack.c.bf16 %v665, %v661
    %v698 = vpack.c.bf16 %v670, %v666
    %v699 = vpack.c.bf16 %v671, %v667
    %v700 = vpack.c.bf16 %v672, %v668
    %v701 = vpack.c.bf16 %v673, %v669
    %v702 = vpack.c.bf16 %v678, %v674
    %v703 = vpack.c.bf16 %v679, %v675
    %v704 = vpack.c.bf16 %v680, %v676
    %v705 = vpack.c.bf16 %v681, %v677
    %v706 = vpack.c.bf16 %v686, %v682
    %v707 = vpack.c.bf16 %v687, %v683
    %v708 = vpack.c.bf16 %v688, %v684
    %v709 = vpack.c.bf16 %v689, %v685
    %v710 = vpack.c.bf16 %v690, %v690
    %v711 = vpack.c.bf16 %v691, %v691
    %v712 = vpack.c.bf16 %v692, %v692
    %v713 = vpack.c.bf16 %v693, %v693
    %v714 = vld [vmem:[%s3 + $0x14] sm:$0xf]
    %v716 = vsel %vm330, %v714, 0
    %v719 = vsel %vm334, %v710, 0
    %v722 = vsel %vm334, %v711, 0
    %v725 = vsel %vm334, %v712, 0
    %v728 = vsel %vm334, %v713, 0
    %730 = vmatpush.bf16.msra.mxu0 0
    %731 = vmatpush.bf16.msra.mxu0 0
    %732 = vmatpush.bf16.msra.mxu0 0
    %733 = vmatpush.bf16.msra.mxu0 %v719
    %734 = vmatpush.bf16.msra.mxu0 %v706
    %735 = vmatpush.bf16.msra.mxu0 %v702
    %736 = vmatpush.bf16.msra.mxu0 %v698
    %737 = vmatpush.bf16.msra.mxu0 %v694
    %738 = vmatmul.bf16.gmra.mxu0 %v716
    %v739 = vpop.f32.mrf.mxu0
    %v740 = vadd.f32 0.0, %v739
    %v741 = vpop.f32.mrf.mxu0
    %742 = vdwg.mxu0
    %743 = vmatpush.bf16.msra.mxu0 0
    %744 = vmatpush.bf16.msra.mxu0 0
    %745 = vmatpush.bf16.msra.mxu0 0
    %746 = vmatpush.bf16.msra.mxu0 %v722
    %747 = vmatpush.bf16.msra.mxu0 %v707
    %748 = vmatpush.bf16.msra.mxu0 %v703
    %749 = vmatpush.bf16.msra.mxu0 %v699
    %750 = vmatpush.bf16.msra.mxu0 %v695
    %751 = vmatmul.bf16.gmra.mxu0 %v716
    %v752 = vpop.f32.mrf.mxu0
    %v753 = vadd.f32 0.0, %v752
    %v754 = vpop.f32.mrf.mxu0
    %755 = vdwg.mxu0
    %756 = vmatpush.bf16.msra.mxu0 0
    %757 = vmatpush.bf16.msra.mxu0 0
    %758 = vmatpush.bf16.msra.mxu0 0
    %759 = vmatpush.bf16.msra.mxu0 %v725
    %760 = vmatpush.bf16.msra.mxu0 %v708
    %761 = vmatpush.bf16.msra.mxu0 %v704
    %762 = vmatpush.bf16.msra.mxu0 %v700
    %763 = vmatpush.bf16.msra.mxu0 %v696
    %764 = vmatmul.bf16.gmra.mxu0 %v716
    %v765 = vpop.f32.mrf.mxu0
    %v766 = vadd.f32 0.0, %v765
    %v767 = vpop.f32.mrf.mxu0
    %768 = vdwg.mxu0
    %769 = vmatpush.bf16.msra.mxu0 0
    %770 = vmatpush.bf16.msra.mxu0 0
    %771 = vmatpush.bf16.msra.mxu0 0
    %772 = vmatpush.bf16.msra.mxu0 %v728
    %773 = vmatpush.bf16.msra.mxu0 %v709
    %774 = vmatpush.bf16.msra.mxu0 %v705
    %775 = vmatpush.bf16.msra.mxu0 %v701
    %776 = vmatpush.bf16.msra.mxu0 %v697
    %777 = vmatmul.bf16.gmra.mxu0 %v716
    %v778 = vpop.f32.mrf.mxu0
    %v779 = vadd.f32 0.0, %v778
    %v780 = vpop.f32.mrf.mxu0
    %781 = vdwg.mxu0
    %v782 = vld [vmem:[%s4 + $0x8] sm:$0xff]
    %v783 = vadd.f32 %v740, %v753
    %v784 = vadd.f32 %v783, %v766
    %v785 = vadd.f32 %v784, %v779
    %786 = vadd.xlane.f32.xlu0 %v785
    %v787 = vpop.xlane.xlu0 %786
    %v788 = vmul.f32 %v787, 0.001953125
    %v789 = vsub.f32 %v740, %v788
    %v790 = vsub.f32 %v753, %v788
    %v791 = vsub.f32 %v766, %v788
    %v792 = vsub.f32 %v779, %v788
    %v793 = vmul.f32 %v789, %v789
    %v794 = vmul.f32 %v790, %v790
    %v795 = vmul.f32 %v791, %v791
    %v796 = vmul.f32 %v792, %v792
    %v797 = vadd.f32 %v793, %v794
    %v798 = vadd.f32 %v797, %v795
    %v799 = vadd.f32 %v798, %v796
    %800 = vadd.xlane.f32.xlu0 %v799
    %v801 = vpop.xlane.xlu0 %800
    %v802 = vmul.f32 %v801, 0.001953125
    %v803 = vadd.f32 %v802, 1e-05
    %v804 = vrsqrt.pop %v803
    %v805 = vmul.f32 %v804, %v803
    %v806 = vmul.f32 %v805, %v804
    %v807 = vmul.f32 0.5, %v806
    %v808 = vsub.f32 1.5, %v807
    %v809 = vmul.f32 %v804, %v808
    %vm810 = vweird.f32 %v803
    %vm811 = vweird.f32 %v804
    %vm812 = vmor %vm810, %vm811
    %v813 = vsel %vm812, %v804, %v809
    %v814 = vmul.f32 %v813, %v782
    %816 = vset.pattern.permute.xlu0 0
    %817 = vperm.xlu0 %816, %v814
    %v818 = vpop.permute.xlu0 %817
    %v820 = vmul.f32 %v789, %v818
    %v821 = vmul.f32 %v790, %v818
    %v822 = vmul.f32 %v791, %v818
    %v823 = vmul.f32 %v792, %v818
    %825 = vset.pattern.permute.xlu0 1
    %826 = vperm.xlu0 %825, %v782
    %v827 = vpop.permute.xlu0 %826
    %v829 = vadd.f32 %v820, %v827
    %v830 = vadd.f32 %v821, %v827
    %v831 = vadd.f32 %v822, %v827
    %v832 = vadd.f32 %v823, %v827
    %v833 = vmax.f32 %v829, 0.0
    %v834 = vmax.f32 %v830, 0.0
    %v835 = vmax.f32 %v831, 0.0
    %v836 = vmax.f32 %v832, 0.0
    %837 = vrot.lane.b32.xlu0 %v833, 17
    %v838 = vpop.permute.xlu0 %837
    %839 = vrot.lane.b32.xlu0 %v834, 17
    %v840 = vpop.permute.xlu0 %839
    %841 = vrot.lane.b32.xlu0 %v835, 17
    %v842 = vpop.permute.xlu0 %841
    %843 = vrot.lane.b32.xlu0 %v836, 17
    %v844 = vpop.permute.xlu0 %843
    %v845 = vsel %vm69, %v842, %v844
    %v846 = vsel %vm69, %v840, %v842
    %v847 = vsel %vm69, %v838, %v840
    %v848 = vsel %vm69, %v844, %v838
    %849 = vst [vmem:[#allocation2] sm:$0xff] %v848
    %850 = vst [vmem:[#allocation2 + $0x8] sm:$0xff] %v847
    %851 = vst [vmem:[#allocation2 + $0x10] sm:$0xff] %v846
    %852 = vst [vmem:[#allocation2 + $0x18] sm:$0xff] %v845
    %853 = vrot.lane.b32.xlu0 %v833, 16
    %v854 = vpop.permute.xlu0 %853
    %855 = vrot.lane.b32.xlu0 %v834, 16
    %v856 = vpop.permute.xlu0 %855
    %857 = vrot.lane.b32.xlu0 %v835, 16
    %v858 = vpop.permute.xlu0 %857
    %859 = vrot.lane.b32.xlu0 %v836, 16
    %v860 = vpop.permute.xlu0 %859
    %v861 = vsel %vm86, %v858, %v860
    %v862 = vsel %vm86, %v856, %v858
    %v863 = vsel %vm86, %v854, %v856
    %v864 = vsel %vm86, %v860, %v854
    %865 = vst [vmem:[#allocation2 + $0x20] sm:$0xff] %v864
    %866 = vst [vmem:[#allocation2 + $0x28] sm:$0xff] %v863
    %867 = vst [vmem:[#allocation2 + $0x30] sm:$0xff] %v862
    %868 = vst [vmem:[#allocation2 + $0x38] sm:$0xff] %v861
    %869 = vrot.lane.b32.xlu0 %v833, 15
    %v870 = vpop.permute.xlu0 %869
    %871 = vrot.lane.b32.xlu0 %v834, 15
    %v872 = vpop.permute.xlu0 %871
    %873 = vrot.lane.b32.xlu0 %v835, 15
    %v874 = vpop.permute.xlu0 %873
    %875 = vrot.lane.b32.xlu0 %v836, 15
    %v876 = vpop.permute.xlu0 %875
    %v877 = vsel %vm103, %v874, %v876
    %v878 = vsel %vm103, %v872, %v874
    %v879 = vsel %vm103, %v870, %v872
    %v880 = vsel %vm103, %v876, %v870
    %881 = vst [vmem:[#allocation2 + $0x40] sm:$0xff] %v880
    %882 = vst [vmem:[#allocation2 + $0x48] sm:$0xff] %v879
    %883 = vst [vmem:[#allocation2 + $0x50] sm:$0xff] %v878
    %884 = vst [vmem:[#allocation2 + $0x58] sm:$0xff] %v877
    %885 = vrot.lane.b32.xlu0 %v833, 1
    %v886 = vpop.permute.xlu0 %885
    %887 = vrot.lane.b32.xlu0 %v834, 1
    %v888 = vpop.permute.xlu0 %887
    %889 = vrot.lane.b32.xlu0 %v835, 1
    %v890 = vpop.permute.xlu0 %889
    %891 = vrot.lane.b32.xlu0 %v836, 1
    %v892 = vpop.permute.xlu0 %891
    %v893 = vsel %vm120, %v890, %v892
    %v894 = vsel %vm120, %v888, %v890
    %v895 = vsel %vm120, %v886, %v888
    %v896 = vsel %vm120, %v892, %v886
    %897 = vst [vmem:[#allocation2 + $0x60] sm:$0xff] %v896
    %898 = vst [vmem:[#allocation2 + $0x68] sm:$0xff] %v895
    %899 = vst [vmem:[#allocation2 + $0x70] sm:$0xff] %v894
    %900 = vst [vmem:[#allocation2 + $0x78] sm:$0xff] %v893
    %901 = vst [vmem:[#allocation2 + $0x80] sm:$0xff] %v833
    %902 = vst [vmem:[#allocation2 + $0x88] sm:$0xff] %v834
    %903 = vst [vmem:[#allocation2 + $0x90] sm:$0xff] %v835
    %904 = vst [vmem:[#allocation2 + $0x98] sm:$0xff] %v836
    %905 = vrot.lane.b32.xlu0 %v833, 127
    %v906 = vpop.permute.xlu0 %905
    %907 = vrot.lane.b32.xlu0 %v834, 127
    %v908 = vpop.permute.xlu0 %907
    %909 = vrot.lane.b32.xlu0 %v835, 127
    %v910 = vpop.permute.xlu0 %909
    %911 = vrot.lane.b32.xlu0 %v836, 127
    %v912 = vpop.permute.xlu0 %911
    %v913 = vsel %vm141, %v910, %v912
    %v914 = vsel %vm141, %v908, %v910
    %v915 = vsel %vm141, %v906, %v908
    %v916 = vsel %vm141, %v912, %v906
    %917 = vst [vmem:[#allocation2 + $0xa0] sm:$0xff] %v915
    %918 = vst [vmem:[#allocation2 + $0xa8] sm:$0xff] %v914
    %919 = vst [vmem:[#allocation2 + $0xb0] sm:$0xff] %v913
    %920 = vst [vmem:[#allocation2 + $0xb8] sm:$0xff] %v916
    %921 = vrot.lane.b32.xlu0 %v833, 113
    %v922 = vpop.permute.xlu0 %921
    %923 = vrot.lane.b32.xlu0 %v834, 113
    %v924 = vpop.permute.xlu0 %923
    %925 = vrot.lane.b32.xlu0 %v835, 113
    %v926 = vpop.permute.xlu0 %925
    %927 = vrot.lane.b32.xlu0 %v836, 113
    %v928 = vpop.permute.xlu0 %927
    %v929 = vsel %vm158, %v926, %v928
    %v930 = vsel %vm158, %v924, %v926
    %v931 = vsel %vm158, %v922, %v924
    %v932 = vsel %vm158, %v928, %v922
    %933 = vst [vmem:[#allocation2 + $0xc0] sm:$0xff] %v931
    %934 = vst [vmem:[#allocation2 + $0xc8] sm:$0xff] %v930
    %935 = vst [vmem:[#allocation2 + $0xd0] sm:$0xff] %v929
    %936 = vst [vmem:[#allocation2 + $0xd8] sm:$0xff] %v932
    %937 = vrot.lane.b32.xlu0 %v833, 112
    %v938 = vpop.permute.xlu0 %937
    %939 = vrot.lane.b32.xlu0 %v834, 112
    %v940 = vpop.permute.xlu0 %939
    %941 = vrot.lane.b32.xlu0 %v835, 112
    %v942 = vpop.permute.xlu0 %941
    %943 = vrot.lane.b32.xlu0 %v836, 112
    %v944 = vpop.permute.xlu0 %943
    %v945 = vsel %vm175, %v942, %v944
    %v946 = vsel %vm175, %v940, %v942
    %v947 = vsel %vm175, %v938, %v940
    %v948 = vsel %vm175, %v944, %v938
    %949 = vst [vmem:[#allocation2 + $0xe0] sm:$0xff] %v947
    %950 = vst [vmem:[#allocation2 + $0xe8] sm:$0xff] %v946
    %951 = vst [vmem:[#allocation2 + $0xf0] sm:$0xff] %v945
    %952 = vst [vmem:[#allocation2 + $0xf8] sm:$0xff] %v948
    %953 = vrot.lane.b32.xlu0 %v833, 111
    %v954 = vpop.permute.xlu0 %953
    %955 = vrot.lane.b32.xlu0 %v834, 111
    %v956 = vpop.permute.xlu0 %955
    %957 = vrot.lane.b32.xlu0 %v835, 111
    %v958 = vpop.permute.xlu0 %957
    %959 = vrot.lane.b32.xlu0 %v836, 111
    %v960 = vpop.permute.xlu0 %959
    %v961 = vsel %vm192, %v958, %v960
    %v962 = vsel %vm192, %v956, %v958
    %v963 = vsel %vm192, %v954, %v956
    %v964 = vsel %vm192, %v960, %v954
    %965 = vst [vmem:[#allocation2 + $0x100] sm:$0xff] %v963
    %966 = vst [vmem:[#allocation2 + $0x108] sm:$0xff] %v962
    %967 = vst [vmem:[#allocation2 + $0x110] sm:$0xff] %v961
    %968 = vst [vmem:[#allocation2 + $0x118] sm:$0xff] %v964
    %v969 = vld [vmem:[#allocation2] sm:$0xff]
    %v970 = vld [vmem:[#allocation2 + $0x8] sm:$0xff]
    %v971 = vld [vmem:[#allocation2 + $0x10] sm:$0xff]
    %v972 = vld [vmem:[#allocation2 + $0x18] sm:$0xff]
    %v973 = vld [vmem:[#allocation2 + $0x20] sm:$0xff]
    %v974 = vld [vmem:[#allocation2 + $0x28] sm:$0xff]
    %v975 = vld [vmem:[#allocation2 + $0x30] sm:$0xff]
    %v976 = vld [vmem:[#allocation2 + $0x38] sm:$0xff]
    %v977 = vld [vmem:[#allocation2 + $0x40] sm:$0xff]
    %v978 = vld [vmem:[#allocation2 + $0x48] sm:$0xff]
    %v979 = vld [vmem:[#allocation2 + $0x50] sm:$0xff]
    %v980 = vld [vmem:[#allocation2 + $0x58] sm:$0xff]
    %v981 = vld [vmem:[#allocation2 + $0x60] sm:$0xff]
    %v982 = vld [vmem:[#allocation2 + $0x68] sm:$0xff]
    %v983 = vld [vmem:[#allocation2 + $0x70] sm:$0xff]
    %v984 = vld [vmem:[#allocation2 + $0x78] sm:$0xff]
    %v985 = vld [vmem:[#allocation2 + $0x80] sm:$0xff]
    %v986 = vld [vmem:[#allocation2 + $0x88] sm:$0xff]
    %v987 = vld [vmem:[#allocation2 + $0x90] sm:$0xff]
    %v988 = vld [vmem:[#allocation2 + $0x98] sm:$0xff]
    %v989 = vld [vmem:[#allocation2 + $0xa0] sm:$0xff]
    %v990 = vld [vmem:[#allocation2 + $0xa8] sm:$0xff]
    %v991 = vld [vmem:[#allocation2 + $0xb0] sm:$0xff]
    %v992 = vld [vmem:[#allocation2 + $0xb8] sm:$0xff]
    %v993 = vld [vmem:[#allocation2 + $0xc0] sm:$0xff]
    %v994 = vld [vmem:[#allocation2 + $0xc8] sm:$0xff]
    %v995 = vld [vmem:[#allocation2 + $0xd0] sm:$0xff]
    %v996 = vld [vmem:[#allocation2 + $0xd8] sm:$0xff]
    %v997 = vld [vmem:[#allocation2 + $0xe0] sm:$0xff]
    %v998 = vld [vmem:[#allocation2 + $0xe8] sm:$0xff]
    %v999 = vld [vmem:[#allocation2 + $0xf0] sm:$0xff]
    %v1000 = vld [vmem:[#allocation2 + $0xf8] sm:$0xff]
    %v1001 = vld [vmem:[#allocation2 + $0x100] sm:$0xff]
    %v1002 = vld [vmem:[#allocation2 + $0x108] sm:$0xff]
    %v1003 = vld [vmem:[#allocation2 + $0x110] sm:$0xff]
    %v1004 = vld [vmem:[#allocation2 + $0x118] sm:$0xff]
    %v1005 = vld [vmem:[#allocation3] sm:$0xff]
    %v1006 = vld [vmem:[#allocation3 + $0x8] sm:$0xff]
    %v1007 = vld [vmem:[#allocation3 + $0x10] sm:$0xff]
    %v1008 = vld [vmem:[#allocation3 + $0x18] sm:$0xff]
    %v1009 = vld [vmem:[#allocation3 + $0x20] sm:$0xff]
    %v1010 = vld [vmem:[#allocation3 + $0x28] sm:$0xff]
    %v1011 = vld [vmem:[#allocation3 + $0x30] sm:$0xff]
    %v1012 = vld [vmem:[#allocation3 + $0x38] sm:$0xff]
    %v1013 = vld [vmem:[#allocation3 + $0x40] sm:$0xff]
    %v1014 = vld [vmem:[#allocation3 + $0x48] sm:$0xff]
    %v1015 = vld [vmem:[#allocation3 + $0x50] sm:$0xff]
    %v1016 = vld [vmem:[#allocation3 + $0x58] sm:$0xff]
    %v1017 = vld [vmem:[#allocation3 + $0x60] sm:$0xff]
    %v1018 = vld [vmem:[#allocation3 + $0x68] sm:$0xff]
    %v1019 = vld [vmem:[#allocation3 + $0x70] sm:$0xff]
    %v1020 = vld [vmem:[#allocation3 + $0x78] sm:$0xff]
    %v1021 = vld [vmem:[#allocation3 + $0x80] sm:$0xff]
    %v1022 = vld [vmem:[#allocation3 + $0x88] sm:$0xff]
    %v1023 = vld [vmem:[#allocation3 + $0x90] sm:$0xff]
    %v1024 = vld [vmem:[#allocation3 + $0x98] sm:$0xff]
    %v1025 = vld [vmem:[#allocation3 + $0xa0] sm:$0xff]
    %v1026 = vld [vmem:[#allocation3 + $0xa8] sm:$0xff]
    %v1027 = vld [vmem:[#allocation3 + $0xb0] sm:$0xff]
    %v1028 = vld [vmem:[#allocation3 + $0xb8] sm:$0xff]
    %v1029 = vld [vmem:[#allocation3 + $0xc0] sm:$0xff]
    %v1030 = vld [vmem:[#allocation3 + $0xc8] sm:$0xff]
    %v1031 = vld [vmem:[#allocation3 + $0xd0] sm:$0xff]
    %v1032 = vld [vmem:[#allocation3 + $0xd8] sm:$0xff]
    %v1033 = vld [vmem:[#allocation3 + $0xe0] sm:$0xff]
    %v1034 = vld [vmem:[#allocation3 + $0xe8] sm:$0xff]
    %v1035 = vld [vmem:[#allocation3 + $0xf0] sm:$0xff]
    %v1036 = vld [vmem:[#allocation3 + $0xf8] sm:$0xff]
    %v1037 = vld [vmem:[#allocation3 + $0x100] sm:$0xff]
    %v1038 = vld [vmem:[#allocation3 + $0x108] sm:$0xff]
    %v1039 = vld [vmem:[#allocation3 + $0x110] sm:$0xff]
    %v1040 = vld [vmem:[#allocation3 + $0x118] sm:$0xff]
    %v1041 = vmul.f32 %v969, %v1005
    %v1042 = vmul.f32 %v970, %v1006
    %v1043 = vmul.f32 %v971, %v1007
    %v1044 = vmul.f32 %v972, %v1008
    %v1045 = vmul.f32 %v973, %v1009
    %v1046 = vmul.f32 %v974, %v1010
    %v1047 = vmul.f32 %v975, %v1011
    %v1048 = vmul.f32 %v976, %v1012
    %v1049 = vmul.f32 %v977, %v1013
    %v1050 = vmul.f32 %v978, %v1014
    %v1051 = vmul.f32 %v979, %v1015
    %v1052 = vmul.f32 %v980, %v1016
    %v1053 = vmul.f32 %v981, %v1017
    %v1054 = vmul.f32 %v982, %v1018
    %v1055 = vmul.f32 %v983, %v1019
    %v1056 = vmul.f32 %v984, %v1020
    %v1057 = vmul.f32 %v985, %v1021
    %v1058 = vmul.f32 %v986, %v1022
    %v1059 = vmul.f32 %v987, %v1023
    %v1060 = vmul.f32 %v988, %v1024
    %v1061 = vmul.f32 %v989, %v1025
    %v1062 = vmul.f32 %v990, %v1026
    %v1063 = vmul.f32 %v991, %v1027
    %v1064 = vmul.f32 %v992, %v1028
    %v1065 = vmul.f32 %v993, %v1029
    %v1066 = vmul.f32 %v994, %v1030
    %v1067 = vmul.f32 %v995, %v1031
    %v1068 = vmul.f32 %v996, %v1032
    %v1069 = vmul.f32 %v997, %v1033
    %v1070 = vmul.f32 %v998, %v1034
    %v1071 = vmul.f32 %v999, %v1035
    %v1072 = vmul.f32 %v1000, %v1036
    %v1073 = vmul.f32 %v1001, %v1037
    %v1074 = vmul.f32 %v1002, %v1038
    %v1075 = vmul.f32 %v1003, %v1039
    %v1076 = vmul.f32 %v1004, %v1040
    %v1077 = vpack.c.bf16 %v1045, %v1041
    %v1078 = vpack.c.bf16 %v1046, %v1042
    %v1079 = vpack.c.bf16 %v1047, %v1043
    %v1080 = vpack.c.bf16 %v1048, %v1044
    %v1081 = vpack.c.bf16 %v1053, %v1049
    %v1082 = vpack.c.bf16 %v1054, %v1050
    %v1083 = vpack.c.bf16 %v1055, %v1051
    %v1084 = vpack.c.bf16 %v1056, %v1052
    %v1085 = vpack.c.bf16 %v1061, %v1057
    %v1086 = vpack.c.bf16 %v1062, %v1058
    %v1087 = vpack.c.bf16 %v1063, %v1059
    %v1088 = vpack.c.bf16 %v1064, %v1060
    %v1089 = vpack.c.bf16 %v1069, %v1065
    %v1090 = vpack.c.bf16 %v1070, %v1066
    %v1091 = vpack.c.bf16 %v1071, %v1067
    %v1092 = vpack.c.bf16 %v1072, %v1068
    %v1093 = vpack.c.bf16 %v1073, %v1073
    %v1094 = vpack.c.bf16 %v1074, %v1074
    %v1095 = vpack.c.bf16 %v1075, %v1075
    %v1096 = vpack.c.bf16 %v1076, %v1076
    %v1097 = vld [vmem:[%s3 + $0x28] sm:$0xf]
    %v1099 = vsel %vm330, %v1097, 0
    %v1102 = vsel %vm334, %v1093, 0
    %v1105 = vsel %vm334, %v1094, 0
    %v1108 = vsel %vm334, %v1095, 0
    %v1111 = vsel %vm334, %v1096, 0
    %1113 = vmatpush.bf16.msra.mxu0 0
    %1114 = vmatpush.bf16.msra.mxu0 0
    %1115 = vmatpush.bf16.msra.mxu0 0
    %1116 = vmatpush.bf16.msra.mxu0 %v1102
    %1117 = vmatpush.bf16.msra.mxu0 %v1089
    %1118 = vmatpush.bf16.msra.mxu0 %v1085
    %1119 = vmatpush.bf16.msra.mxu0 %v1081
    %1120 = vmatpush.bf16.msra.mxu0 %v1077
    %1121 = vmatmul.bf16.gmra.mxu0 %v1099
    %v1122 = vpop.f32.mrf.mxu0
    %v1123 = vadd.f32 0.0, %v1122
    %v1124 = vpop.f32.mrf.mxu0
    %1125 = vdwg.mxu0
    %1126 = vmatpush.bf16.msra.mxu0 0
    %1127 = vmatpush.bf16.msra.mxu0 0
    %1128 = vmatpush.bf16.msra.mxu0 0
    %1129 = vmatpush.bf16.msra.mxu0 %v1105
    %1130 = vmatpush.bf16.msra.mxu0 %v1090
    %1131 = vmatpush.bf16.msra.mxu0 %v1086
    %1132 = vmatpush.bf16.msra.mxu0 %v1082
    %1133 = vmatpush.bf16.msra.mxu0 %v1078
    %1134 = vmatmul.bf16.gmra.mxu0 %v1099
    %v1135 = vpop.f32.mrf.mxu0
    %v1136 = vadd.f32 0.0, %v1135
    %v1137 = vpop.f32.mrf.mxu0
    %1138 = vdwg.mxu0
    %1139 = vmatpush.bf16.msra.mxu0 0
    %1140 = vmatpush.bf16.msra.mxu0 0
    %1141 = vmatpush.bf16.msra.mxu0 0
    %1142 = vmatpush.bf16.msra.mxu0 %v1108
    %1143 = vmatpush.bf16.msra.mxu0 %v1091
    %1144 = vmatpush.bf16.msra.mxu0 %v1087
    %1145 = vmatpush.bf16.msra.mxu0 %v1083
    %1146 = vmatpush.bf16.msra.mxu0 %v1079
    %1147 = vmatmul.bf16.gmra.mxu0 %v1099
    %v1148 = vpop.f32.mrf.mxu0
    %v1149 = vadd.f32 0.0, %v1148
    %v1150 = vpop.f32.mrf.mxu0
    %1151 = vdwg.mxu0
    %1152 = vmatpush.bf16.msra.mxu0 0
    %1153 = vmatpush.bf16.msra.mxu0 0
    %1154 = vmatpush.bf16.msra.mxu0 0
    %1155 = vmatpush.bf16.msra.mxu0 %v1111
    %1156 = vmatpush.bf16.msra.mxu0 %v1092
    %1157 = vmatpush.bf16.msra.mxu0 %v1088
    %1158 = vmatpush.bf16.msra.mxu0 %v1084
    %1159 = vmatpush.bf16.msra.mxu0 %v1080
    %1160 = vmatmul.bf16.gmra.mxu0 %v1099
    %v1161 = vpop.f32.mrf.mxu0
    %v1162 = vadd.f32 0.0, %v1161
    %v1163 = vpop.f32.mrf.mxu0
    %1164 = vdwg.mxu0
    %v1165 = vld [vmem:[%s4 + $0x10] sm:$0xff]
    %v1166 = vadd.f32 %v1123, %v1136
    %v1167 = vadd.f32 %v1166, %v1149
    %v1168 = vadd.f32 %v1167, %v1162
    %1169 = vadd.xlane.f32.xlu0 %v1168
    %v1170 = vpop.xlane.xlu0 %1169
    %v1171 = vmul.f32 %v1170, 0.001953125
    %v1172 = vsub.f32 %v1123, %v1171
    %v1173 = vsub.f32 %v1136, %v1171
    %v1174 = vsub.f32 %v1149, %v1171
    %v1175 = vsub.f32 %v1162, %v1171
    %v1176 = vmul.f32 %v1172, %v1172
    %v1177 = vmul.f32 %v1173, %v1173
    %v1178 = vmul.f32 %v1174, %v1174
    %v1179 = vmul.f32 %v1175, %v1175
    %v1180 = vadd.f32 %v1176, %v1177
    %v1181 = vadd.f32 %v1180, %v1178
    %v1182 = vadd.f32 %v1181, %v1179
    %1183 = vadd.xlane.f32.xlu0 %v1182
    %v1184 = vpop.xlane.xlu0 %1183
    %v1185 = vmul.f32 %v1184, 0.001953125
    %v1186 = vadd.f32 %v1185, 1e-05
    %v1187 = vrsqrt.pop %v1186
    %v1188 = vmul.f32 %v1187, %v1186
    %v1189 = vmul.f32 %v1188, %v1187
    %v1190 = vmul.f32 0.5, %v1189
    %v1191 = vsub.f32 1.5, %v1190
    %v1192 = vmul.f32 %v1187, %v1191
    %vm1193 = vweird.f32 %v1186
    %vm1194 = vweird.f32 %v1187
    %vm1195 = vmor %vm1193, %vm1194
    %v1196 = vsel %vm1195, %v1187, %v1192
    %v1197 = vmul.f32 %v1196, %v1165
    %1199 = vset.pattern.permute.xlu0 0
    %1200 = vperm.xlu0 %1199, %v1197
    %v1201 = vpop.permute.xlu0 %1200
    %v1203 = vmul.f32 %v1172, %v1201
    %v1204 = vmul.f32 %v1173, %v1201
    %v1205 = vmul.f32 %v1174, %v1201
    %v1206 = vmul.f32 %v1175, %v1201
    %1208 = vset.pattern.permute.xlu0 1
    %1209 = vperm.xlu0 %1208, %v1165
    %v1210 = vpop.permute.xlu0 %1209
    %v1212 = vadd.f32 %v1203, %v1210
    %v1213 = vadd.f32 %v1204, %v1210
    %v1214 = vadd.f32 %v1205, %v1210
    %v1215 = vadd.f32 %v1206, %v1210
    %v1216 = vadd.f32 %v1212, %v450
    %v1217 = vadd.f32 %v1213, %v451
    %v1218 = vadd.f32 %v1214, %v452
    %v1219 = vadd.f32 %v1215, %v453
    %v1220 = vmax.f32 %v1216, 0.0
    %v1221 = vmax.f32 %v1217, 0.0
    %v1222 = vmax.f32 %v1218, 0.0
    %v1223 = vmax.f32 %v1219, 0.0
    %1224 = vrot.lane.b32.xlu0 %v1220, 17
    %v1225 = vpop.permute.xlu0 %1224
    %1226 = vrot.lane.b32.xlu0 %v1221, 17
    %v1227 = vpop.permute.xlu0 %1226
    %1228 = vrot.lane.b32.xlu0 %v1222, 17
    %v1229 = vpop.permute.xlu0 %1228
    %1230 = vrot.lane.b32.xlu0 %v1223, 17
    %v1231 = vpop.permute.xlu0 %1230
    %v1232 = vsel %vm69, %v1229, %v1231
    %v1233 = vsel %vm69, %v1227, %v1229
    %v1234 = vsel %vm69, %v1225, %v1227
    %v1235 = vsel %vm69, %v1231, %v1225
    %1236 = vst [vmem:[#allocation2] sm:$0xff] %v1235
    %1237 = vst [vmem:[#allocation2 + $0x8] sm:$0xff] %v1234
    %1238 = vst [vmem:[#allocation2 + $0x10] sm:$0xff] %v1233
    %1239 = vst [vmem:[#allocation2 + $0x18] sm:$0xff] %v1232
    %1240 = vrot.lane.b32.xlu0 %v1220, 16
    %v1241 = vpop.permute.xlu0 %1240
    %1242 = vrot.lane.b32.xlu0 %v1221, 16
    %v1243 = vpop.permute.xlu0 %1242
    %1244 = vrot.lane.b32.xlu0 %v1222, 16
    %v1245 = vpop.permute.xlu0 %1244
    %1246 = vrot.lane.b32.xlu0 %v1223, 16
    %v1247 = vpop.permute.xlu0 %1246
    %v1248 = vsel %vm86, %v1245, %v1247
    %v1249 = vsel %vm86, %v1243, %v1245
    %v1250 = vsel %vm86, %v1241, %v1243
    %v1251 = vsel %vm86, %v1247, %v1241
    %1252 = vst [vmem:[#allocation2 + $0x20] sm:$0xff] %v1251
    %1253 = vst [vmem:[#allocation2 + $0x28] sm:$0xff] %v1250
    %1254 = vst [vmem:[#allocation2 + $0x30] sm:$0xff] %v1249
    %1255 = vst [vmem:[#allocation2 + $0x38] sm:$0xff] %v1248
    %1256 = vrot.lane.b32.xlu0 %v1220, 15
    %v1257 = vpop.permute.xlu0 %1256
    %1258 = vrot.lane.b32.xlu0 %v1221, 15
    %v1259 = vpop.permute.xlu0 %1258
    %1260 = vrot.lane.b32.xlu0 %v1222, 15
    %v1261 = vpop.permute.xlu0 %1260
    %1262 = vrot.lane.b32.xlu0 %v1223, 15
    %v1263 = vpop.permute.xlu0 %1262
    %v1264 = vsel %vm103, %v1261, %v1263
    %v1265 = vsel %vm103, %v1259, %v1261
    %v1266 = vsel %vm103, %v1257, %v1259
    %v1267 = vsel %vm103, %v1263, %v1257
    %1268 = vst [vmem:[#allocation2 + $0x40] sm:$0xff] %v1267
    %1269 = vst [vmem:[#allocation2 + $0x48] sm:$0xff] %v1266
    %1270 = vst [vmem:[#allocation2 + $0x50] sm:$0xff] %v1265
    %1271 = vst [vmem:[#allocation2 + $0x58] sm:$0xff] %v1264
    %1272 = vrot.lane.b32.xlu0 %v1220, 1
    %v1273 = vpop.permute.xlu0 %1272
    %1274 = vrot.lane.b32.xlu0 %v1221, 1
    %v1275 = vpop.permute.xlu0 %1274
    %1276 = vrot.lane.b32.xlu0 %v1222, 1
    %v1277 = vpop.permute.xlu0 %1276
    %1278 = vrot.lane.b32.xlu0 %v1223, 1
    %v1279 = vpop.permute.xlu0 %1278
    %v1280 = vsel %vm120, %v1277, %v1279
    %v1281 = vsel %vm120, %v1275, %v1277
    %v1282 = vsel %vm120, %v1273, %v1275
    %v1283 = vsel %vm120, %v1279, %v1273
    %1284 = vst [vmem:[#allocation2 + $0x60] sm:$0xff] %v1283
    %1285 = vst [vmem:[#allocation2 + $0x68] sm:$0xff] %v1282
    %1286 = vst [vmem:[#allocation2 + $0x70] sm:$0xff] %v1281
    %1287 = vst [vmem:[#allocation2 + $0x78] sm:$0xff] %v1280
    %1288 = vst [vmem:[#allocation2 + $0x80] sm:$0xff] %v1220
    %1289 = vst [vmem:[#allocation2 + $0x88] sm:$0xff] %v1221
    %1290 = vst [vmem:[#allocation2 + $0x90] sm:$0xff] %v1222
    %1291 = vst [vmem:[#allocation2 + $0x98] sm:$0xff] %v1223
    %1292 = vrot.lane.b32.xlu0 %v1220, 127
    %v1293 = vpop.permute.xlu0 %1292
    %1294 = vrot.lane.b32.xlu0 %v1221, 127
    %v1295 = vpop.permute.xlu0 %1294
    %1296 = vrot.lane.b32.xlu0 %v1222, 127
    %v1297 = vpop.permute.xlu0 %1296
    %1298 = vrot.lane.b32.xlu0 %v1223, 127
    %v1299 = vpop.permute.xlu0 %1298
    %v1300 = vsel %vm141, %v1297, %v1299
    %v1301 = vsel %vm141, %v1295, %v1297
    %v1302 = vsel %vm141, %v1293, %v1295
    %v1303 = vsel %vm141, %v1299, %v1293
    %1304 = vst [vmem:[#allocation2 + $0xa0] sm:$0xff] %v1302
    %1305 = vst [vmem:[#allocation2 + $0xa8] sm:$0xff] %v1301
    %1306 = vst [vmem:[#allocation2 + $0xb0] sm:$0xff] %v1300
    %1307 = vst [vmem:[#allocation2 + $0xb8] sm:$0xff] %v1303
    %1308 = vrot.lane.b32.xlu0 %v1220, 113
    %v1309 = vpop.permute.xlu0 %1308
    %1310 = vrot.lane.b32.xlu0 %v1221, 113
    %v1311 = vpop.permute.xlu0 %1310
    %1312 = vrot.lane.b32.xlu0 %v1222, 113
    %v1313 = vpop.permute.xlu0 %1312
    %1314 = vrot.lane.b32.xlu0 %v1223, 113
    %v1315 = vpop.permute.xlu0 %1314
    %v1316 = vsel %vm158, %v1313, %v1315
    %v1317 = vsel %vm158, %v1311, %v1313
    %v1318 = vsel %vm158, %v1309, %v1311
    %v1319 = vsel %vm158, %v1315, %v1309
    %1320 = vst [vmem:[#allocation2 + $0xc0] sm:$0xff] %v1318
    %1321 = vst [vmem:[#allocation2 + $0xc8] sm:$0xff] %v1317
    %1322 = vst [vmem:[#allocation2 + $0xd0] sm:$0xff] %v1316
    %1323 = vst [vmem:[#allocation2 + $0xd8] sm:$0xff] %v1319
    %1324 = vrot.lane.b32.xlu0 %v1220, 112
    %v1325 = vpop.permute.xlu0 %1324
    %1326 = vrot.lane.b32.xlu0 %v1221, 112
    %v1327 = vpop.permute.xlu0 %1326
    %1328 = vrot.lane.b32.xlu0 %v1222, 112
    %v1329 = vpop.permute.xlu0 %1328
    %1330 = vrot.lane.b32.xlu0 %v1223, 112
    %v1331 = vpop.permute.xlu0 %1330
    %v1332 = vsel %vm175, %v1329, %v1331
    %v1333 = vsel %vm175, %v1327, %v1329
    %v1334 = vsel %vm175, %v1325, %v1327
    %v1335 = vsel %vm175, %v1331, %v1325
    %1336 = vst [vmem:[#allocation2 + $0xe0] sm:$0xff] %v1334
    %1337 = vst [vmem:[#allocation2 + $0xe8] sm:$0xff] %v1333
    %1338 = vst [vmem:[#allocation2 + $0xf0] sm:$0xff] %v1332
    %1339 = vst [vmem:[#allocation2 + $0xf8] sm:$0xff] %v1335
    %1340 = vrot.lane.b32.xlu0 %v1220, 111
    %v1341 = vpop.permute.xlu0 %1340
    %1342 = vrot.lane.b32.xlu0 %v1221, 111
    %v1343 = vpop.permute.xlu0 %1342
    %1344 = vrot.lane.b32.xlu0 %v1222, 111
    %v1345 = vpop.permute.xlu0 %1344
    %1346 = vrot.lane.b32.xlu0 %v1223, 111
    %v1347 = vpop.permute.xlu0 %1346
    %v1348 = vsel %vm192, %v1345, %v1347
    %v1349 = vsel %vm192, %v1343, %v1345
    %v1350 = vsel %vm192, %v1341, %v1343
    %v1351 = vsel %vm192, %v1347, %v1341
    %1352 = vst [vmem:[#allocation2 + $0x100] sm:$0xff] %v1350
    %1353 = vst [vmem:[#allocation2 + $0x108] sm:$0xff] %v1349
    %1354 = vst [vmem:[#allocation2 + $0x110] sm:$0xff] %v1348
    %1355 = vst [vmem:[#allocation2 + $0x118] sm:$0xff] %v1351
    %v1356 = vld [vmem:[#allocation2] sm:$0xff]
    %v1357 = vld [vmem:[#allocation2 + $0x8] sm:$0xff]
    %v1358 = vld [vmem:[#allocation2 + $0x10] sm:$0xff]
    %v1359 = vld [vmem:[#allocation2 + $0x18] sm:$0xff]
    %v1360 = vld [vmem:[#allocation2 + $0x20] sm:$0xff]
    %v1361 = vld [vmem:[#allocation2 + $0x28] sm:$0xff]
    %v1362 = vld [vmem:[#allocation2 + $0x30] sm:$0xff]
    %v1363 = vld [vmem:[#allocation2 + $0x38] sm:$0xff]
    %v1364 = vld [vmem:[#allocation2 + $0x40] sm:$0xff]
    %v1365 = vld [vmem:[#allocation2 + $0x48] sm:$0xff]
    %v1366 = vld [vmem:[#allocation2 + $0x50] sm:$0xff]
    %v1367 = vld [vmem:[#allocation2 + $0x58] sm:$0xff]
    %v1368 = vld [vmem:[#allocation2 + $0x60] sm:$0xff]
    %v1369 = vld [vmem:[#allocation2 + $0x68] sm:$0xff]
    %v1370 = vld [vmem:[#allocation2 + $0x70] sm:$0xff]
    %v1371 = vld [vmem:[#allocation2 + $0x78] sm:$0xff]
    %v1372 = vld [vmem:[#allocation2 + $0x80] sm:$0xff]
    %v1373 = vld [vmem:[#allocation2 + $0x88] sm:$0xff]
    %v1374 = vld [vmem:[#allocation2 + $0x90] sm:$0xff]
    %v1375 = vld [vmem:[#allocation2 + $0x98] sm:$0xff]
    %v1376 = vld [vmem:[#allocation2 + $0xa0] sm:$0xff]
    %v1377 = vld [vmem:[#allocation2 + $0xa8] sm:$0xff]
    %v1378 = vld [vmem:[#allocation2 + $0xb0] sm:$0xff]
    %v1379 = vld [vmem:[#allocation2 + $0xb8] sm:$0xff]
    %v1380 = vld [vmem:[#allocation2 + $0xc0] sm:$0xff]
    %v1381 = vld [vmem:[#allocation2 + $0xc8] sm:$0xff]
    %v1382 = vld [vmem:[#allocation2 + $0xd0] sm:$0xff]
    %v1383 = vld [vmem:[#allocation2 + $0xd8] sm:$0xff]
    %v1384 = vld [vmem:[#allocation2 + $0xe0] sm:$0xff]
    %v1385 = vld [vmem:[#allocation2 + $0xe8] sm:$0xff]
    %v1386 = vld [vmem:[#allocation2 + $0xf0] sm:$0xff]
    %v1387 = vld [vmem:[#allocation2 + $0xf8] sm:$0xff]
    %v1388 = vld [vmem:[#allocation2 + $0x100] sm:$0xff]
    %v1389 = vld [vmem:[#allocation2 + $0x108] sm:$0xff]
    %v1390 = vld [vmem:[#allocation2 + $0x110] sm:$0xff]
    %v1391 = vld [vmem:[#allocation2 + $0x118] sm:$0xff]
    %v1392 = vld [vmem:[#allocation3] sm:$0xff]
    %v1393 = vld [vmem:[#allocation3 + $0x8] sm:$0xff]
    %v1394 = vld [vmem:[#allocation3 + $0x10] sm:$0xff]
    %v1395 = vld [vmem:[#allocation3 + $0x18] sm:$0xff]
    %v1396 = vld [vmem:[#allocation3 + $0x20] sm:$0xff]
    %v1397 = vld [vmem:[#allocation3 + $0x28] sm:$0xff]
    %v1398 = vld [vmem:[#allocation3 + $0x30] sm:$0xff]
    %v1399 = vld [vmem:[#allocation3 + $0x38] sm:$0xff]
    %v1400 = vld [vmem:[#allocation3 + $0x40] sm:$0xff]
    %v1401 = vld [vmem:[#allocation3 + $0x48] sm:$0xff]
    %v1402 = vld [vmem:[#allocation3 + $0x50] sm:$0xff]
    %v1403 = vld [vmem:[#allocation3 + $0x58] sm:$0xff]
    %v1404 = vld [vmem:[#allocation3 + $0x60] sm:$0xff]
    %v1405 = vld [vmem:[#allocation3 + $0x68] sm:$0xff]
    %v1406 = vld [vmem:[#allocation3 + $0x70] sm:$0xff]
    %v1407 = vld [vmem:[#allocation3 + $0x78] sm:$0xff]
    %v1408 = vld [vmem:[#allocation3 + $0x80] sm:$0xff]
    %v1409 = vld [vmem:[#allocation3 + $0x88] sm:$0xff]
    %v1410 = vld [vmem:[#allocation3 + $0x90] sm:$0xff]
    %v1411 = vld [vmem:[#allocation3 + $0x98] sm:$0xff]
    %v1412 = vld [vmem:[#allocation3 + $0xa0] sm:$0xff]
    %v1413 = vld [vmem:[#allocation3 + $0xa8] sm:$0xff]
    %v1414 = vld [vmem:[#allocation3 + $0xb0] sm:$0xff]
    %v1415 = vld [vmem:[#allocation3 + $0xb8] sm:$0xff]
    %v1416 = vld [vmem:[#allocation3 + $0xc0] sm:$0xff]
    %v1417 = vld [vmem:[#allocation3 + $0xc8] sm:$0xff]
    %v1418 = vld [vmem:[#allocation3 + $0xd0] sm:$0xff]
    %v1419 = vld [vmem:[#allocation3 + $0xd8] sm:$0xff]
    %v1420 = vld [vmem:[#allocation3 + $0xe0] sm:$0xff]
    %v1421 = vld [vmem:[#allocation3 + $0xe8] sm:$0xff]
    %v1422 = vld [vmem:[#allocation3 + $0xf0] sm:$0xff]
    %v1423 = vld [vmem:[#allocation3 + $0xf8] sm:$0xff]
    %v1424 = vld [vmem:[#allocation3 + $0x100] sm:$0xff]
    %v1425 = vld [vmem:[#allocation3 + $0x108] sm:$0xff]
    %v1426 = vld [vmem:[#allocation3 + $0x110] sm:$0xff]
    %v1427 = vld [vmem:[#allocation3 + $0x118] sm:$0xff]
    %v1428 = vmul.f32 %v1356, %v1392
    %v1429 = vmul.f32 %v1357, %v1393
    %v1430 = vmul.f32 %v1358, %v1394
    %v1431 = vmul.f32 %v1359, %v1395
    %v1432 = vmul.f32 %v1360, %v1396
    %v1433 = vmul.f32 %v1361, %v1397
    %v1434 = vmul.f32 %v1362, %v1398
    %v1435 = vmul.f32 %v1363, %v1399
    %v1436 = vmul.f32 %v1364, %v1400
    %v1437 = vmul.f32 %v1365, %v1401
    %v1438 = vmul.f32 %v1366, %v1402
    %v1439 = vmul.f32 %v1367, %v1403
    %v1440 = vmul.f32 %v1368, %v1404
    %v1441 = vmul.f32 %v1369, %v1405
    %v1442 = vmul.f32 %v1370, %v1406
    %v1443 = vmul.f32 %v1371, %v1407
    %v1444 = vmul.f32 %v1372, %v1408
    %v1445 = vmul.f32 %v1373, %v1409
    %v1446 = vmul.f32 %v1374, %v1410
    %v1447 = vmul.f32 %v1375, %v1411
    %v1448 = vmul.f32 %v1376, %v1412
    %v1449 = vmul.f32 %v1377, %v1413
    %v1450 = vmul.f32 %v1378, %v1414
    %v1451 = vmul.f32 %v1379, %v1415
    %v1452 = vmul.f32 %v1380, %v1416
    %v1453 = vmul.f32 %v1381, %v1417
    %v1454 = vmul.f32 %v1382, %v1418
    %v1455 = vmul.f32 %v1383, %v1419
    %v1456 = vmul.f32 %v1384, %v1420
    %v1457 = vmul.f32 %v1385, %v1421
    %v1458 = vmul.f32 %v1386, %v1422
    %v1459 = vmul.f32 %v1387, %v1423
    %v1460 = vmul.f32 %v1388, %v1424
    %v1461 = vmul.f32 %v1389, %v1425
    %v1462 = vmul.f32 %v1390, %v1426
    %v1463 = vmul.f32 %v1391, %v1427
    %v1464 = vpack.c.bf16 %v1432, %v1428
    %v1465 = vpack.c.bf16 %v1433, %v1429
    %v1466 = vpack.c.bf16 %v1434, %v1430
    %v1467 = vpack.c.bf16 %v1435, %v1431
    %v1468 = vpack.c.bf16 %v1440, %v1436
    %v1469 = vpack.c.bf16 %v1441, %v1437
    %v1470 = vpack.c.bf16 %v1442, %v1438
    %v1471 = vpack.c.bf16 %v1443, %v1439
    %v1472 = vpack.c.bf16 %v1448, %v1444
    %v1473 = vpack.c.bf16 %v1449, %v1445
    %v1474 = vpack.c.bf16 %v1450, %v1446
    %v1475 = vpack.c.bf16 %v1451, %v1447
    %v1476 = vpack.c.bf16 %v1456, %v1452
    %v1477 = vpack.c.bf16 %v1457, %v1453
    %v1478 = vpack.c.bf16 %v1458, %v1454
    %v1479 = vpack.c.bf16 %v1459, %v1455
    %v1480 = vpack.c.bf16 %v1460, %v1460
    %v1481 = vpack.c.bf16 %v1461, %v1461
    %v1482 = vpack.c.bf16 %v1462, %v1462
    %v1483 = vpack.c.bf16 %v1463, %v1463
    %v1484 = vld [vmem:[#allocation5] sm:$0xf]
    %v1485 = vld [vmem:[#allocation5 + $0x4] sm:$0xf]
    %v1486 = vld [vmem:[#allocation5 + $0x8] sm:$0xf]
    %v1487 = vld [vmem:[#allocation5 + $0xc] sm:$0xf]
    %v1488 = vld [vmem:[#allocation5 + $0x10] sm:$0xf]
    %v1489 = vld [vmem:[#allocation5 + $0x14] sm:$0xf]
    %v1490 = vld [vmem:[#allocation5 + $0x18] sm:$0xf]
    %v1491 = vld [vmem:[#allocation5 + $0x1c] sm:$0xf]
    %v1492 = vld [vmem:[#allocation5 + $0x20] sm:$0xf]
    %v1493 = vld [vmem:[#allocation5 + $0x24] sm:$0xf]
    %v1494 = vld [vmem:[#allocation5 + $0x28] sm:$0xf]
    %v1495 = vld [vmem:[#allocation5 + $0x2c] sm:$0xf]
    %v1496 = vld [vmem:[#allocation5 + $0x30] sm:$0xf]
    %v1497 = vld [vmem:[#allocation5 + $0x34] sm:$0xf]
    %v1498 = vld [vmem:[#allocation5 + $0x38] sm:$0xf]
    %v1499 = vld [vmem:[#allocation5 + $0x3c] sm:$0xf]
    %v1500 = vld [vmem:[#allocation5 + $0x40] sm:$0xf]
    %v1501 = vld [vmem:[#allocation5 + $0x44] sm:$0xf]
    %v1502 = vld [vmem:[#allocation5 + $0x48] sm:$0xf]
    %v1503 = vld [vmem:[#allocation5 + $0x4c] sm:$0xf]
    %v1504 = vld [vmem:[#allocation5 + $0x50] sm:$0xf]
    %v1505 = vld [vmem:[#allocation5 + $0x54] sm:$0xf]
    %v1506 = vld [vmem:[#allocation5 + $0x58] sm:$0xf]
    %v1507 = vld [vmem:[#allocation5 + $0x5c] sm:$0xf]
    %v1508 = vld [vmem:[#allocation5 + $0x60] sm:$0xf]
    %v1509 = vld [vmem:[#allocation5 + $0x64] sm:$0xf]
    %v1510 = vld [vmem:[#allocation5 + $0x68] sm:$0xf]
    %v1511 = vld [vmem:[#allocation5 + $0x6c] sm:$0xf]
    %v1512 = vld [vmem:[#allocation5 + $0x70] sm:$0xf]
    %v1513 = vld [vmem:[#allocation5 + $0x74] sm:$0xf]
    %v1514 = vld [vmem:[#allocation5 + $0x78] sm:$0xf]
    %v1515 = vld [vmem:[#allocation5 + $0x7c] sm:$0xf]
    %v1516 = vld [vmem:[#allocation5 + $0x80] sm:$0xf]
    %v1517 = vld [vmem:[#allocation5 + $0x84] sm:$0xf]
    %v1518 = vld [vmem:[#allocation5 + $0x88] sm:$0xf]
    %v1519 = vld [vmem:[#allocation5 + $0x8c] sm:$0xf]
    %v1520 = vld [vmem:[#allocation5 + $0x90] sm:$0xf]
    %v1521 = vld [vmem:[#allocation5 + $0x94] sm:$0xf]
    %v1522 = vld [vmem:[#allocation5 + $0x98] sm:$0xf]
    %v1523 = vld [vmem:[#allocation5 + $0x9c] sm:$0xf]
    %v1524 = vld [vmem:[#allocation5 + $0xa0] sm:$0xf]
    %v1525 = vld [vmem:[#allocation5 + $0xa4] sm:$0xf]
    %v1526 = vld [vmem:[#allocation5 + $0xa8] sm:$0xf]
    %v1527 = vld [vmem:[#allocation5 + $0xac] sm:$0xf]
    %v1528 = vld [vmem:[#allocation5 + $0xb0] sm:$0xf]
    %v1529 = vld [vmem:[#allocation5 + $0xb4] sm:$0xf]
    %v1530 = vld [vmem:[#allocation5 + $0xb8] sm:$0xf]
    %v1531 = vld [vmem:[#allocation5 + $0xbc] sm:$0xf]
    %v1532 = vld [vmem:[#allocation5 + $0xc0] sm:$0xf]
    %v1533 = vld [vmem:[#allocation5 + $0xc4] sm:$0xf]
    %v1534 = vld [vmem:[#allocation5 + $0xc8] sm:$0xf]
    %v1535 = vld [vmem:[#allocation5 + $0xcc] sm:$0xf]
    %v1536 = vld [vmem:[#allocation5 + $0xd0] sm:$0xf]
    %v1537 = vld [vmem:[#allocation5 + $0xd4] sm:$0xf]
    %v1538 = vld [vmem:[#allocation5 + $0xd8] sm:$0xf]
    %v1539 = vld [vmem:[#allocation5 + $0xdc] sm:$0xf]
    %v1540 = vld [vmem:[#allocation5 + $0xe0] sm:$0xf]
    %v1541 = vld [vmem:[#allocation5 + $0xe4] sm:$0xf]
    %v1542 = vld [vmem:[#allocation5 + $0xe8] sm:$0xf]
    %v1543 = vld [vmem:[#allocation5 + $0xec] sm:$0xf]
    %v1544 = vld [vmem:[#allocation5 + $0xf0] sm:$0xf]
    %v1545 = vld [vmem:[#allocation5 + $0xf4] sm:$0xf]
    %v1546 = vld [vmem:[#allocation5 + $0xf8] sm:$0xf]
    %v1547 = vld [vmem:[#allocation5 + $0xfc] sm:$0xf]
    %v1612 = vunpack.c.l.b16 %v1484
    %v1613 = vunpack.c.l.b16 %v1485
    %v1614 = vunpack.c.l.b16 %v1486
    %v1615 = vunpack.c.l.b16 %v1487
    %v1616 = vunpack.c.l.b16 %v1488
    %v1617 = vunpack.c.l.b16 %v1489
    %v1618 = vunpack.c.l.b16 %v1490
    %v1619 = vunpack.c.l.b16 %v1491
    %v1620 = vunpack.c.l.b16 %v1492
    %v1621 = vunpack.c.l.b16 %v1493
    %v1622 = vunpack.c.l.b16 %v1494
    %v1623 = vunpack.c.l.b16 %v1495
    %v1624 = vunpack.c.l.b16 %v1496
    %v1625 = vunpack.c.l.b16 %v1497
    %v1626 = vunpack.c.l.b16 %v1498
    %v1627 = vunpack.c.l.b16 %v1499
    %v1628 = vunpack.c.l.b16 %v1500
    %v1629 = vunpack.c.l.b16 %v1501
    %v1630 = vunpack.c.l.b16 %v1502
    %v1631 = vunpack.c.l.b16 %v1503
    %v1632 = vunpack.c.l.b16 %v1504
    %v1633 = vunpack.c.l.b16 %v1505
    %v1634 = vunpack.c.l.b16 %v1506
    %v1635 = vunpack.c.l.b16 %v1507
    %v1636 = vunpack.c.l.b16 %v1508
    %v1637 = vunpack.c.l.b16 %v1509
    %v1638 = vunpack.c.l.b16 %v1510
    %v1639 = vunpack.c.l.b16 %v1511
    %v1640 = vunpack.c.l.b16 %v1512
    %v1641 = vunpack.c.l.b16 %v1513
    %v1642 = vunpack.c.l.b16 %v1514
    %v1643 = vunpack.c.l.b16 %v1515
    %v1644 = vunpack.c.l.b16 %v1516
    %v1645 = vunpack.c.l.b16 %v1517
    %v1646 = vunpack.c.l.b16 %v1518
    %v1647 = vunpack.c.l.b16 %v1519
    %v1648 = vunpack.c.l.b16 %v1520
    %v1649 = vunpack.c.l.b16 %v1521
    %v1650 = vunpack.c.l.b16 %v1522
    %v1651 = vunpack.c.l.b16 %v1523
    %v1652 = vunpack.c.l.b16 %v1524
    %v1653 = vunpack.c.l.b16 %v1525
    %v1654 = vunpack.c.l.b16 %v1526
    %v1655 = vunpack.c.l.b16 %v1527
    %v1656 = vunpack.c.l.b16 %v1528
    %v1657 = vunpack.c.l.b16 %v1529
    %v1658 = vunpack.c.l.b16 %v1530
    %v1659 = vunpack.c.l.b16 %v1531
    %v1660 = vunpack.c.l.b16 %v1532
    %v1661 = vunpack.c.l.b16 %v1533
    %v1662 = vunpack.c.l.b16 %v1534
    %v1663 = vunpack.c.l.b16 %v1535
    %v1664 = vunpack.c.l.b16 %v1536
    %v1665 = vunpack.c.l.b16 %v1537
    %v1666 = vunpack.c.l.b16 %v1538
    %v1667 = vunpack.c.l.b16 %v1539
    %v1668 = vunpack.c.l.b16 %v1540
    %v1669 = vunpack.c.l.b16 %v1541
    %v1670 = vunpack.c.l.b16 %v1542
    %v1671 = vunpack.c.l.b16 %v1543
    %v1672 = vunpack.c.l.b16 %v1544
    %v1673 = vunpack.c.l.b16 %v1545
    %v1674 = vunpack.c.l.b16 %v1546
    %v1675 = vunpack.c.l.b16 %v1547
    %v1676 = vpack.c.b16 %v1613, %v1612
    %v1677 = vpack.c.b16 %v1615, %v1614
    %v1678 = vpack.c.b16 %v1617, %v1616
    %v1679 = vpack.c.b16 %v1619, %v1618
    %v1680 = vpack.c.b16 %v1621, %v1620
    %v1681 = vpack.c.b16 %v1623, %v1622
    %v1682 = vpack.c.b16 %v1625, %v1624
    %v1683 = vpack.c.b16 %v1627, %v1626
    %v1684 = vpack.c.b16 %v1629, %v1628
    %v1685 = vpack.c.b16 %v1631, %v1630
    %v1686 = vpack.c.b16 %v1633, %v1632
    %v1687 = vpack.c.b16 %v1635, %v1634
    %v1688 = vpack.c.b16 %v1637, %v1636
    %v1689 = vpack.c.b16 %v1639, %v1638
    %v1690 = vpack.c.b16 %v1641, %v1640
    %v1691 = vpack.c.b16 %v1643, %v1642
    %v1692 = vpack.c.b16 %v1645, %v1644
    %v1693 = vpack.c.b16 %v1647, %v1646
    %v1694 = vpack.c.b16 %v1649, %v1648
    %v1695 = vpack.c.b16 %v1651, %v1650
    %v1696 = vpack.c.b16 %v1653, %v1652
    %v1697 = vpack.c.b16 %v1655, %v1654
    %v1698 = vpack.c.b16 %v1657, %v1656
    %v1699 = vpack.c.b16 %v1659, %v1658
    %v1700 = vpack.c.b16 %v1661, %v1660
    %v1701 = vpack.c.b16 %v1663, %v1662
    %v1702 = vpack.c.b16 %v1665, %v1664
    %v1703 = vpack.c.b16 %v1667, %v1666
    %v1704 = vpack.c.b16 %v1669, %v1668
    %v1705 = vpack.c.b16 %v1671, %v1670
    %v1706 = vpack.c.b16 %v1673, %v1672
    %v1707 = vpack.c.b16 %v1675, %v1674
    %1740 = vmatpush.bf16.msra.mxu0 %v1683
    %1741 = vmatpush.bf16.msra.mxu0 %v1682
    %1742 = vmatpush.bf16.msra.mxu0 %v1681
    %1743 = vmatpush.bf16.msra.mxu0 %v1680
    %1744 = vmatpush.bf16.msra.mxu0 %v1679
    %1745 = vmatpush.bf16.msra.mxu0 %v1678
    %1746 = vmatpush.bf16.msra.mxu0 %v1677
    %1747 = vmatpush.bf16.msra.mxu0 %v1676
    %1748 = vmatmul.bf16.gmra.mxu0 %v1464
    %v1749 = vpop.f32.mrf.mxu0
    %v1750 = vadd.f32 0.0, %v1749
    %v1751 = vpop.f32.mrf.mxu0
    %v1752 = vadd.f32 0.0, %v1751
    %1753 = vmatmul.bf16.gmra.mxu0 %v1468
    %v1754 = vpop.f32.mrf.mxu0
    %v1755 = vadd.f32 0.0, %v1754
    %v1756 = vpop.f32.mrf.mxu0
    %v1757 = vadd.f32 0.0, %v1756
    %1758 = vmatmul.bf16.gmra.mxu0 %v1472
    %v1759 = vpop.f32.mrf.mxu0
    %v1760 = vadd.f32 0.0, %v1759
    %v1761 = vpop.f32.mrf.mxu0
    %v1762 = vadd.f32 0.0, %v1761
    %1763 = vmatmul.bf16.gmra.mxu0 %v1476
    %v1764 = vpop.f32.mrf.mxu0
    %v1765 = vadd.f32 0.0, %v1764
    %v1766 = vpop.f32.mrf.mxu0
    %v1767 = vadd.f32 0.0, %v1766
    %1768 = vmatmul.bf16.gmra.mxu0 %v1480
    %v1769 = vpop.f32.mrf.mxu0
    %v1770 = vadd.f32 0.0, %v1769
    %v1771 = vpop.f32.mrf.mxu0
    %1772 = vdwg.mxu0
    %1773 = vmatpush.bf16.msra.mxu0 %v1691
    %1774 = vmatpush.bf16.msra.mxu0 %v1690
    %1775 = vmatpush.bf16.msra.mxu0 %v1689
    %1776 = vmatpush.bf16.msra.mxu0 %v1688
    %1777 = vmatpush.bf16.msra.mxu0 %v1687
    %1778 = vmatpush.bf16.msra.mxu0 %v1686
    %1779 = vmatpush.bf16.msra.mxu0 %v1685
    %1780 = vmatpush.bf16.msra.mxu0 %v1684
    %1781 = vmatmul.bf16.gmra.mxu0 %v1465
    %v1782 = vpop.f32.mrf.mxu0
    %v1783 = vadd.f32 %v1750, %v1782
    %v1784 = vpop.f32.mrf.mxu0
    %v1785 = vadd.f32 %v1752, %v1784
    %1786 = vmatmul.bf16.gmra.mxu0 %v1469
    %v1787 = vpop.f32.mrf.mxu0
    %v1788 = vadd.f32 %v1755, %v1787
    %v1789 = vpop.f32.mrf.mxu0
    %v1790 = vadd.f32 %v1757, %v1789
    %1791 = vmatmul.bf16.gmra.mxu0 %v1473
    %v1792 = vpop.f32.mrf.mxu0
    %v1793 = vadd.f32 %v1760, %v1792
    %v1794 = vpop.f32.mrf.mxu0
    %v1795 = vadd.f32 %v1762, %v1794
    %1796 = vmatmul.bf16.gmra.mxu0 %v1477
    %v1797 = vpop.f32.mrf.mxu0
    %v1798 = vadd.f32 %v1765, %v1797
    %v1799 = vpop.f32.mrf.mxu0
    %v1800 = vadd.f32 %v1767, %v1799
    %1801 = vmatmul.bf16.gmra.mxu0 %v1481
    %v1802 = vpop.f32.mrf.mxu0
    %v1803 = vadd.f32 %v1770, %v1802
    %v1804 = vpop.f32.mrf.mxu0
    %1805 = vdwg.mxu0
    %1806 = vmatpush.bf16.msra.mxu0 %v1699
    %1807 = vmatpush.bf16.msra.mxu0 %v1698
    %1808 = vmatpush.bf16.msra.mxu0 %v1697
    %1809 = vmatpush.bf16.msra.mxu0 %v1696
    %1810 = vmatpush.bf16.msra.mxu0 %v1695
    %1811 = vmatpush.bf16.msra.mxu0 %v1694
    %1812 = vmatpush.bf16.msra.mxu0 %v1693
    %1813 = vmatpush.bf16.msra.mxu0 %v1692
    %1814 = vmatmul.bf16.gmra.mxu0 %v1466
    %v1815 = vpop.f32.mrf.mxu0
    %v1816 = vadd.f32 %v1783, %v1815
    %v1817 = vpop.f32.mrf.mxu0
    %v1818 = vadd.f32 %v1785, %v1817
    %1819 = vmatmul.bf16.gmra.mxu0 %v1470
    %v1820 = vpop.f32.mrf.mxu0
    %v1821 = vadd.f32 %v1788, %v1820
    %v1822 = vpop.f32.mrf.mxu0
    %v1823 = vadd.f32 %v1790, %v1822
    %1824 = vmatmul.bf16.gmra.mxu0 %v1474
    %v1825 = vpop.f32.mrf.mxu0
    %v1826 = vadd.f32 %v1793, %v1825
    %v1827 = vpop.f32.mrf.mxu0
    %v1828 = vadd.f32 %v1795, %v1827
    %1829 = vmatmul.bf16.gmra.mxu0 %v1478
    %v1830 = vpop.f32.mrf.mxu0
    %v1831 = vadd.f32 %v1798, %v1830
    %v1832 = vpop.f32.mrf.mxu0
    %v1833 = vadd.f32 %v1800, %v1832
    %1834 = vmatmul.bf16.gmra.mxu0 %v1482
    %v1835 = vpop.f32.mrf.mxu0
    %v1836 = vadd.f32 %v1803, %v1835
    %v1837 = vpop.f32.mrf.mxu0
    %1838 = vdwg.mxu0
    %1839 = vmatpush.bf16.msra.mxu0 %v1707
    %1840 = vmatpush.bf16.msra.mxu0 %v1706
    %1841 = vmatpush.bf16.msra.mxu0 %v1705
    %1842 = vmatpush.bf16.msra.mxu0 %v1704
    %1843 = vmatpush.bf16.msra.mxu0 %v1703
    %1844 = vmatpush.bf16.msra.mxu0 %v1702
    %1845 = vmatpush.bf16.msra.mxu0 %v1701
    %1846 = vmatpush.bf16.msra.mxu0 %v1700
    %1847 = vmatmul.bf16.gmra.mxu0 %v1467
    %v1848 = vpop.f32.mrf.mxu0
    %v1849 = vadd.f32 %v1816, %v1848
    %v1850 = vpop.f32.mrf.mxu0
    %v1851 = vadd.f32 %v1818, %v1850
    %1852 = vmatmul.bf16.gmra.mxu0 %v1471
    %v1853 = vpop.f32.mrf.mxu0
    %v1854 = vadd.f32 %v1821, %v1853
    %v1855 = vpop.f32.mrf.mxu0
    %v1856 = vadd.f32 %v1823, %v1855
    %1857 = vmatmul.bf16.gmra.mxu0 %v1475
    %v1858 = vpop.f32.mrf.mxu0
    %v1859 = vadd.f32 %v1826, %v1858
    %v1860 = vpop.f32.mrf.mxu0
    %v1861 = vadd.f32 %v1828, %v1860
    %1862 = vmatmul.bf16.gmra.mxu0 %v1479
    %v1863 = vpop.f32.mrf.mxu0
    %v1864 = vadd.f32 %v1831, %v1863
    %v1865 = vpop.f32.mrf.mxu0
    %v1866 = vadd.f32 %v1833, %v1865
    %1867 = vmatmul.bf16.gmra.mxu0 %v1483
    %v1868 = vpop.f32.mrf.mxu0
    %v1869 = vadd.f32 %v1836, %v1868
    %v1870 = vpop.f32.mrf.mxu0
    %1871 = vdwg.mxu0
    %v1872 = vpack.c.bf16 %v1849, %v1849
    %v1873 = vpack.c.bf16 %v1851, %v1851
    %v1874 = vpack.c.bf16 %v1854, %v1854
    %v1875 = vpack.c.bf16 %v1856, %v1856
    %v1876 = vpack.c.bf16 %v1859, %v1859
    %v1877 = vpack.c.bf16 %v1861, %v1861
    %v1878 = vpack.c.bf16 %v1864, %v1864
    %v1879 = vpack.c.bf16 %v1866, %v1866
    %v1880 = vpack.c.bf16 %v1869, %v1869
    %v1881 = vld [vmem:[%s3 + $0x3c] sm:$0xf]
    %v1882 = vld [vmem:[%s3 + $0x50] sm:$0xf]
    %v1885 = vunpack.c.l.b16 %v1881
    %v1886 = vunpack.c.l.b16 %v1882
    %v1887 = vpack.c.b16 %v1886, %v1885
    %v1897 = vunpack.c.l.b16 %v1872
    %v1898 = vunpack.c.l.b16 %v1873
    %v1899 = vunpack.c.l.b16 %v1874
    %v1900 = vunpack.c.l.b16 %v1875
    %v1901 = vunpack.c.l.b16 %v1876
    %v1902 = vunpack.c.l.b16 %v1877
    %v1903 = vunpack.c.l.b16 %v1878
    %v1904 = vunpack.c.l.b16 %v1879
    %v1905 = vunpack.c.l.b16 %v1880
    %v1906 = vpack.c.b16 %v1898, %v1897
    %v1907 = vpack.c.b16 %v1900, %v1899
    %v1908 = vpack.c.b16 %v1902, %v1901
    %v1909 = vpack.c.b16 %v1904, %v1903
    %v1910 = vpack.c.b16 %v1905, %v1905
    %v1916 = vsel %vm330, %v1887, 0
    %v1919 = vsel %vm334, %v1910, 0
    %1921 = vmatpush.bf16.msra.mxu0 0
    %1922 = vmatpush.bf16.msra.mxu0 0
    %1923 = vmatpush.bf16.msra.mxu0 0
    %1924 = vmatpush.bf16.msra.mxu0 %v1919
    %1925 = vmatpush.bf16.msra.mxu0 %v1909
    %1926 = vmatpush.bf16.msra.mxu0 %v1908
    %1927 = vmatpush.bf16.msra.mxu0 %v1907
    %1928 = vmatpush.bf16.msra.mxu0 %v1906
    %1929 = vmatmul.bf16.gmra.mxu0 %v1916
    %v1930 = vpop.f32.mrf.mxu0
    %v1931 = vadd.f32 0.0, %v1930
    %v1932 = vpop.f32.mrf.mxu0
    %v1933 = vadd.f32 0.0, %v1932
    %1934 = vdwg.mxu0
    %v1935 = vld [vmem:[%s4 + $0x18] sm:$0xff]
    %v1936 = vld [vmem:[%s4 + $0x20] sm:$0xff]
    %1937 = vadd.xlane.f32.xlu0 %v1931
    %v1938 = vpop.xlane.xlu0 %1937
    %1939 = vadd.xlane.f32.xlu0 %v1933
    %v1940 = vpop.xlane.xlu0 %1939
    %v1941 = vmul.f32 %v1938, 0.0078125
    %v1942 = vmul.f32 %v1940, 0.0078125
    %v1943 = vsub.f32 %v1931, %v1941
    %v1944 = vsub.f32 %v1933, %v1942
    %v1945 = vmul.f32 %v1943, %v1943
    %v1946 = vmul.f32 %v1944, %v1944
    %1947 = vadd.xlane.f32.xlu0 %v1945
    %v1948 = vpop.xlane.xlu0 %1947
    %1949 = vadd.xlane.f32.xlu0 %v1946
    %v1950 = vpop.xlane.xlu0 %1949
    %v1951 = vmul.f32 %v1948, 0.0078125
    %v1952 = vmul.f32 %v1950, 0.0078125
    %v1953 = vadd.f32 %v1951, 1e-05
    %v1954 = vadd.f32 %v1952, 1e-05
    %v1955 = vrsqrt.pop %v1953
    %v1956 = vmul.f32 %v1955, %v1953
    %v1957 = vmul.f32 %v1956, %v1955
    %v1958 = vmul.f32 0.5, %v1957
    %v1959 = vsub.f32 1.5, %v1958
    %v1960 = vmul.f32 %v1955, %v1959
    %vm1961 = vweird.f32 %v1953
    %vm1962 = vweird.f32 %v1955
    %vm1963 = vmor %vm1961, %vm1962
    %v1964 = vsel %vm1963, %v1955, %v1960
    %v1965 = vrsqrt.pop %v1954
    %v1966 = vmul.f32 %v1965, %v1954
    %v1967 = vmul.f32 %v1966, %v1965
    %v1968 = vmul.f32 0.5, %v1967
    %v1969 = vsub.f32 1.5, %v1968
    %v1970 = vmul.f32 %v1965, %v1969
    %vm1971 = vweird.f32 %v1954
    %vm1972 = vweird.f32 %v1965
    %vm1973 = vmor %vm1971, %vm1972
    %v1974 = vsel %vm1973, %v1965, %v1970
    %v1975 = vmul.f32 %v1964, %v1935
    %v1976 = vmul.f32 %v1974, %v1936
    %1978 = vset.pattern.permute.xlu0 0
    %1979 = vperm.xlu0 %1978, %v1975
    %v1980 = vpop.permute.xlu0 %1979
    %1983 = vset.pattern.permute.xlu0 0
    %1984 = vperm.xlu0 %1983, %v1976
    %v1985 = vpop.permute.xlu0 %1984
    %v1987 = vmul.f32 %v1943, %v1980
    %v1988 = vmul.f32 %v1944, %v1985
    %1990 = vset.pattern.permute.xlu0 1
    %1991 = vperm.xlu0 %1990, %v1935
    %v1992 = vpop.permute.xlu0 %1991
    %1995 = vset.pattern.permute.xlu0 1
    %1996 = vperm.xlu0 %1995, %v1936
    %v1997 = vpop.permute.xlu0 %1996
    %v1999 = vadd.f32 %v1987, %v1992
    %v2000 = vadd.f32 %v1988, %v1997
    %v2001 = vmax.f32 %v1999, 0.0
    %v2002 = vmax.f32 %v2000, 0.0
    %2003 = vrot.lane.b32.xlu0 %v2001, 9
    %v2004 = vpop.permute.xlu0 %2003
    %2005 = vrot.lane.b32.xlu0 %v2002, 9
    %v2006 = vpop.permute.xlu0 %2005
    %2007 = vst [vmem:[#allocation2] sm:$0xff] %v2004
    %2008 = vst [vmem:[#allocation2 + $0x20] sm:$0xff] %v2006
    %2009 = vrot.lane.b32.xlu0 %v2001, 8
    %v2010 = vpop.permute.xlu0 %2009
    %2011 = vrot.lane.b32.xlu0 %v2002, 8
    %v2012 = vpop.permute.xlu0 %2011
    %2013 = vst [vmem:[#allocation2 + $0x40] sm:$0xff] %v2010
    %2014 = vst [vmem:[#allocation2 + $0x60] sm:$0xff] %v2012
    %2015 = vrot.lane.b32.xlu0 %v2001, 7
    %v2016 = vpop.permute.xlu0 %2015
    %2017 = vrot.lane.b32.xlu0 %v2002, 7
    %v2018 = vpop.permute.xlu0 %2017
    %2019 = vst [vmem:[#allocation2 + $0x80] sm:$0xff] %v2016
    %2020 = vst [vmem:[#allocation2 + $0xa0] sm:$0xff] %v2018
    %2021 = vrot.lane.b32.xlu0 %v2001, 1
    %v2022 = vpop.permute.xlu0 %2021
    %2023 = vrot.lane.b32.xlu0 %v2002, 1
    %v2024 = vpop.permute.xlu0 %2023
    %2025 = vst [vmem:[#allocation2 + $0xc0] sm:$0xff] %v2022
    %2026 = vst [vmem:[#allocation2 + $0xe0] sm:$0xff] %v2024
    %2027 = vst [vmem:[#allocation2 + $0x100] sm:$0xff] %v2001
    %2028 = vst [vmem:[#allocation2 + $0x120] sm:$0xff] %v2002
    %2029 = vrot.lane.b32.xlu0 %v2001, 127
    %v2030 = vpop.permute.xlu0 %2029
    %2031 = vrot.lane.b32.xlu0 %v2002, 127
    %v2032 = vpop.permute.xlu0 %2031
    %2033 = vst [vmem:[#allocation2 + $0x140] sm:$0xff] %v2030
    %2034 = vst [vmem:[#allocation2 + $0x160] sm:$0xff] %v2032
    %2035 = vrot.lane.b32.xlu0 %v2001, 121
    %v2036 = vpop.permute.xlu0 %2035
    %2037 = vrot.lane.b32.xlu0 %v2002, 121
    %v2038 = vpop.permute.xlu0 %2037
    %2039 = vst [vmem:[#allocation2 + $0x180] sm:$0xff] %v2036
    %2040 = vst [vmem:[#allocation2 + $0x1a0] sm:$0xff] %v2038
    %2041 = vrot.lane.b32.xlu0 %v2001, 120
    %v2042 = vpop.permute.xlu0 %2041
    %2043 = vrot.lane.b32.xlu0 %v2002, 120
    %v2044 = vpop.permute.xlu0 %2043
    %2045 = vst [vmem:[#allocation2 + $0x1c0] sm:$0xff] %v2042
    %2046 = vst [vmem:[#allocation2 + $0x1e0] sm:$0xff] %v2044
    %2047 = vrot.lane.b32.xlu0 %v2001, 119
    %v2048 = vpop.permute.xlu0 %2047
    %2049 = vrot.lane.b32.xlu0 %v2002, 119
    %v2050 = vpop.permute.xlu0 %2049
    %2051 = vst [vmem:[#allocation2 + $0x200] sm:$0xff] %v2048
    %2052 = vst [vmem:[#allocation2 + $0x220] sm:$0xff] %v2050
    %v2053 = vld [vmem:[#allocation2] sm:$0xff]
    %v2054 = vld [vmem:[#allocation2 + $0x20] sm:$0xff]
    %v2055 = vld [vmem:[#allocation2 + $0x40] sm:$0xff]
    %v2056 = vld [vmem:[#allocation2 + $0x60] sm:$0xff]
    %v2057 = vld [vmem:[#allocation2 + $0x80] sm:$0xff]
    %v2058 = vld [vmem:[#allocation2 + $0xa0] sm:$0xff]
    %v2059 = vld [vmem:[#allocation2 + $0xc0] sm:$0xff]
    %v2060 = vld [vmem:[#allocation2 + $0xe0] sm:$0xff]
    %v2061 = vld [vmem:[#allocation2 + $0x100] sm:$0xff]
    %v2062 = vld [vmem:[#allocation2 + $0x120] sm:$0xff]
    %v2063 = vld [vmem:[#allocation2 + $0x140] sm:$0xff]
    %v2064 = vld [vmem:[#allocation2 + $0x160] sm:$0xff]
    %v2065 = vld [vmem:[#allocation2 + $0x180] sm:$0xff]
    %v2066 = vld [vmem:[#allocation2 + $0x1a0] sm:$0xff]
    %v2067 = vld [vmem:[#allocation2 + $0x1c0] sm:$0xff]
    %v2068 = vld [vmem:[#allocation2 + $0x1e0] sm:$0xff]
    %v2069 = vld [vmem:[#allocation2 + $0x200] sm:$0xff]
    %v2070 = vld [vmem:[#allocation2 + $0x220] sm:$0xff]
    %v2071 = vld [vmem:[#allocation3 + $0x120] sm:$0xff]
    %v2072 = vld [vmem:[#allocation3 + $0x140] sm:$0xff]
    %v2073 = vld [vmem:[#allocation3 + $0x160] sm:$0xff]
    %v2074 = vld [vmem:[#allocation3 + $0x180] sm:$0xff]
    %v2075 = vld [vmem:[#allocation3 + $0x1a0] sm:$0xff]
    %v2076 = vld [vmem:[#allocation3 + $0x1c0] sm:$0xff]
    %v2077 = vld [vmem:[#allocation3 + $0x1e0] sm:$0xff]
    %v2078 = vld [vmem:[#allocation3 + $0x200] sm:$0xff]
    %v2079 = vld [vmem:[#allocation3 + $0x220] sm:$0xff]
    %v2080 = vld [vmem:[#allocation3 + $0x240] sm:$0xff]
    %v2081 = vld [vmem:[#allocation3 + $0x260] sm:$0xff]
    %v2082 = vld [vmem:[#allocation3 + $0x280] sm:$0xff]
    %v2083 = vld [vmem:[#allocation3 + $0x2a0] sm:$0xff]
    %v2084 = vld [vmem:[#allocation3 + $0x2c0] sm:$0xff]
    %v2085 = vld [vmem:[#allocation3 + $0x2e0] sm:$0xff]
    %v2086 = vld [vmem:[#allocation3 + $0x300] sm:$0xff]
    %v2087 = vld [vmem:[#allocation3 + $0x320] sm:$0xff]
    %v2088 = vld [vmem:[#allocation3 + $0x340] sm:$0xff]
    %v2089 = vmul.f32 %v2053, %v2071
    %v2090 = vmul.f32 %v2054, %v2072
    %v2091 = vmul.f32 %v2055, %v2073
    %v2092 = vmul.f32 %v2056, %v2074
    %v2093 = vmul.f32 %v2057, %v2075
    %v2094 = vmul.f32 %v2058, %v2076
    %v2095 = vmul.f32 %v2059, %v2077
    %v2096 = vmul.f32 %v2060, %v2078
    %v2097 = vmul.f32 %v2061, %v2079
    %v2098 = vmul.f32 %v2062, %v2080
    %v2099 = vmul.f32 %v2063, %v2081
    %v2100 = vmul.f32 %v2064, %v2082
    %v2101 = vmul.f32 %v2065, %v2083
    %v2102 = vmul.f32 %v2066, %v2084
    %v2103 = vmul.f32 %v2067, %v2085
    %v2104 = vmul.f32 %v2068, %v2086
    %v2105 = vmul.f32 %v2069, %v2087
    %v2106 = vmul.f32 %v2070, %v2088
    %v2107 = vpack.c.bf16 %v2090, %v2089
    %v2108 = vpack.c.bf16 %v2092, %v2091
    %v2109 = vpack.c.bf16 %v2094, %v2093
    %v2110 = vpack.c.bf16 %v2096, %v2095
    %v2111 = vpack.c.bf16 %v2098, %v2097
    %v2112 = vpack.c.bf16 %v2100, %v2099
    %v2113 = vpack.c.bf16 %v2102, %v2101
    %v2114 = vpack.c.bf16 %v2104, %v2103
    %v2115 = vpack.c.bf16 %v2106, %v2105
    %v2116 = vld [vmem:[%s3 + $0x64] sm:$0xff]
    %v2117 = vld [vmem:[%s3 + $0x78] sm:$0xff]
    %v2120 = vunpack.c.l.b16 %v2116
    %v2121 = vunpack.c.h.b16 %v2116
    %v2122 = vunpack.c.l.b16 %v2117
    %v2123 = vunpack.c.h.b16 %v2117
    %v2124 = vpack.c.b16 %v2122, %v2120
    %v2125 = vpack.c.b16 %v2123, %v2121
    %vm2127 = vcmask 130048
    %v2129 = vsel %vm2127, %v2125, 0
    %2131 = vmatpush.bf16.msra.mxu0 %v2114
    %2132 = vmatpush.bf16.msra.mxu0 %v2113
    %2133 = vmatpush.bf16.msra.mxu0 %v2112
    %2134 = vmatpush.bf16.msra.mxu0 %v2111
    %2135 = vmatpush.bf16.msra.mxu0 %v2110
    %2136 = vmatpush.bf16.msra.mxu0 %v2109
    %2137 = vmatpush.bf16.msra.mxu0 %v2108
    %2138 = vmatpush.bf16.msra.mxu0 %v2107
    %2139 = vmatmul.bf16.gmra.mxu0 %v2124
    %v2140 = vpop.f32.mrf.mxu0
    %v2141 = vadd.f32 0.0, %v2140
    %v2142 = vpop.f32.mrf.mxu0
    %v2143 = vadd.f32 0.0, %v2142
    %2144 = vdwg.mxu0
    %2145 = vmatpush.bf16.msra.mxu0 0
    %2146 = vmatpush.bf16.msra.mxu0 0
    %2147 = vmatpush.bf16.msra.mxu0 0
    %2148 = vmatpush.bf16.msra.mxu0 0
    %2149 = vmatpush.bf16.msra.mxu0 0
    %2150 = vmatpush.bf16.msra.mxu0 0
    %2151 = vmatpush.bf16.msra.mxu0 0
    %2152 = vmatpush.bf16.msra.mxu0 %v2115
    %2153 = vmatmul.bf16.gmra.mxu0 %v2129
    %v2154 = vpop.f32.mrf.mxu0
    %v2155 = vadd.f32 %v2141, %v2154
    %v2156 = vpop.f32.mrf.mxu0
    %v2157 = vadd.f32 %v2143, %v2156
    %2158 = vdwg.mxu0
    %v2159 = vld [vmem:[%s4 + $0x28] sm:$0xff]
    %v2160 = vld [vmem:[%s4 + $0x30] sm:$0xff]
    %2161 = vadd.xlane.f32.xlu0 %v2155
    %v2162 = vpop.xlane.xlu0 %2161
    %2163 = vadd.xlane.f32.xlu0 %v2157
    %v2164 = vpop.xlane.xlu0 %2163
    %v2165 = vmul.f32 %v2162, 0.0078125
    %v2166 = vmul.f32 %v2164, 0.0078125
    %v2167 = vsub.f32 %v2155, %v2165
    %v2168 = vsub.f32 %v2157, %v2166
    %v2169 = vmul.f32 %v2167, %v2167
    %v2170 = vmul.f32 %v2168, %v2168
    %2171 = vadd.xlane.f32.xlu0 %v2169
    %v2172 = vpop.xlane.xlu0 %2171
    %2173 = vadd.xlane.f32.xlu0 %v2170
    %v2174 = vpop.xlane.xlu0 %2173
    %v2175 = vmul.f32 %v2172, 0.0078125
    %v2176 = vmul.f32 %v2174, 0.0078125
    %v2177 = vadd.f32 %v2175, 1e-05
    %v2178 = vadd.f32 %v2176, 1e-05
    %v2179 = vrsqrt.pop %v2177
    %v2180 = vmul.f32 %v2179, %v2177
    %v2181 = vmul.f32 %v2180, %v2179
    %v2182 = vmul.f32 0.5, %v2181
    %v2183 = vsub.f32 1.5, %v2182
    %v2184 = vmul.f32 %v2179, %v2183
    %vm2185 = vweird.f32 %v2177
    %vm2186 = vweird.f32 %v2179
    %vm2187 = vmor %vm2185, %vm2186
    %v2188 = vsel %vm2187, %v2179, %v2184
    %v2189 = vrsqrt.pop %v2178
    %v2190 = vmul.f32 %v2189, %v2178
    %v2191 = vmul.f32 %v2190, %v2189
    %v2192 = vmul.f32 0.5, %v2191
    %v2193 = vsub.f32 1.5, %v2192
    %v2194 = vmul.f32 %v2189, %v2193
    %vm2195 = vweird.f32 %v2178
    %vm2196 = vweird.f32 %v2189
    %vm2197 = vmor %vm2195, %vm2196
    %v2198 = vsel %vm2197, %v2189, %v2194
    %v2199 = vmul.f32 %v2188, %v2159
    %v2200 = vmul.f32 %v2198, %v2160
    %2202 = vset.pattern.permute.xlu0 0
    %2203 = vperm.xlu0 %2202, %v2199
    %v2204 = vpop.permute.xlu0 %2203
    %2207 = vset.pattern.permute.xlu0 0
    %2208 = vperm.xlu0 %2207, %v2200
    %v2209 = vpop.permute.xlu0 %2208
    %v2211 = vmul.f32 %v2167, %v2204
    %v2212 = vmul.f32 %v2168, %v2209
    %2214 = vset.pattern.permute.xlu0 1
    %2215 = vperm.xlu0 %2214, %v2159
    %v2216 = vpop.permute.xlu0 %2215
    %2219 = vset.pattern.permute.xlu0 1
    %2220 = vperm.xlu0 %2219, %v2160
    %v2221 = vpop.permute.xlu0 %2220
    %v2223 = vadd.f32 %v2211, %v2216
    %v2224 = vadd.f32 %v2212, %v2221
    %v2225 = vld [vmem:[%s3 + $0x8c] sm:$0xf]
    %v2226 = vld [vmem:[%s3 + $0xa0] sm:$0xf]
    %v2229 = vunpack.c.l.b16 %v2225
    %v2230 = vunpack.c.l.b16 %v2226
    %v2231 = vpack.c.b16 %v2230, %v2229
    %vm2232 = vcmask 64512
    %v2234 = vsel %vm2232, %v2231, 0
    %v2237 = vsel %vm334, %v1876, 0
    %2239 = vmatpush.bf16.msra.mxu0 0
    %2240 = vmatpush.bf16.msra.mxu0 0
    %2241 = vmatpush.bf16.msra.mxu0 0
    %2242 = vmatpush.bf16.msra.mxu0 0
    %2243 = vmatpush.bf16.msra.mxu0 0
    %2244 = vmatpush.bf16.msra.mxu0 0
    %2245 = vmatpush.bf16.msra.mxu0 0
    %2246 = vmatpush.bf16.msra.mxu0 %v2237
    %2247 = vmatmul.bf16.gmra.mxu0 %v2234
    %v2248 = vpop.f32.mrf.mxu0
    %v2249 = vadd.f32 0.0, %v2248
    %v2250 = vpop.f32.mrf.mxu0
    %v2251 = vadd.f32 0.0, %v2250
    %2252 = vdwg.mxu0
    %v2253 = vld [vmem:[%s4 + $0x38] sm:$0xff]
    %v2254 = vld [vmem:[%s4 + $0x40] sm:$0xff]
    %2255 = vadd.xlane.f32.xlu0 %v2249
    %v2256 = vpop.xlane.xlu0 %2255
    %2257 = vadd.xlane.f32.xlu0 %v2251
    %v2258 = vpop.xlane.xlu0 %2257
    %v2259 = vmul.f32 %v2256, 0.0078125
    %v2260 = vmul.f32 %v2258, 0.0078125
    %v2261 = vsub.f32 %v2249, %v2259
    %v2262 = vsub.f32 %v2251, %v2260
    %v2263 = vmul.f32 %v2261, %v2261
    %v2264 = vmul.f32 %v2262, %v2262
    %2265 = vadd.xlane.f32.xlu0 %v2263
    %v2266 = vpop.xlane.xlu0 %2265
    %2267 = vadd.xlane.f32.xlu0 %v2264
    %v2268 = vpop.xlane.xlu0 %2267
    %v2269 = vmul.f32 %v2266, 0.0078125
    %v2270 = vmul.f32 %v2268, 0.0078125
    %v2271 = vadd.f32 %v2269, 1e-05
    %v2272 = vadd.f32 %v2270, 1e-05
    %v2273 = vrsqrt.pop %v2271
    %v2274 = vmul.f32 %v2273, %v2271
    %v2275 = vmul.f32 %v2274, %v2273
    %v2276 = vmul.f32 0.5, %v2275
    %v2277 = vsub.f32 1.5, %v2276
    %v2278 = vmul.f32 %v2273, %v2277
    %vm2279 = vweird.f32 %v2271
    %vm2280 = vweird.f32 %v2273
    %vm2281 = vmor %vm2279, %vm2280
    %v2282 = vsel %vm2281, %v2273, %v2278
    %v2283 = vrsqrt.pop %v2272
    %v2284 = vmul.f32 %v2283, %v2272
    %v2285 = vmul.f32 %v2284, %v2283
    %v2286 = vmul.f32 0.5, %v2285
    %v2287 = vsub.f32 1.5, %v2286
    %v2288 = vmul.f32 %v2283, %v2287
    %vm2289 = vweird.f32 %v2272
    %vm2290 = vweird.f32 %v2283
    %vm2291 = vmor %vm2289, %vm2290
    %v2292 = vsel %vm2291, %v2283, %v2288
    %v2293 = vmul.f32 %v2282, %v2253
    %v2294 = vmul.f32 %v2292, %v2254
    %2296 = vset.pattern.permute.xlu0 0
    %2297 = vperm.xlu0 %2296, %v2293
    %v2298 = vpop.permute.xlu0 %2297
    %2301 = vset.pattern.permute.xlu0 0
    %2302 = vperm.xlu0 %2301, %v2294
    %v2303 = vpop.permute.xlu0 %2302
    %v2305 = vmul.f32 %v2261, %v2298
    %v2306 = vmul.f32 %v2262, %v2303
    %2308 = vset.pattern.permute.xlu0 1
    %2309 = vperm.xlu0 %2308, %v2253
    %v2310 = vpop.permute.xlu0 %2309
    %2313 = vset.pattern.permute.xlu0 1
    %2314 = vperm.xlu0 %2313, %v2254
    %v2315 = vpop.permute.xlu0 %2314
    %v2317 = vadd.f32 %v2305, %v2310
    %v2318 = vadd.f32 %v2306, %v2315
    %v2319 = vadd.f32 %v2223, %v2317
    %v2320 = vadd.f32 %v2224, %v2318
    %v2321 = vmax.f32 %v2319, 0.0
    %v2322 = vmax.f32 %v2320, 0.0
    %2323 = vrot.lane.b32.xlu0 %v2321, 9
    %v2324 = vpop.permute.xlu0 %2323
    %2325 = vrot.lane.b32.xlu0 %v2322, 9
    %v2326 = vpop.permute.xlu0 %2325
    %2327 = vst [vmem:[#allocation2] sm:$0xff] %v2324
    %2328 = vst [vmem:[#allocation2 + $0x20] sm:$0xff] %v2326
    %2329 = vrot.lane.b32.xlu0 %v2321, 8
    %v2330 = vpop.permute.xlu0 %2329
    %2331 = vrot.lane.b32.xlu0 %v2322, 8
    %v2332 = vpop.permute.xlu0 %2331
    %2333 = vst [vmem:[#allocation2 + $0x40] sm:$0xff] %v2330
    %2334 = vst [vmem:[#allocation2 + $0x60] sm:$0xff] %v2332
    %2335 = vrot.lane.b32.xlu0 %v2321, 7
    %v2336 = vpop.permute.xlu0 %2335
    %2337 = vrot.lane.b32.xlu0 %v2322, 7
    %v2338 = vpop.permute.xlu0 %2337
    %2339 = vst [vmem:[#allocation2 + $0x80] sm:$0xff] %v2336
    %2340 = vst [vmem:[#allocation2 + $0xa0] sm:$0xff] %v2338
    %2341 = vrot.lane.b32.xlu0 %v2321, 1
    %v2342 = vpop.permute.xlu0 %2341
    %2343 = vrot.lane.b32.xlu0 %v2322, 1
    %v2344 = vpop.permute.xlu0 %2343
    %2345 = vst [vmem:[#allocation2 + $0xc0] sm:$0xff] %v2342
    %2346 = vst [vmem:[#allocation2 + $0xe0] sm:$0xff] %v2344
    %2347 = vst [vmem:[#allocation2 + $0x100] sm:$0xff] %v2321
    %2348 = vst [vmem:[#allocation2 + $0x120] sm:$0xff] %v2322
    %2349 = vrot.lane.b32.xlu0 %v2321, 127
    %v2350 = vpop.permute.xlu0 %2349
    %2351 = vrot.lane.b32.xlu0 %v2322, 127
    %v2352 = vpop.permute.xlu0 %2351
    %2353 = vst [vmem:[#allocation2 + $0x140] sm:$0xff] %v2350
    %2354 = vst [vmem:[#allocation2 + $0x160] sm:$0xff] %v2352
    %2355 = vrot.lane.b32.xlu0 %v2321, 121
    %v2356 = vpop.permute.xlu0 %2355
    %2357 = vrot.lane.b32.xlu0 %v2322, 121
    %v2358 = vpop.permute.xlu0 %2357
    %2359 = vst [vmem:[#allocation2 + $0x180] sm:$0xff] %v2356
    %2360 = vst [vmem:[#allocation2 + $0x1a0] sm:$0xff] %v2358
    %2361 = vrot.lane.b32.xlu0 %v2321, 120
    %v2362 = vpop.permute.xlu0 %2361
    %2363 = vrot.lane.b32.xlu0 %v2322, 120
    %v2364 = vpop.permute.xlu0 %2363
    %2365 = vst [vmem:[#allocation2 + $0x1c0] sm:$0xff] %v2362
    %2366 = vst [vmem:[#allocation2 + $0x1e0] sm:$0xff] %v2364
    %2367 = vrot.lane.b32.xlu0 %v2321, 119
    %v2368 = vpop.permute.xlu0 %2367
    %2369 = vrot.lane.b32.xlu0 %v2322, 119
    %v2370 = vpop.permute.xlu0 %2369
    %2371 = vst [vmem:[#allocation2 + $0x200] sm:$0xff] %v2368
    %2372 = vst [vmem:[#allocation2 + $0x220] sm:$0xff] %v2370
    %v2373 = vld [vmem:[#allocation2] sm:$0xff]
    %v2374 = vld [vmem:[#allocation2 + $0x20] sm:$0xff]
    %v2375 = vld [vmem:[#allocation2 + $0x40] sm:$0xff]
    %v2376 = vld [vmem:[#allocation2 + $0x60] sm:$0xff]
    %v2377 = vld [vmem:[#allocation2 + $0x80] sm:$0xff]
    %v2378 = vld [vmem:[#allocation2 + $0xa0] sm:$0xff]
    %v2379 = vld [vmem:[#allocation2 + $0xc0] sm:$0xff]
    %v2380 = vld [vmem:[#allocation2 + $0xe0] sm:$0xff]
    %v2381 = vld [vmem:[#allocation2 + $0x100] sm:$0xff]
    %v2382 = vld [vmem:[#allocation2 + $0x120] sm:$0xff]
    %v2383 = vld [vmem:[#allocation2 + $0x140] sm:$0xff]
    %v2384 = vld [vmem:[#allocation2 + $0x160] sm:$0xff]
    %v2385 = vld [vmem:[#allocation2 + $0x180] sm:$0xff]
    %v2386 = vld [vmem:[#allocation2 + $0x1a0] sm:$0xff]
    %v2387 = vld [vmem:[#allocation2 + $0x1c0] sm:$0xff]
    %v2388 = vld [vmem:[#allocation2 + $0x1e0] sm:$0xff]
    %v2389 = vld [vmem:[#allocation2 + $0x200] sm:$0xff]
    %v2390 = vld [vmem:[#allocation2 + $0x220] sm:$0xff]
    %v2391 = vld [vmem:[#allocation3 + $0x120] sm:$0xff]
    %v2392 = vld [vmem:[#allocation3 + $0x140] sm:$0xff]
    %v2393 = vld [vmem:[#allocation3 + $0x160] sm:$0xff]
    %v2394 = vld [vmem:[#allocation3 + $0x180] sm:$0xff]
    %v2395 = vld [vmem:[#allocation3 + $0x1a0] sm:$0xff]
    %v2396 = vld [vmem:[#allocation3 + $0x1c0] sm:$0xff]
    %v2397 = vld [vmem:[#allocation3 + $0x1e0] sm:$0xff]
    %v2398 = vld [vmem:[#allocation3 + $0x200] sm:$0xff]
    %v2399 = vld [vmem:[#allocation3 + $0x220] sm:$0xff]
    %v2400 = vld [vmem:[#allocation3 + $0x240] sm:$0xff]
    %v2401 = vld [vmem:[#allocation3 + $0x260] sm:$0xff]
    %v2402 = vld [vmem:[#allocation3 + $0x280] sm:$0xff]
    %v2403 = vld [vmem:[#allocation3 + $0x2a0] sm:$0xff]
    %v2404 = vld [vmem:[#allocation3 + $0x2c0] sm:$0xff]
    %v2405 = vld [vmem:[#allocation3 + $0x2e0] sm:$0xff]
    %v2406 = vld [vmem:[#allocation3 + $0x300] sm:$0xff]
    %v2407 = vld [vmem:[#allocation3 + $0x320] sm:$0xff]
    %v2408 = vld [vmem:[#allocation3 + $0x340] sm:$0xff]
    %v2409 = vmul.f32 %v2373, %v2391
    %v2410 = vmul.f32 %v2374, %v2392
    %v2411 = vmul.f32 %v2375, %v2393
    %v2412 = vmul.f32 %v2376, %v2394
    %v2413 = vmul.f32 %v2377, %v2395
    %v2414 = vmul.f32 %v2378, %v2396
    %v2415 = vmul.f32 %v2379, %v2397
    %v2416 = vmul.f32 %v2380, %v2398
    %v2417 = vmul.f32 %v2381, %v2399
    %v2418 = vmul.f32 %v2382, %v2400
    %v2419 = vmul.f32 %v2383, %v2401
    %v2420 = vmul.f32 %v2384, %v2402
    %v2421 = vmul.f32 %v2385, %v2403
    %v2422 = vmul.f32 %v2386, %v2404
    %v2423 = vmul.f32 %v2387, %v2405
    %v2424 = vmul.f32 %v2388, %v2406
    %v2425 = vmul.f32 %v2389, %v2407
    %v2426 = vmul.f32 %v2390, %v2408
    %v2427 = vpack.c.bf16 %v2410, %v2409
    %v2428 = vpack.c.bf16 %v2412, %v2411
    %v2429 = vpack.c.bf16 %v2414, %v2413
    %v2430 = vpack.c.bf16 %v2416, %v2415
    %v2431 = vpack.c.bf16 %v2418, %v2417
    %v2432 = vpack.c.bf16 %v2420, %v2419
    %v2433 = vpack.c.bf16 %v2422, %v2421
    %v2434 = vpack.c.bf16 %v2424, %v2423
    %v2435 = vpack.c.bf16 %v2426, %v2425
    %v2436 = vld [vmem:[#allocation5 + $0x100] sm:$0xf]
    %v2437 = vld [vmem:[#allocation5 + $0x104] sm:$0xf]
    %v2438 = vld [vmem:[#allocation5 + $0x108] sm:$0xf]
    %v2439 = vld [vmem:[#allocation5 + $0x10c] sm:$0xf]
    %v2440 = vld [vmem:[#allocation5 + $0x110] sm:$0xf]
    %v2441 = vld [vmem:[#allocation5 + $0x114] sm:$0xf]
    %v2442 = vld [vmem:[#allocation5 + $0x118] sm:$0xf]
    %v2443 = vld [vmem:[#allocation5 + $0x11c] sm:$0xf]
    %v2444 = vld [vmem:[#allocation5 + $0x120] sm:$0xf]
    %v2445 = vld [vmem:[#allocation5 + $0x124] sm:$0xf]
    %v2446 = vld [vmem:[#allocation5 + $0x128] sm:$0xf]
    %v2447 = vld [vmem:[#allocation5 + $0x12c] sm:$0xf]
    %v2448 = vld [vmem:[#allocation5 + $0x130] sm:$0xf]
    %v2449 = vld [vmem:[#allocation5 + $0x134] sm:$0xf]
    %v2450 = vld [vmem:[#allocation5 + $0x138] sm:$0xf]
    %v2451 = vld [vmem:[#allocation5 + $0x13c] sm:$0xf]
    %v2468 = vunpack.c.l.b16 %v2436
    %v2469 = vunpack.c.l.b16 %v2437
    %v2470 = vunpack.c.l.b16 %v2438
    %v2471 = vunpack.c.l.b16 %v2439
    %v2472 = vunpack.c.l.b16 %v2440
    %v2473 = vunpack.c.l.b16 %v2441
    %v2474 = vunpack.c.l.b16 %v2442
    %v2475 = vunpack.c.l.b16 %v2443
    %v2476 = vunpack.c.l.b16 %v2444
    %v2477 = vunpack.c.l.b16 %v2445
    %v2478 = vunpack.c.l.b16 %v2446
    %v2479 = vunpack.c.l.b16 %v2447
    %v2480 = vunpack.c.l.b16 %v2448
    %v2481 = vunpack.c.l.b16 %v2449
    %v2482 = vunpack.c.l.b16 %v2450
    %v2483 = vunpack.c.l.b16 %v2451
    %v2484 = vpack.c.b16 %v2469, %v2468
    %v2485 = vpack.c.b16 %v2471, %v2470
    %v2486 = vpack.c.b16 %v2473, %v2472
    %v2487 = vpack.c.b16 %v2475, %v2474
    %v2488 = vpack.c.b16 %v2477, %v2476
    %v2489 = vpack.c.b16 %v2479, %v2478
    %v2490 = vpack.c.b16 %v2481, %v2480
    %v2491 = vpack.c.b16 %v2483, %v2482
    %2500 = vmatpush.bf16.msra.mxu0 %v2491
    %2501 = vmatpush.bf16.msra.mxu0 %v2490
    %2502 = vmatpush.bf16.msra.mxu0 %v2489
    %2503 = vmatpush.bf16.msra.mxu0 %v2488
    %2504 = vmatpush.bf16.msra.mxu0 %v2487
    %2505 = vmatpush.bf16.msra.mxu0 %v2486
    %2506 = vmatpush.bf16.msra.mxu0 %v2485
    %2507 = vmatpush.bf16.msra.mxu0 %v2484
    %2508 = vmatmul.bf16.gmra.mxu0 %v2427
    %v2509 = vpop.f32.mrf.mxu0
    %v2510 = vadd.f32 0.0, %v2509
    %v2511 = vpop.f32.mrf.mxu0
    %v2512 = vadd.f32 0.0, %v2511
    %2513 = vmatmul.bf16.gmra.mxu0 %v2428
    %v2514 = vpop.f32.mrf.mxu0
    %v2515 = vadd.f32 0.0, %v2514
    %v2516 = vpop.f32.mrf.mxu0
    %v2517 = vadd.f32 0.0, %v2516
    %2518 = vmatmul.bf16.gmra.mxu0 %v2429
    %v2519 = vpop.f32.mrf.mxu0
    %v2520 = vadd.f32 0.0, %v2519
    %v2521 = vpop.f32.mrf.mxu0
    %v2522 = vadd.f32 0.0, %v2521
    %2523 = vmatmul.bf16.gmra.mxu0 %v2430
    %v2524 = vpop.f32.mrf.mxu0
    %v2525 = vadd.f32 0.0, %v2524
    %v2526 = vpop.f32.mrf.mxu0
    %v2527 = vadd.f32 0.0, %v2526
    %2528 = vmatmul.bf16.gmra.mxu0 %v2431
    %v2529 = vpop.f32.mrf.mxu0
    %v2530 = vadd.f32 0.0, %v2529
    %v2531 = vpop.f32.mrf.mxu0
    %v2532 = vadd.f32 0.0, %v2531
    %2533 = vmatmul.bf16.gmra.mxu0 %v2432
    %v2534 = vpop.f32.mrf.mxu0
    %v2535 = vadd.f32 0.0, %v2534
    %v2536 = vpop.f32.mrf.mxu0
    %v2537 = vadd.f32 0.0, %v2536
    %2538 = vmatmul.bf16.gmra.mxu0 %v2433
    %v2539 = vpop.f32.mrf.mxu0
    %v2540 = vadd.f32 0.0, %v2539
    %v2541 = vpop.f32.mrf.mxu0
    %v2542 = vadd.f32 0.0, %v2541
    %2543 = vmatmul.bf16.gmra.mxu0 %v2434
    %v2544 = vpop.f32.mrf.mxu0
    %v2545 = vadd.f32 0.0, %v2544
    %v2546 = vpop.f32.mrf.mxu0
    %v2547 = vadd.f32 0.0, %v2546
    %2548 = vmatmul.bf16.gmra.mxu0 %v2435
    %v2549 = vpop.f32.mrf.mxu0
    %v2550 = vadd.f32 0.0, %v2549
    %v2551 = vpop.f32.mrf.mxu0
    %v2552 = vadd.f32 0.0, %v2551
    %2553 = vdwg.mxu0
    %v2554 = vpack.c.bf16 %v2510, %v2510
    %v2555 = vpack.c.bf16 %v2512, %v2512
    %v2556 = vpack.c.bf16 %v2515, %v2515
    %v2557 = vpack.c.bf16 %v2517, %v2517
    %v2558 = vpack.c.bf16 %v2520, %v2520
    %v2559 = vpack.c.bf16 %v2522, %v2522
    %v2560 = vpack.c.bf16 %v2525, %v2525
    %v2561 = vpack.c.bf16 %v2527, %v2527
    %v2562 = vpack.c.bf16 %v2530, %v2530
    %v2563 = vpack.c.bf16 %v2532, %v2532
    %v2564 = vpack.c.bf16 %v2535, %v2535
    %v2565 = vpack.c.bf16 %v2537, %v2537
    %v2566 = vpack.c.bf16 %v2540, %v2540
    %v2567 = vpack.c.bf16 %v2542, %v2542
    %v2568 = vpack.c.bf16 %v2545, %v2545
    %v2569 = vpack.c.bf16 %v2547, %v2547
    %v2570 = vpack.c.bf16 %v2550, %v2550
    %v2571 = vpack.c.bf16 %v2552, %v2552
    %v2572 = vld [vmem:[%s3 + $0xb4] sm:$0xff]
    %v2573 = vld [vmem:[%s3 + $0xc8] sm:$0xff]
    %v2574 = vld [vmem:[%s3 + $0xdc] sm:$0xff]
    %v2575 = vld [vmem:[%s3 + $0xf0] sm:$0xff]
    %v2580 = vunpack.c.l.b16 %v2572
    %v2581 = vunpack.c.h.b16 %v2572
    %v2582 = vunpack.c.l.b16 %v2573
    %v2583 = vunpack.c.h.b16 %v2573
    %v2584 = vunpack.c.l.b16 %v2574
    %v2585 = vunpack.c.h.b16 %v2574
    %v2586 = vunpack.c.l.b16 %v2575
    %v2587 = vunpack.c.h.b16 %v2575
    %v2588 = vpack.c.b16 %v2582, %v2580
    %v2589 = vpack.c.b16 %v2583, %v2581
    %v2590 = vpack.c.b16 %v2586, %v2584
    %v2591 = vpack.c.b16 %v2587, %v2585
    %v2612 = vunpack.c.l.b16 %v2554
    %v2613 = vunpack.c.l.b16 %v2555
    %v2614 = vunpack.c.l.b16 %v2556
    %v2615 = vunpack.c.l.b16 %v2557
    %v2616 = vunpack.c.l.b16 %v2558
    %v2617 = vunpack.c.l.b16 %v2559
    %v2618 = vunpack.c.l.b16 %v2560
    %v2619 = vunpack.c.l.b16 %v2561
    %v2620 = vunpack.c.l.b16 %v2562
    %v2621 = vunpack.c.l.b16 %v2563
    %v2622 = vunpack.c.l.b16 %v2564
    %v2623 = vunpack.c.l.b16 %v2565
    %v2624 = vunpack.c.l.b16 %v2566
    %v2625 = vunpack.c.l.b16 %v2567
    %v2626 = vunpack.c.l.b16 %v2568
    %v2627 = vunpack.c.l.b16 %v2569
    %v2628 = vunpack.c.l.b16 %v2570
    %v2629 = vunpack.c.l.b16 %v2571
    %v2630 = vpack.c.b16 %v2613, %v2612
    %v2631 = vpack.c.b16 %v2615, %v2614
    %v2632 = vpack.c.b16 %v2617, %v2616
    %v2633 = vpack.c.b16 %v2619, %v2618
    %v2634 = vpack.c.b16 %v2621, %v2620
    %v2635 = vpack.c.b16 %v2623, %v2622
    %v2636 = vpack.c.b16 %v2625, %v2624
    %v2637 = vpack.c.b16 %v2627, %v2626
    %v2638 = vpack.c.b16 %v2629, %v2628
    %v2649 = vsel %vm2127, %v2589, 0
    %v2652 = vsel %vm2127, %v2591, 0
    %2654 = vmatpush.bf16.msra.mxu0 %v2637
    %2655 = vmatpush.bf16.msra.mxu0 %v2636
    %2656 = vmatpush.bf16.msra.mxu0 %v2635
    %2657 = vmatpush.bf16.msra.mxu0 %v2634
    %2658 = vmatpush.bf16.msra.mxu0 %v2633
    %2659 = vmatpush.bf16.msra.mxu0 %v2632
    %2660 = vmatpush.bf16.msra.mxu0 %v2631
    %2661 = vmatpush.bf16.msra.mxu0 %v2630
    %2662 = vmatmul.bf16.gmra.mxu0 %v2588
    %v2663 = vpop.f32.mrf.mxu0
    %v2664 = vadd.f32 0.0, %v2663
    %v2665 = vpop.f32.mrf.mxu0
    %v2666 = vadd.f32 0.0, %v2665
    %2667 = vmatmul.bf16.gmra.mxu0 %v2590
    %v2668 = vpop.f32.mrf.mxu0
    %v2669 = vadd.f32 0.0, %v2668
    %v2670 = vpop.f32.mrf.mxu0
    %v2671 = vadd.f32 0.0, %v2670
    %2672 = vdwg.mxu0
    %2673 = vmatpush.bf16.msra.mxu0 0
    %2674 = vmatpush.bf16.msra.mxu0 0
    %2675 = vmatpush.bf16.msra.mxu0 0
    %2676 = vmatpush.bf16.msra.mxu0 0
    %2677 = vmatpush.bf16.msra.mxu0 0
    %2678 = vmatpush.bf16.msra.mxu0 0
    %2679 = vmatpush.bf16.msra.mxu0 0
    %2680 = vmatpush.bf16.msra.mxu0 %v2638
    %2681 = vmatmul.bf16.gmra.mxu0 %v2649
    %v2682 = vpop.f32.mrf.mxu0
    %v2683 = vadd.f32 %v2664, %v2682
    %v2684 = vpop.f32.mrf.mxu0
    %v2685 = vadd.f32 %v2666, %v2684
    %2686 = vmatmul.bf16.gmra.mxu0 %v2652
    %v2687 = vpop.f32.mrf.mxu0
    %v2688 = vadd.f32 %v2669, %v2687
    %v2689 = vpop.f32.mrf.mxu0
    %v2690 = vadd.f32 %v2671, %v2689
    %2691 = vdwg.mxu0
    %v2692 = vld [vmem:[%s4 + $0x48] sm:$0xff]
    %v2693 = vld [vmem:[%s4 + $0x50] sm:$0xff]
    %v2694 = vld [vmem:[%s4 + $0x58] sm:$0xff]
    %v2695 = vld [vmem:[%s4 + $0x60] sm:$0xff]
    %vm2696 = vcmask 261120
    %v2697 = vsel %vm2696, %v2683, 0.0
    %2698 = vadd.xlane.f32.xlu0 %v2697
    %v2699 = vpop.xlane.xlu0 %2698
    %v2700 = vsel %vm2696, %v2685, 0.0
    %2701 = vadd.xlane.f32.xlu0 %v2700
    %v2702 = vpop.xlane.xlu0 %2701
    %v2703 = vsel %vm2696, %v2688, 0.0
    %2704 = vadd.xlane.f32.xlu0 %v2703
    %v2705 = vpop.xlane.xlu0 %2704
    %v2706 = vsel %vm2696, %v2690, 0.0
    %2707 = vadd.xlane.f32.xlu0 %v2706
    %v2708 = vpop.xlane.xlu0 %2707
    %v2709 = vmul.f32 %v2699, 0.03125
    %v2710 = vmul.f32 %v2702, 0.03125
    %v2711 = vmul.f32 %v2705, 0.03125
    %v2712 = vmul.f32 %v2708, 0.03125
    %v2713 = vsub.f32 %v2683, %v2709
    %v2714 = vsub.f32 %v2685, %v2710
    %v2715 = vsub.f32 %v2688, %v2711
    %v2716 = vsub.f32 %v2690, %v2712
    %v2717 = vmul.f32 %v2713, %v2713
    %v2718 = vmul.f32 %v2714, %v2714
    %v2719 = vmul.f32 %v2715, %v2715
    %v2720 = vmul.f32 %v2716, %v2716
    %v2721 = vsel %vm2696, %v2717, 0.0
    %2722 = vadd.xlane.f32.xlu0 %v2721
    %v2723 = vpop.xlane.xlu0 %2722
    %v2724 = vsel %vm2696, %v2718, 0.0
    %2725 = vadd.xlane.f32.xlu0 %v2724
    %v2726 = vpop.xlane.xlu0 %2725
    %v2727 = vsel %vm2696, %v2719, 0.0
    %2728 = vadd.xlane.f32.xlu0 %v2727
    %v2729 = vpop.xlane.xlu0 %2728
    %v2730 = vsel %vm2696, %v2720, 0.0
    %2731 = vadd.xlane.f32.xlu0 %v2730
    %v2732 = vpop.xlane.xlu0 %2731
    %v2733 = vmul.f32 %v2723, 0.03125
    %v2734 = vmul.f32 %v2726, 0.03125
    %v2735 = vmul.f32 %v2729, 0.03125
    %v2736 = vmul.f32 %v2732, 0.03125
    %v2737 = vadd.f32 %v2733, 1e-05
    %v2738 = vadd.f32 %v2734, 1e-05
    %v2739 = vadd.f32 %v2735, 1e-05
    %v2740 = vadd.f32 %v2736, 1e-05
    %v2741 = vrsqrt.pop %v2737
    %v2742 = vmul.f32 %v2741, %v2737
    %v2743 = vmul.f32 %v2742, %v2741
    %v2744 = vmul.f32 0.5, %v2743
    %v2745 = vsub.f32 1.5, %v2744
    %v2746 = vmul.f32 %v2741, %v2745
    %vm2747 = vweird.f32 %v2737
    %vm2748 = vweird.f32 %v2741
    %vm2749 = vmor %vm2747, %vm2748
    %v2750 = vsel %vm2749, %v2741, %v2746
    %v2751 = vrsqrt.pop %v2738
    %v2752 = vmul.f32 %v2751, %v2738
    %v2753 = vmul.f32 %v2752, %v2751
    %v2754 = vmul.f32 0.5, %v2753
    %v2755 = vsub.f32 1.5, %v2754
    %v2756 = vmul.f32 %v2751, %v2755
    %vm2757 = vweird.f32 %v2738
    %vm2758 = vweird.f32 %v2751
    %vm2759 = vmor %vm2757, %vm2758
    %v2760 = vsel %vm2759, %v2751, %v2756
    %v2761 = vrsqrt.pop %v2739
    %v2762 = vmul.f32 %v2761, %v2739
    %v2763 = vmul.f32 %v2762, %v2761
    %v2764 = vmul.f32 0.5, %v2763
    %v2765 = vsub.f32 1.5, %v2764
    %v2766 = vmul.f32 %v2761, %v2765
    %vm2767 = vweird.f32 %v2739
    %vm2768 = vweird.f32 %v2761
    %vm2769 = vmor %vm2767, %vm2768
    %v2770 = vsel %vm2769, %v2761, %v2766
    %v2771 = vrsqrt.pop %v2740
    %v2772 = vmul.f32 %v2771, %v2740
    %v2773 = vmul.f32 %v2772, %v2771
    %v2774 = vmul.f32 0.5, %v2773
    %v2775 = vsub.f32 1.5, %v2774
    %v2776 = vmul.f32 %v2771, %v2775
    %vm2777 = vweird.f32 %v2740
    %vm2778 = vweird.f32 %v2771
    %vm2779 = vmor %vm2777, %vm2778
    %v2780 = vsel %vm2779, %v2771, %v2776
    %v2781 = vmul.f32 %v2750, %v2692
    %v2782 = vmul.f32 %v2760, %v2693
    %v2783 = vmul.f32 %v2770, %v2694
    %v2784 = vmul.f32 %v2780, %v2695
    %2786 = vset.pattern.permute.xlu0 0
    %2787 = vperm.xlu0 %2786, %v2781
    %v2788 = vpop.permute.xlu0 %2787
    %2791 = vset.pattern.permute.xlu0 0
    %2792 = vperm.xlu0 %2791, %v2782
    %v2793 = vpop.permute.xlu0 %2792
    %2796 = vset.pattern.permute.xlu0 0
    %2797 = vperm.xlu0 %2796, %v2783
    %v2798 = vpop.permute.xlu0 %2797
    %2801 = vset.pattern.permute.xlu0 0
    %2802 = vperm.xlu0 %2801, %v2784
    %v2803 = vpop.permute.xlu0 %2802
    %v2805 = vmul.f32 %v2713, %v2788
    %v2806 = vmul.f32 %v2714, %v2793
    %v2807 = vmul.f32 %v2715, %v2798
    %v2808 = vmul.f32 %v2716, %v2803
    %2810 = vset.pattern.permute.xlu0 1
    %2811 = vperm.xlu0 %2810, %v2692
    %v2812 = vpop.permute.xlu0 %2811
    %2815 = vset.pattern.permute.xlu0 1
    %2816 = vperm.xlu0 %2815, %v2693
    %v2817 = vpop.permute.xlu0 %2816
    %2820 = vset.pattern.permute.xlu0 1
    %2821 = vperm.xlu0 %2820, %v2694
    %v2822 = vpop.permute.xlu0 %2821
    %2825 = vset.pattern.permute.xlu0 1
    %2826 = vperm.xlu0 %2825, %v2695
    %v2827 = vpop.permute.xlu0 %2826
    %v2829 = vadd.f32 %v2805, %v2812
    %v2830 = vadd.f32 %v2806, %v2817
    %v2831 = vadd.f32 %v2807, %v2822
    %v2832 = vadd.f32 %v2808, %v2827
    %v2833 = vmax.f32 %v2829, 0.0
    %v2834 = vmax.f32 %v2830, 0.0
    %v2835 = vmax.f32 %v2831, 0.0
    %v2836 = vmax.f32 %v2832, 0.0
    %2841 = vrot.lane.b32.xlu0 %v2833, 5
    %v2842 = vpop.permute.xlu0 %2841
    %2843 = vrot.lane.b32.xlu0 %v2834, 5
    %v2844 = vpop.permute.xlu0 %2843
    %2845 = vrot.lane.b32.xlu0 %v2835, 5
    %v2846 = vpop.permute.xlu0 %2845
    %2847 = vrot.lane.b32.xlu0 %v2836, 5
    %v2848 = vpop.permute.xlu0 %2847
    %vm2853 = vcmask 39936
    %v2854 = vsel %vm2853, 0.0, %v2842
    %v2855 = vsel %vm2853, 0.0, %v2844
    %v2856 = vsel %vm2853, 0.0, %v2846
    %v2857 = vsel %vm2853, 0.0, %v2848
    %2858 = vst.msk [vmem:[#allocation2] sm:$0xff] %vm2696, %v2854
    %2859 = vst.msk [vmem:[#allocation2 + $0x20] sm:$0xff] %vm2696, %v2855
    %2860 = vst.msk [vmem:[#allocation2 + $0x40] sm:$0xff] %vm2696, %v2856
    %2861 = vst.msk [vmem:[#allocation2 + $0x60] sm:$0xff] %vm2696, %v2857
    %2862 = vrot.lane.b32.xlu0 %v2833, 4
    %v2863 = vpop.permute.xlu0 %2862
    %2864 = vrot.lane.b32.xlu0 %v2834, 4
    %v2865 = vpop.permute.xlu0 %2864
    %2866 = vrot.lane.b32.xlu0 %v2835, 4
    %v2867 = vpop.permute.xlu0 %2866
    %2868 = vrot.lane.b32.xlu0 %v2836, 4
    %v2869 = vpop.permute.xlu0 %2868
    %vm2874 = vcmask 31744
    %v2875 = vsel %vm2874, 0.0, %v2863
    %v2876 = vsel %vm2874, 0.0, %v2865
    %v2877 = vsel %vm2874, 0.0, %v2867
    %v2878 = vsel %vm2874, 0.0, %v2869
    %2879 = vst.msk [vmem:[#allocation2 + $0x80] sm:$0xff] %vm2696, %v2875
    %2880 = vst.msk [vmem:[#allocation2 + $0xa0] sm:$0xff] %vm2696, %v2876
    %2881 = vst.msk [vmem:[#allocation2 + $0xc0] sm:$0xff] %vm2696, %v2877
    %2882 = vst.msk [vmem:[#allocation2 + $0xe0] sm:$0xff] %vm2696, %v2878
    %2883 = vrot.lane.b32.xlu0 %v2833, 3
    %v2884 = vpop.permute.xlu0 %2883
    %2885 = vrot.lane.b32.xlu0 %v2834, 3
    %v2886 = vpop.permute.xlu0 %2885
    %2887 = vrot.lane.b32.xlu0 %v2835, 3
    %v2888 = vpop.permute.xlu0 %2887
    %2889 = vrot.lane.b32.xlu0 %v2836, 3
    %v2890 = vpop.permute.xlu0 %2889
    %vm2895 = vcmask 23552
    %v2896 = vsel %vm2895, 0.0, %v2884
    %v2897 = vsel %vm2895, 0.0, %v2886
    %v2898 = vsel %vm2895, 0.0, %v2888
    %v2899 = vsel %vm2895, 0.0, %v2890
    %2900 = vst.msk [vmem:[#allocation2 + $0x100] sm:$0xff] %vm2696, %v2896
    %2901 = vst.msk [vmem:[#allocation2 + $0x120] sm:$0xff] %vm2696, %v2897
    %2902 = vst.msk [vmem:[#allocation2 + $0x140] sm:$0xff] %vm2696, %v2898
    %2903 = vst.msk [vmem:[#allocation2 + $0x160] sm:$0xff] %vm2696, %v2899
    %2904 = vrot.lane.b32.xlu0 %v2833, 1
    %v2905 = vpop.permute.xlu0 %2904
    %2906 = vrot.lane.b32.xlu0 %v2834, 1
    %v2907 = vpop.permute.xlu0 %2906
    %2908 = vrot.lane.b32.xlu0 %v2835, 1
    %v2909 = vpop.permute.xlu0 %2908
    %2910 = vrot.lane.b32.xlu0 %v2836, 1
    %v2911 = vpop.permute.xlu0 %2910
    %vm2916 = vcmask 7168
    %v2917 = vsel %vm2916, 0.0, %v2905
    %v2918 = vsel %vm2916, 0.0, %v2907
    %v2919 = vsel %vm2916, 0.0, %v2909
    %v2920 = vsel %vm2916, 0.0, %v2911
    %2921 = vst.msk [vmem:[#allocation2 + $0x180] sm:$0xff] %vm2696, %v2917
    %2922 = vst.msk [vmem:[#allocation2 + $0x1a0] sm:$0xff] %vm2696, %v2918
    %2923 = vst.msk [vmem:[#allocation2 + $0x1c0] sm:$0xff] %vm2696, %v2919
    %2924 = vst.msk [vmem:[#allocation2 + $0x1e0] sm:$0xff] %vm2696, %v2920
    %2925 = vst.msk [vmem:[#allocation2 + $0x200] sm:$0xff] %vm2696, %v2833
    %2926 = vst.msk [vmem:[#allocation2 + $0x220] sm:$0xff] %vm2696, %v2834
    %2927 = vst.msk [vmem:[#allocation2 + $0x240] sm:$0xff] %vm2696, %v2835
    %2928 = vst.msk [vmem:[#allocation2 + $0x260] sm:$0xff] %vm2696, %v2836
    %2929 = vrot.lane.b32.xlu0 %v2833, 127
    %v2930 = vpop.permute.xlu0 %2929
    %2931 = vrot.lane.b32.xlu0 %v2834, 127
    %v2932 = vpop.permute.xlu0 %2931
    %2933 = vrot.lane.b32.xlu0 %v2835, 127
    %v2934 = vpop.permute.xlu0 %2933
    %2935 = vrot.lane.b32.xlu0 %v2836, 127
    %v2936 = vpop.permute.xlu0 %2935
    %vm2941 = vcmask 252928
    %v2942 = vsel %vm2941, %v2930, 0.0
    %v2943 = vsel %vm2941, %v2932, 0.0
    %v2944 = vsel %vm2941, %v2934, 0.0
    %v2945 = vsel %vm2941, %v2936, 0.0
    %2946 = vst.msk [vmem:[#allocation2 + $0x280] sm:$0xff] %vm2696, %v2942
    %2947 = vst.msk [vmem:[#allocation2 + $0x2a0] sm:$0xff] %vm2696, %v2943
    %2948 = vst.msk [vmem:[#allocation2 + $0x2c0] sm:$0xff] %vm2696, %v2944
    %2949 = vst.msk [vmem:[#allocation2 + $0x2e0] sm:$0xff] %vm2696, %v2945
    %2950 = vrot.lane.b32.xlu0 %v2833, 125
    %v2951 = vpop.permute.xlu0 %2950
    %2952 = vrot.lane.b32.xlu0 %v2834, 125
    %v2953 = vpop.permute.xlu0 %2952
    %2954 = vrot.lane.b32.xlu0 %v2835, 125
    %v2955 = vpop.permute.xlu0 %2954
    %2956 = vrot.lane.b32.xlu0 %v2836, 125
    %v2957 = vpop.permute.xlu0 %2956
    %vm2962 = vcmask 236544
    %v2963 = vsel %vm2962, %v2951, 0.0
    %v2964 = vsel %vm2962, %v2953, 0.0
    %v2965 = vsel %vm2962, %v2955, 0.0
    %v2966 = vsel %vm2962, %v2957, 0.0
    %2967 = vst.msk [vmem:[#allocation2 + $0x300] sm:$0xff] %vm2696, %v2963
    %2968 = vst.msk [vmem:[#allocation2 + $0x320] sm:$0xff] %vm2696, %v2964
    %2969 = vst.msk [vmem:[#allocation2 + $0x340] sm:$0xff] %vm2696, %v2965
    %2970 = vst.msk [vmem:[#allocation2 + $0x360] sm:$0xff] %vm2696, %v2966
    %2971 = vrot.lane.b32.xlu0 %v2833, 124
    %v2972 = vpop.permute.xlu0 %2971
    %2973 = vrot.lane.b32.xlu0 %v2834, 124
    %v2974 = vpop.permute.xlu0 %2973
    %2975 = vrot.lane.b32.xlu0 %v2835, 124
    %v2976 = vpop.permute.xlu0 %2975
    %2977 = vrot.lane.b32.xlu0 %v2836, 124
    %v2978 = vpop.permute.xlu0 %2977
    %vm2983 = vcmask 228352
    %v2984 = vsel %vm2983, %v2972, 0.0
    %v2985 = vsel %vm2983, %v2974, 0.0
    %v2986 = vsel %vm2983, %v2976, 0.0
    %v2987 = vsel %vm2983, %v2978, 0.0
    %2988 = vst.msk [vmem:[#allocation2 + $0x380] sm:$0xff] %vm2696, %v2984
    %2989 = vst.msk [vmem:[#allocation2 + $0x3a0] sm:$0xff] %vm2696, %v2985
    %2990 = vst.msk [vmem:[#allocation2 + $0x3c0] sm:$0xff] %vm2696, %v2986
    %2991 = vst.msk [vmem:[#allocation2 + $0x3e0] sm:$0xff] %vm2696, %v2987
    %2992 = vrot.lane.b32.xlu0 %v2833, 123
    %v2993 = vpop.permute.xlu0 %2992
    %2994 = vrot.lane.b32.xlu0 %v2834, 123
    %v2995 = vpop.permute.xlu0 %2994
    %2996 = vrot.lane.b32.xlu0 %v2835, 123
    %v2997 = vpop.permute.xlu0 %2996
    %2998 = vrot.lane.b32.xlu0 %v2836, 123
    %v2999 = vpop.permute.xlu0 %2998
    %vm3004 = vcmask 220160
    %v3005 = vsel %vm3004, %v2993, 0.0
    %v3006 = vsel %vm3004, %v2995, 0.0
    %v3007 = vsel %vm3004, %v2997, 0.0
    %v3008 = vsel %vm3004, %v2999, 0.0
    %3009 = vst.msk [vmem:[#allocation2 + $0x400] sm:$0xff] %vm2696, %v3005
    %3010 = vst.msk [vmem:[#allocation2 + $0x420] sm:$0xff] %vm2696, %v3006
    %3011 = vst.msk [vmem:[#allocation2 + $0x440] sm:$0xff] %vm2696, %v3007
    %3012 = vst.msk [vmem:[#allocation2 + $0x460] sm:$0xff] %vm2696, %v3008
    %v3013 = vld [vmem:[#allocation2] sm:$0xff]
    %v3014 = vld [vmem:[#allocation2 + $0x20] sm:$0xff]
    %v3015 = vld [vmem:[#allocation2 + $0x40] sm:$0xff]
    %v3016 = vld [vmem:[#allocation2 + $0x60] sm:$0xff]
    %v3017 = vld [vmem:[#allocation2 + $0x80] sm:$0xff]
    %v3018 = vld [vmem:[#allocation2 + $0xa0] sm:$0xff]
    %v3019 = vld [vmem:[#allocation2 + $0xc0] sm:$0xff]
    %v3020 = vld [vmem:[#allocation2 + $0xe0] sm:$0xff]
    %v3021 = vld [vmem:[#allocation2 + $0x100] sm:$0xff]
    %v3022 = vld [vmem:[#allocation2 + $0x120] sm:$0xff]
    %v3023 = vld [vmem:[#allocation2 + $0x140] sm:$0xff]
    %v3024 = vld [vmem:[#allocation2 + $0x160] sm:$0xff]
    %v3025 = vld [vmem:[#allocation2 + $0x180] sm:$0xff]
    %v3026 = vld [vmem:[#allocation2 + $0x1a0] sm:$0xff]
    %v3027 = vld [vmem:[#allocation2 + $0x1c0] sm:$0xff]
    %v3028 = vld [vmem:[#allocation2 + $0x1e0] sm:$0xff]
    %v3029 = vld [vmem:[#allocation2 + $0x200] sm:$0xff]
    %v3030 = vld [vmem:[#allocation2 + $0x220] sm:$0xff]
    %v3031 = vld [vmem:[#allocation2 + $0x240] sm:$0xff]
    %v3032 = vld [vmem:[#allocation2 + $0x260] sm:$0xff]
    %v3033 = vld [vmem:[#allocation2 + $0x280] sm:$0xff]
    %v3034 = vld [vmem:[#allocation2 + $0x2a0] sm:$0xff]
    %v3035 = vld [vmem:[#allocation2 + $0x2c0] sm:$0xff]
    %v3036 = vld [vmem:[#allocation2 + $0x2e0] sm:$0xff]
    %v3037 = vld [vmem:[#allocation2 + $0x300] sm:$0xff]
    %v3038 = vld [vmem:[#allocation2 + $0x320] sm:$0xff]
    %v3039 = vld [vmem:[#allocation2 + $0x340] sm:$0xff]
    %v3040 = vld [vmem:[#allocation2 + $0x360] sm:$0xff]
    %v3041 = vld [vmem:[#allocation2 + $0x380] sm:$0xff]
    %v3042 = vld [vmem:[#allocation2 + $0x3a0] sm:$0xff]
    %v3043 = vld [vmem:[#allocation2 + $0x3c0] sm:$0xff]
    %v3044 = vld [vmem:[#allocation2 + $0x3e0] sm:$0xff]
    %v3045 = vld [vmem:[#allocation2 + $0x400] sm:$0xff]
    %v3046 = vld [vmem:[#allocation2 + $0x420] sm:$0xff]
    %v3047 = vld [vmem:[#allocation2 + $0x440] sm:$0xff]
    %v3048 = vld [vmem:[#allocation2 + $0x460] sm:$0xff]
    %v3049 = vld [vmem:[#allocation3 + $0x360] sm:$0xff]
    %v3050 = vld [vmem:[#allocation3 + $0x380] sm:$0xff]
    %v3051 = vld [vmem:[#allocation3 + $0x3a0] sm:$0xff]
    %v3052 = vld [vmem:[#allocation3 + $0x3c0] sm:$0xff]
    %v3053 = vld [vmem:[#allocation3 + $0x3e0] sm:$0xff]
    %v3054 = vld [vmem:[#allocation3 + $0x400] sm:$0xff]
    %v3055 = vld [vmem:[#allocation3 + $0x420] sm:$0xff]
    %v3056 = vld [vmem:[#allocation3 + $0x440] sm:$0xff]
    %v3057 = vld [vmem:[#allocation3 + $0x460] sm:$0xff]
    %v3058 = vld [vmem:[#allocation3 + $0x480] sm:$0xff]
    %v3059 = vld [vmem:[#allocation3 + $0x4a0] sm:$0xff]
    %v3060 = vld [vmem:[#allocation3 + $0x4c0] sm:$0xff]
    %v3061 = vld [vmem:[#allocation3 + $0x4e0] sm:$0xff]
    %v3062 = vld [vmem:[#allocation3 + $0x500] sm:$0xff]
    %v3063 = vld [vmem:[#allocation3 + $0x520] sm:$0xff]
    %v3064 = vld [vmem:[#allocation3 + $0x540] sm:$0xff]
    %v3065 = vld [vmem:[#allocation3 + $0x560] sm:$0xff]
    %v3066 = vld [vmem:[#allocation3 + $0x580] sm:$0xff]
    %v3067 = vld [vmem:[#allocation3 + $0x5a0] sm:$0xff]
    %v3068 = vld [vmem:[#allocation3 + $0x5c0] sm:$0xff]
    %v3069 = vld [vmem:[#allocation3 + $0x5e0] sm:$0xff]
    %v3070 = vld [vmem:[#allocation3 + $0x600] sm:$0xff]
    %v3071 = vld [vmem:[#allocation3 + $0x620] sm:$0xff]
    %v3072 = vld [vmem:[#allocation3 + $0x640] sm:$0xff]
    %v3073 = vld [vmem:[#allocation3 + $0x660] sm:$0xff]
    %v3074 = vld [vmem:[#allocation3 + $0x680] sm:$0xff]
    %v3075 = vld [vmem:[#allocation3 + $0x6a0] sm:$0xff]
    %v3076 = vld [vmem:[#allocation3 + $0x6c0] sm:$0xff]
    %v3077 = vld [vmem:[#allocation3 + $0x6e0] sm:$0xff]
    %v3078 = vld [vmem:[#allocation3 + $0x700] sm:$0xff]
    %v3079 = vld [vmem:[#allocation3 + $0x720] sm:$0xff]
    %v3080 = vld [vmem:[#allocation3 + $0x740] sm:$0xff]
    %v3081 = vld [vmem:[#allocation3 + $0x760] sm:$0xff]
    %v3082 = vld [vmem:[#allocation3 + $0x780] sm:$0xff]
    %v3083 = vld [vmem:[#allocation3 + $0x7a0] sm:$0xff]
    %v3084 = vld [vmem:[#allocation3 + $0x7c0] sm:$0xff]
    %v3085 = vmul.f32 %v3013, %v3049
    %v3086 = vmul.f32 %v3014, %v3050
    %v3087 = vmul.f32 %v3015, %v3051
    %v3088 = vmul.f32 %v3016, %v3052
    %v3089 = vmul.f32 %v3017, %v3053
    %v3090 = vmul.f32 %v3018, %v3054
    %v3091 = vmul.f32 %v3019, %v3055
    %v3092 = vmul.f32 %v3020, %v3056
    %v3093 = vmul.f32 %v3021, %v3057
    %v3094 = vmul.f32 %v3022, %v3058
    %v3095 = vmul.f32 %v3023, %v3059
    %v3096 = vmul.f32 %v3024, %v3060
    %v3097 = vmul.f32 %v3025, %v3061
    %v3098 = vmul.f32 %v3026, %v3062
    %v3099 = vmul.f32 %v3027, %v3063
    %v3100 = vmul.f32 %v3028, %v3064
    %v3101 = vmul.f32 %v3029, %v3065
    %v3102 = vmul.f32 %v3030, %v3066
    %v3103 = vmul.f32 %v3031, %v3067
    %v3104 = vmul.f32 %v3032, %v3068
    %v3105 = vmul.f32 %v3033, %v3069
    %v3106 = vmul.f32 %v3034, %v3070
    %v3107 = vmul.f32 %v3035, %v3071
    %v3108 = vmul.f32 %v3036, %v3072
    %v3109 = vmul.f32 %v3037, %v3073
    %v3110 = vmul.f32 %v3038, %v3074
    %v3111 = vmul.f32 %v3039, %v3075
    %v3112 = vmul.f32 %v3040, %v3076
    %v3113 = vmul.f32 %v3041, %v3077
    %v3114 = vmul.f32 %v3042, %v3078
    %v3115 = vmul.f32 %v3043, %v3079
    %v3116 = vmul.f32 %v3044, %v3080
    %v3117 = vmul.f32 %v3045, %v3081
    %v3118 = vmul.f32 %v3046, %v3082
    %v3119 = vmul.f32 %v3047, %v3083
    %v3120 = vmul.f32 %v3048, %v3084
    %v3121 = vpack.c.bf16 %v3086, %v3085
    %v3122 = vpack.c.bf16 %v3088, %v3087
    %v3123 = vpack.c.bf16 %v3090, %v3089
    %v3124 = vpack.c.bf16 %v3092, %v3091
    %v3125 = vpack.c.bf16 %v3094, %v3093
    %v3126 = vpack.c.bf16 %v3096, %v3095
    %v3127 = vpack.c.bf16 %v3098, %v3097
    %v3128 = vpack.c.bf16 %v3100, %v3099
    %v3129 = vpack.c.bf16 %v3102, %v3101
    %v3130 = vpack.c.bf16 %v3104, %v3103
    %v3131 = vpack.c.bf16 %v3106, %v3105
    %v3132 = vpack.c.bf16 %v3108, %v3107
    %v3133 = vpack.c.bf16 %v3110, %v3109
    %v3134 = vpack.c.bf16 %v3112, %v3111
    %v3135 = vpack.c.bf16 %v3114, %v3113
    %v3136 = vpack.c.bf16 %v3116, %v3115
    %v3137 = vpack.c.bf16 %v3118, %v3117
    %v3138 = vpack.c.bf16 %v3120, %v3119
    %v3139 = vld [vmem:[%s3 + $0x104] sm:$0xff]
    %v3140 = vld [vmem:[%s3 + $0x10c] sm:$0xf]
    %v3141 = vld [vmem:[%s3 + $0x118] sm:$0xff]
    %v3142 = vld [vmem:[%s3 + $0x120] sm:$0xf]
    %v3143 = vld [vmem:[%s3 + $0x12c] sm:$0xff]
    %v3144 = vld [vmem:[%s3 + $0x134] sm:$0xf]
    %v3145 = vld [vmem:[%s3 + $0x140] sm:$0xff]
    %v3146 = vld [vmem:[%s3 + $0x148] sm:$0xf]
    %v3155 = vunpack.c.l.b16 %v3139
    %v3156 = vunpack.c.h.b16 %v3139
    %v3157 = vunpack.c.l.b16 %v3140
    %v3158 = vunpack.c.l.b16 %v3141
    %v3159 = vunpack.c.h.b16 %v3141
    %v3160 = vunpack.c.l.b16 %v3142
    %v3161 = vunpack.c.l.b16 %v3143
    %v3162 = vunpack.c.h.b16 %v3143
    %v3163 = vunpack.c.l.b16 %v3144
    %v3164 = vunpack.c.l.b16 %v3145
    %v3165 = vunpack.c.h.b16 %v3145
    %v3166 = vunpack.c.l.b16 %v3146
    %v3167 = vpack.c.b16 %v3158, %v3155
    %v3168 = vpack.c.b16 %v3159, %v3156
    %v3169 = vpack.c.b16 %v3160, %v3157
    %v3170 = vpack.c.b16 %v3164, %v3161
    %v3171 = vpack.c.b16 %v3165, %v3162
    %v3172 = vpack.c.b16 %v3166, %v3163
    %v3178 = vsel %vm2696, %v3169, 0
    %v3181 = vsel %vm2696, %v3172, 0
    %3183 = vmatpush.bf16.msra.mxu0 %v3128
    %3184 = vmatpush.bf16.msra.mxu0 %v3127
    %3185 = vmatpush.bf16.msra.mxu0 %v3126
    %3186 = vmatpush.bf16.msra.mxu0 %v3125
    %3187 = vmatpush.bf16.msra.mxu0 %v3124
    %3188 = vmatpush.bf16.msra.mxu0 %v3123
    %3189 = vmatpush.bf16.msra.mxu0 %v3122
    %3190 = vmatpush.bf16.msra.mxu0 %v3121
    %3191 = vmatmul.bf16.gmra.mxu0 %v3167
    %v3192 = vpop.f32.mrf.mxu0
    %v3193 = vadd.f32 0.0, %v3192
    %v3194 = vpop.f32.mrf.mxu0
    %v3195 = vadd.f32 0.0, %v3194
    %3196 = vmatmul.bf16.gmra.mxu0 %v3170
    %v3197 = vpop.f32.mrf.mxu0
    %v3198 = vadd.f32 0.0, %v3197
    %v3199 = vpop.f32.mrf.mxu0
    %v3200 = vadd.f32 0.0, %v3199
    %3201 = vdwg.mxu0
    %3202 = vmatpush.bf16.msra.mxu0 %v3136
    %3203 = vmatpush.bf16.msra.mxu0 %v3135
    %3204 = vmatpush.bf16.msra.mxu0 %v3134
    %3205 = vmatpush.bf16.msra.mxu0 %v3133
    %3206 = vmatpush.bf16.msra.mxu0 %v3132
    %3207 = vmatpush.bf16.msra.mxu0 %v3131
    %3208 = vmatpush.bf16.msra.mxu0 %v3130
    %3209 = vmatpush.bf16.msra.mxu0 %v3129
    %3210 = vmatmul.bf16.gmra.mxu0 %v3168
    %v3211 = vpop.f32.mrf.mxu0
    %v3212 = vadd.f32 %v3193, %v3211
    %v3213 = vpop.f32.mrf.mxu0
    %v3214 = vadd.f32 %v3195, %v3213
    %3215 = vmatmul.bf16.gmra.mxu0 %v3171
    %v3216 = vpop.f32.mrf.mxu0
    %v3217 = vadd.f32 %v3198, %v3216
    %v3218 = vpop.f32.mrf.mxu0
    %v3219 = vadd.f32 %v3200, %v3218
    %3220 = vdwg.mxu0
    %3221 = vmatpush.bf16.msra.mxu0 0
    %3222 = vmatpush.bf16.msra.mxu0 0
    %3223 = vmatpush.bf16.msra.mxu0 0
    %3224 = vmatpush.bf16.msra.mxu0 0
    %3225 = vmatpush.bf16.msra.mxu0 0
    %3226 = vmatpush.bf16.msra.mxu0 0
    %3227 = vmatpush.bf16.msra.mxu0 %v3138
    %3228 = vmatpush.bf16.msra.mxu0 %v3137
    %3229 = vmatmul.bf16.gmra.mxu0 %v3178
    %v3230 = vpop.f32.mrf.mxu0
    %v3231 = vadd.f32 %v3212, %v3230
    %v3232 = vpop.f32.mrf.mxu0
    %v3233 = vadd.f32 %v3214, %v3232
    %3234 = vmatmul.bf16.gmra.mxu0 %v3181
    %v3235 = vpop.f32.mrf.mxu0
    %v3236 = vadd.f32 %v3217, %v3235
    %v3237 = vpop.f32.mrf.mxu0
    %v3238 = vadd.f32 %v3219, %v3237
    %3239 = vdwg.mxu0
    %v3240 = vld [vmem:[%s4 + $0x68] sm:$0xff]
    %v3241 = vld [vmem:[%s4 + $0x70] sm:$0xff]
    %v3242 = vld [vmem:[%s4 + $0x78] sm:$0xff]
    %v3243 = vld [vmem:[%s4 + $0x80] sm:$0xff]
    %v3244 = vsel %vm2696, %v3231, 0.0
    %3245 = vadd.xlane.f32.xlu0 %v3244
    %v3246 = vpop.xlane.xlu0 %3245
    %v3247 = vsel %vm2696, %v3233, 0.0
    %3248 = vadd.xlane.f32.xlu0 %v3247
    %v3249 = vpop.xlane.xlu0 %3248
    %v3250 = vsel %vm2696, %v3236, 0.0
    %3251 = vadd.xlane.f32.xlu0 %v3250
    %v3252 = vpop.xlane.xlu0 %3251
    %v3253 = vsel %vm2696, %v3238, 0.0
    %3254 = vadd.xlane.f32.xlu0 %v3253
    %v3255 = vpop.xlane.xlu0 %3254
    %v3256 = vmul.f32 %v3246, 0.03125
    %v3257 = vmul.f32 %v3249, 0.03125
    %v3258 = vmul.f32 %v3252, 0.03125
    %v3259 = vmul.f32 %v3255, 0.03125
    %v3260 = vsub.f32 %v3231, %v3256
    %v3261 = vsub.f32 %v3233, %v3257
    %v3262 = vsub.f32 %v3236, %v3258
    %v3263 = vsub.f32 %v3238, %v3259
    %v3264 = vmul.f32 %v3260, %v3260
    %v3265 = vmul.f32 %v3261, %v3261
    %v3266 = vmul.f32 %v3262, %v3262
    %v3267 = vmul.f32 %v3263, %v3263
    %v3268 = vsel %vm2696, %v3264, 0.0
    %3269 = vadd.xlane.f32.xlu0 %v3268
    %v3270 = vpop.xlane.xlu0 %3269
    %v3271 = vsel %vm2696, %v3265, 0.0
    %3272 = vadd.xlane.f32.xlu0 %v3271
    %v3273 = vpop.xlane.xlu0 %3272
    %v3274 = vsel %vm2696, %v3266, 0.0
    %3275 = vadd.xlane.f32.xlu0 %v3274
    %v3276 = vpop.xlane.xlu0 %3275
    %v3277 = vsel %vm2696, %v3267, 0.0
    %3278 = vadd.xlane.f32.xlu0 %v3277
    %v3279 = vpop.xlane.xlu0 %3278
    %v3280 = vmul.f32 %v3270, 0.03125
    %v3281 = vmul.f32 %v3273, 0.03125
    %v3282 = vmul.f32 %v3276, 0.03125
    %v3283 = vmul.f32 %v3279, 0.03125
    %v3284 = vadd.f32 %v3280, 1e-05
    %v3285 = vadd.f32 %v3281, 1e-05
    %v3286 = vadd.f32 %v3282, 1e-05
    %v3287 = vadd.f32 %v3283, 1e-05
    %v3288 = vrsqrt.pop %v3284
    %v3289 = vmul.f32 %v3288, %v3284
    %v3290 = vmul.f32 %v3289, %v3288
    %v3291 = vmul.f32 0.5, %v3290
    %v3292 = vsub.f32 1.5, %v3291
    %v3293 = vmul.f32 %v3288, %v3292
    %vm3294 = vweird.f32 %v3284
    %vm3295 = vweird.f32 %v3288
    %vm3296 = vmor %vm3294, %vm3295
    %v3297 = vsel %vm3296, %v3288, %v3293
    %v3298 = vrsqrt.pop %v3285
    %v3299 = vmul.f32 %v3298, %v3285
    %v3300 = vmul.f32 %v3299, %v3298
    %v3301 = vmul.f32 0.5, %v3300
    %v3302 = vsub.f32 1.5, %v3301
    %v3303 = vmul.f32 %v3298, %v3302
    %vm3304 = vweird.f32 %v3285
    %vm3305 = vweird.f32 %v3298
    %vm3306 = vmor %vm3304, %vm3305
    %v3307 = vsel %vm3306, %v3298, %v3303
    %v3308 = vrsqrt.pop %v3286
    %v3309 = vmul.f32 %v3308, %v3286
    %v3310 = vmul.f32 %v3309, %v3308
    %v3311 = vmul.f32 0.5, %v3310
    %v3312 = vsub.f32 1.5, %v3311
    %v3313 = vmul.f32 %v3308, %v3312
    %vm3314 = vweird.f32 %v3286
    %vm3315 = vweird.f32 %v3308
    %vm3316 = vmor %vm3314, %vm3315
    %v3317 = vsel %vm3316, %v3308, %v3313
    %v3318 = vrsqrt.pop %v3287
    %v3319 = vmul.f32 %v3318, %v3287
    %v3320 = vmul.f32 %v3319, %v3318
    %v3321 = vmul.f32 0.5, %v3320
    %v3322 = vsub.f32 1.5, %v3321
    %v3323 = vmul.f32 %v3318, %v3322
    %vm3324 = vweird.f32 %v3287
    %vm3325 = vweird.f32 %v3318
    %vm3326 = vmor %vm3324, %vm3325
    %v3327 = vsel %vm3326, %v3318, %v3323
    %v3328 = vmul.f32 %v3297, %v3240
    %v3329 = vmul.f32 %v3307, %v3241
    %v3330 = vmul.f32 %v3317, %v3242
    %v3331 = vmul.f32 %v3327, %v3243
    %3333 = vset.pattern.permute.xlu0 0
    %3334 = vperm.xlu0 %3333, %v3328
    %v3335 = vpop.permute.xlu0 %3334
    %3338 = vset.pattern.permute.xlu0 0
    %3339 = vperm.xlu0 %3338, %v3329
    %v3340 = vpop.permute.xlu0 %3339
    %3343 = vset.pattern.permute.xlu0 0
    %3344 = vperm.xlu0 %3343, %v3330
    %v3345 = vpop.permute.xlu0 %3344
    %3348 = vset.pattern.permute.xlu0 0
    %3349 = vperm.xlu0 %3348, %v3331
    %v3350 = vpop.permute.xlu0 %3349
    %v3352 = vmul.f32 %v3260, %v3335
    %v3353 = vmul.f32 %v3261, %v3340
    %v3354 = vmul.f32 %v3262, %v3345
    %v3355 = vmul.f32 %v3263, %v3350
    %3357 = vset.pattern.permute.xlu0 1
    %3358 = vperm.xlu0 %3357, %v3240
    %v3359 = vpop.permute.xlu0 %3358
    %3362 = vset.pattern.permute.xlu0 1
    %3363 = vperm.xlu0 %3362, %v3241
    %v3364 = vpop.permute.xlu0 %3363
    %3367 = vset.pattern.permute.xlu0 1
    %3368 = vperm.xlu0 %3367, %v3242
    %v3369 = vpop.permute.xlu0 %3368
    %3372 = vset.pattern.permute.xlu0 1
    %3373 = vperm.xlu0 %3372, %v3243
    %v3374 = vpop.permute.xlu0 %3373
    %v3376 = vadd.f32 %v3352, %v3359
    %v3377 = vadd.f32 %v3353, %v3364
    %v3378 = vadd.f32 %v3354, %v3369
    %v3379 = vadd.f32 %v3355, %v3374
    %v3380 = vld [vmem:[%s3 + $0x154] sm:$0xf]
    %v3381 = vld [vmem:[%s3 + $0x168] sm:$0xf]
    %v3382 = vld [vmem:[%s3 + $0x17c] sm:$0xf]
    %v3383 = vld [vmem:[%s3 + $0x190] sm:$0xf]
    %v3388 = vunpack.c.l.b16 %v3380
    %v3389 = vunpack.c.l.b16 %v3381
    %v3390 = vunpack.c.l.b16 %v3382
    %v3391 = vunpack.c.l.b16 %v3383
    %v3392 = vpack.c.b16 %v3389, %v3388
    %v3393 = vpack.c.b16 %v3391, %v3390
    %v3395 = vsel %vm2127, %v3392, 0
    %v3398 = vsel %vm2127, %v3393, 0
    %3400 = vmatpush.bf16.msra.mxu0 0
    %3401 = vmatpush.bf16.msra.mxu0 0
    %3402 = vmatpush.bf16.msra.mxu0 0
    %3403 = vmatpush.bf16.msra.mxu0 0
    %3404 = vmatpush.bf16.msra.mxu0 0
    %3405 = vmatpush.bf16.msra.mxu0 0
    %3406 = vmatpush.bf16.msra.mxu0 0
    %3407 = vmatpush.bf16.msra.mxu0 %v2634
    %3408 = vmatmul.bf16.gmra.mxu0 %v3395
    %v3409 = vpop.f32.mrf.mxu0
    %v3410 = vadd.f32 0.0, %v3409
    %v3411 = vpop.f32.mrf.mxu0
    %v3412 = vadd.f32 0.0, %v3411
    %3413 = vmatmul.bf16.gmra.mxu0 %v3398
    %v3414 = vpop.f32.mrf.mxu0
    %v3415 = vadd.f32 0.0, %v3414
    %v3416 = vpop.f32.mrf.mxu0
    %v3417 = vadd.f32 0.0, %v3416
    %3418 = vdwg.mxu0
    %v3419 = vld [vmem:[%s4 + $0x88] sm:$0xff]
    %v3420 = vld [vmem:[%s4 + $0x90] sm:$0xff]
    %v3421 = vld [vmem:[%s4 + $0x98] sm:$0xff]
    %v3422 = vld [vmem:[%s4 + $0xa0] sm:$0xff]
    %v3423 = vsel %vm2696, %v3410, 0.0
    %3424 = vadd.xlane.f32.xlu0 %v3423
    %v3425 = vpop.xlane.xlu0 %3424
    %v3426 = vsel %vm2696, %v3412, 0.0
    %3427 = vadd.xlane.f32.xlu0 %v3426
    %v3428 = vpop.xlane.xlu0 %3427
    %v3429 = vsel %vm2696, %v3415, 0.0
    %3430 = vadd.xlane.f32.xlu0 %v3429
    %v3431 = vpop.xlane.xlu0 %3430
    %v3432 = vsel %vm2696, %v3417, 0.0
    %3433 = vadd.xlane.f32.xlu0 %v3432
    %v3434 = vpop.xlane.xlu0 %3433
    %v3435 = vmul.f32 %v3425, 0.03125
    %v3436 = vmul.f32 %v3428, 0.03125
    %v3437 = vmul.f32 %v3431, 0.03125
    %v3438 = vmul.f32 %v3434, 0.03125
    %v3439 = vsub.f32 %v3410, %v3435
    %v3440 = vsub.f32 %v3412, %v3436
    %v3441 = vsub.f32 %v3415, %v3437
    %v3442 = vsub.f32 %v3417, %v3438
    %v3443 = vmul.f32 %v3439, %v3439
    %v3444 = vmul.f32 %v3440, %v3440
    %v3445 = vmul.f32 %v3441, %v3441
    %v3446 = vmul.f32 %v3442, %v3442
    %v3447 = vsel %vm2696, %v3443, 0.0
    %3448 = vadd.xlane.f32.xlu0 %v3447
    %v3449 = vpop.xlane.xlu0 %3448
    %v3450 = vsel %vm2696, %v3444, 0.0
    %3451 = vadd.xlane.f32.xlu0 %v3450
    %v3452 = vpop.xlane.xlu0 %3451
    %v3453 = vsel %vm2696, %v3445, 0.0
    %3454 = vadd.xlane.f32.xlu0 %v3453
    %v3455 = vpop.xlane.xlu0 %3454
    %v3456 = vsel %vm2696, %v3446, 0.0
    %3457 = vadd.xlane.f32.xlu0 %v3456
    %v3458 = vpop.xlane.xlu0 %3457
    %v3459 = vmul.f32 %v3449, 0.03125
    %v3460 = vmul.f32 %v3452, 0.03125
    %v3461 = vmul.f32 %v3455, 0.03125
    %v3462 = vmul.f32 %v3458, 0.03125
    %v3463 = vadd.f32 %v3459, 1e-05
    %v3464 = vadd.f32 %v3460, 1e-05
    %v3465 = vadd.f32 %v3461, 1e-05
    %v3466 = vadd.f32 %v3462, 1e-05
    %v3467 = vrsqrt.pop %v3463
    %v3468 = vmul.f32 %v3467, %v3463
    %v3469 = vmul.f32 %v3468, %v3467
    %v3470 = vmul.f32 0.5, %v3469
    %v3471 = vsub.f32 1.5, %v3470
    %v3472 = vmul.f32 %v3467, %v3471
    %vm3473 = vweird.f32 %v3463
    %vm3474 = vweird.f32 %v3467
    %vm3475 = vmor %vm3473, %vm3474
    %v3476 = vsel %vm3475, %v3467, %v3472
    %v3477 = vrsqrt.pop %v3464
    %v3478 = vmul.f32 %v3477, %v3464
    %v3479 = vmul.f32 %v3478, %v3477
    %v3480 = vmul.f32 0.5, %v3479
    %v3481 = vsub.f32 1.5, %v3480
    %v3482 = vmul.f32 %v3477, %v3481
    %vm3483 = vweird.f32 %v3464
    %vm3484 = vweird.f32 %v3477
    %vm3485 = vmor %vm3483, %vm3484
    %v3486 = vsel %vm3485, %v3477, %v3482
    %v3487 = vrsqrt.pop %v3465
    %v3488 = vmul.f32 %v3487, %v3465
    %v3489 = vmul.f32 %v3488, %v3487
    %v3490 = vmul.f32 0.5, %v3489
    %v3491 = vsub.f32 1.5, %v3490
    %v3492 = vmul.f32 %v3487, %v3491
    %vm3493 = vweird.f32 %v3465
    %vm3494 = vweird.f32 %v3487
    %vm3495 = vmor %vm3493, %vm3494
    %v3496 = vsel %vm3495, %v3487, %v3492
    %v3497 = vrsqrt.pop %v3466
    %v3498 = vmul.f32 %v3497, %v3466
    %v3499 = vmul.f32 %v3498, %v3497
    %v3500 = vmul.f32 0.5, %v3499
    %v3501 = vsub.f32 1.5, %v3500
    %v3502 = vmul.f32 %v3497, %v3501
    %vm3503 = vweird.f32 %v3466
    %vm3504 = vweird.f32 %v3497
    %vm3505 = vmor %vm3503, %vm3504
    %v3506 = vsel %vm3505, %v3497, %v3502
    %v3507 = vmul.f32 %v3476, %v3419
    %v3508 = vmul.f32 %v3486, %v3420
    %v3509 = vmul.f32 %v3496, %v3421
    %v3510 = vmul.f32 %v3506, %v3422
    %3512 = vset.pattern.permute.xlu0 0
    %3513 = vperm.xlu0 %3512, %v3507
    %v3514 = vpop.permute.xlu0 %3513
    %3517 = vset.pattern.permute.xlu0 0
    %3518 = vperm.xlu0 %3517, %v3508
    %v3519 = vpop.permute.xlu0 %3518
    %3522 = vset.pattern.permute.xlu0 0
    %3523 = vperm.xlu0 %3522, %v3509
    %v3524 = vpop.permute.xlu0 %3523
    %3527 = vset.pattern.permute.xlu0 0
    %3528 = vperm.xlu0 %3527, %v3510
    %v3529 = vpop.permute.xlu0 %3528
    %v3531 = vmul.f32 %v3439, %v3514
    %v3532 = vmul.f32 %v3440, %v3519
    %v3533 = vmul.f32 %v3441, %v3524
    %v3534 = vmul.f32 %v3442, %v3529
    %3536 = vset.pattern.permute.xlu0 1
    %3537 = vperm.xlu0 %3536, %v3419
    %v3538 = vpop.permute.xlu0 %3537
    %3541 = vset.pattern.permute.xlu0 1
    %3542 = vperm.xlu0 %3541, %v3420
    %v3543 = vpop.permute.xlu0 %3542
    %3546 = vset.pattern.permute.xlu0 1
    %3547 = vperm.xlu0 %3546, %v3421
    %v3548 = vpop.permute.xlu0 %3547
    %3551 = vset.pattern.permute.xlu0 1
    %3552 = vperm.xlu0 %3551, %v3422
    %v3553 = vpop.permute.xlu0 %3552
    %v3555 = vadd.f32 %v3531, %v3538
    %v3556 = vadd.f32 %v3532, %v3543
    %v3557 = vadd.f32 %v3533, %v3548
    %v3558 = vadd.f32 %v3534, %v3553
    %v3559 = vadd.f32 %v3376, %v3555
    %v3560 = vadd.f32 %v3377, %v3556
    %v3561 = vadd.f32 %v3378, %v3557
    %v3562 = vadd.f32 %v3379, %v3558
    %v3563 = vmax.f32 %v3559, 0.0
    %v3564 = vmax.f32 %v3560, 0.0
    %v3565 = vmax.f32 %v3561, 0.0
    %v3566 = vmax.f32 %v3562, 0.0
    %3571 = vrot.lane.b32.xlu0 %v3563, 5
    %v3572 = vpop.permute.xlu0 %3571
    %3573 = vrot.lane.b32.xlu0 %v3564, 5
    %v3574 = vpop.permute.xlu0 %3573
    %3575 = vrot.lane.b32.xlu0 %v3565, 5
    %v3576 = vpop.permute.xlu0 %3575
    %3577 = vrot.lane.b32.xlu0 %v3566, 5
    %v3578 = vpop.permute.xlu0 %3577
    %v3583 = vsel %vm2853, 0.0, %v3572
    %v3584 = vsel %vm2853, 0.0, %v3574
    %v3585 = vsel %vm2853, 0.0, %v3576
    %v3586 = vsel %vm2853, 0.0, %v3578
    %3587 = vst.msk [vmem:[#allocation2] sm:$0xff] %vm2696, %v3583
    %3588 = vst.msk [vmem:[#allocation2 + $0x20] sm:$0xff] %vm2696, %v3584
    %3589 = vst.msk [vmem:[#allocation2 + $0x40] sm:$0xff] %vm2696, %v3585
    %3590 = vst.msk [vmem:[#allocation2 + $0x60] sm:$0xff] %vm2696, %v3586
    %3591 = vrot.lane.b32.xlu0 %v3563, 4
    %v3592 = vpop.permute.xlu0 %3591
    %3593 = vrot.lane.b32.xlu0 %v3564, 4
    %v3594 = vpop.permute.xlu0 %3593
    %3595 = vrot.lane.b32.xlu0 %v3565, 4
    %v3596 = vpop.permute.xlu0 %3595
    %3597 = vrot.lane.b32.xlu0 %v3566, 4
    %v3598 = vpop.permute.xlu0 %3597
    %v3603 = vsel %vm2874, 0.0, %v3592
    %v3604 = vsel %vm2874, 0.0, %v3594
    %v3605 = vsel %vm2874, 0.0, %v3596
    %v3606 = vsel %vm2874, 0.0, %v3598
    %3607 = vst.msk [vmem:[#allocation2 + $0x80] sm:$0xff] %vm2696, %v3603
    %3608 = vst.msk [vmem:[#allocation2 + $0xa0] sm:$0xff] %vm2696, %v3604
    %3609 = vst.msk [vmem:[#allocation2 + $0xc0] sm:$0xff] %vm2696, %v3605
    %3610 = vst.msk [vmem:[#allocation2 + $0xe0] sm:$0xff] %vm2696, %v3606
    %3611 = vrot.lane.b32.xlu0 %v3563, 3
    %v3612 = vpop.permute.xlu0 %3611
    %3613 = vrot.lane.b32.xlu0 %v3564, 3
    %v3614 = vpop.permute.xlu0 %3613
    %3615 = vrot.lane.b32.xlu0 %v3565, 3
    %v3616 = vpop.permute.xlu0 %3615
    %3617 = vrot.lane.b32.xlu0 %v3566, 3
    %v3618 = vpop.permute.xlu0 %3617
    %v3623 = vsel %vm2895, 0.0, %v3612
    %v3624 = vsel %vm2895, 0.0, %v3614
    %v3625 = vsel %vm2895, 0.0, %v3616
    %v3626 = vsel %vm2895, 0.0, %v3618
    %3627 = vst.msk [vmem:[#allocation2 + $0x100] sm:$0xff] %vm2696, %v3623
    %3628 = vst.msk [vmem:[#allocation2 + $0x120] sm:$0xff] %vm2696, %v3624
    %3629 = vst.msk [vmem:[#allocation2 + $0x140] sm:$0xff] %vm2696, %v3625
    %3630 = vst.msk [vmem:[#allocation2 + $0x160] sm:$0xff] %vm2696, %v3626
    %3631 = vrot.lane.b32.xlu0 %v3563, 1
    %v3632 = vpop.permute.xlu0 %3631
    %3633 = vrot.lane.b32.xlu0 %v3564, 1
    %v3634 = vpop.permute.xlu0 %3633
    %3635 = vrot.lane.b32.xlu0 %v3565, 1
    %v3636 = vpop.permute.xlu0 %3635
    %3637 = vrot.lane.b32.xlu0 %v3566, 1
    %v3638 = vpop.permute.xlu0 %3637
    %v3643 = vsel %vm2916, 0.0, %v3632
    %v3644 = vsel %vm2916, 0.0, %v3634
    %v3645 = vsel %vm2916, 0.0, %v3636
    %v3646 = vsel %vm2916, 0.0, %v3638
    %3647 = vst.msk [vmem:[#allocation2 + $0x180] sm:$0xff] %vm2696, %v3643
    %3648 = vst.msk [vmem:[#allocation2 + $0x1a0] sm:$0xff] %vm2696, %v3644
    %3649 = vst.msk [vmem:[#allocation2 + $0x1c0] sm:$0xff] %vm2696, %v3645
    %3650 = vst.msk [vmem:[#allocation2 + $0x1e0] sm:$0xff] %vm2696, %v3646
    %3651 = vst.msk [vmem:[#allocation2 + $0x200] sm:$0xff] %vm2696, %v3563
    %3652 = vst.msk [vmem:[#allocation2 + $0x220] sm:$0xff] %vm2696, %v3564
    %3653 = vst.msk [vmem:[#allocation2 + $0x240] sm:$0xff] %vm2696, %v3565
    %3654 = vst.msk [vmem:[#allocation2 + $0x260] sm:$0xff] %vm2696, %v3566
    %3655 = vrot.lane.b32.xlu0 %v3563, 127
    %v3656 = vpop.permute.xlu0 %3655
    %3657 = vrot.lane.b32.xlu0 %v3564, 127
    %v3658 = vpop.permute.xlu0 %3657
    %3659 = vrot.lane.b32.xlu0 %v3565, 127
    %v3660 = vpop.permute.xlu0 %3659
    %3661 = vrot.lane.b32.xlu0 %v3566, 127
    %v3662 = vpop.permute.xlu0 %3661
    %v3667 = vsel %vm2941, %v3656, 0.0
    %v3668 = vsel %vm2941, %v3658, 0.0
    %v3669 = vsel %vm2941, %v3660, 0.0
    %v3670 = vsel %vm2941, %v3662, 0.0
    %3671 = vst.msk [vmem:[#allocation2 + $0x280] sm:$0xff] %vm2696, %v3667
    %3672 = vst.msk [vmem:[#allocation2 + $0x2a0] sm:$0xff] %vm2696, %v3668
    %3673 = vst.msk [vmem:[#allocation2 + $0x2c0] sm:$0xff] %vm2696, %v3669
    %3674 = vst.msk [vmem:[#allocation2 + $0x2e0] sm:$0xff] %vm2696, %v3670
    %3675 = vrot.lane.b32.xlu0 %v3563, 125
    %v3676 = vpop.permute.xlu0 %3675
    %3677 = vrot.lane.b32.xlu0 %v3564, 125
    %v3678 = vpop.permute.xlu0 %3677
    %3679 = vrot.lane.b32.xlu0 %v3565, 125
    %v3680 = vpop.permute.xlu0 %3679
    %3681 = vrot.lane.b32.xlu0 %v3566, 125
    %v3682 = vpop.permute.xlu0 %3681
    %v3687 = vsel %vm2962, %v3676, 0.0
    %v3688 = vsel %vm2962, %v3678, 0.0
    %v3689 = vsel %vm2962, %v3680, 0.0
    %v3690 = vsel %vm2962, %v3682, 0.0
    %3691 = vst.msk [vmem:[#allocation2 + $0x300] sm:$0xff] %vm2696, %v3687
    %3692 = vst.msk [vmem:[#allocation2 + $0x320] sm:$0xff] %vm2696, %v3688
    %3693 = vst.msk [vmem:[#allocation2 + $0x340] sm:$0xff] %vm2696, %v3689
    %3694 = vst.msk [vmem:[#allocation2 + $0x360] sm:$0xff] %vm2696, %v3690
    %3695 = vrot.lane.b32.xlu0 %v3563, 124
    %v3696 = vpop.permute.xlu0 %3695
    %3697 = vrot.lane.b32.xlu0 %v3564, 124
    %v3698 = vpop.permute.xlu0 %3697
    %3699 = vrot.lane.b32.xlu0 %v3565, 124
    %v3700 = vpop.permute.xlu0 %3699
    %3701 = vrot.lane.b32.xlu0 %v3566, 124
    %v3702 = vpop.permute.xlu0 %3701
    %v3707 = vsel %vm2983, %v3696, 0.0
    %v3708 = vsel %vm2983, %v3698, 0.0
    %v3709 = vsel %vm2983, %v3700, 0.0
    %v3710 = vsel %vm2983, %v3702, 0.0
    %3711 = vst.msk [vmem:[#allocation2 + $0x380] sm:$0xff] %vm2696, %v3707
    %3712 = vst.msk [vmem:[#allocation2 + $0x3a0] sm:$0xff] %vm2696, %v3708
    %3713 = vst.msk [vmem:[#allocation2 + $0x3c0] sm:$0xff] %vm2696, %v3709
    %3714 = vst.msk [vmem:[#allocation2 + $0x3e0] sm:$0xff] %vm2696, %v3710
    %3715 = vrot.lane.b32.xlu0 %v3563, 123
    %v3716 = vpop.permute.xlu0 %3715
    %3717 = vrot.lane.b32.xlu0 %v3564, 123
    %v3718 = vpop.permute.xlu0 %3717
    %3719 = vrot.lane.b32.xlu0 %v3565, 123
    %v3720 = vpop.permute.xlu0 %3719
    %3721 = vrot.lane.b32.xlu0 %v3566, 123
    %v3722 = vpop.permute.xlu0 %3721
    %v3727 = vsel %vm3004, %v3716, 0.0
    %v3728 = vsel %vm3004, %v3718, 0.0
    %v3729 = vsel %vm3004, %v3720, 0.0
    %v3730 = vsel %vm3004, %v3722, 0.0
    %3731 = vst.msk [vmem:[#allocation2 + $0x400] sm:$0xff] %vm2696, %v3727
    %3732 = vst.msk [vmem:[#allocation2 + $0x420] sm:$0xff] %vm2696, %v3728
    %3733 = vst.msk [vmem:[#allocation2 + $0x440] sm:$0xff] %vm2696, %v3729
    %3734 = vst.msk [vmem:[#allocation2 + $0x460] sm:$0xff] %vm2696, %v3730
    %v3735 = vld [vmem:[#allocation2] sm:$0xff]
    %v3736 = vld [vmem:[#allocation2 + $0x20] sm:$0xff]
    %v3737 = vld [vmem:[#allocation2 + $0x40] sm:$0xff]
    %v3738 = vld [vmem:[#allocation2 + $0x60] sm:$0xff]
    %v3739 = vld [vmem:[#allocation2 + $0x80] sm:$0xff]
    %v3740 = vld [vmem:[#allocation2 + $0xa0] sm:$0xff]
    %v3741 = vld [vmem:[#allocation2 + $0xc0] sm:$0xff]
    %v3742 = vld [vmem:[#allocation2 + $0xe0] sm:$0xff]
    %v3743 = vld [vmem:[#allocation2 + $0x100] sm:$0xff]
    %v3744 = vld [vmem:[#allocation2 + $0x120] sm:$0xff]
    %v3745 = vld [vmem:[#allocation2 + $0x140] sm:$0xff]
    %v3746 = vld [vmem:[#allocation2 + $0x160] sm:$0xff]
    %v3747 = vld [vmem:[#allocation2 + $0x180] sm:$0xff]
    %v3748 = vld [vmem:[#allocation2 + $0x1a0] sm:$0xff]
    %v3749 = vld [vmem:[#allocation2 + $0x1c0] sm:$0xff]
    %v3750 = vld [vmem:[#allocation2 + $0x1e0] sm:$0xff]
    %v3751 = vld [vmem:[#allocation2 + $0x200] sm:$0xff]
    %v3752 = vld [vmem:[#allocation2 + $0x220] sm:$0xff]
    %v3753 = vld [vmem:[#allocation2 + $0x240] sm:$0xff]
    %v3754 = vld [vmem:[#allocation2 + $0x260] sm:$0xff]
    %v3755 = vld [vmem:[#allocation2 + $0x280] sm:$0xff]
    %v3756 = vld [vmem:[#allocation2 + $0x2a0] sm:$0xff]
    %v3757 = vld [vmem:[#allocation2 + $0x2c0] sm:$0xff]
    %v3758 = vld [vmem:[#allocation2 + $0x2e0] sm:$0xff]
    %v3759 = vld [vmem:[#allocation2 + $0x300] sm:$0xff]
    %v3760 = vld [vmem:[#allocation2 + $0x320] sm:$0xff]
    %v3761 = vld [vmem:[#allocation2 + $0x340] sm:$0xff]
    %v3762 = vld [vmem:[#allocation2 + $0x360] sm:$0xff]
    %v3763 = vld [vmem:[#allocation2 + $0x380] sm:$0xff]
    %v3764 = vld [vmem:[#allocation2 + $0x3a0] sm:$0xff]
    %v3765 = vld [vmem:[#allocation2 + $0x3c0] sm:$0xff]
    %v3766 = vld [vmem:[#allocation2 + $0x3e0] sm:$0xff]
    %v3767 = vld [vmem:[#allocation2 + $0x400] sm:$0xff]
    %v3768 = vld [vmem:[#allocation2 + $0x420] sm:$0xff]
    %v3769 = vld [vmem:[#allocation2 + $0x440] sm:$0xff]
    %v3770 = vld [vmem:[#allocation2 + $0x460] sm:$0xff]
    %v3771 = vld [vmem:[#allocation3 + $0x360] sm:$0xff]
    %v3772 = vld [vmem:[#allocation3 + $0x380] sm:$0xff]
    %v3773 = vld [vmem:[#allocation3 + $0x3a0] sm:$0xff]
    %v3774 = vld [vmem:[#allocation3 + $0x3c0] sm:$0xff]
    %v3775 = vld [vmem:[#allocation3 + $0x3e0] sm:$0xff]
    %v3776 = vld [vmem:[#allocation3 + $0x400] sm:$0xff]
    %v3777 = vld [vmem:[#allocation3 + $0x420] sm:$0xff]
    %v3778 = vld [vmem:[#allocation3 + $0x440] sm:$0xff]
    %v3779 = vld [vmem:[#allocation3 + $0x460] sm:$0xff]
    %v3780 = vld [vmem:[#allocation3 + $0x480] sm:$0xff]
    %v3781 = vld [vmem:[#allocation3 + $0x4a0] sm:$0xff]
    %v3782 = vld [vmem:[#allocation3 + $0x4c0] sm:$0xff]
    %v3783 = vld [vmem:[#allocation3 + $0x4e0] sm:$0xff]
    %v3784 = vld [vmem:[#allocation3 + $0x500] sm:$0xff]
    %v3785 = vld [vmem:[#allocation3 + $0x520] sm:$0xff]
    %v3786 = vld [vmem:[#allocation3 + $0x540] sm:$0xff]
    %v3787 = vld [vmem:[#allocation3 + $0x560] sm:$0xff]
    %v3788 = vld [vmem:[#allocation3 + $0x580] sm:$0xff]
    %v3789 = vld [vmem:[#allocation3 + $0x5a0] sm:$0xff]
    %v3790 = vld [vmem:[#allocation3 + $0x5c0] sm:$0xff]
    %v3791 = vld [vmem:[#allocation3 + $0x5e0] sm:$0xff]
    %v3792 = vld [vmem:[#allocation3 + $0x600] sm:$0xff]
    %v3793 = vld [vmem:[#allocation3 + $0x620] sm:$0xff]
    %v3794 = vld [vmem:[#allocation3 + $0x640] sm:$0xff]
    %v3795 = vld [vmem:[#allocation3 + $0x660] sm:$0xff]
    %v3796 = vld [vmem:[#allocation3 + $0x680] sm:$0xff]
    %v3797 = vld [vmem:[#allocation3 + $0x6a0] sm:$0xff]
    %v3798 = vld [vmem:[#allocation3 + $0x6c0] sm:$0xff]
    %v3799 = vld [vmem:[#allocation3 + $0x6e0] sm:$0xff]
    %v3800 = vld [vmem:[#allocation3 + $0x700] sm:$0xff]
    %v3801 = vld [vmem:[#allocation3 + $0x720] sm:$0xff]
    %v3802 = vld [vmem:[#allocation3 + $0x740] sm:$0xff]
    %v3803 = vld [vmem:[#allocation3 + $0x760] sm:$0xff]
    %v3804 = vld [vmem:[#allocation3 + $0x780] sm:$0xff]
    %v3805 = vld [vmem:[#allocation3 + $0x7a0] sm:$0xff]
    %v3806 = vld [vmem:[#allocation3 + $0x7c0] sm:$0xff]
    %v3807 = vmul.f32 %v3735, %v3771
    %v3808 = vmul.f32 %v3736, %v3772
    %v3809 = vmul.f32 %v3737, %v3773
    %v3810 = vmul.f32 %v3738, %v3774
    %v3811 = vmul.f32 %v3739, %v3775
    %v3812 = vmul.f32 %v3740, %v3776
    %v3813 = vmul.f32 %v3741, %v3777
    %v3814 = vmul.f32 %v3742, %v3778
    %v3815 = vmul.f32 %v3743, %v3779
    %v3816 = vmul.f32 %v3744, %v3780
    %v3817 = vmul.f32 %v3745, %v3781
    %v3818 = vmul.f32 %v3746, %v3782
    %v3819 = vmul.f32 %v3747, %v3783
    %v3820 = vmul.f32 %v3748, %v3784
    %v3821 = vmul.f32 %v3749, %v3785
    %v3822 = vmul.f32 %v3750, %v3786
    %v3823 = vmul.f32 %v3751, %v3787
    %v3824 = vmul.f32 %v3752, %v3788
    %v3825 = vmul.f32 %v3753, %v3789
    %v3826 = vmul.f32 %v3754, %v3790
    %v3827 = vmul.f32 %v3755, %v3791
    %v3828 = vmul.f32 %v3756, %v3792
    %v3829 = vmul.f32 %v3757, %v3793
    %v3830 = vmul.f32 %v3758, %v3794
    %v3831 = vmul.f32 %v3759, %v3795
    %v3832 = vmul.f32 %v3760, %v3796
    %v3833 = vmul.f32 %v3761, %v3797
    %v3834 = vmul.f32 %v3762, %v3798
    %v3835 = vmul.f32 %v3763, %v3799
    %v3836 = vmul.f32 %v3764, %v3800
    %v3837 = vmul.f32 %v3765, %v3801
    %v3838 = vmul.f32 %v3766, %v3802
    %v3839 = vmul.f32 %v3767, %v3803
    %v3840 = vmul.f32 %v3768, %v3804
    %v3841 = vmul.f32 %v3769, %v3805
    %v3842 = vmul.f32 %v3770, %v3806
    %v3843 = vpack.c.bf16 %v3808, %v3807
    %v3844 = vpack.c.bf16 %v3810, %v3809
    %v3845 = vpack.c.bf16 %v3812, %v3811
    %v3846 = vpack.c.bf16 %v3814, %v3813
    %v3847 = vpack.c.bf16 %v3816, %v3815
    %v3848 = vpack.c.bf16 %v3818, %v3817
    %v3849 = vpack.c.bf16 %v3820, %v3819
    %v3850 = vpack.c.bf16 %v3822, %v3821
    %v3851 = vpack.c.bf16 %v3824, %v3823
    %v3852 = vpack.c.bf16 %v3826, %v3825
    %v3853 = vpack.c.bf16 %v3828, %v3827
    %v3854 = vpack.c.bf16 %v3830, %v3829
    %v3855 = vpack.c.bf16 %v3832, %v3831
    %v3856 = vpack.c.bf16 %v3834, %v3833
    %v3857 = vpack.c.bf16 %v3836, %v3835
    %v3858 = vpack.c.bf16 %v3838, %v3837
    %v3859 = vpack.c.bf16 %v3840, %v3839
    %v3860 = vpack.c.bf16 %v3842, %v3841
    %v3861 = vld [vmem:[#allocation5 + $0x140] sm:$0xf]
    %v3862 = vld [vmem:[#allocation5 + $0x144] sm:$0xf]
    %v3863 = vld [vmem:[#allocation5 + $0x148] sm:$0xf]
    %v3864 = vld [vmem:[#allocation5 + $0x14c] sm:$0xf]
    %v3869 = vunpack.c.l.b16 %v3861
    %v3870 = vunpack.c.l.b16 %v3862
    %v3871 = vunpack.c.l.b16 %v3863
    %v3872 = vunpack.c.l.b16 %v3864
    %v3873 = vpack.c.b16 %v3870, %v3869
    %v3874 = vpack.c.b16 %v3872, %v3871
    %v3878 = vsel %vm2696, %v3843, 0
    %v3881 = vsel %vm2696, %v3844, 0
    %v3884 = vsel %vm2696, %v3845, 0
    %v3887 = vsel %vm2696, %v3846, 0
    %v3890 = vsel %vm2696, %v3847, 0
    %v3893 = vsel %vm2696, %v3848, 0
    %v3896 = vsel %vm2696, %v3849, 0
    %v3899 = vsel %vm2696, %v3850, 0
    %v3902 = vsel %vm2696, %v3851, 0
    %v3905 = vsel %vm2696, %v3852, 0
    %v3908 = vsel %vm2696, %v3853, 0
    %v3911 = vsel %vm2696, %v3854, 0
    %v3914 = vsel %vm2696, %v3855, 0
    %v3917 = vsel %vm2696, %v3856, 0
    %v3920 = vsel %vm2696, %v3857, 0
    %v3923 = vsel %vm2696, %v3858, 0
    %v3926 = vsel %vm2696, %v3859, 0
    %v3929 = vsel %vm2696, %v3860, 0
    %3931 = vmatpush.bf16.msra.mxu0 0
    %3932 = vmatpush.bf16.msra.mxu0 0
    %3933 = vmatpush.bf16.msra.mxu0 0
    %3934 = vmatpush.bf16.msra.mxu0 0
    %3935 = vmatpush.bf16.msra.mxu0 0
    %3936 = vmatpush.bf16.msra.mxu0 0
    %3937 = vmatpush.bf16.msra.mxu0 %v3874
    %3938 = vmatpush.bf16.msra.mxu0 %v3873
    %3939 = vmatmul.bf16.gmra.mxu0 %v3878
    %v3940 = vpop.f32.mrf.mxu0
    %v3941 = vadd.f32 0.0, %v3940
    %v3942 = vpop.f32.mrf.mxu0
    %v3943 = vadd.f32 0.0, %v3942
    %3944 = vmatmul.bf16.gmra.mxu0 %v3881
    %v3945 = vpop.f32.mrf.mxu0
    %v3946 = vadd.f32 0.0, %v3945
    %v3947 = vpop.f32.mrf.mxu0
    %v3948 = vadd.f32 0.0, %v3947
    %3949 = vmatmul.bf16.gmra.mxu0 %v3884
    %v3950 = vpop.f32.mrf.mxu0
    %v3951 = vadd.f32 0.0, %v3950
    %v3952 = vpop.f32.mrf.mxu0
    %v3953 = vadd.f32 0.0, %v3952
    %3954 = vmatmul.bf16.gmra.mxu0 %v3887
    %v3955 = vpop.f32.mrf.mxu0
    %v3956 = vadd.f32 0.0, %v3955
    %v3957 = vpop.f32.mrf.mxu0
    %v3958 = vadd.f32 0.0, %v3957
    %3959 = vmatmul.bf16.gmra.mxu0 %v3890
    %v3960 = vpop.f32.mrf.mxu0
    %v3961 = vadd.f32 0.0, %v3960
    %v3962 = vpop.f32.mrf.mxu0
    %v3963 = vadd.f32 0.0, %v3962
    %3964 = vmatmul.bf16.gmra.mxu0 %v3893
    %v3965 = vpop.f32.mrf.mxu0
    %v3966 = vadd.f32 0.0, %v3965
    %v3967 = vpop.f32.mrf.mxu0
    %v3968 = vadd.f32 0.0, %v3967
    %3969 = vmatmul.bf16.gmra.mxu0 %v3896
    %v3970 = vpop.f32.mrf.mxu0
    %v3971 = vadd.f32 0.0, %v3970
    %v3972 = vpop.f32.mrf.mxu0
    %v3973 = vadd.f32 0.0, %v3972
    %3974 = vmatmul.bf16.gmra.mxu0 %v3899
    %v3975 = vpop.f32.mrf.mxu0
    %v3976 = vadd.f32 0.0, %v3975
    %v3977 = vpop.f32.mrf.mxu0
    %v3978 = vadd.f32 0.0, %v3977
    %3979 = vmatmul.bf16.gmra.mxu0 %v3902
    %v3980 = vpop.f32.mrf.mxu0
    %v3981 = vadd.f32 0.0, %v3980
    %v3982 = vpop.f32.mrf.mxu0
    %v3983 = vadd.f32 0.0, %v3982
    %3984 = vmatmul.bf16.gmra.mxu0 %v3905
    %v3985 = vpop.f32.mrf.mxu0
    %v3986 = vadd.f32 0.0, %v3985
    %v3987 = vpop.f32.mrf.mxu0
    %v3988 = vadd.f32 0.0, %v3987
    %3989 = vmatmul.bf16.gmra.mxu0 %v3908
    %v3990 = vpop.f32.mrf.mxu0
    %v3991 = vadd.f32 0.0, %v3990
    %v3992 = vpop.f32.mrf.mxu0
    %v3993 = vadd.f32 0.0, %v3992
    %3994 = vmatmul.bf16.gmra.mxu0 %v3911
    %v3995 = vpop.f32.mrf.mxu0
    %v3996 = vadd.f32 0.0, %v3995
    %v3997 = vpop.f32.mrf.mxu0
    %v3998 = vadd.f32 0.0, %v3997
    %3999 = vmatmul.bf16.gmra.mxu0 %v3914
    %v4000 = vpop.f32.mrf.mxu0
    %v4001 = vadd.f32 0.0, %v4000
    %v4002 = vpop.f32.mrf.mxu0
    %v4003 = vadd.f32 0.0, %v4002
    %4004 = vmatmul.bf16.gmra.mxu0 %v3917
    %v4005 = vpop.f32.mrf.mxu0
    %v4006 = vadd.f32 0.0, %v4005
    %v4007 = vpop.f32.mrf.mxu0
    %v4008 = vadd.f32 0.0, %v4007
    %4009 = vmatmul.bf16.gmra.mxu0 %v3920
    %v4010 = vpop.f32.mrf.mxu0
    %v4011 = vadd.f32 0.0, %v4010
    %v4012 = vpop.f32.mrf.mxu0
    %v4013 = vadd.f32 0.0, %v4012
    %4014 = vmatmul.bf16.gmra.mxu0 %v3923
    %v4015 = vpop.f32.mrf.mxu0
    %v4016 = vadd.f32 0.0, %v4015
    %v4017 = vpop.f32.mrf.mxu0
    %v4018 = vadd.f32 0.0, %v4017
    %4019 = vmatmul.bf16.gmra.mxu0 %v3926
    %v4020 = vpop.f32.mrf.mxu0
    %v4021 = vadd.f32 0.0, %v4020
    %v4022 = vpop.f32.mrf.mxu0
    %v4023 = vadd.f32 0.0, %v4022
    %4024 = vmatmul.bf16.gmra.mxu0 %v3929
    %v4025 = vpop.f32.mrf.mxu0
    %v4026 = vadd.f32 0.0, %v4025
    %v4027 = vpop.f32.mrf.mxu0
    %v4028 = vadd.f32 0.0, %v4027
    %4029 = vdwg.mxu0
    %v4030 = vpack.c.bf16 %v3941, %v3941
    %v4031 = vpack.c.bf16 %v3943, %v3943
    %v4032 = vpack.c.bf16 %v3946, %v3946
    %v4033 = vpack.c.bf16 %v3948, %v3948
    %v4034 = vpack.c.bf16 %v3951, %v3951
    %v4035 = vpack.c.bf16 %v3953, %v3953
    %v4036 = vpack.c.bf16 %v3956, %v3956
    %v4037 = vpack.c.bf16 %v3958, %v3958
    %v4038 = vpack.c.bf16 %v3961, %v3961
    %v4039 = vpack.c.bf16 %v3963, %v3963
    %v4040 = vpack.c.bf16 %v3966, %v3966
    %v4041 = vpack.c.bf16 %v3968, %v3968
    %v4042 = vpack.c.bf16 %v3971, %v3971
    %v4043 = vpack.c.bf16 %v3973, %v3973
    %v4044 = vpack.c.bf16 %v3976, %v3976
    %v4045 = vpack.c.bf16 %v3978, %v3978
    %v4046 = vpack.c.bf16 %v3981, %v3981
    %v4047 = vpack.c.bf16 %v3983, %v3983
    %v4048 = vpack.c.bf16 %v3986, %v3986
    %v4049 = vpack.c.bf16 %v3988, %v3988
    %v4050 = vpack.c.bf16 %v3991, %v3991
    %v4051 = vpack.c.bf16 %v3993, %v3993
    %v4052 = vpack.c.bf16 %v3996, %v3996
    %v4053 = vpack.c.bf16 %v3998, %v3998
    %v4054 = vpack.c.bf16 %v4001, %v4001
    %v4055 = vpack.c.bf16 %v4003, %v4003
    %v4056 = vpack.c.bf16 %v4006, %v4006
    %v4057 = vpack.c.bf16 %v4008, %v4008
    %v4058 = vpack.c.bf16 %v4011, %v4011
    %v4059 = vpack.c.bf16 %v4013, %v4013
    %v4060 = vpack.c.bf16 %v4016, %v4016
    %v4061 = vpack.c.bf16 %v4018, %v4018
    %v4062 = vpack.c.bf16 %v4021, %v4021
    %v4063 = vpack.c.bf16 %v4023, %v4023
    %v4064 = vpack.c.bf16 %v4026, %v4026
    %v4065 = vpack.c.bf16 %v4028, %v4028
    %v4066 = vld [vmem:[%s3 + $0x1a4] sm:$0xff]
    %v4067 = vld [vmem:[%s3 + $0x1ac] sm:$0xf]
    %v4068 = vld [vmem:[%s3 + $0x1b8] sm:$0xff]
    %v4069 = vld [vmem:[%s3 + $0x1c0] sm:$0xf]
    %v4070 = vld [vmem:[%s3 + $0x1cc] sm:$0xff]
    %v4071 = vld [vmem:[%s3 + $0x1d4] sm:$0xf]
    %v4072 = vld [vmem:[%s3 + $0x1e0] sm:$0xff]
    %v4073 = vld [vmem:[%s3 + $0x1e8] sm:$0xf]
    %v4074 = vld [vmem:[%s3 + $0x1f4] sm:$0xff]
    %v4075 = vld [vmem:[%s3 + $0x1fc] sm:$0xf]
    %v4076 = vld [vmem:[%s3 + $0x208] sm:$0xff]
    %v4077 = vld [vmem:[%s3 + $0x210] sm:$0xf]
    %v4078 = vld [vmem:[%s3 + $0x21c] sm:$0xff]
    %v4079 = vld [vmem:[%s3 + $0x224] sm:$0xf]
    %v4080 = vld [vmem:[%s3 + $0x230] sm:$0xff]
    %v4081 = vld [vmem:[%s3 + $0x238] sm:$0xf]
    %v4098 = vunpack.c.l.b16 %v4066
    %v4099 = vunpack.c.h.b16 %v4066
    %v4100 = vunpack.c.l.b16 %v4067
    %v4101 = vunpack.c.l.b16 %v4068
    %v4102 = vunpack.c.h.b16 %v4068
    %v4103 = vunpack.c.l.b16 %v4069
    %v4104 = vunpack.c.l.b16 %v4070
    %v4105 = vunpack.c.h.b16 %v4070
    %v4106 = vunpack.c.l.b16 %v4071
    %v4107 = vunpack.c.l.b16 %v4072
    %v4108 = vunpack.c.h.b16 %v4072
    %v4109 = vunpack.c.l.b16 %v4073
    %v4110 = vunpack.c.l.b16 %v4074
    %v4111 = vunpack.c.h.b16 %v4074
    %v4112 = vunpack.c.l.b16 %v4075
    %v4113 = vunpack.c.l.b16 %v4076
    %v4114 = vunpack.c.h.b16 %v4076
    %v4115 = vunpack.c.l.b16 %v4077
    %v4116 = vunpack.c.l.b16 %v4078
    %v4117 = vunpack.c.h.b16 %v4078
    %v4118 = vunpack.c.l.b16 %v4079
    %v4119 = vunpack.c.l.b16 %v4080
    %v4120 = vunpack.c.h.b16 %v4080
    %v4121 = vunpack.c.l.b16 %v4081
    %v4122 = vpack.c.b16 %v4101, %v4098
    %v4123 = vpack.c.b16 %v4102, %v4099
    %v4124 = vpack.c.b16 %v4103, %v4100
    %v4125 = vpack.c.b16 %v4107, %v4104
    %v4126 = vpack.c.b16 %v4108, %v4105
    %v4127 = vpack.c.b16 %v4109, %v4106
    %v4128 = vpack.c.b16 %v4113, %v4110
    %v4129 = vpack.c.b16 %v4114, %v4111
    %v4130 = vpack.c.b16 %v4115, %v4112
    %v4131 = vpack.c.b16 %v4119, %v4116
    %v4132 = vpack.c.b16 %v4120, %v4117
    %v4133 = vpack.c.b16 %v4121, %v4118
    %v4178 = vunpack.c.l.b16 %v4030
    %v4179 = vunpack.c.l.b16 %v4031
    %v4180 = vunpack.c.l.b16 %v4032
    %v4181 = vunpack.c.l.b16 %v4033
    %v4182 = vunpack.c.l.b16 %v4034
    %v4183 = vunpack.c.l.b16 %v4035
    %v4184 = vunpack.c.l.b16 %v4036
    %v4185 = vunpack.c.l.b16 %v4037
    %v4186 = vunpack.c.l.b16 %v4038
    %v4187 = vunpack.c.l.b16 %v4039
    %v4188 = vunpack.c.l.b16 %v4040
    %v4189 = vunpack.c.l.b16 %v4041
    %v4190 = vunpack.c.l.b16 %v4042
    %v4191 = vunpack.c.l.b16 %v4043
    %v4192 = vunpack.c.l.b16 %v4044
    %v4193 = vunpack.c.l.b16 %v4045
    %v4194 = vunpack.c.l.b16 %v4046
    %v4195 = vunpack.c.l.b16 %v4047
    %v4196 = vunpack.c.l.b16 %v4048
    %v4197 = vunpack.c.l.b16 %v4049
    %v4198 = vunpack.c.l.b16 %v4050
    %v4199 = vunpack.c.l.b16 %v4051
    %v4200 = vunpack.c.l.b16 %v4052
    %v4201 = vunpack.c.l.b16 %v4053
    %v4202 = vunpack.c.l.b16 %v4054
    %v4203 = vunpack.c.l.b16 %v4055
    %v4204 = vunpack.c.l.b16 %v4056
    %v4205 = vunpack.c.l.b16 %v4057
    %v4206 = vunpack.c.l.b16 %v4058
    %v4207 = vunpack.c.l.b16 %v4059
    %v4208 = vunpack.c.l.b16 %v4060
    %v4209 = vunpack.c.l.b16 %v4061
    %v4210 = vunpack.c.l.b16 %v4062
    %v4211 = vunpack.c.l.b16 %v4063
    %v4212 = vunpack.c.l.b16 %v4064
    %v4213 = vunpack.c.l.b16 %v4065
    %v4214 = vpack.c.b16 %v4179, %v4178
    %v4215 = vpack.c.b16 %v4181, %v4180
    %v4216 = vpack.c.b16 %v4183, %v4182
    %v4217 = vpack.c.b16 %v4185, %v4184
    %v4218 = vpack.c.b16 %v4187, %v4186
    %v4219 = vpack.c.b16 %v4189, %v4188
    %v4220 = vpack.c.b16 %v4191, %v4190
    %v4221 = vpack.c.b16 %v4193, %v4192
    %v4222 = vpack.c.b16 %v4195, %v4194
    %v4223 = vpack.c.b16 %v4197, %v4196
    %v4224 = vpack.c.b16 %v4199, %v4198
    %v4225 = vpack.c.b16 %v4201, %v4200
    %v4226 = vpack.c.b16 %v4203, %v4202
    %v4227 = vpack.c.b16 %v4205, %v4204
    %v4228 = vpack.c.b16 %v4207, %v4206
    %v4229 = vpack.c.b16 %v4209, %v4208
    %v4230 = vpack.c.b16 %v4211, %v4210
    %v4231 = vpack.c.b16 %v4213, %v4212
    %v4251 = vsel %vm2696, %v4124, 0
    %v4254 = vsel %vm2696, %v4127, 0
    %v4257 = vsel %vm2696, %v4130, 0
    %v4260 = vsel %vm2696, %v4133, 0
    %4262 = vmatpush.bf16.msra.mxu0 %v4221
    %4263 = vmatpush.bf16.msra.mxu0 %v4220
    %4264 = vmatpush.bf16.msra.mxu0 %v4219
    %4265 = vmatpush.bf16.msra.mxu0 %v4218
    %4266 = vmatpush.bf16.msra.mxu0 %v4217
    %4267 = vmatpush.bf16.msra.mxu0 %v4216
    %4268 = vmatpush.bf16.msra.mxu0 %v4215
    %4269 = vmatpush.bf16.msra.mxu0 %v4214
    %4270 = vmatmul.bf16.gmra.mxu0 %v4122
    %v4271 = vpop.f32.mrf.mxu0
    %v4272 = vadd.f32 0.0, %v4271
    %v4273 = vpop.f32.mrf.mxu0
    %v4274 = vadd.f32 0.0, %v4273
    %4275 = vmatmul.bf16.gmra.mxu0 %v4125
    %v4276 = vpop.f32.mrf.mxu0
    %v4277 = vadd.f32 0.0, %v4276
    %v4278 = vpop.f32.mrf.mxu0
    %v4279 = vadd.f32 0.0, %v4278
    %4280 = vmatmul.bf16.gmra.mxu0 %v4128
    %v4281 = vpop.f32.mrf.mxu0
    %v4282 = vadd.f32 0.0, %v4281
    %v4283 = vpop.f32.mrf.mxu0
    %v4284 = vadd.f32 0.0, %v4283
    %4285 = vmatmul.bf16.gmra.mxu0 %v4131
    %v4286 = vpop.f32.mrf.mxu0
    %v4287 = vadd.f32 0.0, %v4286
    %v4288 = vpop.f32.mrf.mxu0
    %v4289 = vadd.f32 0.0, %v4288
    %4290 = vdwg.mxu0
    %4291 = vmatpush.bf16.msra.mxu0 %v4229
    %4292 = vmatpush.bf16.msra.mxu0 %v4228
    %4293 = vmatpush.bf16.msra.mxu0 %v4227
    %4294 = vmatpush.bf16.msra.mxu0 %v4226
    %4295 = vmatpush.bf16.msra.mxu0 %v4225
    %4296 = vmatpush.bf16.msra.mxu0 %v4224
    %4297 = vmatpush.bf16.msra.mxu0 %v4223
    %4298 = vmatpush.bf16.msra.mxu0 %v4222
    %4299 = vmatmul.bf16.gmra.mxu0 %v4123
    %v4300 = vpop.f32.mrf.mxu0
    %v4301 = vadd.f32 %v4272, %v4300
    %v4302 = vpop.f32.mrf.mxu0
    %v4303 = vadd.f32 %v4274, %v4302
    %4304 = vmatmul.bf16.gmra.mxu0 %v4126
    %v4305 = vpop.f32.mrf.mxu0
    %v4306 = vadd.f32 %v4277, %v4305
    %v4307 = vpop.f32.mrf.mxu0
    %v4308 = vadd.f32 %v4279, %v4307
    %4309 = vmatmul.bf16.gmra.mxu0 %v4129
    %v4310 = vpop.f32.mrf.mxu0
    %v4311 = vadd.f32 %v4282, %v4310
    %v4312 = vpop.f32.mrf.mxu0
    %v4313 = vadd.f32 %v4284, %v4312
    %4314 = vmatmul.bf16.gmra.mxu0 %v4132
    %v4315 = vpop.f32.mrf.mxu0
    %v4316 = vadd.f32 %v4287, %v4315
    %v4317 = vpop.f32.mrf.mxu0
    %v4318 = vadd.f32 %v4289, %v4317
    %4319 = vdwg.mxu0
    %4320 = vmatpush.bf16.msra.mxu0 0
    %4321 = vmatpush.bf16.msra.mxu0 0
    %4322 = vmatpush.bf16.msra.mxu0 0
    %4323 = vmatpush.bf16.msra.mxu0 0
    %4324 = vmatpush.bf16.msra.mxu0 0
    %4325 = vmatpush.bf16.msra.mxu0 0
    %4326 = vmatpush.bf16.msra.mxu0 %v4231
    %4327 = vmatpush.bf16.msra.mxu0 %v4230
    %4328 = vmatmul.bf16.gmra.mxu0 %v4251
    %v4329 = vpop.f32.mrf.mxu0
    %v4330 = vadd.f32 %v4301, %v4329
    %v4331 = vpop.f32.mrf.mxu0
    %v4332 = vadd.f32 %v4303, %v4331
    %4333 = vmatmul.bf16.gmra.mxu0 %v4254
    %v4334 = vpop.f32.mrf.mxu0
    %v4335 = vadd.f32 %v4306, %v4334
    %v4336 = vpop.f32.mrf.mxu0
    %v4337 = vadd.f32 %v4308, %v4336
    %4338 = vmatmul.bf16.gmra.mxu0 %v4257
    %v4339 = vpop.f32.mrf.mxu0
    %v4340 = vadd.f32 %v4311, %v4339
    %v4341 = vpop.f32.mrf.mxu0
    %v4342 = vadd.f32 %v4313, %v4341
    %4343 = vmatmul.bf16.gmra.mxu0 %v4260
    %v4344 = vpop.f32.mrf.mxu0
    %v4345 = vadd.f32 %v4316, %v4344
    %v4346 = vpop.f32.mrf.mxu0
    %v4347 = vadd.f32 %v4318, %v4346
    %4348 = vdwg.mxu0
    %v4349 = vld [vmem:[%s4 + $0xa8] sm:$0xff]
    %v4350 = vld [vmem:[%s4 + $0xb0] sm:$0xff]
    %v4351 = vld [vmem:[%s4 + $0xb8] sm:$0xff]
    %v4352 = vld [vmem:[%s4 + $0xc0] sm:$0xff]
    %v4353 = vld [vmem:[%s4 + $0xc8] sm:$0xff]
    %v4354 = vld [vmem:[%s4 + $0xd0] sm:$0xff]
    %v4355 = vld [vmem:[%s4 + $0xd8] sm:$0xff]
    %v4356 = vld [vmem:[%s4 + $0xe0] sm:$0xff]
    %v4357 = vsel %vm2232, %v4330, 0.0
    %4358 = vadd.xlane.f32.xlu0 %v4357
    %v4359 = vpop.xlane.xlu0 %4358
    %v4360 = vsel %vm2232, %v4332, 0.0
    %4361 = vadd.xlane.f32.xlu0 %v4360
    %v4362 = vpop.xlane.xlu0 %4361
    %v4363 = vsel %vm2232, %v4335, 0.0
    %4364 = vadd.xlane.f32.xlu0 %v4363
    %v4365 = vpop.xlane.xlu0 %4364
    %v4366 = vsel %vm2232, %v4337, 0.0
    %4367 = vadd.xlane.f32.xlu0 %v4366
    %v4368 = vpop.xlane.xlu0 %4367
    %v4369 = vsel %vm2232, %v4340, 0.0
    %4370 = vadd.xlane.f32.xlu0 %v4369
    %v4371 = vpop.xlane.xlu0 %4370
    %v4372 = vsel %vm2232, %v4342, 0.0
    %4373 = vadd.xlane.f32.xlu0 %v4372
    %v4374 = vpop.xlane.xlu0 %4373
    %v4375 = vsel %vm2232, %v4345, 0.0
    %4376 = vadd.xlane.f32.xlu0 %v4375
    %v4377 = vpop.xlane.xlu0 %4376
    %v4378 = vsel %vm2232, %v4347, 0.0
    %4379 = vadd.xlane.f32.xlu0 %v4378
    %v4380 = vpop.xlane.xlu0 %4379
    %v4381 = vmul.f32 %v4359, 0.125
    %v4382 = vmul.f32 %v4362, 0.125
    %v4383 = vmul.f32 %v4365, 0.125
    %v4384 = vmul.f32 %v4368, 0.125
    %v4385 = vmul.f32 %v4371, 0.125
    %v4386 = vmul.f32 %v4374, 0.125
    %v4387 = vmul.f32 %v4377, 0.125
    %v4388 = vmul.f32 %v4380, 0.125
    %v4389 = vsub.f32 %v4330, %v4381
    %v4390 = vsub.f32 %v4332, %v4382
    %v4391 = vsub.f32 %v4335, %v4383
    %v4392 = vsub.f32 %v4337, %v4384
    %v4393 = vsub.f32 %v4340, %v4385
    %v4394 = vsub.f32 %v4342, %v4386
    %v4395 = vsub.f32 %v4345, %v4387
    %v4396 = vsub.f32 %v4347, %v4388
    %v4397 = vmul.f32 %v4389, %v4389
    %v4398 = vmul.f32 %v4390, %v4390
    %v4399 = vmul.f32 %v4391, %v4391
    %v4400 = vmul.f32 %v4392, %v4392
    %v4401 = vmul.f32 %v4393, %v4393
    %v4402 = vmul.f32 %v4394, %v4394
    %v4403 = vmul.f32 %v4395, %v4395
    %v4404 = vmul.f32 %v4396, %v4396
    %v4405 = vsel %vm2232, %v4397, 0.0
    %4406 = vadd.xlane.f32.xlu0 %v4405
    %v4407 = vpop.xlane.xlu0 %4406
    %v4408 = vsel %vm2232, %v4398, 0.0
    %4409 = vadd.xlane.f32.xlu0 %v4408
    %v4410 = vpop.xlane.xlu0 %4409
    %v4411 = vsel %vm2232, %v4399, 0.0
    %4412 = vadd.xlane.f32.xlu0 %v4411
    %v4413 = vpop.xlane.xlu0 %4412
    %v4414 = vsel %vm2232, %v4400, 0.0
    %4415 = vadd.xlane.f32.xlu0 %v4414
    %v4416 = vpop.xlane.xlu0 %4415
    %v4417 = vsel %vm2232, %v4401, 0.0
    %4418 = vadd.xlane.f32.xlu0 %v4417
    %v4419 = vpop.xlane.xlu0 %4418
    %v4420 = vsel %vm2232, %v4402, 0.0
    %4421 = vadd.xlane.f32.xlu0 %v4420
    %v4422 = vpop.xlane.xlu0 %4421
    %v4423 = vsel %vm2232, %v4403, 0.0
    %4424 = vadd.xlane.f32.xlu0 %v4423
    %v4425 = vpop.xlane.xlu0 %4424
    %v4426 = vsel %vm2232, %v4404, 0.0
    %4427 = vadd.xlane.f32.xlu0 %v4426
    %v4428 = vpop.xlane.xlu0 %4427
    %v4429 = vmul.f32 %v4407, 0.125
    %v4430 = vmul.f32 %v4410, 0.125
    %v4431 = vmul.f32 %v4413, 0.125
    %v4432 = vmul.f32 %v4416, 0.125
    %v4433 = vmul.f32 %v4419, 0.125
    %v4434 = vmul.f32 %v4422, 0.125
    %v4435 = vmul.f32 %v4425, 0.125
    %v4436 = vmul.f32 %v4428, 0.125
    %v4437 = vadd.f32 %v4429, 1e-05
    %v4438 = vadd.f32 %v4430, 1e-05
    %v4439 = vadd.f32 %v4431, 1e-05
    %v4440 = vadd.f32 %v4432, 1e-05
    %v4441 = vadd.f32 %v4433, 1e-05
    %v4442 = vadd.f32 %v4434, 1e-05
    %v4443 = vadd.f32 %v4435, 1e-05
    %v4444 = vadd.f32 %v4436, 1e-05
    %v4445 = vrsqrt.pop %v4437
    %v4446 = vmul.f32 %v4445, %v4437
    %v4447 = vmul.f32 %v4446, %v4445
    %v4448 = vmul.f32 0.5, %v4447
    %v4449 = vsub.f32 1.5, %v4448
    %v4450 = vmul.f32 %v4445, %v4449
    %vm4451 = vweird.f32 %v4437
    %vm4452 = vweird.f32 %v4445
    %vm4453 = vmor %vm4451, %vm4452
    %v4454 = vsel %vm4453, %v4445, %v4450
    %v4455 = vrsqrt.pop %v4438
    %v4456 = vmul.f32 %v4455, %v4438
    %v4457 = vmul.f32 %v4456, %v4455
    %v4458 = vmul.f32 0.5, %v4457
    %v4459 = vsub.f32 1.5, %v4458
    %v4460 = vmul.f32 %v4455, %v4459
    %vm4461 = vweird.f32 %v4438
    %vm4462 = vweird.f32 %v4455
    %vm4463 = vmor %vm4461, %vm4462
    %v4464 = vsel %vm4463, %v4455, %v4460
    %v4465 = vrsqrt.pop %v4439
    %v4466 = vmul.f32 %v4465, %v4439
    %v4467 = vmul.f32 %v4466, %v4465
    %v4468 = vmul.f32 0.5, %v4467
    %v4469 = vsub.f32 1.5, %v4468
    %v4470 = vmul.f32 %v4465, %v4469
    %vm4471 = vweird.f32 %v4439
    %vm4472 = vweird.f32 %v4465
    %vm4473 = vmor %vm4471, %vm4472
    %v4474 = vsel %vm4473, %v4465, %v4470
    %v4475 = vrsqrt.pop %v4440
    %v4476 = vmul.f32 %v4475, %v4440
    %v4477 = vmul.f32 %v4476, %v4475
    %v4478 = vmul.f32 0.5, %v4477
    %v4479 = vsub.f32 1.5, %v4478
    %v4480 = vmul.f32 %v4475, %v4479
    %vm4481 = vweird.f32 %v4440
    %vm4482 = vweird.f32 %v4475
    %vm4483 = vmor %vm4481, %vm4482
    %v4484 = vsel %vm4483, %v4475, %v4480
    %v4485 = vrsqrt.pop %v4441
    %v4486 = vmul.f32 %v4485, %v4441
    %v4487 = vmul.f32 %v4486, %v4485
    %v4488 = vmul.f32 0.5, %v4487
    %v4489 = vsub.f32 1.5, %v4488
    %v4490 = vmul.f32 %v4485, %v4489
    %vm4491 = vweird.f32 %v4441
    %vm4492 = vweird.f32 %v4485
    %vm4493 = vmor %vm4491, %vm4492
    %v4494 = vsel %vm4493, %v4485, %v4490
    %v4495 = vrsqrt.pop %v4442
    %v4496 = vmul.f32 %v4495, %v4442
    %v4497 = vmul.f32 %v4496, %v4495
    %v4498 = vmul.f32 0.5, %v4497
    %v4499 = vsub.f32 1.5, %v4498
    %v4500 = vmul.f32 %v4495, %v4499
    %vm4501 = vweird.f32 %v4442
    %vm4502 = vweird.f32 %v4495
    %vm4503 = vmor %vm4501, %vm4502
    %v4504 = vsel %vm4503, %v4495, %v4500
    %v4505 = vrsqrt.pop %v4443
    %v4506 = vmul.f32 %v4505, %v4443
    %v4507 = vmul.f32 %v4506, %v4505
    %v4508 = vmul.f32 0.5, %v4507
    %v4509 = vsub.f32 1.5, %v4508
    %v4510 = vmul.f32 %v4505, %v4509
    %vm4511 = vweird.f32 %v4443
    %vm4512 = vweird.f32 %v4505
    %vm4513 = vmor %vm4511, %vm4512
    %v4514 = vsel %vm4513, %v4505, %v4510
    %v4515 = vrsqrt.pop %v4444
    %v4516 = vmul.f32 %v4515, %v4444
    %v4517 = vmul.f32 %v4516, %v4515
    %v4518 = vmul.f32 0.5, %v4517
    %v4519 = vsub.f32 1.5, %v4518
    %v4520 = vmul.f32 %v4515, %v4519
    %vm4521 = vweird.f32 %v4444
    %vm4522 = vweird.f32 %v4515
    %vm4523 = vmor %vm4521, %vm4522
    %v4524 = vsel %vm4523, %v4515, %v4520
    %v4525 = vmul.f32 %v4454, %v4349
    %v4526 = vmul.f32 %v4464, %v4350
    %v4527 = vmul.f32 %v4474, %v4351
    %v4528 = vmul.f32 %v4484, %v4352
    %v4529 = vmul.f32 %v4494, %v4353
    %v4530 = vmul.f32 %v4504, %v4354
    %v4531 = vmul.f32 %v4514, %v4355
    %v4532 = vmul.f32 %v4524, %v4356
    %4534 = vset.pattern.permute.xlu0 0
    %4535 = vperm.xlu0 %4534, %v4525
    %v4536 = vpop.permute.xlu0 %4535
    %4539 = vset.pattern.permute.xlu0 0
    %4540 = vperm.xlu0 %4539, %v4526
    %v4541 = vpop.permute.xlu0 %4540
    %4544 = vset.pattern.permute.xlu0 0
    %4545 = vperm.xlu0 %4544, %v4527
    %v4546 = vpop.permute.xlu0 %4545
    %4549 = vset.pattern.permute.xlu0 0
    %4550 = vperm.xlu0 %4549, %v4528
    %v4551 = vpop.permute.xlu0 %4550
    %4554 = vset.pattern.permute.xlu0 0
    %4555 = vperm.xlu0 %4554, %v4529
    %v4556 = vpop.permute.xlu0 %4555
    %4559 = vset.pattern.permute.xlu0 0
    %4560 = vperm.xlu0 %4559, %v4530
    %v4561 = vpop.permute.xlu0 %4560
    %4564 = vset.pattern.permute.xlu0 0
    %4565 = vperm.xlu0 %4564, %v4531
    %v4566 = vpop.permute.xlu0 %4565
    %4569 = vset.pattern.permute.xlu0 0
    %4570 = vperm.xlu0 %4569, %v4532
    %v4571 = vpop.permute.xlu0 %4570
    %v4573 = vmul.f32 %v4389, %v4536
    %v4574 = vmul.f32 %v4390, %v4541
    %v4575 = vmul.f32 %v4391, %v4546
    %v4576 = vmul.f32 %v4392, %v4551
    %v4577 = vmul.f32 %v4393, %v4556
    %v4578 = vmul.f32 %v4394, %v4561
    %v4579 = vmul.f32 %v4395, %v4566
    %v4580 = vmul.f32 %v4396, %v4571
    %4582 = vset.pattern.permute.xlu0 1
    %4583 = vperm.xlu0 %4582, %v4349
    %v4584 = vpop.permute.xlu0 %4583
    %4587 = vset.pattern.permute.xlu0 1
    %4588 = vperm.xlu0 %4587, %v4350
    %v4589 = vpop.permute.xlu0 %4588
    %4592 = vset.pattern.permute.xlu0 1
    %4593 = vperm.xlu0 %4592, %v4351
    %v4594 = vpop.permute.xlu0 %4593
    %4597 = vset.pattern.permute.xlu0 1
    %4598 = vperm.xlu0 %4597, %v4352
    %v4599 = vpop.permute.xlu0 %4598
    %4602 = vset.pattern.permute.xlu0 1
    %4603 = vperm.xlu0 %4602, %v4353
    %v4604 = vpop.permute.xlu0 %4603
    %4607 = vset.pattern.permute.xlu0 1
    %4608 = vperm.xlu0 %4607, %v4354
    %v4609 = vpop.permute.xlu0 %4608
    %4612 = vset.pattern.permute.xlu0 1
    %4613 = vperm.xlu0 %4612, %v4355
    %v4614 = vpop.permute.xlu0 %4613
    %4617 = vset.pattern.permute.xlu0 1
    %4618 = vperm.xlu0 %4617, %v4356
    %v4619 = vpop.permute.xlu0 %4618
    %v4621 = vadd.f32 %v4573, %v4584
    %v4622 = vadd.f32 %v4574, %v4589
    %v4623 = vadd.f32 %v4575, %v4594
    %v4624 = vadd.f32 %v4576, %v4599
    %v4625 = vadd.f32 %v4577, %v4604
    %v4626 = vadd.f32 %v4578, %v4609
    %v4627 = vadd.f32 %v4579, %v4614
    %v4628 = vadd.f32 %v4580, %v4619
    %v4629 = vmax.f32 %v4621, 0.0
    %v4630 = vmax.f32 %v4622, 0.0
    %v4631 = vmax.f32 %v4623, 0.0
    %v4632 = vmax.f32 %v4624, 0.0
    %v4633 = vmax.f32 %v4625, 0.0
    %v4634 = vmax.f32 %v4626, 0.0
    %v4635 = vmax.f32 %v4627, 0.0
    %v4636 = vmax.f32 %v4628, 0.0
    %4645 = vrot.lane.b32.xlu0 %v4629, 3
    %v4646 = vpop.permute.xlu0 %4645
    %4647 = vrot.lane.b32.xlu0 %v4630, 3
    %v4648 = vpop.permute.xlu0 %4647
    %4649 = vrot.lane.b32.xlu0 %v4631, 3
    %v4650 = vpop.permute.xlu0 %4649
    %4651 = vrot.lane.b32.xlu0 %v4632, 3
    %v4652 = vpop.permute.xlu0 %4651
    %4653 = vrot.lane.b32.xlu0 %v4633, 3
    %v4654 = vpop.permute.xlu0 %4653
    %4655 = vrot.lane.b32.xlu0 %v4634, 3
    %v4656 = vpop.permute.xlu0 %4655
    %4657 = vrot.lane.b32.xlu0 %v4635, 3
    %v4658 = vpop.permute.xlu0 %4657
    %4659 = vrot.lane.b32.xlu0 %v4636, 3
    %v4660 = vpop.permute.xlu0 %4659
    %v4669 = vsel %vm2895, 0.0, %v4646
    %v4670 = vsel %vm2895, 0.0, %v4648
    %v4671 = vsel %vm2895, 0.0, %v4650
    %v4672 = vsel %vm2895, 0.0, %v4652
    %v4673 = vsel %vm2895, 0.0, %v4654
    %v4674 = vsel %vm2895, 0.0, %v4656
    %v4675 = vsel %vm2895, 0.0, %v4658
    %v4676 = vsel %vm2895, 0.0, %v4660
    %4677 = vst.msk [vmem:[#allocation2] sm:$0xff] %vm2232, %v4669
    %4678 = vst.msk [vmem:[#allocation2 + $0x20] sm:$0xff] %vm2232, %v4670
    %4679 = vst.msk [vmem:[#allocation2 + $0x40] sm:$0xff] %vm2232, %v4671
    %4680 = vst.msk [vmem:[#allocation2 + $0x60] sm:$0xff] %vm2232, %v4672
    %4681 = vst.msk [vmem:[#allocation2 + $0x80] sm:$0xff] %vm2232, %v4673
    %4682 = vst.msk [vmem:[#allocation2 + $0xa0] sm:$0xff] %vm2232, %v4674
    %4683 = vst.msk [vmem:[#allocation2 + $0xc0] sm:$0xff] %vm2232, %v4675
    %4684 = vst.msk [vmem:[#allocation2 + $0xe0] sm:$0xff] %vm2232, %v4676
    %4685 = vrot.lane.b32.xlu0 %v4629, 2
    %v4686 = vpop.permute.xlu0 %4685
    %4687 = vrot.lane.b32.xlu0 %v4630, 2
    %v4688 = vpop.permute.xlu0 %4687
    %4689 = vrot.lane.b32.xlu0 %v4631, 2
    %v4690 = vpop.permute.xlu0 %4689
    %4691 = vrot.lane.b32.xlu0 %v4632, 2
    %v4692 = vpop.permute.xlu0 %4691
    %4693 = vrot.lane.b32.xlu0 %v4633, 2
    %v4694 = vpop.permute.xlu0 %4693
    %4695 = vrot.lane.b32.xlu0 %v4634, 2
    %v4696 = vpop.permute.xlu0 %4695
    %4697 = vrot.lane.b32.xlu0 %v4635, 2
    %v4698 = vpop.permute.xlu0 %4697
    %4699 = vrot.lane.b32.xlu0 %v4636, 2
    %v4700 = vpop.permute.xlu0 %4699
    %vm4709 = vcmask 15360
    %v4710 = vsel %vm4709, 0.0, %v4686
    %v4711 = vsel %vm4709, 0.0, %v4688
    %v4712 = vsel %vm4709, 0.0, %v4690
    %v4713 = vsel %vm4709, 0.0, %v4692
    %v4714 = vsel %vm4709, 0.0, %v4694
    %v4715 = vsel %vm4709, 0.0, %v4696
    %v4716 = vsel %vm4709, 0.0, %v4698
    %v4717 = vsel %vm4709, 0.0, %v4700
    %4718 = vst.msk [vmem:[#allocation2 + $0x100] sm:$0xff] %vm2232, %v4710
    %4719 = vst.msk [vmem:[#allocation2 + $0x120] sm:$0xff] %vm2232, %v4711
    %4720 = vst.msk [vmem:[#allocation2 + $0x140] sm:$0xff] %vm2232, %v4712
    %4721 = vst.msk [vmem:[#allocation2 + $0x160] sm:$0xff] %vm2232, %v4713
    %4722 = vst.msk [vmem:[#allocation2 + $0x180] sm:$0xff] %vm2232, %v4714
    %4723 = vst.msk [vmem:[#allocation2 + $0x1a0] sm:$0xff] %vm2232, %v4715
    %4724 = vst.msk [vmem:[#allocation2 + $0x1c0] sm:$0xff] %vm2232, %v4716
    %4725 = vst.msk [vmem:[#allocation2 + $0x1e0] sm:$0xff] %vm2232, %v4717
    %4726 = vrot.lane.b32.xlu0 %v4629, 1
    %v4727 = vpop.permute.xlu0 %4726
    %4728 = vrot.lane.b32.xlu0 %v4630, 1
    %v4729 = vpop.permute.xlu0 %4728
    %4730 = vrot.lane.b32.xlu0 %v4631, 1
    %v4731 = vpop.permute.xlu0 %4730
    %4732 = vrot.lane.b32.xlu0 %v4632, 1
    %v4733 = vpop.permute.xlu0 %4732
    %4734 = vrot.lane.b32.xlu0 %v4633, 1
    %v4735 = vpop.permute.xlu0 %4734
    %4736 = vrot.lane.b32.xlu0 %v4634, 1
    %v4737 = vpop.permute.xlu0 %4736
    %4738 = vrot.lane.b32.xlu0 %v4635, 1
    %v4739 = vpop.permute.xlu0 %4738
    %4740 = vrot.lane.b32.xlu0 %v4636, 1
    %v4741 = vpop.permute.xlu0 %4740
    %v4750 = vsel %vm2916, 0.0, %v4727
    %v4751 = vsel %vm2916, 0.0, %v4729
    %v4752 = vsel %vm2916, 0.0, %v4731
    %v4753 = vsel %vm2916, 0.0, %v4733
    %v4754 = vsel %vm2916, 0.0, %v4735
    %v4755 = vsel %vm2916, 0.0, %v4737
    %v4756 = vsel %vm2916, 0.0, %v4739
    %v4757 = vsel %vm2916, 0.0, %v4741
    %4758 = vst.msk [vmem:[#allocation2 + $0x200] sm:$0xff] %vm2232, %v4750
    %4759 = vst.msk [vmem:[#allocation2 + $0x220] sm:$0xff] %vm2232, %v4751
    %4760 = vst.msk [vmem:[#allocation2 + $0x240] sm:$0xff] %vm2232, %v4752
    %4761 = vst.msk [vmem:[#allocation2 + $0x260] sm:$0xff] %vm2232, %v4753
    %4762 = vst.msk [vmem:[#allocation2 + $0x280] sm:$0xff] %vm2232, %v4754
    %4763 = vst.msk [vmem:[#allocation2 + $0x2a0] sm:$0xff] %vm2232, %v4755
    %4764 = vst.msk [vmem:[#allocation2 + $0x2c0] sm:$0xff] %vm2232, %v4756
    %4765 = vst.msk [vmem:[#allocation2 + $0x2e0] sm:$0xff] %vm2232, %v4757
    %4766 = vst.msk [vmem:[#allocation2 + $0x300] sm:$0xff] %vm2232, %v4750
    %4767 = vst.msk [vmem:[#allocation2 + $0x320] sm:$0xff] %vm2232, %v4751
    %4768 = vst.msk [vmem:[#allocation2 + $0x340] sm:$0xff] %vm2232, %v4752
    %4769 = vst.msk [vmem:[#allocation2 + $0x360] sm:$0xff] %vm2232, %v4753
    %4770 = vst.msk [vmem:[#allocation2 + $0x380] sm:$0xff] %vm2232, %v4754
    %4771 = vst.msk [vmem:[#allocation2 + $0x3a0] sm:$0xff] %vm2232, %v4755
    %4772 = vst.msk [vmem:[#allocation2 + $0x3c0] sm:$0xff] %vm2232, %v4756
    %4773 = vst.msk [vmem:[#allocation2 + $0x3e0] sm:$0xff] %vm2232, %v4757
    %4774 = vst.msk [vmem:[#allocation2 + $0x400] sm:$0xff] %vm2232, %v4629
    %4775 = vst.msk [vmem:[#allocation2 + $0x420] sm:$0xff] %vm2232, %v4630
    %4776 = vst.msk [vmem:[#allocation2 + $0x440] sm:$0xff] %vm2232, %v4631
    %4777 = vst.msk [vmem:[#allocation2 + $0x460] sm:$0xff] %vm2232, %v4632
    %4778 = vst.msk [vmem:[#allocation2 + $0x480] sm:$0xff] %vm2232, %v4633
    %4779 = vst.msk [vmem:[#allocation2 + $0x4a0] sm:$0xff] %vm2232, %v4634
    %4780 = vst.msk [vmem:[#allocation2 + $0x4c0] sm:$0xff] %vm2232, %v4635
    %4781 = vst.msk [vmem:[#allocation2 + $0x4e0] sm:$0xff] %vm2232, %v4636
    %4782 = vrot.lane.b32.xlu0 %v4629, 127
    %v4783 = vpop.permute.xlu0 %4782
    %4784 = vrot.lane.b32.xlu0 %v4630, 127
    %v4785 = vpop.permute.xlu0 %4784
    %4786 = vrot.lane.b32.xlu0 %v4631, 127
    %v4787 = vpop.permute.xlu0 %4786
    %4788 = vrot.lane.b32.xlu0 %v4632, 127
    %v4789 = vpop.permute.xlu0 %4788
    %4790 = vrot.lane.b32.xlu0 %v4633, 127
    %v4791 = vpop.permute.xlu0 %4790
    %4792 = vrot.lane.b32.xlu0 %v4634, 127
    %v4793 = vpop.permute.xlu0 %4792
    %4794 = vrot.lane.b32.xlu0 %v4635, 127
    %v4795 = vpop.permute.xlu0 %4794
    %4796 = vrot.lane.b32.xlu0 %v4636, 127
    %v4797 = vpop.permute.xlu0 %4796
    %vm4806 = vcmask 56320
    %v4807 = vsel %vm4806, %v4783, 0.0
    %v4808 = vsel %vm4806, %v4785, 0.0
    %v4809 = vsel %vm4806, %v4787, 0.0
    %v4810 = vsel %vm4806, %v4789, 0.0
    %v4811 = vsel %vm4806, %v4791, 0.0
    %v4812 = vsel %vm4806, %v4793, 0.0
    %v4813 = vsel %vm4806, %v4795, 0.0
    %v4814 = vsel %vm4806, %v4797, 0.0
    %4815 = vst.msk [vmem:[#allocation2 + $0x500] sm:$0xff] %vm2232, %v4807
    %4816 = vst.msk [vmem:[#allocation2 + $0x520] sm:$0xff] %vm2232, %v4808
    %4817 = vst.msk [vmem:[#allocation2 + $0x540] sm:$0xff] %vm2232, %v4809
    %4818 = vst.msk [vmem:[#allocation2 + $0x560] sm:$0xff] %vm2232, %v4810
    %4819 = vst.msk [vmem:[#allocation2 + $0x580] sm:$0xff] %vm2232, %v4811
    %4820 = vst.msk [vmem:[#allocation2 + $0x5a0] sm:$0xff] %vm2232, %v4812
    %4821 = vst.msk [vmem:[#allocation2 + $0x5c0] sm:$0xff] %vm2232, %v4813
    %4822 = vst.msk [vmem:[#allocation2 + $0x5e0] sm:$0xff] %vm2232, %v4814
    %4823 = vst.msk [vmem:[#allocation2 + $0x600] sm:$0xff] %vm2232, %v4807
    %4824 = vst.msk [vmem:[#allocation2 + $0x620] sm:$0xff] %vm2232, %v4808
    %4825 = vst.msk [vmem:[#allocation2 + $0x640] sm:$0xff] %vm2232, %v4809
    %4826 = vst.msk [vmem:[#allocation2 + $0x660] sm:$0xff] %vm2232, %v4810
    %4827 = vst.msk [vmem:[#allocation2 + $0x680] sm:$0xff] %vm2232, %v4811
    %4828 = vst.msk [vmem:[#allocation2 + $0x6a0] sm:$0xff] %vm2232, %v4812
    %4829 = vst.msk [vmem:[#allocation2 + $0x6c0] sm:$0xff] %vm2232, %v4813
    %4830 = vst.msk [vmem:[#allocation2 + $0x6e0] sm:$0xff] %vm2232, %v4814
    %4831 = vrot.lane.b32.xlu0 %v4629, 126
    %v4832 = vpop.permute.xlu0 %4831
    %4833 = vrot.lane.b32.xlu0 %v4630, 126
    %v4834 = vpop.permute.xlu0 %4833
    %4835 = vrot.lane.b32.xlu0 %v4631, 126
    %v4836 = vpop.permute.xlu0 %4835
    %4837 = vrot.lane.b32.xlu0 %v4632, 126
    %v4838 = vpop.permute.xlu0 %4837
    %4839 = vrot.lane.b32.xlu0 %v4633, 126
    %v4840 = vpop.permute.xlu0 %4839
    %4841 = vrot.lane.b32.xlu0 %v4634, 126
    %v4842 = vpop.permute.xlu0 %4841
    %4843 = vrot.lane.b32.xlu0 %v4635, 126
    %v4844 = vpop.permute.xlu0 %4843
    %4845 = vrot.lane.b32.xlu0 %v4636, 126
    %v4846 = vpop.permute.xlu0 %4845
    %vm4855 = vcmask 48128
    %v4856 = vsel %vm4855, %v4832, 0.0
    %v4857 = vsel %vm4855, %v4834, 0.0
    %v4858 = vsel %vm4855, %v4836, 0.0
    %v4859 = vsel %vm4855, %v4838, 0.0
    %v4860 = vsel %vm4855, %v4840, 0.0
    %v4861 = vsel %vm4855, %v4842, 0.0
    %v4862 = vsel %vm4855, %v4844, 0.0
    %v4863 = vsel %vm4855, %v4846, 0.0
    %4864 = vst.msk [vmem:[#allocation2 + $0x700] sm:$0xff] %vm2232, %v4856
    %4865 = vst.msk [vmem:[#allocation2 + $0x720] sm:$0xff] %vm2232, %v4857
    %4866 = vst.msk [vmem:[#allocation2 + $0x740] sm:$0xff] %vm2232, %v4858
    %4867 = vst.msk [vmem:[#allocation2 + $0x760] sm:$0xff] %vm2232, %v4859
    %4868 = vst.msk [vmem:[#allocation2 + $0x780] sm:$0xff] %vm2232, %v4860
    %4869 = vst.msk [vmem:[#allocation2 + $0x7a0] sm:$0xff] %vm2232, %v4861
    %4870 = vst.msk [vmem:[#allocation2 + $0x7c0] sm:$0xff] %vm2232, %v4862
    %4871 = vst.msk [vmem:[#allocation2 + $0x7e0] sm:$0xff] %vm2232, %v4863
    %4872 = vrot.lane.b32.xlu0 %v4629, 125
    %v4873 = vpop.permute.xlu0 %4872
    %4874 = vrot.lane.b32.xlu0 %v4630, 125
    %v4875 = vpop.permute.xlu0 %4874
    %4876 = vrot.lane.b32.xlu0 %v4631, 125
    %v4877 = vpop.permute.xlu0 %4876
    %4878 = vrot.lane.b32.xlu0 %v4632, 125
    %v4879 = vpop.permute.xlu0 %4878
    %4880 = vrot.lane.b32.xlu0 %v4633, 125
    %v4881 = vpop.permute.xlu0 %4880
    %4882 = vrot.lane.b32.xlu0 %v4634, 125
    %v4883 = vpop.permute.xlu0 %4882
    %4884 = vrot.lane.b32.xlu0 %v4635, 125
    %v4885 = vpop.permute.xlu0 %4884
    %4886 = vrot.lane.b32.xlu0 %v4636, 125
    %v4887 = vpop.permute.xlu0 %4886
    %v4896 = vsel %vm2853, %v4873, 0.0
    %v4897 = vsel %vm2853, %v4875, 0.0
    %v4898 = vsel %vm2853, %v4877, 0.0
    %v4899 = vsel %vm2853, %v4879, 0.0
    %v4900 = vsel %vm2853, %v4881, 0.0
    %v4901 = vsel %vm2853, %v4883, 0.0
    %v4902 = vsel %vm2853, %v4885, 0.0
    %v4903 = vsel %vm2853, %v4887, 0.0
    %4904 = vst.msk [vmem:[#allocation2 + $0x800] sm:$0xff] %vm2232, %v4896
    %4905 = vst.msk [vmem:[#allocation2 + $0x820] sm:$0xff] %vm2232, %v4897
    %4906 = vst.msk [vmem:[#allocation2 + $0x840] sm:$0xff] %vm2232, %v4898
    %4907 = vst.msk [vmem:[#allocation2 + $0x860] sm:$0xff] %vm2232, %v4899
    %4908 = vst.msk [vmem:[#allocation2 + $0x880] sm:$0xff] %vm2232, %v4900
    %4909 = vst.msk [vmem:[#allocation2 + $0x8a0] sm:$0xff] %vm2232, %v4901
    %4910 = vst.msk [vmem:[#allocation2 + $0x8c0] sm:$0xff] %vm2232, %v4902
    %4911 = vst.msk [vmem:[#allocation2 + $0x8e0] sm:$0xff] %vm2232, %v4903
    %v4912 = vld [vmem:[#allocation2] sm:$0xff]
    %v4913 = vld [vmem:[#allocation2 + $0x20] sm:$0xff]
    %v4914 = vld [vmem:[#allocation2 + $0x40] sm:$0xff]
    %v4915 = vld [vmem:[#allocation2 + $0x60] sm:$0xff]
    %v4916 = vld [vmem:[#allocation2 + $0x80] sm:$0xff]
    %v4917 = vld [vmem:[#allocation2 + $0xa0] sm:$0xff]
    %v4918 = vld [vmem:[#allocation2 + $0xc0] sm:$0xff]
    %v4919 = vld [vmem:[#allocation2 + $0xe0] sm:$0xff]
    %v4920 = vld [vmem:[#allocation2 + $0x100] sm:$0xff]
    %v4921 = vld [vmem:[#allocation2 + $0x120] sm:$0xff]
    %v4922 = vld [vmem:[#allocation2 + $0x140] sm:$0xff]
    %v4923 = vld [vmem:[#allocation2 + $0x160] sm:$0xff]
    %v4924 = vld [vmem:[#allocation2 + $0x180] sm:$0xff]
    %v4925 = vld [vmem:[#allocation2 + $0x1a0] sm:$0xff]
    %v4926 = vld [vmem:[#allocation2 + $0x1c0] sm:$0xff]
    %v4927 = vld [vmem:[#allocation2 + $0x1e0] sm:$0xff]
    %v4928 = vld [vmem:[#allocation2 + $0x200] sm:$0xff]
    %v4929 = vld [vmem:[#allocation2 + $0x220] sm:$0xff]
    %v4930 = vld [vmem:[#allocation2 + $0x240] sm:$0xff]
    %v4931 = vld [vmem:[#allocation2 + $0x260] sm:$0xff]
    %v4932 = vld [vmem:[#allocation2 + $0x280] sm:$0xff]
    %v4933 = vld [vmem:[#allocation2 + $0x2a0] sm:$0xff]
    %v4934 = vld [vmem:[#allocation2 + $0x2c0] sm:$0xff]
    %v4935 = vld [vmem:[#allocation2 + $0x2e0] sm:$0xff]
    %v4936 = vld [vmem:[#allocation2 + $0x300] sm:$0xff]
    %v4937 = vld [vmem:[#allocation2 + $0x320] sm:$0xff]
    %v4938 = vld [vmem:[#allocation2 + $0x340] sm:$0xff]
    %v4939 = vld [vmem:[#allocation2 + $0x360] sm:$0xff]
    %v4940 = vld [vmem:[#allocation2 + $0x380] sm:$0xff]
    %v4941 = vld [vmem:[#allocation2 + $0x3a0] sm:$0xff]
    %v4942 = vld [vmem:[#allocation2 + $0x3c0] sm:$0xff]
    %v4943 = vld [vmem:[#allocation2 + $0x3e0] sm:$0xff]
    %v4944 = vld [vmem:[#allocation2 + $0x400] sm:$0xff]
    %v4945 = vld [vmem:[#allocation2 + $0x420] sm:$0xff]
    %v4946 = vld [vmem:[#allocation2 + $0x440] sm:$0xff]
    %v4947 = vld [vmem:[#allocation2 + $0x460] sm:$0xff]
    %v4948 = vld [vmem:[#allocation2 + $0x480] sm:$0xff]
    %v4949 = vld [vmem:[#allocation2 + $0x4a0] sm:$0xff]
    %v4950 = vld [vmem:[#allocation2 + $0x4c0] sm:$0xff]
    %v4951 = vld [vmem:[#allocation2 + $0x4e0] sm:$0xff]
    %v4952 = vld [vmem:[#allocation2 + $0x500] sm:$0xff]
    %v4953 = vld [vmem:[#allocation2 + $0x520] sm:$0xff]
    %v4954 = vld [vmem:[#allocation2 + $0x540] sm:$0xff]
    %v4955 = vld [vmem:[#allocation2 + $0x560] sm:$0xff]
    %v4956 = vld [vmem:[#allocation2 + $0x580] sm:$0xff]
    %v4957 = vld [vmem:[#allocation2 + $0x5a0] sm:$0xff]
    %v4958 = vld [vmem:[#allocation2 + $0x5c0] sm:$0xff]
    %v4959 = vld [vmem:[#allocation2 + $0x5e0] sm:$0xff]
    %v4960 = vld [vmem:[#allocation2 + $0x600] sm:$0xff]
    %v4961 = vld [vmem:[#allocation2 + $0x620] sm:$0xff]
    %v4962 = vld [vmem:[#allocation2 + $0x640] sm:$0xff]
    %v4963 = vld [vmem:[#allocation2 + $0x660] sm:$0xff]
    %v4964 = vld [vmem:[#allocation2 + $0x680] sm:$0xff]
    %v4965 = vld [vmem:[#allocation2 + $0x6a0] sm:$0xff]
    %v4966 = vld [vmem:[#allocation2 + $0x6c0] sm:$0xff]
    %v4967 = vld [vmem:[#allocation2 + $0x6e0] sm:$0xff]
    %v4968 = vld [vmem:[#allocation2 + $0x700] sm:$0xff]
    %v4969 = vld [vmem:[#allocation2 + $0x720] sm:$0xff]
    %v4970 = vld [vmem:[#allocation2 + $0x740] sm:$0xff]
    %v4971 = vld [vmem:[#allocation2 + $0x760] sm:$0xff]
    %v4972 = vld [vmem:[#allocation2 + $0x780] sm:$0xff]
    %v4973 = vld [vmem:[#allocation2 + $0x7a0] sm:$0xff]
    %v4974 = vld [vmem:[#allocation2 + $0x7c0] sm:$0xff]
    %v4975 = vld [vmem:[#allocation2 + $0x7e0] sm:$0xff]
    %v4976 = vld [vmem:[#allocation2 + $0x800] sm:$0xff]
    %v4977 = vld [vmem:[#allocation2 + $0x820] sm:$0xff]
    %v4978 = vld [vmem:[#allocation2 + $0x840] sm:$0xff]
    %v4979 = vld [vmem:[#allocation2 + $0x860] sm:$0xff]
    %v4980 = vld [vmem:[#allocation2 + $0x880] sm:$0xff]
    %v4981 = vld [vmem:[#allocation2 + $0x8a0] sm:$0xff]
    %v4982 = vld [vmem:[#allocation2 + $0x8c0] sm:$0xff]
    %v4983 = vld [vmem:[#allocation2 + $0x8e0] sm:$0xff]
    %v4984 = vld [vmem:[#allocation3 + $0x7e0] sm:$0xff]
    %v4985 = vld [vmem:[#allocation3 + $0x800] sm:$0xff]
    %v4986 = vld [vmem:[#allocation3 + $0x820] sm:$0xff]
    %v4987 = vld [vmem:[#allocation3 + $0x840] sm:$0xff]
    %v4988 = vld [vmem:[#allocation3 + $0x860] sm:$0xff]
    %v4989 = vld [vmem:[#allocation3 + $0x880] sm:$0xff]
    %v4990 = vld [vmem:[#allocation3 + $0x8a0] sm:$0xff]
    %v4991 = vld [vmem:[#allocation3 + $0x8c0] sm:$0xff]
    %v4992 = vld [vmem:[#allocation3 + $0x8e0] sm:$0xff]
    %v4993 = vld [vmem:[#allocation3 + $0x900] sm:$0xff]
    %v4994 = vld [vmem:[#allocation3 + $0x920] sm:$0xff]
    %v4995 = vld [vmem:[#allocation3 + $0x940] sm:$0xff]
    %v4996 = vld [vmem:[#allocation3 + $0x960] sm:$0xff]
    %v4997 = vld [vmem:[#allocation3 + $0x980] sm:$0xff]
    %v4998 = vld [vmem:[#allocation3 + $0x9a0] sm:$0xff]
    %v4999 = vld [vmem:[#allocation3 + $0x9c0] sm:$0xff]
    %v5000 = vld [vmem:[#allocation3 + $0x9e0] sm:$0xff]
    %v5001 = vld [vmem:[#allocation3 + $0xa00] sm:$0xff]
    %v5002 = vld [vmem:[#allocation3 + $0xa20] sm:$0xff]
    %v5003 = vld [vmem:[#allocation3 + $0xa40] sm:$0xff]
    %v5004 = vld [vmem:[#allocation3 + $0xa60] sm:$0xff]
    %v5005 = vld [vmem:[#allocation3 + $0xa80] sm:$0xff]
    %v5006 = vld [vmem:[#allocation3 + $0xaa0] sm:$0xff]
    %v5007 = vld [vmem:[#allocation3 + $0xac0] sm:$0xff]
    %v5008 = vld [vmem:[#allocation3 + $0xae0] sm:$0xff]
    %v5009 = vld [vmem:[#allocation3 + $0xb00] sm:$0xff]
    %v5010 = vld [vmem:[#allocation3 + $0xb20] sm:$0xff]
    %v5011 = vld [vmem:[#allocation3 + $0xb40] sm:$0xff]
    %v5012 = vld [vmem:[#allocation3 + $0xb60] sm:$0xff]
    %v5013 = vld [vmem:[#allocation3 + $0xb80] sm:$0xff]
    %v5014 = vld [vmem:[#allocation3 + $0xba0] sm:$0xff]
    %v5015 = vld [vmem:[#allocation3 + $0xbc0] sm:$0xff]
    %v5016 = vld [vmem:[#allocation3 + $0xbe0] sm:$0xff]
    %v5017 = vld [vmem:[#allocation3 + $0xc00] sm:$0xff]
    %v5018 = vld [vmem:[#allocation3 + $0xc20] sm:$0xff]
    %v5019 = vld [vmem:[#allocation3 + $0xc40] sm:$0xff]
    %v5020 = vld [vmem:[#allocation3 + $0xc60] sm:$0xff]
    %v5021 = vld [vmem:[#allocation3 + $0xc80] sm:$0xff]
    %v5022 = vld [vmem:[#allocation3 + $0xca0] sm:$0xff]
    %v5023 = vld [vmem:[#allocation3 + $0xcc0] sm:$0xff]
    %v5024 = vld [vmem:[#allocation3 + $0xce0] sm:$0xff]
    %v5025 = vld [vmem:[#allocation3 + $0xd00] sm:$0xff]
    %v5026 = vld [vmem:[#allocation3 + $0xd20] sm:$0xff]
    %v5027 = vld [vmem:[#allocation3 + $0xd40] sm:$0xff]
    %v5028 = vld [vmem:[#allocation3 + $0xd60] sm:$0xff]
    %v5029 = vld [vmem:[#allocation3 + $0xd80] sm:$0xff]
    %v5030 = vld [vmem:[#allocation3 + $0xda0] sm:$0xff]
    %v5031 = vld [vmem:[#allocation3 + $0xdc0] sm:$0xff]
    %v5032 = vld [vmem:[#allocation3 + $0xde0] sm:$0xff]
    %v5033 = vld [vmem:[#allocation3 + $0xe00] sm:$0xff]
    %v5034 = vld [vmem:[#allocation3 + $0xe20] sm:$0xff]
    %v5035 = vld [vmem:[#allocation3 + $0xe40] sm:$0xff]
    %v5036 = vld [vmem:[#allocation3 + $0xe60] sm:$0xff]
    %v5037 = vld [vmem:[#allocation3 + $0xe80] sm:$0xff]
    %v5038 = vld [vmem:[#allocation3 + $0xea0] sm:$0xff]
    %v5039 = vld [vmem:[#allocation3 + $0xec0] sm:$0xff]
    %v5040 = vld [vmem:[#allocation3 + $0xee0] sm:$0xff]
    %v5041 = vld [vmem:[#allocation3 + $0xf00] sm:$0xff]
    %v5042 = vld [vmem:[#allocation3 + $0xf20] sm:$0xff]
    %v5043 = vld [vmem:[#allocation3 + $0xf40] sm:$0xff]
    %v5044 = vld [vmem:[#allocation3 + $0xf60] sm:$0xff]
    %v5045 = vld [vmem:[#allocation3 + $0xf80] sm:$0xff]
    %v5046 = vld [vmem:[#allocation3 + $0xfa0] sm:$0xff]
    %v5047 = vld [vmem:[#allocation3 + $0xfc0] sm:$0xff]
    %v5048 = vld [vmem:[#allocation3 + $0xfe0] sm:$0xff]
    %v5049 = vld [vmem:[#allocation3 + $0x1000] sm:$0xff]
    %v5050 = vld [vmem:[#allocation3 + $0x1020] sm:$0xff]
    %v5051 = vld [vmem:[#allocation3 + $0x1040] sm:$0xff]
    %v5052 = vld [vmem:[#allocation3 + $0x1060] sm:$0xff]
    %v5053 = vld [vmem:[#allocation3 + $0x1080] sm:$0xff]
    %v5054 = vld [vmem:[#allocation3 + $0x10a0] sm:$0xff]
    %v5055 = vld [vmem:[#allocation3 + $0x10c0] sm:$0xff]
    %v5056 = vmul.f32 %v4912, %v4984
    %v5057 = vmul.f32 %v4913, %v4985
    %v5058 = vmul.f32 %v4914, %v4986
    %v5059 = vmul.f32 %v4915, %v4987
    %v5060 = vmul.f32 %v4916, %v4988
    %v5061 = vmul.f32 %v4917, %v4989
    %v5062 = vmul.f32 %v4918, %v4990
    %v5063 = vmul.f32 %v4919, %v4991
    %v5064 = vmul.f32 %v4920, %v4992
    %v5065 = vmul.f32 %v4921, %v4993
    %v5066 = vmul.f32 %v4922, %v4994
    %v5067 = vmul.f32 %v4923, %v4995
    %v5068 = vmul.f32 %v4924, %v4996
    %v5069 = vmul.f32 %v4925, %v4997
    %v5070 = vmul.f32 %v4926, %v4998
    %v5071 = vmul.f32 %v4927, %v4999
    %v5072 = vmul.f32 %v4928, %v5000
    %v5073 = vmul.f32 %v4929, %v5001
    %v5074 = vmul.f32 %v4930, %v5002
    %v5075 = vmul.f32 %v4931, %v5003
    %v5076 = vmul.f32 %v4932, %v5004
    %v5077 = vmul.f32 %v4933, %v5005
    %v5078 = vmul.f32 %v4934, %v5006
    %v5079 = vmul.f32 %v4935, %v5007
    %v5080 = vmul.f32 %v4936, %v5008
    %v5081 = vmul.f32 %v4937, %v5009
    %v5082 = vmul.f32 %v4938, %v5010
    %v5083 = vmul.f32 %v4939, %v5011
    %v5084 = vmul.f32 %v4940, %v5012
    %v5085 = vmul.f32 %v4941, %v5013
    %v5086 = vmul.f32 %v4942, %v5014
    %v5087 = vmul.f32 %v4943, %v5015
    %v5088 = vmul.f32 %v4944, %v5016
    %v5089 = vmul.f32 %v4945, %v5017
    %v5090 = vmul.f32 %v4946, %v5018
    %v5091 = vmul.f32 %v4947, %v5019
    %v5092 = vmul.f32 %v4948, %v5020
    %v5093 = vmul.f32 %v4949, %v5021
    %v5094 = vmul.f32 %v4950, %v5022
    %v5095 = vmul.f32 %v4951, %v5023
    %v5096 = vmul.f32 %v4952, %v5024
    %v5097 = vmul.f32 %v4953, %v5025
    %v5098 = vmul.f32 %v4954, %v5026
    %v5099 = vmul.f32 %v4955, %v5027
    %v5100 = vmul.f32 %v4956, %v5028
    %v5101 = vmul.f32 %v4957, %v5029
    %v5102 = vmul.f32 %v4958, %v5030
    %v5103 = vmul.f32 %v4959, %v5031
    %v5104 = vmul.f32 %v4960, %v5032
    %v5105 = vmul.f32 %v4961, %v5033
    %v5106 = vmul.f32 %v4962, %v5034
    %v5107 = vmul.f32 %v4963, %v5035
    %v5108 = vmul.f32 %v4964, %v5036
    %v5109 = vmul.f32 %v4965, %v5037
    %v5110 = vmul.f32 %v4966, %v5038
    %v5111 = vmul.f32 %v4967, %v5039
    %v5112 = vmul.f32 %v4968, %v5040
    %v5113 = vmul.f32 %v4969, %v5041
    %v5114 = vmul.f32 %v4970, %v5042
    %v5115 = vmul.f32 %v4971, %v5043
    %v5116 = vmul.f32 %v4972, %v5044
    %v5117 = vmul.f32 %v4973, %v5045
    %v5118 = vmul.f32 %v4974, %v5046
    %v5119 = vmul.f32 %v4975, %v5047
    %v5120 = vmul.f32 %v4976, %v5048
    %v5121 = vmul.f32 %v4977, %v5049
    %v5122 = vmul.f32 %v4978, %v5050
    %v5123 = vmul.f32 %v4979, %v5051
    %v5124 = vmul.f32 %v4980, %v5052
    %v5125 = vmul.f32 %v4981, %v5053
    %v5126 = vmul.f32 %v4982, %v5054
    %v5127 = vmul.f32 %v4983, %v5055
    %v5128 = vpack.c.bf16 %v5057, %v5056
    %v5129 = vpack.c.bf16 %v5059, %v5058
    %v5130 = vpack.c.bf16 %v5061, %v5060
    %v5131 = vpack.c.bf16 %v5063, %v5062
    %v5132 = vpack.c.bf16 %v5065, %v5064
    %v5133 = vpack.c.bf16 %v5067, %v5066
    %v5134 = vpack.c.bf16 %v5069, %v5068
    %v5135 = vpack.c.bf16 %v5071, %v5070
    %v5136 = vpack.c.bf16 %v5073, %v5072
    %v5137 = vpack.c.bf16 %v5075, %v5074
    %v5138 = vpack.c.bf16 %v5077, %v5076
    %v5139 = vpack.c.bf16 %v5079, %v5078
    %v5140 = vpack.c.bf16 %v5081, %v5080
    %v5141 = vpack.c.bf16 %v5083, %v5082
    %v5142 = vpack.c.bf16 %v5085, %v5084
    %v5143 = vpack.c.bf16 %v5087, %v5086
    %v5144 = vpack.c.bf16 %v5089, %v5088
    %v5145 = vpack.c.bf16 %v5091, %v5090
    %v5146 = vpack.c.bf16 %v5093, %v5092
    %v5147 = vpack.c.bf16 %v5095, %v5094
    %v5148 = vpack.c.bf16 %v5097, %v5096
    %v5149 = vpack.c.bf16 %v5099, %v5098
    %v5150 = vpack.c.bf16 %v5101, %v5100
    %v5151 = vpack.c.bf16 %v5103, %v5102
    %v5152 = vpack.c.bf16 %v5105, %v5104
    %v5153 = vpack.c.bf16 %v5107, %v5106
    %v5154 = vpack.c.bf16 %v5109, %v5108
    %v5155 = vpack.c.bf16 %v5111, %v5110
    %v5156 = vpack.c.bf16 %v5113, %v5112
    %v5157 = vpack.c.bf16 %v5115, %v5114
    %v5158 = vpack.c.bf16 %v5117, %v5116
    %v5159 = vpack.c.bf16 %v5119, %v5118
    %v5160 = vpack.c.bf16 %v5121, %v5120
    %v5161 = vpack.c.bf16 %v5123, %v5122
    %v5162 = vpack.c.bf16 %v5125, %v5124
    %v5163 = vpack.c.bf16 %v5127, %v5126
    %v5164 = vld [vmem:[%s3 + $0x244] sm:$0xff]
    %v5165 = vld [vmem:[%s3 + $0x24c] sm:$0xff]
    %v5166 = vld [vmem:[%s3 + $0x254] sm:$0xf]
    %v5167 = vld [vmem:[%s3 + $0x258] sm:$0xff]
    %v5168 = vld [vmem:[%s3 + $0x260] sm:$0xff]
    %v5169 = vld [vmem:[%s3 + $0x268] sm:$0xf]
    %v5170 = vld [vmem:[%s3 + $0x26c] sm:$0xff]
    %v5171 = vld [vmem:[%s3 + $0x274] sm:$0xff]
    %v5172 = vld [vmem:[%s3 + $0x27c] sm:$0xf]
    %v5173 = vld [vmem:[%s3 + $0x280] sm:$0xff]
    %v5174 = vld [vmem:[%s3 + $0x288] sm:$0xff]
    %v5175 = vld [vmem:[%s3 + $0x290] sm:$0xf]
    %v5176 = vld [vmem:[%s3 + $0x294] sm:$0xff]
    %v5177 = vld [vmem:[%s3 + $0x29c] sm:$0xff]
    %v5178 = vld [vmem:[%s3 + $0x2a4] sm:$0xf]
    %v5179 = vld [vmem:[%s3 + $0x2a8] sm:$0xff]
    %v5180 = vld [vmem:[%s3 + $0x2b0] sm:$0xff]
    %v5181 = vld [vmem:[%s3 + $0x2b8] sm:$0xf]
    %v5182 = vld [vmem:[%s3 + $0x2bc] sm:$0xff]
    %v5183 = vld [vmem:[%s3 + $0x2c4] sm:$0xff]
    %v5184 = vld [vmem:[%s3 + $0x2cc] sm:$0xf]
    %v5185 = vld [vmem:[%s3 + $0x2d0] sm:$0xff]
    %v5186 = vld [vmem:[%s3 + $0x2d8] sm:$0xff]
    %v5187 = vld [vmem:[%s3 + $0x2e0] sm:$0xf]
    %v5212 = vunpack.c.l.b16 %v5164
    %v5213 = vunpack.c.h.b16 %v5164
    %v5214 = vunpack.c.l.b16 %v5165
    %v5215 = vunpack.c.h.b16 %v5165
    %v5216 = vunpack.c.l.b16 %v5166
    %v5217 = vunpack.c.l.b16 %v5167
    %v5218 = vunpack.c.h.b16 %v5167
    %v5219 = vunpack.c.l.b16 %v5168
    %v5220 = vunpack.c.h.b16 %v5168
    %v5221 = vunpack.c.l.b16 %v5169
    %v5222 = vunpack.c.l.b16 %v5170
    %v5223 = vunpack.c.h.b16 %v5170
    %v5224 = vunpack.c.l.b16 %v5171
    %v5225 = vunpack.c.h.b16 %v5171
    %v5226 = vunpack.c.l.b16 %v5172
    %v5227 = vunpack.c.l.b16 %v5173
    %v5228 = vunpack.c.h.b16 %v5173
    %v5229 = vunpack.c.l.b16 %v5174
    %v5230 = vunpack.c.h.b16 %v5174
    %v5231 = vunpack.c.l.b16 %v5175
    %v5232 = vunpack.c.l.b16 %v5176
    %v5233 = vunpack.c.h.b16 %v5176
    %v5234 = vunpack.c.l.b16 %v5177
    %v5235 = vunpack.c.h.b16 %v5177
    %v5236 = vunpack.c.l.b16 %v5178
    %v5237 = vunpack.c.l.b16 %v5179
    %v5238 = vunpack.c.h.b16 %v5179
    %v5239 = vunpack.c.l.b16 %v5180
    %v5240 = vunpack.c.h.b16 %v5180
    %v5241 = vunpack.c.l.b16 %v5181
    %v5242 = vunpack.c.l.b16 %v5182
    %v5243 = vunpack.c.h.b16 %v5182
    %v5244 = vunpack.c.l.b16 %v5183
    %v5245 = vunpack.c.h.b16 %v5183
    %v5246 = vunpack.c.l.b16 %v5184
    %v5247 = vunpack.c.l.b16 %v5185
    %v5248 = vunpack.c.h.b16 %v5185
    %v5249 = vunpack.c.l.b16 %v5186
    %v5250 = vunpack.c.h.b16 %v5186
    %v5251 = vunpack.c.l.b16 %v5187
    %v5252 = vpack.c.b16 %v5217, %v5212
    %v5253 = vpack.c.b16 %v5218, %v5213
    %v5254 = vpack.c.b16 %v5219, %v5214
    %v5255 = vpack.c.b16 %v5220, %v5215
    %v5256 = vpack.c.b16 %v5221, %v5216
    %v5257 = vpack.c.b16 %v5227, %v5222
    %v5258 = vpack.c.b16 %v5228, %v5223
    %v5259 = vpack.c.b16 %v5229, %v5224
    %v5260 = vpack.c.b16 %v5230, %v5225
    %v5261 = vpack.c.b16 %v5231, %v5226
    %v5262 = vpack.c.b16 %v5237, %v5232
    %v5263 = vpack.c.b16 %v5238, %v5233
    %v5264 = vpack.c.b16 %v5239, %v5234
    %v5265 = vpack.c.b16 %v5240, %v5235
    %v5266 = vpack.c.b16 %v5241, %v5236
    %v5267 = vpack.c.b16 %v5247, %v5242
    %v5268 = vpack.c.b16 %v5248, %v5243
    %v5269 = vpack.c.b16 %v5249, %v5244
    %v5270 = vpack.c.b16 %v5250, %v5245
    %v5271 = vpack.c.b16 %v5251, %v5246
    %vm5288 = vcmask 523264
    %v5290 = vsel %vm5288, %v5256, 0
    %v5293 = vsel %vm5288, %v5261, 0
    %v5296 = vsel %vm5288, %v5266, 0
    %v5299 = vsel %vm5288, %v5271, 0
    %5301 = vmatpush.bf16.msra.mxu0 %v5135
    %5302 = vmatpush.bf16.msra.mxu0 %v5134
    %5303 = vmatpush.bf16.msra.mxu0 %v5133
    %5304 = vmatpush.bf16.msra.mxu0 %v5132
    %5305 = vmatpush.bf16.msra.mxu0 %v5131
    %5306 = vmatpush.bf16.msra.mxu0 %v5130
    %5307 = vmatpush.bf16.msra.mxu0 %v5129
    %5308 = vmatpush.bf16.msra.mxu0 %v5128
    %5309 = vmatmul.bf16.gmra.mxu0 %v5252
    %v5310 = vpop.f32.mrf.mxu0
    %v5311 = vadd.f32 0.0, %v5310
    %v5312 = vpop.f32.mrf.mxu0
    %v5313 = vadd.f32 0.0, %v5312
    %5314 = vmatmul.bf16.gmra.mxu0 %v5257
    %v5315 = vpop.f32.mrf.mxu0
    %v5316 = vadd.f32 0.0, %v5315
    %v5317 = vpop.f32.mrf.mxu0
    %v5318 = vadd.f32 0.0, %v5317
    %5319 = vmatmul.bf16.gmra.mxu0 %v5262
    %v5320 = vpop.f32.mrf.mxu0
    %v5321 = vadd.f32 0.0, %v5320
    %v5322 = vpop.f32.mrf.mxu0
    %v5323 = vadd.f32 0.0, %v5322
    %5324 = vmatmul.bf16.gmra.mxu0 %v5267
    %v5325 = vpop.f32.mrf.mxu0
    %v5326 = vadd.f32 0.0, %v5325
    %v5327 = vpop.f32.mrf.mxu0
    %v5328 = vadd.f32 0.0, %v5327
    %5329 = vdwg.mxu0
    %5330 = vmatpush.bf16.msra.mxu0 %v5143
    %5331 = vmatpush.bf16.msra.mxu0 %v5142
    %5332 = vmatpush.bf16.msra.mxu0 %v5141
    %5333 = vmatpush.bf16.msra.mxu0 %v5140
    %5334 = vmatpush.bf16.msra.mxu0 %v5139
    %5335 = vmatpush.bf16.msra.mxu0 %v5138
    %5336 = vmatpush.bf16.msra.mxu0 %v5137
    %5337 = vmatpush.bf16.msra.mxu0 %v5136
    %5338 = vmatmul.bf16.gmra.mxu0 %v5253
    %v5339 = vpop.f32.mrf.mxu0
    %v5340 = vadd.f32 %v5311, %v5339
    %v5341 = vpop.f32.mrf.mxu0
    %v5342 = vadd.f32 %v5313, %v5341
    %5343 = vmatmul.bf16.gmra.mxu0 %v5258
    %v5344 = vpop.f32.mrf.mxu0
    %v5345 = vadd.f32 %v5316, %v5344
    %v5346 = vpop.f32.mrf.mxu0
    %v5347 = vadd.f32 %v5318, %v5346
    %5348 = vmatmul.bf16.gmra.mxu0 %v5263
    %v5349 = vpop.f32.mrf.mxu0
    %v5350 = vadd.f32 %v5321, %v5349
    %v5351 = vpop.f32.mrf.mxu0
    %v5352 = vadd.f32 %v5323, %v5351
    %5353 = vmatmul.bf16.gmra.mxu0 %v5268
    %v5354 = vpop.f32.mrf.mxu0
    %v5355 = vadd.f32 %v5326, %v5354
    %v5356 = vpop.f32.mrf.mxu0
    %v5357 = vadd.f32 %v5328, %v5356
    %5358 = vdwg.mxu0
    %5359 = vmatpush.bf16.msra.mxu0 %v5151
    %5360 = vmatpush.bf16.msra.mxu0 %v5150
    %5361 = vmatpush.bf16.msra.mxu0 %v5149
    %5362 = vmatpush.bf16.msra.mxu0 %v5148
    %5363 = vmatpush.bf16.msra.mxu0 %v5147
    %5364 = vmatpush.bf16.msra.mxu0 %v5146
    %5365 = vmatpush.bf16.msra.mxu0 %v5145
    %5366 = vmatpush.bf16.msra.mxu0 %v5144
    %5367 = vmatmul.bf16.gmra.mxu0 %v5254
    %v5368 = vpop.f32.mrf.mxu0
    %v5369 = vadd.f32 %v5340, %v5368
    %v5370 = vpop.f32.mrf.mxu0
    %v5371 = vadd.f32 %v5342, %v5370
    %5372 = vmatmul.bf16.gmra.mxu0 %v5259
    %v5373 = vpop.f32.mrf.mxu0
    %v5374 = vadd.f32 %v5345, %v5373
    %v5375 = vpop.f32.mrf.mxu0
    %v5376 = vadd.f32 %v5347, %v5375
    %5377 = vmatmul.bf16.gmra.mxu0 %v5264
    %v5378 = vpop.f32.mrf.mxu0
    %v5379 = vadd.f32 %v5350, %v5378
    %v5380 = vpop.f32.mrf.mxu0
    %v5381 = vadd.f32 %v5352, %v5380
    %5382 = vmatmul.bf16.gmra.mxu0 %v5269
    %v5383 = vpop.f32.mrf.mxu0
    %v5384 = vadd.f32 %v5355, %v5383
    %v5385 = vpop.f32.mrf.mxu0
    %v5386 = vadd.f32 %v5357, %v5385
    %5387 = vdwg.mxu0
    %5388 = vmatpush.bf16.msra.mxu0 %v5159
    %5389 = vmatpush.bf16.msra.mxu0 %v5158
    %5390 = vmatpush.bf16.msra.mxu0 %v5157
    %5391 = vmatpush.bf16.msra.mxu0 %v5156
    %5392 = vmatpush.bf16.msra.mxu0 %v5155
    %5393 = vmatpush.bf16.msra.mxu0 %v5154
    %5394 = vmatpush.bf16.msra.mxu0 %v5153
    %5395 = vmatpush.bf16.msra.mxu0 %v5152
    %5396 = vmatmul.bf16.gmra.mxu0 %v5255
    %v5397 = vpop.f32.mrf.mxu0
    %v5398 = vadd.f32 %v5369, %v5397
    %v5399 = vpop.f32.mrf.mxu0
    %v5400 = vadd.f32 %v5371, %v5399
    %5401 = vmatmul.bf16.gmra.mxu0 %v5260
    %v5402 = vpop.f32.mrf.mxu0
    %v5403 = vadd.f32 %v5374, %v5402
    %v5404 = vpop.f32.mrf.mxu0
    %v5405 = vadd.f32 %v5376, %v5404
    %5406 = vmatmul.bf16.gmra.mxu0 %v5265
    %v5407 = vpop.f32.mrf.mxu0
    %v5408 = vadd.f32 %v5379, %v5407
    %v5409 = vpop.f32.mrf.mxu0
    %v5410 = vadd.f32 %v5381, %v5409
    %5411 = vmatmul.bf16.gmra.mxu0 %v5270
    %v5412 = vpop.f32.mrf.mxu0
    %v5413 = vadd.f32 %v5384, %v5412
    %v5414 = vpop.f32.mrf.mxu0
    %v5415 = vadd.f32 %v5386, %v5414
    %5416 = vdwg.mxu0
    %5417 = vmatpush.bf16.msra.mxu0 0
    %5418 = vmatpush.bf16.msra.mxu0 0
    %5419 = vmatpush.bf16.msra.mxu0 0
    %5420 = vmatpush.bf16.msra.mxu0 0
    %5421 = vmatpush.bf16.msra.mxu0 %v5163
    %5422 = vmatpush.bf16.msra.mxu0 %v5162
    %5423 = vmatpush.bf16.msra.mxu0 %v5161
    %5424 = vmatpush.bf16.msra.mxu0 %v5160
    %5425 = vmatmul.bf16.gmra.mxu0 %v5290
    %v5426 = vpop.f32.mrf.mxu0
    %v5427 = vadd.f32 %v5398, %v5426
    %v5428 = vpop.f32.mrf.mxu0
    %v5429 = vadd.f32 %v5400, %v5428
    %5430 = vmatmul.bf16.gmra.mxu0 %v5293
    %v5431 = vpop.f32.mrf.mxu0
    %v5432 = vadd.f32 %v5403, %v5431
    %v5433 = vpop.f32.mrf.mxu0
    %v5434 = vadd.f32 %v5405, %v5433
    %5435 = vmatmul.bf16.gmra.mxu0 %v5296
    %v5436 = vpop.f32.mrf.mxu0
    %v5437 = vadd.f32 %v5408, %v5436
    %v5438 = vpop.f32.mrf.mxu0
    %v5439 = vadd.f32 %v5410, %v5438
    %5440 = vmatmul.bf16.gmra.mxu0 %v5299
    %v5441 = vpop.f32.mrf.mxu0
    %v5442 = vadd.f32 %v5413, %v5441
    %v5443 = vpop.f32.mrf.mxu0
    %v5444 = vadd.f32 %v5415, %v5443
    %5445 = vdwg.mxu0
    %v5446 = vld [vmem:[%s4 + $0xe8] sm:$0xff]
    %v5447 = vld [vmem:[%s4 + $0xf0] sm:$0xff]
    %v5448 = vld [vmem:[%s4 + $0xf8] sm:$0xff]
    %v5449 = vld [vmem:[%s4 + $0x100] sm:$0xff]
    %v5450 = vld [vmem:[%s4 + $0x108] sm:$0xff]
    %v5451 = vld [vmem:[%s4 + $0x110] sm:$0xff]
    %v5452 = vld [vmem:[%s4 + $0x118] sm:$0xff]
    %v5453 = vld [vmem:[%s4 + $0x120] sm:$0xff]
    %v5454 = vsel %vm2232, %v5427, 0.0
    %5455 = vadd.xlane.f32.xlu0 %v5454
    %v5456 = vpop.xlane.xlu0 %5455
    %v5457 = vsel %vm2232, %v5429, 0.0
    %5458 = vadd.xlane.f32.xlu0 %v5457
    %v5459 = vpop.xlane.xlu0 %5458
    %v5460 = vsel %vm2232, %v5432, 0.0
    %5461 = vadd.xlane.f32.xlu0 %v5460
    %v5462 = vpop.xlane.xlu0 %5461
    %v5463 = vsel %vm2232, %v5434, 0.0
    %5464 = vadd.xlane.f32.xlu0 %v5463
    %v5465 = vpop.xlane.xlu0 %5464
    %v5466 = vsel %vm2232, %v5437, 0.0
    %5467 = vadd.xlane.f32.xlu0 %v5466
    %v5468 = vpop.xlane.xlu0 %5467
    %v5469 = vsel %vm2232, %v5439, 0.0
    %5470 = vadd.xlane.f32.xlu0 %v5469
    %v5471 = vpop.xlane.xlu0 %5470
    %v5472 = vsel %vm2232, %v5442, 0.0
    %5473 = vadd.xlane.f32.xlu0 %v5472
    %v5474 = vpop.xlane.xlu0 %5473
    %v5475 = vsel %vm2232, %v5444, 0.0
    %5476 = vadd.xlane.f32.xlu0 %v5475
    %v5477 = vpop.xlane.xlu0 %5476
    %v5478 = vmul.f32 %v5456, 0.125
    %v5479 = vmul.f32 %v5459, 0.125
    %v5480 = vmul.f32 %v5462, 0.125
    %v5481 = vmul.f32 %v5465, 0.125
    %v5482 = vmul.f32 %v5468, 0.125
    %v5483 = vmul.f32 %v5471, 0.125
    %v5484 = vmul.f32 %v5474, 0.125
    %v5485 = vmul.f32 %v5477, 0.125
    %v5486 = vsub.f32 %v5427, %v5478
    %v5487 = vsub.f32 %v5429, %v5479
    %v5488 = vsub.f32 %v5432, %v5480
    %v5489 = vsub.f32 %v5434, %v5481
    %v5490 = vsub.f32 %v5437, %v5482
    %v5491 = vsub.f32 %v5439, %v5483
    %v5492 = vsub.f32 %v5442, %v5484
    %v5493 = vsub.f32 %v5444, %v5485
    %v5494 = vmul.f32 %v5486, %v5486
    %v5495 = vmul.f32 %v5487, %v5487
    %v5496 = vmul.f32 %v5488, %v5488
    %v5497 = vmul.f32 %v5489, %v5489
    %v5498 = vmul.f32 %v5490, %v5490
    %v5499 = vmul.f32 %v5491, %v5491
    %v5500 = vmul.f32 %v5492, %v5492
    %v5501 = vmul.f32 %v5493, %v5493
    %v5502 = vsel %vm2232, %v5494, 0.0
    %5503 = vadd.xlane.f32.xlu0 %v5502
    %v5504 = vpop.xlane.xlu0 %5503
    %v5505 = vsel %vm2232, %v5495, 0.0
    %5506 = vadd.xlane.f32.xlu0 %v5505
    %v5507 = vpop.xlane.xlu0 %5506
    %v5508 = vsel %vm2232, %v5496, 0.0
    %5509 = vadd.xlane.f32.xlu0 %v5508
    %v5510 = vpop.xlane.xlu0 %5509
    %v5511 = vsel %vm2232, %v5497, 0.0
    %5512 = vadd.xlane.f32.xlu0 %v5511
    %v5513 = vpop.xlane.xlu0 %5512
    %v5514 = vsel %vm2232, %v5498, 0.0
    %5515 = vadd.xlane.f32.xlu0 %v5514
    %v5516 = vpop.xlane.xlu0 %5515
    %v5517 = vsel %vm2232, %v5499, 0.0
    %5518 = vadd.xlane.f32.xlu0 %v5517
    %v5519 = vpop.xlane.xlu0 %5518
    %v5520 = vsel %vm2232, %v5500, 0.0
    %5521 = vadd.xlane.f32.xlu0 %v5520
    %v5522 = vpop.xlane.xlu0 %5521
    %v5523 = vsel %vm2232, %v5501, 0.0
    %5524 = vadd.xlane.f32.xlu0 %v5523
    %v5525 = vpop.xlane.xlu0 %5524
    %v5526 = vmul.f32 %v5504, 0.125
    %v5527 = vmul.f32 %v5507, 0.125
    %v5528 = vmul.f32 %v5510, 0.125
    %v5529 = vmul.f32 %v5513, 0.125
    %v5530 = vmul.f32 %v5516, 0.125
    %v5531 = vmul.f32 %v5519, 0.125
    %v5532 = vmul.f32 %v5522, 0.125
    %v5533 = vmul.f32 %v5525, 0.125
    %v5534 = vadd.f32 %v5526, 1e-05
    %v5535 = vadd.f32 %v5527, 1e-05
    %v5536 = vadd.f32 %v5528, 1e-05
    %v5537 = vadd.f32 %v5529, 1e-05
    %v5538 = vadd.f32 %v5530, 1e-05
    %v5539 = vadd.f32 %v5531, 1e-05
    %v5540 = vadd.f32 %v5532, 1e-05
    %v5541 = vadd.f32 %v5533, 1e-05
    %v5542 = vrsqrt.pop %v5534
    %v5543 = vmul.f32 %v5542, %v5534
    %v5544 = vmul.f32 %v5543, %v5542
    %v5545 = vmul.f32 0.5, %v5544
    %v5546 = vsub.f32 1.5, %v5545
    %v5547 = vmul.f32 %v5542, %v5546
    %vm5548 = vweird.f32 %v5534
    %vm5549 = vweird.f32 %v5542
    %vm5550 = vmor %vm5548, %vm5549
    %v5551 = vsel %vm5550, %v5542, %v5547
    %v5552 = vrsqrt.pop %v5535
    %v5553 = vmul.f32 %v5552, %v5535
    %v5554 = vmul.f32 %v5553, %v5552
    %v5555 = vmul.f32 0.5, %v5554
    %v5556 = vsub.f32 1.5, %v5555
    %v5557 = vmul.f32 %v5552, %v5556
    %vm5558 = vweird.f32 %v5535
    %vm5559 = vweird.f32 %v5552
    %vm5560 = vmor %vm5558, %vm5559
    %v5561 = vsel %vm5560, %v5552, %v5557
    %v5562 = vrsqrt.pop %v5536
    %v5563 = vmul.f32 %v5562, %v5536
    %v5564 = vmul.f32 %v5563, %v5562
    %v5565 = vmul.f32 0.5, %v5564
    %v5566 = vsub.f32 1.5, %v5565
    %v5567 = vmul.f32 %v5562, %v5566
    %vm5568 = vweird.f32 %v5536
    %vm5569 = vweird.f32 %v5562
    %vm5570 = vmor %vm5568, %vm5569
    %v5571 = vsel %vm5570, %v5562, %v5567
    %v5572 = vrsqrt.pop %v5537
    %v5573 = vmul.f32 %v5572, %v5537
    %v5574 = vmul.f32 %v5573, %v5572
    %v5575 = vmul.f32 0.5, %v5574
    %v5576 = vsub.f32 1.5, %v5575
    %v5577 = vmul.f32 %v5572, %v5576
    %vm5578 = vweird.f32 %v5537
    %vm5579 = vweird.f32 %v5572
    %vm5580 = vmor %vm5578, %vm5579
    %v5581 = vsel %vm5580, %v5572, %v5577
    %v5582 = vrsqrt.pop %v5538
    %v5583 = vmul.f32 %v5582, %v5538
    %v5584 = vmul.f32 %v5583, %v5582
    %v5585 = vmul.f32 0.5, %v5584
    %v5586 = vsub.f32 1.5, %v5585
    %v5587 = vmul.f32 %v5582, %v5586
    %vm5588 = vweird.f32 %v5538
    %vm5589 = vweird.f32 %v5582
    %vm5590 = vmor %vm5588, %vm5589
    %v5591 = vsel %vm5590, %v5582, %v5587
    %v5592 = vrsqrt.pop %v5539
    %v5593 = vmul.f32 %v5592, %v5539
    %v5594 = vmul.f32 %v5593, %v5592
    %v5595 = vmul.f32 0.5, %v5594
    %v5596 = vsub.f32 1.5, %v5595
    %v5597 = vmul.f32 %v5592, %v5596
    %vm5598 = vweird.f32 %v5539
    %vm5599 = vweird.f32 %v5592
    %vm5600 = vmor %vm5598, %vm5599
    %v5601 = vsel %vm5600, %v5592, %v5597
    %v5602 = vrsqrt.pop %v5540
    %v5603 = vmul.f32 %v5602, %v5540
    %v5604 = vmul.f32 %v5603, %v5602
    %v5605 = vmul.f32 0.5, %v5604
    %v5606 = vsub.f32 1.5, %v5605
    %v5607 = vmul.f32 %v5602, %v5606
    %vm5608 = vweird.f32 %v5540
    %vm5609 = vweird.f32 %v5602
    %vm5610 = vmor %vm5608, %vm5609
    %v5611 = vsel %vm5610, %v5602, %v5607
    %v5612 = vrsqrt.pop %v5541
    %v5613 = vmul.f32 %v5612, %v5541
    %v5614 = vmul.f32 %v5613, %v5612
    %v5615 = vmul.f32 0.5, %v5614
    %v5616 = vsub.f32 1.5, %v5615
    %v5617 = vmul.f32 %v5612, %v5616
    %vm5618 = vweird.f32 %v5541
    %vm5619 = vweird.f32 %v5612
    %vm5620 = vmor %vm5618, %vm5619
    %v5621 = vsel %vm5620, %v5612, %v5617
    %v5622 = vmul.f32 %v5551, %v5446
    %v5623 = vmul.f32 %v5561, %v5447
    %v5624 = vmul.f32 %v5571, %v5448
    %v5625 = vmul.f32 %v5581, %v5449
    %v5626 = vmul.f32 %v5591, %v5450
    %v5627 = vmul.f32 %v5601, %v5451
    %v5628 = vmul.f32 %v5611, %v5452
    %v5629 = vmul.f32 %v5621, %v5453
    %5631 = vset.pattern.permute.xlu0 0
    %5632 = vperm.xlu0 %5631, %v5622
    %v5633 = vpop.permute.xlu0 %5632
    %5636 = vset.pattern.permute.xlu0 0
    %5637 = vperm.xlu0 %5636, %v5623
    %v5638 = vpop.permute.xlu0 %5637
    %5641 = vset.pattern.permute.xlu0 0
    %5642 = vperm.xlu0 %5641, %v5624
    %v5643 = vpop.permute.xlu0 %5642
    %5646 = vset.pattern.permute.xlu0 0
    %5647 = vperm.xlu0 %5646, %v5625
    %v5648 = vpop.permute.xlu0 %5647
    %5651 = vset.pattern.permute.xlu0 0
    %5652 = vperm.xlu0 %5651, %v5626
    %v5653 = vpop.permute.xlu0 %5652
    %5656 = vset.pattern.permute.xlu0 0
    %5657 = vperm.xlu0 %5656, %v5627
    %v5658 = vpop.permute.xlu0 %5657
    %5661 = vset.pattern.permute.xlu0 0
    %5662 = vperm.xlu0 %5661, %v5628
    %v5663 = vpop.permute.xlu0 %5662
    %5666 = vset.pattern.permute.xlu0 0
    %5667 = vperm.xlu0 %5666, %v5629
    %v5668 = vpop.permute.xlu0 %5667
    %v5670 = vmul.f32 %v5486, %v5633
    %v5671 = vmul.f32 %v5487, %v5638
    %v5672 = vmul.f32 %v5488, %v5643
    %v5673 = vmul.f32 %v5489, %v5648
    %v5674 = vmul.f32 %v5490, %v5653
    %v5675 = vmul.f32 %v5491, %v5658
    %v5676 = vmul.f32 %v5492, %v5663
    %v5677 = vmul.f32 %v5493, %v5668
    %5679 = vset.pattern.permute.xlu0 1
    %5680 = vperm.xlu0 %5679, %v5446
    %v5681 = vpop.permute.xlu0 %5680
    %5684 = vset.pattern.permute.xlu0 1
    %5685 = vperm.xlu0 %5684, %v5447
    %v5686 = vpop.permute.xlu0 %5685
    %5689 = vset.pattern.permute.xlu0 1
    %5690 = vperm.xlu0 %5689, %v5448
    %v5691 = vpop.permute.xlu0 %5690
    %5694 = vset.pattern.permute.xlu0 1
    %5695 = vperm.xlu0 %5694, %v5449
    %v5696 = vpop.permute.xlu0 %5695
    %5699 = vset.pattern.permute.xlu0 1
    %5700 = vperm.xlu0 %5699, %v5450
    %v5701 = vpop.permute.xlu0 %5700
    %5704 = vset.pattern.permute.xlu0 1
    %5705 = vperm.xlu0 %5704, %v5451
    %v5706 = vpop.permute.xlu0 %5705
    %5709 = vset.pattern.permute.xlu0 1
    %5710 = vperm.xlu0 %5709, %v5452
    %v5711 = vpop.permute.xlu0 %5710
    %5714 = vset.pattern.permute.xlu0 1
    %5715 = vperm.xlu0 %5714, %v5453
    %v5716 = vpop.permute.xlu0 %5715
    %v5718 = vadd.f32 %v5670, %v5681
    %v5719 = vadd.f32 %v5671, %v5686
    %v5720 = vadd.f32 %v5672, %v5691
    %v5721 = vadd.f32 %v5673, %v5696
    %v5722 = vadd.f32 %v5674, %v5701
    %v5723 = vadd.f32 %v5675, %v5706
    %v5724 = vadd.f32 %v5676, %v5711
    %v5725 = vadd.f32 %v5677, %v5716
    %v5726 = vld [vmem:[%s3 + $0x2e4] sm:$0xf]
    %v5727 = vld [vmem:[%s3 + $0x2f8] sm:$0xf]
    %v5728 = vld [vmem:[%s3 + $0x30c] sm:$0xf]
    %v5729 = vld [vmem:[%s3 + $0x320] sm:$0xf]
    %v5730 = vld [vmem:[%s3 + $0x334] sm:$0xf]
    %v5731 = vld [vmem:[%s3 + $0x348] sm:$0xf]
    %v5732 = vld [vmem:[%s3 + $0x35c] sm:$0xf]
    %v5733 = vld [vmem:[%s3 + $0x370] sm:$0xf]
    %v5742 = vunpack.c.l.b16 %v5726
    %v5743 = vunpack.c.l.b16 %v5727
    %v5744 = vunpack.c.l.b16 %v5728
    %v5745 = vunpack.c.l.b16 %v5729
    %v5746 = vunpack.c.l.b16 %v5730
    %v5747 = vunpack.c.l.b16 %v5731
    %v5748 = vunpack.c.l.b16 %v5732
    %v5749 = vunpack.c.l.b16 %v5733
    %v5750 = vpack.c.b16 %v5743, %v5742
    %v5751 = vpack.c.b16 %v5745, %v5744
    %v5752 = vpack.c.b16 %v5747, %v5746
    %v5753 = vpack.c.b16 %v5749, %v5748
    %v5755 = vsel %vm2696, %v5750, 0
    %v5758 = vsel %vm2696, %v5751, 0
    %v5761 = vsel %vm2696, %v5752, 0
    %v5764 = vsel %vm2696, %v5753, 0
    %5766 = vmatpush.bf16.msra.mxu0 0
    %5767 = vmatpush.bf16.msra.mxu0 0
    %5768 = vmatpush.bf16.msra.mxu0 0
    %5769 = vmatpush.bf16.msra.mxu0 0
    %5770 = vmatpush.bf16.msra.mxu0 0
    %5771 = vmatpush.bf16.msra.mxu0 0
    %5772 = vmatpush.bf16.msra.mxu0 %v4223
    %5773 = vmatpush.bf16.msra.mxu0 %v4222
    %5774 = vmatmul.bf16.gmra.mxu0 %v5755
    %v5775 = vpop.f32.mrf.mxu0
    %v5776 = vadd.f32 0.0, %v5775
    %v5777 = vpop.f32.mrf.mxu0
    %v5778 = vadd.f32 0.0, %v5777
    %5779 = vmatmul.bf16.gmra.mxu0 %v5758
    %v5780 = vpop.f32.mrf.mxu0
    %v5781 = vadd.f32 0.0, %v5780
    %v5782 = vpop.f32.mrf.mxu0
    %v5783 = vadd.f32 0.0, %v5782
    %5784 = vmatmul.bf16.gmra.mxu0 %v5761
    %v5785 = vpop.f32.mrf.mxu0
    %v5786 = vadd.f32 0.0, %v5785
    %v5787 = vpop.f32.mrf.mxu0
    %v5788 = vadd.f32 0.0, %v5787
    %5789 = vmatmul.bf16.gmra.mxu0 %v5764
    %v5790 = vpop.f32.mrf.mxu0
    %v5791 = vadd.f32 0.0, %v5790
    %v5792 = vpop.f32.mrf.mxu0
    %v5793 = vadd.f32 0.0, %v5792
    %5794 = vdwg.mxu0
    %v5795 = vld [vmem:[%s4 + $0x128] sm:$0xff]
    %v5796 = vld [vmem:[%s4 + $0x130] sm:$0xff]
    %v5797 = vld [vmem:[%s4 + $0x138] sm:$0xff]
    %v5798 = vld [vmem:[%s4 + $0x140] sm:$0xff]
    %v5799 = vld [vmem:[%s4 + $0x148] sm:$0xff]
    %v5800 = vld [vmem:[%s4 + $0x150] sm:$0xff]
    %v5801 = vld [vmem:[%s4 + $0x158] sm:$0xff]
    %v5802 = vld [vmem:[%s4 + $0x160] sm:$0xff]
    %v5803 = vsel %vm2232, %v5776, 0.0
    %5804 = vadd.xlane.f32.xlu0 %v5803
    %v5805 = vpop.xlane.xlu0 %5804
    %v5806 = vsel %vm2232, %v5778, 0.0
    %5807 = vadd.xlane.f32.xlu0 %v5806
    %v5808 = vpop.xlane.xlu0 %5807
    %v5809 = vsel %vm2232, %v5781, 0.0
    %5810 = vadd.xlane.f32.xlu0 %v5809
    %v5811 = vpop.xlane.xlu0 %5810
    %v5812 = vsel %vm2232, %v5783, 0.0
    %5813 = vadd.xlane.f32.xlu0 %v5812
    %v5814 = vpop.xlane.xlu0 %5813
    %v5815 = vsel %vm2232, %v5786, 0.0
    %5816 = vadd.xlane.f32.xlu0 %v5815
    %v5817 = vpop.xlane.xlu0 %5816
    %v5818 = vsel %vm2232, %v5788, 0.0
    %5819 = vadd.xlane.f32.xlu0 %v5818
    %v5820 = vpop.xlane.xlu0 %5819
    %v5821 = vsel %vm2232, %v5791, 0.0
    %5822 = vadd.xlane.f32.xlu0 %v5821
    %v5823 = vpop.xlane.xlu0 %5822
    %v5824 = vsel %vm2232, %v5793, 0.0
    %5825 = vadd.xlane.f32.xlu0 %v5824
    %v5826 = vpop.xlane.xlu0 %5825
    %v5827 = vmul.f32 %v5805, 0.125
    %v5828 = vmul.f32 %v5808, 0.125
    %v5829 = vmul.f32 %v5811, 0.125
    %v5830 = vmul.f32 %v5814, 0.125
    %v5831 = vmul.f32 %v5817, 0.125
    %v5832 = vmul.f32 %v5820, 0.125
    %v5833 = vmul.f32 %v5823, 0.125
    %v5834 = vmul.f32 %v5826, 0.125
    %v5835 = vsub.f32 %v5776, %v5827
    %v5836 = vsub.f32 %v5778, %v5828
    %v5837 = vsub.f32 %v5781, %v5829
    %v5838 = vsub.f32 %v5783, %v5830
    %v5839 = vsub.f32 %v5786, %v5831
    %v5840 = vsub.f32 %v5788, %v5832
    %v5841 = vsub.f32 %v5791, %v5833
    %v5842 = vsub.f32 %v5793, %v5834
    %v5843 = vmul.f32 %v5835, %v5835
    %v5844 = vmul.f32 %v5836, %v5836
    %v5845 = vmul.f32 %v5837, %v5837
    %v5846 = vmul.f32 %v5838, %v5838
    %v5847 = vmul.f32 %v5839, %v5839
    %v5848 = vmul.f32 %v5840, %v5840
    %v5849 = vmul.f32 %v5841, %v5841
    %v5850 = vmul.f32 %v5842, %v5842
    %v5851 = vsel %vm2232, %v5843, 0.0
    %5852 = vadd.xlane.f32.xlu0 %v5851
    %v5853 = vpop.xlane.xlu0 %5852
    %v5854 = vsel %vm2232, %v5844, 0.0
    %5855 = vadd.xlane.f32.xlu0 %v5854
    %v5856 = vpop.xlane.xlu0 %5855
    %v5857 = vsel %vm2232, %v5845, 0.0
    %5858 = vadd.xlane.f32.xlu0 %v5857
    %v5859 = vpop.xlane.xlu0 %5858
    %v5860 = vsel %vm2232, %v5846, 0.0
    %5861 = vadd.xlane.f32.xlu0 %v5860
    %v5862 = vpop.xlane.xlu0 %5861
    %v5863 = vsel %vm2232, %v5847, 0.0
    %5864 = vadd.xlane.f32.xlu0 %v5863
    %v5865 = vpop.xlane.xlu0 %5864
    %v5866 = vsel %vm2232, %v5848, 0.0
    %5867 = vadd.xlane.f32.xlu0 %v5866
    %v5868 = vpop.xlane.xlu0 %5867
    %v5869 = vsel %vm2232, %v5849, 0.0
    %5870 = vadd.xlane.f32.xlu0 %v5869
    %v5871 = vpop.xlane.xlu0 %5870
    %v5872 = vsel %vm2232, %v5850, 0.0
    %5873 = vadd.xlane.f32.xlu0 %v5872
    %v5874 = vpop.xlane.xlu0 %5873
    %v5875 = vmul.f32 %v5853, 0.125
    %v5876 = vmul.f32 %v5856, 0.125
    %v5877 = vmul.f32 %v5859, 0.125
    %v5878 = vmul.f32 %v5862, 0.125
    %v5879 = vmul.f32 %v5865, 0.125
    %v5880 = vmul.f32 %v5868, 0.125
    %v5881 = vmul.f32 %v5871, 0.125
    %v5882 = vmul.f32 %v5874, 0.125
    %v5883 = vadd.f32 %v5875, 1e-05
    %v5884 = vadd.f32 %v5876, 1e-05
    %v5885 = vadd.f32 %v5877, 1e-05
    %v5886 = vadd.f32 %v5878, 1e-05
    %v5887 = vadd.f32 %v5879, 1e-05
    %v5888 = vadd.f32 %v5880, 1e-05
    %v5889 = vadd.f32 %v5881, 1e-05
    %v5890 = vadd.f32 %v5882, 1e-05
    %v5891 = vrsqrt.pop %v5883
    %v5892 = vmul.f32 %v5891, %v5883
    %v5893 = vmul.f32 %v5892, %v5891
    %v5894 = vmul.f32 0.5, %v5893
    %v5895 = vsub.f32 1.5, %v5894
    %v5896 = vmul.f32 %v5891, %v5895
    %vm5897 = vweird.f32 %v5883
    %vm5898 = vweird.f32 %v5891
    %vm5899 = vmor %vm5897, %vm5898
    %v5900 = vsel %vm5899, %v5891, %v5896
    %v5901 = vrsqrt.pop %v5884
    %v5902 = vmul.f32 %v5901, %v5884
    %v5903 = vmul.f32 %v5902, %v5901
    %v5904 = vmul.f32 0.5, %v5903
    %v5905 = vsub.f32 1.5, %v5904
    %v5906 = vmul.f32 %v5901, %v5905
    %vm5907 = vweird.f32 %v5884
    %vm5908 = vweird.f32 %v5901
    %vm5909 = vmor %vm5907, %vm5908
    %v5910 = vsel %vm5909, %v5901, %v5906
    %v5911 = vrsqrt.pop %v5885
    %v5912 = vmul.f32 %v5911, %v5885
    %v5913 = vmul.f32 %v5912, %v5911
    %v5914 = vmul.f32 0.5, %v5913
    %v5915 = vsub.f32 1.5, %v5914
    %v5916 = vmul.f32 %v5911, %v5915
    %vm5917 = vweird.f32 %v5885
    %vm5918 = vweird.f32 %v5911
    %vm5919 = vmor %vm5917, %vm5918
    %v5920 = vsel %vm5919, %v5911, %v5916
    %v5921 = vrsqrt.pop %v5886
    %v5922 = vmul.f32 %v5921, %v5886
    %v5923 = vmul.f32 %v5922, %v5921
    %v5924 = vmul.f32 0.5, %v5923
    %v5925 = vsub.f32 1.5, %v5924
    %v5926 = vmul.f32 %v5921, %v5925
    %vm5927 = vweird.f32 %v5886
    %vm5928 = vweird.f32 %v5921
    %vm5929 = vmor %vm5927, %vm5928
    %v5930 = vsel %vm5929, %v5921, %v5926
    %v5931 = vrsqrt.pop %v5887
    %v5932 = vmul.f32 %v5931, %v5887
    %v5933 = vmul.f32 %v5932, %v5931
    %v5934 = vmul.f32 0.5, %v5933
    %v5935 = vsub.f32 1.5, %v5934
    %v5936 = vmul.f32 %v5931, %v5935
    %vm5937 = vweird.f32 %v5887
    %vm5938 = vweird.f32 %v5931
    %vm5939 = vmor %vm5937, %vm5938
    %v5940 = vsel %vm5939, %v5931, %v5936
    %v5941 = vrsqrt.pop %v5888
    %v5942 = vmul.f32 %v5941, %v5888
    %v5943 = vmul.f32 %v5942, %v5941
    %v5944 = vmul.f32 0.5, %v5943
    %v5945 = vsub.f32 1.5, %v5944
    %v5946 = vmul.f32 %v5941, %v5945
    %vm5947 = vweird.f32 %v5888
    %vm5948 = vweird.f32 %v5941
    %vm5949 = vmor %vm5947, %vm5948
    %v5950 = vsel %vm5949, %v5941, %v5946
    %v5951 = vrsqrt.pop %v5889
    %v5952 = vmul.f32 %v5951, %v5889
    %v5953 = vmul.f32 %v5952, %v5951
    %v5954 = vmul.f32 0.5, %v5953
    %v5955 = vsub.f32 1.5, %v5954
    %v5956 = vmul.f32 %v5951, %v5955
    %vm5957 = vweird.f32 %v5889
    %vm5958 = vweird.f32 %v5951
    %vm5959 = vmor %vm5957, %vm5958
    %v5960 = vsel %vm5959, %v5951, %v5956
    %v5961 = vrsqrt.pop %v5890
    %v5962 = vmul.f32 %v5961, %v5890
    %v5963 = vmul.f32 %v5962, %v5961
    %v5964 = vmul.f32 0.5, %v5963
    %v5965 = vsub.f32 1.5, %v5964
    %v5966 = vmul.f32 %v5961, %v5965
    %vm5967 = vweird.f32 %v5890
    %vm5968 = vweird.f32 %v5961
    %vm5969 = vmor %vm5967, %vm5968
    %v5970 = vsel %vm5969, %v5961, %v5966
    %v5971 = vmul.f32 %v5900, %v5795
    %v5972 = vmul.f32 %v5910, %v5796
    %v5973 = vmul.f32 %v5920, %v5797
    %v5974 = vmul.f32 %v5930, %v5798
    %v5975 = vmul.f32 %v5940, %v5799
    %v5976 = vmul.f32 %v5950, %v5800
    %v5977 = vmul.f32 %v5960, %v5801
    %v5978 = vmul.f32 %v5970, %v5802
    %5980 = vset.pattern.permute.xlu0 0
    %5981 = vperm.xlu0 %5980, %v5971
    %v5982 = vpop.permute.xlu0 %5981
    %5985 = vset.pattern.permute.xlu0 0
    %5986 = vperm.xlu0 %5985, %v5972
    %v5987 = vpop.permute.xlu0 %5986
    %5990 = vset.pattern.permute.xlu0 0
    %5991 = vperm.xlu0 %5990, %v5973
    %v5992 = vpop.permute.xlu0 %5991
    %5995 = vset.pattern.permute.xlu0 0
    %5996 = vperm.xlu0 %5995, %v5974
    %v5997 = vpop.permute.xlu0 %5996
    %6000 = vset.pattern.permute.xlu0 0
    %6001 = vperm.xlu0 %6000, %v5975
    %v6002 = vpop.permute.xlu0 %6001
    %6005 = vset.pattern.permute.xlu0 0
    %6006 = vperm.xlu0 %6005, %v5976
    %v6007 = vpop.permute.xlu0 %6006
    %6010 = vset.pattern.permute.xlu0 0
    %6011 = vperm.xlu0 %6010, %v5977
    %v6012 = vpop.permute.xlu0 %6011
    %6015 = vset.pattern.permute.xlu0 0
    %6016 = vperm.xlu0 %6015, %v5978
    %v6017 = vpop.permute.xlu0 %6016
    %v6019 = vmul.f32 %v5835, %v5982
    %v6020 = vmul.f32 %v5836, %v5987
    %v6021 = vmul.f32 %v5837, %v5992
    %v6022 = vmul.f32 %v5838, %v5997
    %v6023 = vmul.f32 %v5839, %v6002
    %v6024 = vmul.f32 %v5840, %v6007
    %v6025 = vmul.f32 %v5841, %v6012
    %v6026 = vmul.f32 %v5842, %v6017
    %6028 = vset.pattern.permute.xlu0 1
    %6029 = vperm.xlu0 %6028, %v5795
    %v6030 = vpop.permute.xlu0 %6029
    %6033 = vset.pattern.permute.xlu0 1
    %6034 = vperm.xlu0 %6033, %v5796
    %v6035 = vpop.permute.xlu0 %6034
    %6038 = vset.pattern.permute.xlu0 1
    %6039 = vperm.xlu0 %6038, %v5797
    %v6040 = vpop.permute.xlu0 %6039
    %6043 = vset.pattern.permute.xlu0 1
    %6044 = vperm.xlu0 %6043, %v5798
    %v6045 = vpop.permute.xlu0 %6044
    %6048 = vset.pattern.permute.xlu0 1
    %6049 = vperm.xlu0 %6048, %v5799
    %v6050 = vpop.permute.xlu0 %6049
    %6053 = vset.pattern.permute.xlu0 1
    %6054 = vperm.xlu0 %6053, %v5800
    %v6055 = vpop.permute.xlu0 %6054
    %6058 = vset.pattern.permute.xlu0 1
    %6059 = vperm.xlu0 %6058, %v5801
    %v6060 = vpop.permute.xlu0 %6059
    %6063 = vset.pattern.permute.xlu0 1
    %6064 = vperm.xlu0 %6063, %v5802
    %v6065 = vpop.permute.xlu0 %6064
    %v6067 = vadd.f32 %v6019, %v6030
    %v6068 = vadd.f32 %v6020, %v6035
    %v6069 = vadd.f32 %v6021, %v6040
    %v6070 = vadd.f32 %v6022, %v6045
    %v6071 = vadd.f32 %v6023, %v6050
    %v6072 = vadd.f32 %v6024, %v6055
    %v6073 = vadd.f32 %v6025, %v6060
    %v6074 = vadd.f32 %v6026, %v6065
    %v6075 = vadd.f32 %v5718, %v6067
    %v6076 = vadd.f32 %v5719, %v6068
    %v6077 = vadd.f32 %v5720, %v6069
    %v6078 = vadd.f32 %v5721, %v6070
    %v6079 = vadd.f32 %v5722, %v6071
    %v6080 = vadd.f32 %v5723, %v6072
    %v6081 = vadd.f32 %v5724, %v6073
    %v6082 = vadd.f32 %v5725, %v6074
    %v6083 = vmax.f32 %v6075, 0.0
    %v6084 = vmax.f32 %v6076, 0.0
    %v6085 = vmax.f32 %v6077, 0.0
    %v6086 = vmax.f32 %v6078, 0.0
    %v6087 = vmax.f32 %v6079, 0.0
    %v6088 = vmax.f32 %v6080, 0.0
    %v6089 = vmax.f32 %v6081, 0.0
    %v6090 = vmax.f32 %v6082, 0.0
    %v6091 = vld [vmem:[#allocation5 + $0x150] sm:$0xf]
    %v6092 = vpack.c.bf16 %v6084, %v6083
    %v6093 = vpack.c.bf16 %v6086, %v6085
    %v6094 = vpack.c.bf16 %v6088, %v6087
    %v6095 = vpack.c.bf16 %v6090, %v6089
    %v6097 = vsel %vm2232, %v6092, 0
    %v6100 = vsel %vm2232, %v6093, 0
    %v6103 = vsel %vm2232, %v6094, 0
    %v6106 = vsel %vm2232, %v6095, 0
    %v6109 = vsel %vm334, %v6091, 0
    %6111 = vmatpush.bf16.msra.mxu0 0
    %6112 = vmatpush.bf16.msra.mxu0 0
    %6113 = vmatpush.bf16.msra.mxu0 0
    %6114 = vmatpush.bf16.msra.mxu0 0
    %6115 = vmatpush.bf16.msra.mxu0 0
    %6116 = vmatpush.bf16.msra.mxu0 0
    %6117 = vmatpush.bf16.msra.mxu0 0
    %6118 = vmatpush.bf16.msra.mxu0 %v6109
    %6119 = vmatmul.bf16.gmra.mxu0 %v6097
    %v6120 = vpop.f32.mrf.mxu0
    %v6121 = vadd.f32 0.0, %v6120
    %v6122 = vpop.f32.mrf.mxu0
    %v6123 = vadd.f32 0.0, %v6122
    %6124 = vmatmul.bf16.gmra.mxu0 %v6100
    %v6125 = vpop.f32.mrf.mxu0
    %v6126 = vadd.f32 0.0, %v6125
    %v6127 = vpop.f32.mrf.mxu0
    %v6128 = vadd.f32 0.0, %v6127
    %6129 = vmatmul.bf16.gmra.mxu0 %v6103
    %v6130 = vpop.f32.mrf.mxu0
    %v6131 = vadd.f32 0.0, %v6130
    %v6132 = vpop.f32.mrf.mxu0
    %v6133 = vadd.f32 0.0, %v6132
    %6134 = vmatmul.bf16.gmra.mxu0 %v6106
    %v6135 = vpop.f32.mrf.mxu0
    %v6136 = vadd.f32 0.0, %v6135
    %v6137 = vpop.f32.mrf.mxu0
    %v6138 = vadd.f32 0.0, %v6137
    %6139 = vdwg.mxu0
    %6140 = vst.msk [vmem:[%s5] sm:$0xff] %vm4709, %v6121
    %6141 = vst.msk [vmem:[%s5 + $0x8] sm:$0xff] %vm4709, %v6123
    %6142 = vst.msk [vmem:[%s5 + $0x10] sm:$0xff] %vm4709, %v6126
    %6143 = vst.msk [vmem:[%s5 + $0x18] sm:$0xff] %vm4709, %v6128
    %6144 = vst.msk [vmem:[%s5 + $0x20] sm:$0xff] %vm4709, %v6131
    %6145 = vst.msk [vmem:[%s5 + $0x28] sm:$0xff] %vm4709, %v6133
    %6146 = vst.msk [vmem:[%s5 + $0x30] sm:$0xff] %vm4709, %v6136
    %6147 = vst.msk [vmem:[%s5 + $0x38] sm:$0xff] %vm4709, %v6138
    %v6148 = vld [vmem:[%s3 + $0x384] sm:$0xf]
    %v6149 = vld [vmem:[%s3 + $0x398] sm:$0xf]
    %v6150 = vld [vmem:[%s4 + $0x168] sm:$0xff]
    %v6151 = vld [vmem:[%s4 + $0x170] sm:$0xff]
    %v6152 = vpack.c.bf16 %v6123, %v6121
    %v6153 = vpack.c.bf16 %v6128, %v6126
    %v6154 = vpack.c.bf16 %v6133, %v6131
    %v6155 = vpack.c.bf16 %v6138, %v6136
    %6157 = vset.pattern.permute.xlu0 0
    %6158 = vperm.xlu0 %6157, %v6150
    %v6159 = vpop.permute.xlu0 %6158
    %6162 = vset.pattern.permute.xlu0 0
    %6163 = vperm.xlu0 %6162, %v6151
    %v6164 = vpop.permute.xlu0 %6163
    %v6168 = vunpack.c.l.b16 %v6148
    %v6169 = vunpack.c.l.b16 %v6149
    %v6170 = vpack.c.b16 %v6169, %v6168
    %v6172 = vsel %vm5288, %v6170, 0
    %6174 = vmatpush.bf16.msra.mxu0 0
    %6175 = vmatpush.bf16.msra.mxu0 0
    %6176 = vmatpush.bf16.msra.mxu0 0
    %6177 = vmatpush.bf16.msra.mxu0 0
    %6178 = vmatpush.bf16.msra.mxu0 %v6155
    %6179 = vmatpush.bf16.msra.mxu0 %v6154
    %6180 = vmatpush.bf16.msra.mxu0 %v6153
    %6181 = vmatpush.bf16.msra.mxu0 %v6152
    %6182 = vmatmul.bf16.gmra.mxu0 %v6172
    %v6183 = vpop.f32.mrf.mxu0
    %v6184 = vadd.f32 %v6159, %v6183
    %v6185 = vpop.f32.mrf.mxu0
    %v6186 = vadd.f32 %v6164, %v6185
    %6187 = vdwg.mxu0
    %6188 = vst.msk [vmem:[%s6] sm:$0xff] %vm4709, %v6184
    %vm6189 = vcmask 9216
    %6190 = vst.msk [vmem:[%s6 + $0x8] sm:$0x3] %vm6189, %v6186
    // Predicated region
    $region30: #{resnet_forward.1} parent=1 // pred_check
      _
    $region31: #{resnet_forward.1} parent=1 // pred_check_branch
      %6192 = sbr.rel (0) target = $region33
    $region32: #{resnet_forward.1} parent=1 // pred_region
      _
    $region33: #{resnet_forward.1} parent=1 // pred_fallthru
      _
    // Predicated region
    $region34: #{resnet_forward.1} parent=1 // pred_check
      _
    $region35: #{resnet_forward.1} parent=1 // pred_check_branch
      %6194 = sbr.rel (0) target = $region37
    $region36: #{resnet_forward.1} parent=1 // pred_region
      _
    $region37: #{resnet_forward.1} parent=1 // pred_fallthru
      _
    // Predicated region
    $region38: #{resnet_forward.1} parent=1 // pred_check
      _
    $region39: #{resnet_forward.1} parent=1 // pred_check_branch
      %6196 = sbr.rel (0) target = $region41
    $region40: #{resnet_forward.1} parent=1 // pred_region
      _
    $region41: #{resnet_forward.1} parent=1 // pred_fallthru
      _
    // Predicated region
    $region42: #{resnet_forward.1} parent=1 // pred_check
      _
    $region43: #{resnet_forward.1} parent=1 // pred_check_branch
      %6198 = sbr.rel (0) target = $region45
    $region44: #{resnet_forward.1} parent=1 // pred_region
      _
    $region45: #{resnet_forward.1} parent=1 // pred_fallthru
      _
    %6199 = vsyncpa [#allocation4], 1
    %6200 = vsyncpa [#allocation6], 1

</llo_original>
